<compile_context>
chip_gen: v7x
topology: tpu7x:2x2x1
jax: 0.10.0
libtpu: 0.0.40
codegen_flags: <defaults>
</compile_context>

<pallas_src>
import functools

import jax
import jax.numpy as jnp
from jax.experimental import pallas as pl
from jax.experimental.pallas import tpu as pltpu


# ---------------------------------------------------------------------------
# Model constants
# ---------------------------------------------------------------------------
HDIM, CDIM = 96, 64
CORR_LEVELS, CORR_RADIUS = 4, 3
COR_PLANES = CORR_LEVELS * (2 * CORR_RADIUS + 1) ** 2      # 196
FDIM = 128
PATCH_DIM = 3 * 8 * 8                                       # 192
GRU_IN = HDIM + CDIM + 82                                   # 242
GRU_KPAD = 256                                               # 242 padded to 256


def _round_up(x, m):
    return ((x + m - 1) // m) * m


def _choose_tm(P, cap=512):
    """Large row tiles (all pixel-major kernels are HBM-bound), but keep the
    grid length >= 2 so v7x can shard across both TensorCores."""
    return max(8, min(cap, _round_up(pl.cdiv(P, 2), 8)))


def _pick_corr_tiles(hw):
    tq = hw
    for t in (512, 256, 128, 64, 32, 16, 8):
        if hw % t == 0:
            tq = t
            break
    tk = hw
    for t in (512, 384, 256, 128):
        if hw % t == 0:
            tk = t
            break
    return tq, tk


@functools.lru_cache(maxsize=None)
def _vmem_limit_bytes():
    # Per-generation limit: ~80% of physical VMEM (64 MiB/TC on v7x, 128 MiB
    # on v5e/v6e).  Fall back to the previously-working 64 MiB.
    try:
        cap = int(pltpu.get_tpu_info().vmem_capacity_bytes)
        return max(32 << 20, int(cap * 0.8))
    except Exception:
        return 64 << 20


def _cparams(n_par):
    return pltpu.CompilerParams(
        dimension_semantics=("parallel",) * n_par,
        vmem_limit_bytes=_vmem_limit_bytes())


# ---------------------------------------------------------------------------
# Pallas kernels
# ---------------------------------------------------------------------------

def _linear_kernel(x_ref, w_ref, b_ref, o_ref, *, act):
    """Per-pixel linear layer (== 1x1 conv), bf16 matmul + f32 epilogue."""
    y = jnp.dot(x_ref[...], w_ref[...], preferred_element_type=jnp.float32)
    y = y + b_ref[...]
    if act == "relu":
        y = jnp.maximum(y, 0.0)
    elif act == "tanh":
        y = jnp.tanh(y)
    elif act == "sigmoid":
        y = jax.nn.sigmoid(y)
    o_ref[...] = y.astype(o_ref.dtype)


def linear(x, w, b, act="none", out_dtype=jnp.float32, tm=None):
    M, K = x.shape
    N = w.shape[1]
    tm = tm or _choose_tm(M)
    assert M % tm == 0
    cost = pl.CostEstimate(
        flops=int(2 * M * K * N), transcendentals=0,
        bytes_accessed=int(M * K * 2 + K * N * 2 + M * N * 4))
    return pl.pallas_call(
        functools.partial(_linear_kernel, act=act),
        out_shape=jax.ShapeDtypeStruct((M, N), out_dtype),
        grid=(M // tm,),
        in_specs=[pl.BlockSpec((tm, K), lambda i: (i, 0)),
                  pl.BlockSpec((K, N), lambda i: (0, 0)),
                  pl.BlockSpec((1, N), lambda i: (0, 0))],
        out_specs=pl.BlockSpec((tm, N), lambda i: (i, 0)),
        compiler_params=_cparams(1),
        cost_estimate=cost,
    )(x, w, b)


def _cnet_kernel(x_ref, w_ref, b_ref, net_ref, inp_ref, *, hdim):
    """Context net: one matmul, split into tanh(hidden) / relu(input)."""
    y = jnp.dot(x_ref[...], w_ref[...], preferred_element_type=jnp.float32)
    y = y + b_ref[...]
    net_ref[...] = jnp.tanh(y[:, :hdim])
    inp_ref[...] = jnp.maximum(y[:, hdim:], 0.0).astype(inp_ref.dtype)


def cnet_split(x, w, b, hdim, tm):
    M, K = x.shape
    N = w.shape[1]
    cdim = N - hdim
    return pl.pallas_call(
        functools.partial(_cnet_kernel, hdim=hdim),
        out_shape=(jax.ShapeDtypeStruct((M, hdim), jnp.float32),
                   jax.ShapeDtypeStruct((M, cdim), jnp.bfloat16)),
        grid=(M // tm,),
        in_specs=[pl.BlockSpec((tm, K), lambda i: (i, 0)),
                  pl.BlockSpec((K, N), lambda i: (0, 0)),
                  pl.BlockSpec((1, N), lambda i: (0, 0))],
        out_specs=(pl.BlockSpec((tm, hdim), lambda i: (i, 0)),
                   pl.BlockSpec((tm, cdim), lambda i: (i, 0))),
        compiler_params=_cparams(1),
    )(x, w, b)


def _corr_kernel(f1_ref, f2_ref, o_ref, *, scale):
    """All-pairs correlation tile: f1 @ f2^T / sqrt(C) (bf16 -> f32 -> bf16)."""
    corr = jax.lax.dot_general(
        f1_ref[...], f2_ref[...], (((2,), (2,)), ((0,), (0,))),
        preferred_element_type=jnp.float32)
    o_ref[...] = (corr * scale).astype(o_ref.dtype)


def corr_volume(fmap1, fmap2):
    B, HW, C = fmap1.shape
    tq, tk = _pick_corr_tiles(HW)
    cost = pl.CostEstimate(
        flops=int(2 * B * HW * HW * C), transcendentals=0,
        bytes_accessed=int(2 * B * HW * C * 2 + 2 * B * HW * HW))
    return pl.pallas_call(
        functools.partial(_corr_kernel, scale=1.0 / (float(C) ** 0.5)),
        out_shape=jax.ShapeDtypeStruct((B, HW, HW), jnp.bfloat16),
        grid=(B, HW // tq, HW // tk),
        in_specs=[pl.BlockSpec((1, tq, C), lambda b, i, j: (b, i, 0)),
                  pl.BlockSpec((1, tk, C), lambda b, i, j: (b, j, 0))],
        out_specs=pl.BlockSpec((1, tq, tk), lambda b, i, j: (b, i, j)),
        compiler_params=_cparams(3),
        cost_estimate=cost,
    )(fmap1, fmap2)


def _update_kernel(corr_ref, net_ref, inp_ref, c0_ref, c1_ref,
                   wc_ref, bc_ref, wf_ref, bf_ref, we_ref, be_ref,
                   wzrq_ref, bz_ref, br_ref, bq_ref, wqh_ref,
                   wh1_ref, bh1_ref, wf2_ref, bf2_ref, wm2_ref, bm2_ref,
                   net_out_ref, mask_out_ref, c1_out_ref):
    """Fused motion-encoder + ConvGRU + heads + mask softmax + homography."""
    f32 = jnp.float32
    bf16 = jnp.bfloat16

    net = net_ref[...]                                    # (TM, 96) f32
    c0 = c0_ref[...]                                      # (TM, 2)  f32
    c1 = c1_ref[...]                                      # (TM, 2)  f32
    flow = c1 - c0                                        # (TM, 2)  f32

    # --- motion encoder ----------------------------------------------------
    cor = jnp.dot(corr_ref[...], wc_ref[...], preferred_element_type=f32)
    cor = jnp.maximum(cor + bc_ref[...], 0.0)             # (TM, 96)
    # K=2 "matmul" done as two VPU broadcast multiply-adds (MXU has slack).
    wf = wf_ref[...].astype(f32)                          # (2, 64)
    flo = flow[:, 0:1] * wf[0:1, :] + flow[:, 1:2] * wf[1:2, :] + bf_ref[...]
    flo = jnp.maximum(flo, 0.0)                           # (TM, 64)
    cf = jnp.concatenate([cor.astype(bf16), flo.astype(bf16)], axis=1)
    mot = jnp.dot(cf, we_ref[...], preferred_element_type=f32)
    mot = jnp.maximum(mot + be_ref[...], 0.0)             # (TM, 80)

    # --- fused ConvGRU -------------------------------------------------------
    n_rows = net.shape[0]
    hx = jnp.concatenate(
        [net.astype(bf16), inp_ref[...], mot.astype(bf16), flow.astype(bf16),
         jnp.zeros((n_rows, GRU_KPAD - GRU_IN), bf16)], axis=1)   # (TM, 256)
    big = jnp.dot(hx, wzrq_ref[...], preferred_element_type=f32)  # (TM, 384)
    z = jax.nn.sigmoid(big[:, 0:96] + bz_ref[...])
    r = jax.nn.sigmoid(big[:, 128:224] + br_ref[...])
    rh = (r * net).astype(bf16)
    q = jnp.tanh(big[:, 256:352]
                 + jnp.dot(rh, wqh_ref[...], preferred_element_type=f32)
                 + bq_ref[...])
    net_new = (1.0 - z) * net + z * q                     # (TM, 96) f32
    net_out_ref[...] = net_new

    # --- fused flow / mask heads --------------------------------------------
    h = jnp.dot(net_new.astype(bf16), wh1_ref[...], preferred_element_type=f32)
    h = jnp.maximum(h + bh1_ref[...], 0.0)                # (TM, 256)
    h_bf = h.astype(bf16)
    delta = jnp.dot(h_bf[:, 0:128], wf2_ref[...],
                    preferred_element_type=f32) + bf2_ref[...]    # (TM, 9)
    mask = jnp.dot(h_bf[:, 128:256], wm2_ref[...],
                   preferred_element_type=f32) + bm2_ref[...]     # (TM, 576)
    mask = 0.25 * mask

    # Fused grouped softmax over the 9 neighbour taps (columns k*64 + subpix);
    # emit normalized weights as bf16 to cut the dominant HBM slab traffic.
    chunks = [mask[:, k * 64:(k + 1) * 64] for k in range(9)]
    mmax = chunks[0]
    for k in range(1, 9):
        mmax = jnp.maximum(mmax, chunks[k])
    exps = [jnp.exp(c - mmax) for c in chunks]
    den = exps[0]
    for k in range(1, 9):
        den = den + exps[k]
    inv = pl.reciprocal(den, approx=True)
    mask_out_ref[...] = jnp.concatenate(
        [e * inv for e in exps], axis=1).astype(mask_out_ref.dtype)

    # --- homography-based coordinate update (exact divide: iterated state) --
    d = delta * 0.003
    x = c0[:, 0:1]
    y = c0[:, 1:2]
    tx = (1.0 + d[:, 0:1]) * x + d[:, 1:2] * y + d[:, 2:3]
    ty = d[:, 3:4] * x + (1.0 + d[:, 4:5]) * y + d[:, 5:6]
    tz = d[:, 6:7] * x + d[:, 7:8] * y + (1.0 + d[:, 8:9])
    dx = tx / tz - x
    dy = ty / tz - y
    c1_out_ref[...] = c1 + jnp.concatenate([dx, dy], axis=1)


def update_step(p, corr_feat, net, inp, coords0, coords1, tm):
    P = net.shape[0]
    row = lambda i: (i, 0)
    full = lambda i: (0, 0)
    weights = [p["enc_c_w"], p["enc_c_b"], p["enc_f_w"], p["enc_f_b"],
               p["enc_w"], p["enc_b"], p["gru_w"], p["gru_bz"], p["gru_br"],
               p["gru_bq"], p["gru_wq_h"], p["head1_w"], p["head1_b"],
               p["fh2_w"], p["fh2_b"], p["mh2_w"], p["mh2_b"]]
    # TODO(synk): constant-index weight specs could be single-buffered
    # (pipeline_mode=pl.Buffered(1)) for extra v7x VMEM headroom.
    in_specs = ([pl.BlockSpec((tm, COR_PLANES), row),
                 pl.BlockSpec((tm, HDIM), row),
                 pl.BlockSpec((tm, CDIM), row),
                 pl.BlockSpec((tm, 2), row),
                 pl.BlockSpec((tm, 2), row)]
                + [pl.BlockSpec(w.shape, full) for w in weights])
    flops_per_row = 2 * (COR_PLANES * 96 + 160 * 80 + GRU_KPAD * 384
                         + 96 * 96 + 96 * 256 + 128 * 9 + 128 * 576)
    cost = pl.CostEstimate(
        flops=int(P * flops_per_row),
        transcendentals=int(P * (2 * 96 + 96 + 576)),
        bytes_accessed=int(P * (920 + 1544) + 500000))
    return pl.pallas_call(
        _update_kernel,
        out_shape=(jax.ShapeDtypeStruct((P, HDIM), jnp.float32),
                   jax.ShapeDtypeStruct((P, 576), jnp.bfloat16),
                   jax.ShapeDtypeStruct((P, 2), jnp.float32)),
        grid=(P // tm,),
        in_specs=in_specs,
        out_specs=(pl.BlockSpec((tm, HDIM), row),
                   pl.BlockSpec((tm, 576), row),
                   pl.BlockSpec((tm, 2), row)),
        input_output_aliases={1: 0, 4: 2},     # net -> net_out, coords1 -> c1_out
        compiler_params=_cparams(1),
        cost_estimate=cost,
    )(corr_feat, net, inp, coords0, coords1, *weights)


def _upsample_kernel(w_ref, f9_ref, o_ref):
    """Convex combination with pre-softmaxed bf16 weights.
    w: (TM, 576) with col = k*64 + (r8*8 + c8); f9: (TM, 18) with col = ch*9+k.
    Output: (TM, 128) lane-dense, col = ch*64 + r8*8 + c8."""
    w = w_ref[...].astype(jnp.float32)
    f = f9_ref[...]
    ox = jnp.zeros_like(w[:, 0:64])
    oy = jnp.zeros_like(ox)
    for k in range(9):
        wk = w[:, k * 64:(k + 1) * 64]
        ox = ox + wk * f[:, k:k + 1]
        oy = oy + wk * f[:, 9 + k:10 + k]
    o_ref[...] = jnp.concatenate([ox, oy], axis=1)


def _make_flow9(flow_p, B, H8, W8):
    """[P,2] flow at 1/8 res -> [P,18] 3x3 unfold (col = ch*9 + k): pad + one gather."""
    fl = 8.0 * flow_p.reshape(B, H8, W8, 2)
    pad = jnp.pad(fl, ((0, 0), (1, 1), (1, 1), (0, 0)))        # [B,H8+2,W8+2,2]
    Hp, Wp = H8 + 2, W8 + 2
    yy = jnp.arange(H8)
    xx = jnp.arange(W8)
    ky = jnp.arange(3)
    kx = jnp.arange(3)
    rows = (yy[:, None, None, None] + ky[None, None, :, None]) * Wp   # (H8,1,3,1)
    cols = xx[None, :, None, None] + kx[None, None, None, :]          # (1,W8,1,3)
    idx = (rows + cols).reshape(H8 * W8, 9)                           # F.unfold order
    f9 = jnp.take(pad.reshape(B, Hp * Wp, 2), idx, axis=1)            # [B,HW,9,2]
    return f9.transpose(0, 1, 3, 2).reshape(B * H8 * W8, 18)


def upsample_flow(flow_p, mask_w, B, H8, W8, tm, P_pad):
    """flow_p: [P,2] (coords1-coords0), mask_w: [P_pad,576] bf16 softmax weights."""
    P = B * H8 * W8
    flow9 = _make_flow9(flow_p, B, H8, W8)
    flow9 = jnp.pad(flow9, ((0, P_pad - P), (0, 0)))

    up = pl.pallas_call(
        _upsample_kernel,
        out_shape=jax.ShapeDtypeStruct((P_pad, 128), jnp.float32),
        grid=(P_pad // tm,),
        in_specs=[pl.BlockSpec((tm, 576), lambda i: (i, 0)),
                  pl.BlockSpec((tm, 18), lambda i: (i, 0))],
        out_specs=pl.BlockSpec((tm, 128), lambda i: (i, 0)),
        compiler_params=_cparams(1),
    )(mask_w, flow9)

    up = up[:P].reshape(B, H8, W8, 2, 8, 8)
    up = up.transpose(0, 3, 1, 4, 2, 5)                    # (B, 2, H8, 8, W8, 8)
    return up.reshape(B, 2, 8 * H8, 8 * W8)


# ---------------------------------------------------------------------------
# Plain-JAX glue (coordinate grid, gather-based correlation lookup)
# ---------------------------------------------------------------------------

def coords_grid_p(B, H8, W8):
    ys, xs = jnp.meshgrid(jnp.arange(H8), jnp.arange(W8), indexing="ij")
    c = jnp.stack([xs, ys], axis=-1).astype(jnp.float32).reshape(H8 * W8, 2)
    return jnp.tile(c, (B, 1))                             # [P, 2], (x, y)


def _bilinear_sample(img, x, y):
    """img: [N,H,W] (bf16); x,y: [N,Q] pixel coords; zero padding outside."""
    N, H, W = img.shape
    x0 = jnp.floor(x)
    y0 = jnp.floor(y)
    x1 = x0 + 1.0
    y1 = y0 + 1.0
    flat = img.reshape(N, H * W)

    def gather(ix, iy):
        valid = (ix >= 0) & (ix <= W - 1) & (iy >= 0) & (iy <= H - 1)
        ixc = jnp.clip(ix, 0, W - 1).astype(jnp.int32)
        iyc = jnp.clip(iy, 0, H - 1).astype(jnp.int32)
        v = jnp.take_along_axis(flat, iyc * W + ixc, axis=1).astype(jnp.float32)
        return jnp.where(valid, v, 0.0)

    Ia = gather(x0, y0)
    Ib = gather(x0, y1)
    Ic = gather(x1, y0)
    Id = gather(x1, y1)
    wa = (x1 - x) * (y1 - y)
    wb = (x1 - x) * (y - y0)
    wc = (x - x0) * (y1 - y)
    wd = (x - x0) * (y - y0)
    return wa * Ia + wb * Ib + wc * Ic + wd * Id


def corr_lookup(pyramid, coords_p, radius):
    # TODO(synk): grid_sample-style bilinear lookup is a data-dependent gather
    # (no rectangular BlockSpec / safe in-kernel lane gather); kept in plain JAX.
    r = radius
    dvals = jnp.linspace(-r, r, 2 * r + 1)
    dgy, dgx = jnp.meshgrid(dvals, dvals, indexing="ij")
    off0 = dgy.reshape(-1)                 # added to x (mirrors torch meshgrid(dy,dx))
    off1 = dgx.reshape(-1)                 # added to y
    outs = []
    for lvl, corr in enumerate(pyramid):
        cx = coords_p[:, 0:1] / (2.0 ** lvl) + off0[None, :]
        cy = coords_p[:, 1:2] / (2.0 ** lvl) + off1[None, :]
        outs.append(_bilinear_sample(corr, cx, cy))        # [P, (2r+1)^2]
    return jnp.concatenate(outs, axis=1)                   # [P, 196]


# ---------------------------------------------------------------------------
# Parameters (deterministic synthetic init, packed for the fused kernels)
# ---------------------------------------------------------------------------

def init_params(key):
    def mk(k, shape):
        return (1.0 / (shape[0] ** 0.5)) * jax.random.normal(k, shape, jnp.float32)

    bf = jnp.bfloat16
    ks = jax.random.split(key, 16)
    p = {}
    p["fnet_w"] = mk(ks[0], (PATCH_DIM, FDIM)).astype(bf)
    p["fnet_b"] = jnp.zeros((1, FDIM), jnp.float32)
    p["cnet_w"] = mk(ks[1], (PATCH_DIM, HDIM + CDIM)).astype(bf)
    p["cnet_b"] = jnp.zeros((1, HDIM + CDIM), jnp.float32)

    p["enc_c_w"] = mk(ks[2], (COR_PLANES, 96)).astype(bf)
    p["enc_c_b"] = jnp.zeros((1, 96), jnp.float32)
    p["enc_f_w"] = mk(ks[3], (2, 64))                       # f32, used on VPU
    p["enc_f_b"] = jnp.zeros((1, 64), jnp.float32)
    p["enc_w"] = mk(ks[4], (160, 80)).astype(bf)
    p["enc_b"] = jnp.zeros((1, 80), jnp.float32)

    # Fused ConvGRU: pack wz | wr | wq(x-rows) into a lane-aligned [256, 384]
    # weight (columns 0:96 / 128:224 / 256:352); the net-rows of wq are applied
    # separately to r*net via gru_wq_h.
    wz = mk(ks[5], (GRU_IN, HDIM))
    wr = mk(ks[6], (GRU_IN, HDIM))
    wq = mk(ks[7], (GRU_IN, HDIM))
    w_zrq = jnp.zeros((GRU_KPAD, 384), jnp.float32)
    w_zrq = w_zrq.at[:GRU_IN, 0:96].set(wz)
    w_zrq = w_zrq.at[:GRU_IN, 128:224].set(wr)
    w_zrq = w_zrq.at[HDIM:GRU_IN, 256:352].set(wq[HDIM:])
    p["gru_w"] = w_zrq.astype(bf)
    p["gru_wq_h"] = wq[:HDIM].astype(bf)
    p["gru_bz"] = jnp.zeros((1, HDIM), jnp.float32)
    p["gru_br"] = jnp.zeros((1, HDIM), jnp.float32)
    p["gru_bq"] = jnp.zeros((1, HDIM), jnp.float32)

    # Fused heads: fh1 | mh1 share the input net -> one [96, 256] matmul.
    fh1 = mk(ks[8], (HDIM, 128))
    mh1 = mk(ks[10], (HDIM, 128))
    p["head1_w"] = jnp.concatenate([fh1, mh1], axis=1).astype(bf)
    p["head1_b"] = jnp.zeros((1, 256), jnp.float32)
    p["fh2_w"] = mk(ks[9], (128, 9)).astype(bf)
    p["fh2_b"] = jnp.zeros((1, 9), jnp.float32)
    p["mh2_w"] = mk(ks[11], (128, 64 * 9)).astype(bf)
    p["mh2_b"] = jnp.zeros((1, 64 * 9), jnp.float32)
    return p


# ---------------------------------------------------------------------------
# RAFT forward
# ---------------------------------------------------------------------------

def raft_forward(params, image1, image2, iters=4):
    B, C, H, W = image1.shape
    H8, W8 = H // 8, W // 8
    HW = H8 * W8
    P = B * HW
    tm = _choose_tm(P)
    P_pad = _round_up(P, tm)
    pr = P_pad - P

    img1 = 2.0 * (image1 / 255.0) - 1.0
    img2 = 2.0 * (image2 / 255.0) - 1.0

    def patchify(img):  # NCHW -> [P_pad, C*64] stride-8 space-to-depth, bf16
        x = img.reshape(B, C, H8, 8, W8, 8)
        x = x.transpose(0, 2, 4, 1, 3, 5)
        x = x.reshape(P, C * 64).astype(jnp.bfloat16)
        return jnp.pad(x, ((0, pr), (0, 0)))

    # TODO(synk): SmallEncoder residual conv stack + instance norm replaced by a
    # stride-8 patch embedding (Pallas matmul), same as the accepted baseline.
    x1 = patchify(img1)
    x2 = patchify(img2)

    # fnet on both frames in one pallas_call (weights DMA'd once, 2x grid).
    x12 = jnp.concatenate([x1, x2], axis=0)
    fmap12 = linear(x12, params["fnet_w"], params["fnet_b"], "relu",
                    out_dtype=jnp.bfloat16, tm=tm)
    fmap1 = fmap12[:P].reshape(B, HW, FDIM)
    fmap2 = fmap12[P_pad:P_pad + P].reshape(B, HW, FDIM)

    # Correlation pyramid: Pallas bf16 batched matmul; 2x2 pools in glue.
    # TODO(synk): the 2x2 avg-pool chain stays in plain JAX (bf16); fusing it
    # into the corr kernel epilogue needs tk % (2*W8) == 0 tiling.
    corr = corr_volume(fmap1, fmap2).reshape(P, H8, W8)
    pyramid = [corr]
    for _ in range(CORR_LEVELS - 1):
        c = pyramid[-1]
        hh, ww = c.shape[-2:]
        c = c.reshape(P, hh // 2, 2, ww // 2, 2).mean(
            axis=(2, 4), dtype=jnp.float32).astype(jnp.bfloat16)
        pyramid.append(c)

    # Context network (single fused kernel, two outputs).
    net, inp = cnet_split(x1, params["cnet_w"], params["cnet_b"], HDIM, tm)

    coords0 = jnp.pad(coords_grid_p(B, H8, W8), ((0, pr), (0, 0)))   # [P_pad,2]
    coords1 = coords0

    predictions = []
    for _ in range(iters):
        corr_feat = corr_lookup(pyramid, coords1[:P], CORR_RADIUS)
        corr_feat = jnp.pad(corr_feat.astype(jnp.bfloat16), ((0, pr), (0, 0)))
        net, mask_w, coords1 = update_step(
            params, corr_feat, net, inp, coords0, coords1, tm)
        flow_up = upsample_flow((coords1 - coords0)[:P], mask_w,
                                B, H8, W8, tm, P_pad)
        predictions.append(flow_up)                 # loss_type == 'flow'

    return predictions


# ---------------------------------------------------------------------------

if __name__ == "__main__":
    key = jax.random.PRNGKey(0)
    kp, k1, k2 = jax.random.split(key, 3)
    params = init_params(kp)

    B, C, H, W = 2, 3, 64, 64          # 1/8-resolution grid is 8x8
    image1 = jax.random.uniform(k1, (B, C, H, W), jnp.float32, 0.0, 255.0)
    image2 = jax.random.uniform(k2, (B, C, H, W), jnp.float32, 0.0, 255.0)

    fwd = jax.jit(raft_forward, static_argnums=(3,))
    preds = fwd(params, image1, image2, 4)
    preds = jax.block_until_ready(preds)

    flow_up = preds[-1]
    assert flow_up.shape == (B, 2, H, W), flow_up.shape
    assert not bool(jnp.any(jnp.isnan(flow_up)))
    print("KERNEL_OK")
</pallas_src>

<mosaic_0001>
module attributes {stable_mosaic.version = 11 : i64} {
  func.func private @main(%arg0: i32) attributes {dimension_semantics = [#tpu.dimension_semantics<core_parallel>], iteration_bounds = array<i64: 2>, tpu.core_type = #tpu.core_type<sc_scalar_subcore>, window_params = []} {
    return
  }
}

module attributes {stable_mosaic.version = 11 : i64} {
  func.func private @main(%arg0: i32) attributes {dimension_semantics = [#tpu.dimension_semantics<core_parallel>], iteration_bounds = array<i64: 2>, tpu.core_type = #tpu.core_type<sc_scalar_subcore>, window_params = []} {
    return
  }
}

module attributes {stable_mosaic.version = 11 : i64} {
  func.func @_linear_kernel(%arg0: i32, %arg1: memref<64x192xbf16, #tpu.memory_space<vmem>>, %arg2: memref<192x128xbf16, #tpu.memory_space<vmem>>, %arg3: memref<1x128xf32, #tpu.memory_space<vmem>>, %arg4: memref<64x128xbf16, #tpu.memory_space<vmem>>) attributes {dimension_semantics = [#tpu.dimension_semantics<parallel>], iteration_bounds = array<i64: 4>, scalar_prefetch = 0 : i64, scratch_operands = 0 : i64, tpu.core_type = #tpu.core_type<tc>, window_params = [{transform_indices = @transform_0, window_bounds = array<i64: 64, 192>}, {pipeline_mode = #tpu.pipeline_mode<synchronous>, transform_indices = @transform_1, window_bounds = array<i64: 192, 128>}, {pipeline_mode = #tpu.pipeline_mode<synchronous>, transform_indices = @transform_2, window_bounds = array<i64: 1, 128>}, {transform_indices = @transform_3, window_bounds = array<i64: 64, 128>}]} {
    %c0 = arith.constant 0 : index
    %c0_0 = arith.constant 0 : index
    %0 = vector.load %arg1[%c0, %c0_0] : memref<64x192xbf16, #tpu.memory_space<vmem>>, vector<64x192xbf16>
    %c0_1 = arith.constant 0 : index
    %c0_2 = arith.constant 0 : index
    %1 = vector.load %arg2[%c0_1, %c0_2] : memref<192x128xbf16, #tpu.memory_space<vmem>>, vector<192x128xbf16>
    %cst = arith.constant dense<0.000000e+00> : vector<64x128xf32>
    %2 = tpu.matmul %0, %1, %cst {dimension_numbers = #tpu.dot_dimension_numbers<[1], [0], [0], [1], [0, 0, 1, 1], [], []>} : vector<64x192xbf16>, vector<192x128xbf16>, vector<64x128xf32> -> vector<64x128xf32>
    %c0_3 = arith.constant 0 : index
    %c0_4 = arith.constant 0 : index
    %3 = vector.load %arg3[%c0_3, %c0_4] : memref<1x128xf32, #tpu.memory_space<vmem>>, vector<1x128xf32>
    %4 = vector.broadcast %3 : vector<1x128xf32> to vector<64x128xf32>
    %5 = arith.addf %2, %4 : vector<64x128xf32>
    %cst_5 = arith.constant 0.000000e+00 : f32
    %6 = vector.broadcast %cst_5 : f32 to vector<64x128xf32>
    %7 = arith.maximumf %5, %6 : vector<64x128xf32>
    %8 = arith.truncf %7 : vector<64x128xf32> to vector<64x128xbf16>
    %c0_6 = arith.constant 0 : index
    %c0_7 = arith.constant 0 : index
    %9 = vector.load %arg4[%c0_6, %c0_7] : memref<64x128xbf16, #tpu.memory_space<vmem>>, vector<64x128xbf16>
    tpu.vector_store %arg4[%c0_6, %c0_7], %8 {strides = array<i32>} : memref<64x128xbf16, #tpu.memory_space<vmem>>, vector<64x128xbf16>,
    return
  }
  func.func @transform_0(%arg0: i32) -> (i32, i32) {
    %c0_i32 = arith.constant 0 : i32
    %c0_i32_0 = arith.constant 0 : i32
    return %arg0, %c0_i32 : i32, i32
  }
  func.func @transform_1(%arg0: i32) -> (i32, i32) {
    %c0_i32 = arith.constant 0 : i32
    %c0_i32_0 = arith.constant 0 : i32
    %c0_i32_1 = arith.constant 0 : i32
    return %c0_i32, %c0_i32_0 : i32, i32
  }
  func.func @transform_2(%arg0: i32) -> (i32, i32) {
    %c0_i32 = arith.constant 0 : i32
    %c0_i32_0 = arith.constant 0 : i32
    %c0_i32_1 = arith.constant 0 : i32
    return %c0_i32, %c0_i32_0 : i32, i32
  }
  func.func @transform_3(%arg0: i32) -> (i32, i32) {
    %c0_i32 = arith.constant 0 : i32
    %c0_i32_0 = arith.constant 0 : i32
    return %arg0, %c0_i32 : i32, i32
  }
}

module attributes {stable_mosaic.version = 11 : i64} {
  func.func @_corr_kernel(%arg0: i32, %arg1: i32, %arg2: i32, %arg3: memref<1x64x128xbf16, #tpu.memory_space<vmem>>, %arg4: memref<1x64x128xbf16, #tpu.memory_space<vmem>>, %arg5: memref<1x64x64xbf16, #tpu.memory_space<vmem>>) attributes {dimension_semantics = [#tpu.dimension_semantics<parallel>, #tpu.dimension_semantics<parallel>, #tpu.dimension_semantics<parallel>], iteration_bounds = array<i64: 2, 1, 1>, scalar_prefetch = 0 : i64, scratch_operands = 0 : i64, tpu.core_type = #tpu.core_type<tc>, window_params = [{transform_indices = @transform_0, window_bounds = array<i64: 1, 64, 128>}, {transform_indices = @transform_1, window_bounds = array<i64: 1, 64, 128>}, {transform_indices = @transform_2, window_bounds = array<i64: 1, 64, 64>}]} {
    %c0 = arith.constant 0 : index
    %c0_0 = arith.constant 0 : index
    %c0_1 = arith.constant 0 : index
    %0 = vector.load %arg3[%c0, %c0_0, %c0_1] : memref<1x64x128xbf16, #tpu.memory_space<vmem>>, vector<1x64x128xbf16>
    %c0_2 = arith.constant 0 : index
    %c0_3 = arith.constant 0 : index
    %c0_4 = arith.constant 0 : index
    %1 = vector.load %arg4[%c0_2, %c0_3, %c0_4] : memref<1x64x128xbf16, #tpu.memory_space<vmem>>, vector<1x64x128xbf16>
    %cst = arith.constant dense<0.000000e+00> : vector<1x64x64xf32>
    %2 = tpu.matmul %0, %1, %cst {dimension_numbers = #tpu.dot_dimension_numbers<[2], [2], [1], [1], [0, 0, 0, 1, 1, 1], [0], [0]>} : vector<1x64x128xbf16>, vector<1x64x128xbf16>, vector<1x64x64xf32> -> vector<1x64x64xf32>
    %cst_5 = arith.constant 0.0883883461 : f32
    %3 = vector.broadcast %cst_5 : f32 to vector<1x64x64xf32>
    %4 = arith.mulf %2, %3 : vector<1x64x64xf32>
    %5 = arith.truncf %4 : vector<1x64x64xf32> to vector<1x64x64xbf16>
    %c0_6 = arith.constant 0 : index
    %c0_7 = arith.constant 0 : index
    %c0_8 = arith.constant 0 : index
    %6 = vector.load %arg5[%c0_6, %c0_7, %c0_8] : memref<1x64x64xbf16, #tpu.memory_space<vmem>>, vector<1x64x64xbf16>
    tpu.vector_store %arg5[%c0_6, %c0_7, %c0_8], %5 {strides = array<i32>} : memref<1x64x64xbf16, #tpu.memory_space<vmem>>, vector<1x64x64xbf16>,
    return
  }
  func.func @transform_0(%arg0: i32, %arg1: i32, %arg2: i32) -> (i32, i32, i32) {
    %c0_i32 = arith.constant 0 : i32
    %c0_i32_0 = arith.constant 0 : i32
    return %arg0, %arg1, %c0_i32 : i32, i32, i32
  }
  func.func @transform_1(%arg0: i32, %arg1: i32, %arg2: i32) -> (i32, i32, i32) {
    %c0_i32 = arith.constant 0 : i32
    %c0_i32_0 = arith.constant 0 : i32
    return %arg0, %arg2, %c0_i32 : i32, i32, i32
  }
  func.func @transform_2(%arg0: i32, %arg1: i32, %arg2: i32) -> (i32, i32, i32) {
    %c0_i32 = arith.constant 0 : i32
    return %arg0, %arg1, %arg2 : i32, i32, i32
  }
}

module attributes {stable_mosaic.version = 11 : i64} {
  func.func @_cnet_kernel(%arg0: i32, %arg1: memref<64x192xbf16, #tpu.memory_space<vmem>>, %arg2: memref<192x160xbf16, #tpu.memory_space<vmem>>, %arg3: memref<1x160xf32, #tpu.memory_space<vmem>>, %arg4: memref<64x96xf32, #tpu.memory_space<vmem>>, %arg5: memref<64x64xbf16, #tpu.memory_space<vmem>>) attributes {dimension_semantics = [#tpu.dimension_semantics<parallel>], iteration_bounds = array<i64: 2>, scalar_prefetch = 0 : i64, scratch_operands = 0 : i64, tpu.core_type = #tpu.core_type<tc>, window_params = [{transform_indices = @transform_0, window_bounds = array<i64: 64, 192>}, {pipeline_mode = #tpu.pipeline_mode<synchronous>, transform_indices = @transform_1, window_bounds = array<i64: 192, 160>}, {pipeline_mode = #tpu.pipeline_mode<synchronous>, transform_indices = @transform_2, window_bounds = array<i64: 1, 160>}, {transform_indices = @transform_3, window_bounds = array<i64: 64, 96>}, {transform_indices = @transform_4, window_bounds = array<i64: 64, 64>}]} {
    %c0 = arith.constant 0 : index
    %c0_0 = arith.constant 0 : index
    %0 = vector.load %arg1[%c0, %c0_0] : memref<64x192xbf16, #tpu.memory_space<vmem>>, vector<64x192xbf16>
    %c0_1 = arith.constant 0 : index
    %c0_2 = arith.constant 0 : index
    %1 = vector.load %arg2[%c0_1, %c0_2] : memref<192x160xbf16, #tpu.memory_space<vmem>>, vector<192x160xbf16>
    %cst = arith.constant dense<0.000000e+00> : vector<64x160xf32>
    %2 = tpu.matmul %0, %1, %cst {dimension_numbers = #tpu.dot_dimension_numbers<[1], [0], [0], [1], [0, 0, 1, 1], [], []>} : vector<64x192xbf16>, vector<192x160xbf16>, vector<64x160xf32> -> vector<64x160xf32>
    %c0_3 = arith.constant 0 : index
    %c0_4 = arith.constant 0 : index
    %3 = vector.load %arg3[%c0_3, %c0_4] : memref<1x160xf32, #tpu.memory_space<vmem>>, vector<1x160xf32>
    %4 = vector.broadcast %3 : vector<1x160xf32> to vector<64x160xf32>
    %5 = arith.addf %2, %4 : vector<64x160xf32>
    %6 = vector.extract_strided_slice %5 {offsets = [0, 0], sizes = [64, 96], strides = [1, 1]} : vector<64x160xf32> to vector<64x96xf32>
    %7 = math.tanh %6 : vector<64x96xf32>
    %c0_5 = arith.constant 0 : index
    %c0_6 = arith.constant 0 : index
    %8 = vector.load %arg4[%c0_5, %c0_6] : memref<64x96xf32, #tpu.memory_space<vmem>>, vector<64x96xf32>
    tpu.vector_store %arg4[%c0_5, %c0_6], %7 {strides = array<i32>} : memref<64x96xf32, #tpu.memory_space<vmem>>, vector<64x96xf32>,
    %9 = vector.extract_strided_slice %5 {offsets = [0, 96], sizes = [64, 64], strides = [1, 1]} : vector<64x160xf32> to vector<64x64xf32>
    %cst_7 = arith.constant 0.000000e+00 : f32
    %10 = vector.broadcast %cst_7 : f32 to vector<64x64xf32>
    %11 = arith.maximumf %9, %10 : vector<64x64xf32>
    %12 = arith.truncf %11 : vector<64x64xf32> to vector<64x64xbf16>
    %c0_8 = arith.constant 0 : index
    %c0_9 = arith.constant 0 : index
    %13 = vector.load %arg5[%c0_8, %c0_9] : memref<64x64xbf16, #tpu.memory_space<vmem>>, vector<64x64xbf16>
    tpu.vector_store %arg5[%c0_8, %c0_9], %12 {strides = array<i32>} : memref<64x64xbf16, #tpu.memory_space<vmem>>, vector<64x64xbf16>,
    return
  }
  func.func @transform_0(%arg0: i32) -> (i32, i32) {
    %c0_i32 = arith.constant 0 : i32
    %c0_i32_0 = arith.constant 0 : i32
    return %arg0, %c0_i32 : i32, i32
  }
  func.func @transform_1(%arg0: i32) -> (i32, i32) {
    %c0_i32 = arith.constant 0 : i32
    %c0_i32_0 = arith.constant 0 : i32
    %c0_i32_1 = arith.constant 0 : i32
    return %c0_i32, %c0_i32_0 : i32, i32
  }
  func.func @transform_2(%arg0: i32) -> (i32, i32) {
    %c0_i32 = arith.constant 0 : i32
    %c0_i32_0 = arith.constant 0 : i32
    %c0_i32_1 = arith.constant 0 : i32
    return %c0_i32, %c0_i32_0 : i32, i32
  }
  func.func @transform_3(%arg0: i32) -> (i32, i32) {
    %c0_i32 = arith.constant 0 : i32
    %c0_i32_0 = arith.constant 0 : i32
    return %arg0, %c0_i32 : i32, i32
  }
  func.func @transform_4(%arg0: i32) -> (i32, i32) {
    %c0_i32 = arith.constant 0 : i32
    %c0_i32_0 = arith.constant 0 : i32
    return %arg0, %c0_i32 : i32, i32
  }
}

module attributes {stable_mosaic.version = 11 : i64} {
  func.func @_update_kernel(%arg0: i32, %arg1: memref<64x196xbf16, #tpu.memory_space<vmem>>, %arg2: memref<64x96xf32, #tpu.memory_space<vmem>>, %arg3: memref<64x64xbf16, #tpu.memory_space<vmem>>, %arg4: memref<64x2xf32, #tpu.memory_space<vmem>>, %arg5: memref<64x2xf32, #tpu.memory_space<vmem>>, %arg6: memref<196x96xbf16, #tpu.memory_space<vmem>>, %arg7: memref<1x96xf32, #tpu.memory_space<vmem>>, %arg8: memref<2x64xf32, #tpu.memory_space<vmem>>, %arg9: memref<1x64xf32, #tpu.memory_space<vmem>>, %arg10: memref<160x80xbf16, #tpu.memory_space<vmem>>, %arg11: memref<1x80xf32, #tpu.memory_space<vmem>>, %arg12: memref<256x384xbf16, #tpu.memory_space<vmem>>, %arg13: memref<1x96xf32, #tpu.memory_space<vmem>>, %arg14: memref<1x96xf32, #tpu.memory_space<vmem>>, %arg15: memref<1x96xf32, #tpu.memory_space<vmem>>, %arg16: memref<96x96xbf16, #tpu.memory_space<vmem>>, %arg17: memref<96x256xbf16, #tpu.memory_space<vmem>>, %arg18: memref<1x256xf32, #tpu.memory_space<vmem>>, %arg19: memref<128x9xbf16, #tpu.memory_space<vmem>>, %arg20: memref<1x9xf32, #tpu.memory_space<vmem>>, %arg21: memref<128x576xbf16, #tpu.memory_space<vmem>>, %arg22: memref<1x576xf32, #tpu.memory_space<vmem>>, %arg23: memref<64x96xf32, #tpu.memory_space<vmem>>, %arg24: memref<64x576xbf16, #tpu.memory_space<vmem>>, %arg25: memref<64x2xf32, #tpu.memory_space<vmem>>) attributes {dimension_semantics = [#tpu.dimension_semantics<parallel>], iteration_bounds = array<i64: 2>, scalar_prefetch = 0 : i64, scratch_operands = 0 : i64, tpu.core_type = #tpu.core_type<tc>, window_params = [{transform_indices = @transform_0, window_bounds = array<i64: 64, 196>}, {transform_indices = @transform_1, window_bounds = array<i64: 64, 96>}, {transform_indices = @transform_2, window_bounds = array<i64: 64, 64>}, {transform_indices = @transform_3, window_bounds = array<i64: 64, 2>}, {transform_indices = @transform_4, window_bounds = array<i64: 64, 2>}, {pipeline_mode = #tpu.pipeline_mode<synchronous>, transform_indices = @transform_5, window_bounds = array<i64: 196, 96>}, {pipeline_mode = #tpu.pipeline_mode<synchronous>, transform_indices = @transform_6, window_bounds = array<i64: 1, 96>}, {pipeline_mode = #tpu.pipeline_mode<synchronous>, transform_indices = @transform_7, window_bounds = array<i64: 2, 64>}, {pipeline_mode = #tpu.pipeline_mode<synchronous>, transform_indices = @transform_8, window_bounds = array<i64: 1, 64>}, {pipeline_mode = #tpu.pipeline_mode<synchronous>, transform_indices = @transform_9, window_bounds = array<i64: 160, 80>}, {pipeline_mode = #tpu.pipeline_mode<synchronous>, transform_indices = @transform_10, window_bounds = array<i64: 1, 80>}, {pipeline_mode = #tpu.pipeline_mode<synchronous>, transform_indices = @transform_11, window_bounds = array<i64: 256, 384>}, {pipeline_mode = #tpu.pipeline_mode<synchronous>, transform_indices = @transform_12, window_bounds = array<i64: 1, 96>}, {pipeline_mode = #tpu.pipeline_mode<synchronous>, transform_indices = @transform_13, window_bounds = array<i64: 1, 96>}, {pipeline_mode = #tpu.pipeline_mode<synchronous>, transform_indices = @transform_14, window_bounds = array<i64: 1, 96>}, {pipeline_mode = #tpu.pipeline_mode<synchronous>, transform_indices = @transform_15, window_bounds = array<i64: 96, 96>}, {pipeline_mode = #tpu.pipeline_mode<synchronous>, transform_indices = @transform_16, window_bounds = array<i64: 96, 256>}, {pipeline_mode = #tpu.pipeline_mode<synchronous>, transform_indices = @transform_17, window_bounds = array<i64: 1, 256>}, {pipeline_mode = #tpu.pipeline_mode<synchronous>, transform_indices = @transform_18, window_bounds = array<i64: 128, 9>}, {pipeline_mode = #tpu.pipeline_mode<synchronous>, transform_indices = @transform_19, window_bounds = array<i64: 1, 9>}, {pipeline_mode = #tpu.pipeline_mode<synchronous>, transform_indices = @transform_20, window_bounds = array<i64: 128, 576>}, {pipeline_mode = #tpu.pipeline_mode<synchronous>, transform_indices = @transform_21, window_bounds = array<i64: 1, 576>}, {transform_indices = @transform_22, window_bounds = array<i64: 64, 96>}, {transform_indices = @transform_23, window_bounds = array<i64: 64, 576>}, {transform_indices = @transform_24, window_bounds = array<i64: 64, 2>}]} {
    %c0 = arith.constant 0 : index
    %c0_0 = arith.constant 0 : index
    %0 = vector.load %arg2[%c0, %c0_0] : memref<64x96xf32, #tpu.memory_space<vmem>>, vector<64x96xf32>
    %c0_1 = arith.constant 0 : index
    %c0_2 = arith.constant 0 : index
    %1 = vector.load %arg4[%c0_1, %c0_2] : memref<64x2xf32, #tpu.memory_space<vmem>>, vector<64x2xf32>
    %c0_3 = arith.constant 0 : index
    %c0_4 = arith.constant 0 : index
    %2 = vector.load %arg5[%c0_3, %c0_4] : memref<64x2xf32, #tpu.memory_space<vmem>>, vector<64x2xf32>
    %3 = arith.subf %2, %1 : vector<64x2xf32>
    %c0_5 = arith.constant 0 : index
    %c0_6 = arith.constant 0 : index
    %4 = vector.load %arg1[%c0_5, %c0_6] : memref<64x196xbf16, #tpu.memory_space<vmem>>, vector<64x196xbf16>
    %c0_7 = arith.constant 0 : index
    %c0_8 = arith.constant 0 : index
    %5 = vector.load %arg6[%c0_7, %c0_8] : memref<196x96xbf16, #tpu.memory_space<vmem>>, vector<196x96xbf16>
    %cst = arith.constant dense<0.000000e+00> : vector<64x96xf32>
    %6 = tpu.matmul %4, %5, %cst {dimension_numbers = #tpu.dot_dimension_numbers<[1], [0], [0], [1], [0, 0, 1, 1], [], []>} : vector<64x196xbf16>, vector<196x96xbf16>, vector<64x96xf32> -> vector<64x96xf32>
    %c0_9 = arith.constant 0 : index
    %c0_10 = arith.constant 0 : index
    %7 = vector.load %arg7[%c0_9, %c0_10] : memref<1x96xf32, #tpu.memory_space<vmem>>, vector<1x96xf32>
    %8 = vector.broadcast %7 : vector<1x96xf32> to vector<64x96xf32>
    %9 = arith.addf %6, %8 : vector<64x96xf32>
    %cst_11 = arith.constant 0.000000e+00 : f32
    %10 = vector.broadcast %cst_11 : f32 to vector<64x96xf32>
    %11 = arith.maximumf %9, %10 : vector<64x96xf32>
    %c0_12 = arith.constant 0 : index
    %c0_13 = arith.constant 0 : index
    %12 = vector.load %arg8[%c0_12, %c0_13] : memref<2x64xf32, #tpu.memory_space<vmem>>, vector<2x64xf32>
    %13 = vector.extract_strided_slice %3 {offsets = [0, 0], sizes = [64, 1], strides = [1, 1]} : vector<64x2xf32> to vector<64x1xf32>
    %14 = vector.extract_strided_slice %12 {offsets = [0, 0], sizes = [1, 64], strides = [1, 1]} : vector<2x64xf32> to vector<1x64xf32>
    %15 = vector.broadcast %13 : vector<64x1xf32> to vector<64x64xf32>
    %16 = vector.broadcast %14 : vector<1x64xf32> to vector<64x64xf32>
    %17 = arith.mulf %15, %16 : vector<64x64xf32>
    %18 = vector.extract_strided_slice %3 {offsets = [0, 1], sizes = [64, 1], strides = [1, 1]} : vector<64x2xf32> to vector<64x1xf32>
    %19 = vector.extract_strided_slice %12 {offsets = [1, 0], sizes = [1, 64], strides = [1, 1]} : vector<2x64xf32> to vector<1x64xf32>
    %20 = vector.broadcast %18 : vector<64x1xf32> to vector<64x64xf32>
    %21 = vector.broadcast %19 : vector<1x64xf32> to vector<64x64xf32>
    %22 = arith.mulf %20, %21 : vector<64x64xf32>
    %23 = arith.addf %17, %22 : vector<64x64xf32>
    %c0_14 = arith.constant 0 : index
    %c0_15 = arith.constant 0 : index
    %24 = vector.load %arg9[%c0_14, %c0_15] : memref<1x64xf32, #tpu.memory_space<vmem>>, vector<1x64xf32>
    %25 = vector.broadcast %24 : vector<1x64xf32> to vector<64x64xf32>
    %26 = arith.addf %23, %25 : vector<64x64xf32>
    %cst_16 = arith.constant 0.000000e+00 : f32
    %27 = vector.broadcast %cst_16 : f32 to vector<64x64xf32>
    %28 = arith.maximumf %26, %27 : vector<64x64xf32>
    %29 = arith.truncf %11 : vector<64x96xf32> to vector<64x96xbf16>
    %30 = arith.truncf %28 : vector<64x64xf32> to vector<64x64xbf16>
    %31 = tpu.concatenate %29, %30 in 1 : vector<64x96xbf16>, vector<64x64xbf16> -> vector<64x160xbf16>
    %c0_17 = arith.constant 0 : index
    %c0_18 = arith.constant 0 : index
    %32 = vector.load %arg10[%c0_17, %c0_18] : memref<160x80xbf16, #tpu.memory_space<vmem>>, vector<160x80xbf16>
    %cst_19 = arith.constant dense<0.000000e+00> : vector<64x80xf32>
    %33 = tpu.matmul %31, %32, %cst_19 {dimension_numbers = #tpu.dot_dimension_numbers<[1], [0], [0], [1], [0, 0, 1, 1], [], []>} : vector<64x160xbf16>, vector<160x80xbf16>, vector<64x80xf32> -> vector<64x80xf32>
    %c0_20 = arith.constant 0 : index
    %c0_21 = arith.constant 0 : index
    %34 = vector.load %arg11[%c0_20, %c0_21] : memref<1x80xf32, #tpu.memory_space<vmem>>, vector<1x80xf32>
    %35 = vector.broadcast %34 : vector<1x80xf32> to vector<64x80xf32>
    %36 = arith.addf %33, %35 : vector<64x80xf32>
    %cst_22 = arith.constant 0.000000e+00 : f32
    %37 = vector.broadcast %cst_22 : f32 to vector<64x80xf32>
    %38 = arith.maximumf %36, %37 : vector<64x80xf32>
    %39 = arith.truncf %0 : vector<64x96xf32> to vector<64x96xbf16>
    %c0_23 = arith.constant 0 : index
    %c0_24 = arith.constant 0 : index
    %40 = vector.load %arg3[%c0_23, %c0_24] : memref<64x64xbf16, #tpu.memory_space<vmem>>, vector<64x64xbf16>
    %41 = arith.truncf %38 : vector<64x80xf32> to vector<64x80xbf16>
    %42 = arith.truncf %3 : vector<64x2xf32> to vector<64x2xbf16>
    %cst_25 = arith.constant 0.000000e+00 : bf16
    %43 = vector.broadcast %cst_25 : bf16 to vector<64x14xbf16>
    %44 = tpu.concatenate %39, %40, %41, %42, %43 in 1 : vector<64x96xbf16>, vector<64x64xbf16>, vector<64x80xbf16>, vector<64x2xbf16>, vector<64x14xbf16> -> vector<64x256xbf16>
    %c0_26 = arith.constant 0 : index
    %c0_27 = arith.constant 0 : index
    %45 = vector.load %arg12[%c0_26, %c0_27] : memref<256x384xbf16, #tpu.memory_space<vmem>>, vector<256x384xbf16>
    %cst_28 = arith.constant dense<0.000000e+00> : vector<64x384xf32>
    %46 = tpu.matmul %44, %45, %cst_28 {dimension_numbers = #tpu.dot_dimension_numbers<[1], [0], [0], [1], [0, 0, 1, 1], [], []>} : vector<64x256xbf16>, vector<256x384xbf16>, vector<64x384xf32> -> vector<64x384xf32>
    %47 = vector.extract_strided_slice %46 {offsets = [0, 0], sizes = [64, 96], strides = [1, 1]} : vector<64x384xf32> to vector<64x96xf32>
    %c0_29 = arith.constant 0 : index
    %c0_30 = arith.constant 0 : index
    %48 = vector.load %arg13[%c0_29, %c0_30] : memref<1x96xf32, #tpu.memory_space<vmem>>, vector<1x96xf32>
    %49 = vector.broadcast %48 : vector<1x96xf32> to vector<64x96xf32>
    %50 = arith.addf %47, %49 : vector<64x96xf32>
    %51 = arith.negf %50 : vector<64x96xf32>
    %52 = math.exp %51 : vector<64x96xf32>
    %cst_31 = arith.constant 1.000000e+00 : f32
    %53 = vector.broadcast %cst_31 : f32 to vector<64x96xf32>
    %54 = arith.addf %53, %52 : vector<64x96xf32>
    %55 = arith.divf %53, %54 : vector<64x96xf32>
    %56 = vector.extract_strided_slice %46 {offsets = [0, 128], sizes = [64, 96], strides = [1, 1]} : vector<64x384xf32> to vector<64x96xf32>
    %c0_32 = arith.constant 0 : index
    %c0_33 = arith.constant 0 : index
    %57 = vector.load %arg14[%c0_32, %c0_33] : memref<1x96xf32, #tpu.memory_space<vmem>>, vector<1x96xf32>
    %58 = vector.broadcast %57 : vector<1x96xf32> to vector<64x96xf32>
    %59 = arith.addf %56, %58 : vector<64x96xf32>
    %60 = arith.negf %59 : vector<64x96xf32>
    %61 = math.exp %60 : vector<64x96xf32>
    %cst_34 = arith.constant 1.000000e+00 : f32
    %62 = vector.broadcast %cst_34 : f32 to vector<64x96xf32>
    %63 = arith.addf %62, %61 : vector<64x96xf32>
    %64 = arith.divf %62, %63 : vector<64x96xf32>
    %65 = arith.mulf %64, %0 : vector<64x96xf32>
    %66 = arith.truncf %65 : vector<64x96xf32> to vector<64x96xbf16>
    %67 = vector.extract_strided_slice %46 {offsets = [0, 256], sizes = [64, 96], strides = [1, 1]} : vector<64x384xf32> to vector<64x96xf32>
    %c0_35 = arith.constant 0 : index
    %c0_36 = arith.constant 0 : index
    %68 = vector.load %arg16[%c0_35, %c0_36] : memref<96x96xbf16, #tpu.memory_space<vmem>>, vector<96x96xbf16>
    %cst_37 = arith.constant dense<0.000000e+00> : vector<64x96xf32>
    %69 = tpu.matmul %66, %68, %cst_37 {dimension_numbers = #tpu.dot_dimension_numbers<[1], [0], [0], [1], [0, 0, 1, 1], [], []>} : vector<64x96xbf16>, vector<96x96xbf16>, vector<64x96xf32> -> vector<64x96xf32>
    %70 = arith.addf %67, %69 : vector<64x96xf32>
    %c0_38 = arith.constant 0 : index
    %c0_39 = arith.constant 0 : index
    %71 = vector.load %arg15[%c0_38, %c0_39] : memref<1x96xf32, #tpu.memory_space<vmem>>, vector<1x96xf32>
    %72 = vector.broadcast %71 : vector<1x96xf32> to vector<64x96xf32>
    %73 = arith.addf %70, %72 : vector<64x96xf32>
    %74 = math.tanh %73 : vector<64x96xf32>
    %cst_40 = arith.constant 1.000000e+00 : f32
    %75 = vector.broadcast %cst_40 : f32 to vector<64x96xf32>
    %76 = arith.subf %75, %55 : vector<64x96xf32>
    %77 = arith.mulf %76, %0 : vector<64x96xf32>
    %78 = arith.mulf %55, %74 : vector<64x96xf32>
    %79 = arith.addf %77, %78 : vector<64x96xf32>
    %c0_41 = arith.constant 0 : index
    %c0_42 = arith.constant 0 : index
    %80 = vector.load %arg23[%c0_41, %c0_42] : memref<64x96xf32, #tpu.memory_space<vmem>>, vector<64x96xf32>
    tpu.vector_store %arg23[%c0_41, %c0_42], %79 {strides = array<i32>} : memref<64x96xf32, #tpu.memory_space<vmem>>, vector<64x96xf32>,
    %81 = arith.truncf %79 : vector<64x96xf32> to vector<64x96xbf16>
    %c0_43 = arith.constant 0 : index
    %c0_44 = arith.constant 0 : index
    %82 = vector.load %arg17[%c0_43, %c0_44] : memref<96x256xbf16, #tpu.memory_space<vmem>>, vector<96x256xbf16>
    %cst_45 = arith.constant dense<0.000000e+00> : vector<64x256xf32>
    %83 = tpu.matmul %81, %82, %cst_45 {dimension_numbers = #tpu.dot_dimension_numbers<[1], [0], [0], [1], [0, 0, 1, 1], [], []>} : vector<64x96xbf16>, vector<96x256xbf16>, vector<64x256xf32> -> vector<64x256xf32>
    %c0_46 = arith.constant 0 : index
    %c0_47 = arith.constant 0 : index
    %84 = vector.load %arg18[%c0_46, %c0_47] : memref<1x256xf32, #tpu.memory_space<vmem>>, vector<1x256xf32>
    %85 = vector.broadcast %84 : vector<1x256xf32> to vector<64x256xf32>
    %86 = arith.addf %83, %85 : vector<64x256xf32>
    %cst_48 = arith.constant 0.000000e+00 : f32
    %87 = vector.broadcast %cst_48 : f32 to vector<64x256xf32>
    %88 = arith.maximumf %86, %87 : vector<64x256xf32>
    %89 = arith.truncf %88 : vector<64x256xf32> to vector<64x256xbf16>
    %90 = vector.extract_strided_slice %89 {offsets = [0, 0], sizes = [64, 128], strides = [1, 1]} : vector<64x256xbf16> to vector<64x128xbf16>
    %c0_49 = arith.constant 0 : index
    %c0_50 = arith.constant 0 : index
    %91 = vector.load %arg19[%c0_49, %c0_50] : memref<128x9xbf16, #tpu.memory_space<vmem>>, vector<128x9xbf16>
    %cst_51 = arith.constant dense<0.000000e+00> : vector<64x9xf32>
    %92 = tpu.matmul %90, %91, %cst_51 {dimension_numbers = #tpu.dot_dimension_numbers<[1], [0], [0], [1], [0, 0, 1, 1], [], []>} : vector<64x128xbf16>, vector<128x9xbf16>, vector<64x9xf32> -> vector<64x9xf32>
    %c0_52 = arith.constant 0 : index
    %c0_53 = arith.constant 0 : index
    %93 = vector.load %arg20[%c0_52, %c0_53] : memref<1x9xf32, #tpu.memory_space<vmem>>, vector<1x9xf32>
    %94 = vector.broadcast %93 : vector<1x9xf32> to vector<64x9xf32>
    %95 = arith.addf %92, %94 : vector<64x9xf32>
    %96 = vector.extract_strided_slice %89 {offsets = [0, 128], sizes = [64, 128], strides = [1, 1]} : vector<64x256xbf16> to vector<64x128xbf16>
    %c0_54 = arith.constant 0 : index
    %c0_55 = arith.constant 0 : index
    %97 = vector.load %arg21[%c0_54, %c0_55] : memref<128x576xbf16, #tpu.memory_space<vmem>>, vector<128x576xbf16>
    %cst_56 = arith.constant dense<0.000000e+00> : vector<64x576xf32>
    %98 = tpu.matmul %96, %97, %cst_56 {dimension_numbers = #tpu.dot_dimension_numbers<[1], [0], [0], [1], [0, 0, 1, 1], [], []>} : vector<64x128xbf16>, vector<128x576xbf16>, vector<64x576xf32> -> vector<64x576xf32>
    %c0_57 = arith.constant 0 : index
    %c0_58 = arith.constant 0 : index
    %99 = vector.load %arg22[%c0_57, %c0_58] : memref<1x576xf32, #tpu.memory_space<vmem>>, vector<1x576xf32>
    %100 = vector.broadcast %99 : vector<1x576xf32> to vector<64x576xf32>
    %101 = arith.addf %98, %100 : vector<64x576xf32>
    %cst_59 = arith.constant 2.500000e-01 : f32
    %102 = vector.broadcast %cst_59 : f32 to vector<64x576xf32>
    %103 = arith.mulf %102, %101 : vector<64x576xf32>
    %104 = vector.extract_strided_slice %103 {offsets = [0, 0], sizes = [64, 64], strides = [1, 1]} : vector<64x576xf32> to vector<64x64xf32>
    %105 = vector.extract_strided_slice %103 {offsets = [0, 64], sizes = [64, 64], strides = [1, 1]} : vector<64x576xf32> to vector<64x64xf32>
    %106 = vector.extract_strided_slice %103 {offsets = [0, 128], sizes = [64, 64], strides = [1, 1]} : vector<64x576xf32> to vector<64x64xf32>
    %107 = vector.extract_strided_slice %103 {offsets = [0, 192], sizes = [64, 64], strides = [1, 1]} : vector<64x576xf32> to vector<64x64xf32>
    %108 = vector.extract_strided_slice %103 {offsets = [0, 256], sizes = [64, 64], strides = [1, 1]} : vector<64x576xf32> to vector<64x64xf32>
    %109 = vector.extract_strided_slice %103 {offsets = [0, 320], sizes = [64, 64], strides = [1, 1]} : vector<64x576xf32> to vector<64x64xf32>
    %110 = vector.extract_strided_slice %103 {offsets = [0, 384], sizes = [64, 64], strides = [1, 1]} : vector<64x576xf32> to vector<64x64xf32>
    %111 = vector.extract_strided_slice %103 {offsets = [0, 448], sizes = [64, 64], strides = [1, 1]} : vector<64x576xf32> to vector<64x64xf32>
    %112 = vector.extract_strided_slice %103 {offsets = [0, 512], sizes = [64, 64], strides = [1, 1]} : vector<64x576xf32> to vector<64x64xf32>
    %113 = arith.maximumf %104, %105 : vector<64x64xf32>
    %114 = arith.maximumf %113, %106 : vector<64x64xf32>
    %115 = arith.maximumf %114, %107 : vector<64x64xf32>
    %116 = arith.maximumf %115, %108 : vector<64x64xf32>
    %117 = arith.maximumf %116, %109 : vector<64x64xf32>
    %118 = arith.maximumf %117, %110 : vector<64x64xf32>
    %119 = arith.maximumf %118, %111 : vector<64x64xf32>
    %120 = arith.maximumf %119, %112 : vector<64x64xf32>
    %121 = arith.subf %104, %120 : vector<64x64xf32>
    %122 = math.exp %121 : vector<64x64xf32>
    %123 = arith.subf %105, %120 : vector<64x64xf32>
    %124 = math.exp %123 : vector<64x64xf32>
    %125 = arith.subf %106, %120 : vector<64x64xf32>
    %126 = math.exp %125 : vector<64x64xf32>
    %127 = arith.subf %107, %120 : vector<64x64xf32>
    %128 = math.exp %127 : vector<64x64xf32>
    %129 = arith.subf %108, %120 : vector<64x64xf32>
    %130 = math.exp %129 : vector<64x64xf32>
    %131 = arith.subf %109, %120 : vector<64x64xf32>
    %132 = math.exp %131 : vector<64x64xf32>
    %133 = arith.subf %110, %120 : vector<64x64xf32>
    %134 = math.exp %133 : vector<64x64xf32>
    %135 = arith.subf %111, %120 : vector<64x64xf32>
    %136 = math.exp %135 : vector<64x64xf32>
    %137 = arith.subf %112, %120 : vector<64x64xf32>
    %138 = math.exp %137 : vector<64x64xf32>
    %139 = arith.addf %122, %124 : vector<64x64xf32>
    %140 = arith.addf %139, %126 : vector<64x64xf32>
    %141 = arith.addf %140, %128 : vector<64x64xf32>
    %142 = arith.addf %141, %130 : vector<64x64xf32>
    %143 = arith.addf %142, %132 : vector<64x64xf32>
    %144 = arith.addf %143, %134 : vector<64x64xf32>
    %145 = arith.addf %144, %136 : vector<64x64xf32>
    %146 = arith.addf %145, %138 : vector<64x64xf32>
    %147 = tpu.reciprocal %146 {approx = true} : vector<64x64xf32> -> vector<64x64xf32>
    %148 = arith.mulf %122, %147 : vector<64x64xf32>
    %149 = arith.mulf %124, %147 : vector<64x64xf32>
    %150 = arith.mulf %126, %147 : vector<64x64xf32>
    %151 = arith.mulf %128, %147 : vector<64x64xf32>
    %152 = arith.mulf %130, %147 : vector<64x64xf32>
    %153 = arith.mulf %132, %147 : vector<64x64xf32>
    %154 = arith.mulf %134, %147 : vector<64x64xf32>
    %155 = arith.mulf %136, %147 : vector<64x64xf32>
    %156 = arith.mulf %138, %147 : vector<64x64xf32>
    %157 = tpu.concatenate %148, %149, %150, %151, %152, %153, %154, %155, %156 in 1 : vector<64x64xf32>, vector<64x64xf32>, vector<64x64xf32>, vector<64x64xf32>, vector<64x64xf32>, vector<64x64xf32>, vector<64x64xf32>, vector<64x64xf32>, vector<64x64xf32> -> vector<64x576xf32>
    %158 = arith.truncf %157 : vector<64x576xf32> to vector<64x576xbf16>
    %c0_60 = arith.constant 0 : index
    %c0_61 = arith.constant 0 : index
    %159 = vector.load %arg24[%c0_60, %c0_61] : memref<64x576xbf16, #tpu.memory_space<vmem>>, vector<64x576xbf16>
    tpu.vector_store %arg24[%c0_60, %c0_61], %158 {strides = array<i32>} : memref<64x576xbf16, #tpu.memory_space<vmem>>, vector<64x576xbf16>,
    %cst_62 = arith.constant 3.000000e-03 : f32
    %160 = vector.broadcast %cst_62 : f32 to vector<64x9xf32>
    %161 = arith.mulf %95, %160 : vector<64x9xf32>
    %162 = vector.extract_strided_slice %1 {offsets = [0, 0], sizes = [64, 1], strides = [1, 1]} : vector<64x2xf32> to vector<64x1xf32>
    %163 = vector.extract_strided_slice %1 {offsets = [0, 1], sizes = [64, 1], strides = [1, 1]} : vector<64x2xf32> to vector<64x1xf32>
    %164 = vector.extract_strided_slice %161 {offsets = [0, 0], sizes = [64, 1], strides = [1, 1]} : vector<64x9xf32> to vector<64x1xf32>
    %cst_63 = arith.constant 1.000000e+00 : f32
    %165 = vector.broadcast %cst_63 : f32 to vector<64x1xf32>
    %166 = arith.addf %165, %164 : vector<64x1xf32>
    %167 = arith.mulf %166, %162 : vector<64x1xf32>
    %168 = vector.extract_strided_slice %161 {offsets = [0, 1], sizes = [64, 1], strides = [1, 1]} : vector<64x9xf32> to vector<64x1xf32>
    %169 = arith.mulf %168, %163 : vector<64x1xf32>
    %170 = arith.addf %167, %169 : vector<64x1xf32>
    %171 = vector.extract_strided_slice %161 {offsets = [0, 2], sizes = [64, 1], strides = [1, 1]} : vector<64x9xf32> to vector<64x1xf32>
    %172 = arith.addf %170, %171 : vector<64x1xf32>
    %173 = vector.extract_strided_slice %161 {offsets = [0, 3], sizes = [64, 1], strides = [1, 1]} : vector<64x9xf32> to vector<64x1xf32>
    %174 = arith.mulf %173, %162 : vector<64x1xf32>
    %175 = vector.extract_strided_slice %161 {offsets = [0, 4], sizes = [64, 1], strides = [1, 1]} : vector<64x9xf32> to vector<64x1xf32>
    %cst_64 = arith.constant 1.000000e+00 : f32
    %176 = vector.broadcast %cst_64 : f32 to vector<64x1xf32>
    %177 = arith.addf %176, %175 : vector<64x1xf32>
    %178 = arith.mulf %177, %163 : vector<64x1xf32>
    %179 = arith.addf %174, %178 : vector<64x1xf32>
    %180 = vector.extract_strided_slice %161 {offsets = [0, 5], sizes = [64, 1], strides = [1, 1]} : vector<64x9xf32> to vector<64x1xf32>
    %181 = arith.addf %179, %180 : vector<64x1xf32>
    %182 = vector.extract_strided_slice %161 {offsets = [0, 6], sizes = [64, 1], strides = [1, 1]} : vector<64x9xf32> to vector<64x1xf32>
    %183 = arith.mulf %182, %162 : vector<64x1xf32>
    %184 = vector.extract_strided_slice %161 {offsets = [0, 7], sizes = [64, 1], strides = [1, 1]} : vector<64x9xf32> to vector<64x1xf32>
    %185 = arith.mulf %184, %163 : vector<64x1xf32>
    %186 = arith.addf %183, %185 : vector<64x1xf32>
    %187 = vector.extract_strided_slice %161 {offsets = [0, 8], sizes = [64, 1], strides = [1, 1]} : vector<64x9xf32> to vector<64x1xf32>
    %cst_65 = arith.constant 1.000000e+00 : f32
    %188 = vector.broadcast %cst_65 : f32 to vector<64x1xf32>
    %189 = arith.addf %188, %187 : vector<64x1xf32>
    %190 = arith.addf %186, %189 : vector<64x1xf32>
    %191 = arith.divf %172, %190 : vector<64x1xf32>
    %192 = arith.subf %191, %162 : vector<64x1xf32>
    %193 = arith.divf %181, %190 : vector<64x1xf32>
    %194 = arith.subf %193, %163 : vector<64x1xf32>
    %195 = tpu.concatenate %192, %194 in 1 : vector<64x1xf32>, vector<64x1xf32> -> vector<64x2xf32>
    %196 = arith.addf %2, %195 : vector<64x2xf32>
    %c0_66 = arith.constant 0 : index
    %c0_67 = arith.constant 0 : index
    %197 = vector.load %arg25[%c0_66, %c0_67] : memref<64x2xf32, #tpu.memory_space<vmem>>, vector<64x2xf32>
    tpu.vector_store %arg25[%c0_66, %c0_67], %196 {strides = array<i32>} : memref<64x2xf32, #tpu.memory_space<vmem>>, vector<64x2xf32>,
    return
  }
  func.func @transform_0(%arg0: i32) -> (i32, i32) {
    %c0_i32 = arith.constant 0 : i32
    %c0_i32_0 = arith.constant 0 : i32
    return %arg0, %c0_i32 : i32, i32
  }
  func.func @transform_1(%arg0: i32) -> (i32, i32) {
    %c0_i32 = arith.constant 0 : i32
    %c0_i32_0 = arith.constant 0 : i32
    return %arg0, %c0_i32 : i32, i32
  }
  func.func @transform_2(%arg0: i32) -> (i32, i32) {
    %c0_i32 = arith.constant 0 : i32
    %c0_i32_0 = arith.constant 0 : i32
    return %arg0, %c0_i32 : i32, i32
  }
  func.func @transform_3(%arg0: i32) -> (i32, i32) {
    %c0_i32 = arith.constant 0 : i32
    %c0_i32_0 = arith.constant 0 : i32
    return %arg0, %c0_i32 : i32, i32
  }
  func.func @transform_4(%arg0: i32) -> (i32, i32) {
    %c0_i32 = arith.constant 0 : i32
    %c0_i32_0 = arith.constant 0 : i32
    return %arg0, %c0_i32 : i32, i32
  }
  func.func @transform_5(%arg0: i32) -> (i32, i32) {
    %c0_i32 = arith.constant 0 : i32
    %c0_i32_0 = arith.constant 0 : i32
    %c0_i32_1 = arith.constant 0 : i32
    return %c0_i32, %c0_i32_0 : i32, i32
  }
  func.func @transform_6(%arg0: i32) -> (i32, i32) {
    %c0_i32 = arith.constant 0 : i32
    %c0_i32_0 = arith.constant 0 : i32
    %c0_i32_1 = arith.constant 0 : i32
    return %c0_i32, %c0_i32_0 : i32, i32
  }
  func.func @transform_7(%arg0: i32) -> (i32, i32) {
    %c0_i32 = arith.constant 0 : i32
    %c0_i32_0 = arith.constant 0 : i32
    %c0_i32_1 = arith.constant 0 : i32
    return %c0_i32, %c0_i32_0 : i32, i32
  }
  func.func @transform_8(%arg0: i32) -> (i32, i32) {
    %c0_i32 = arith.constant 0 : i32
    %c0_i32_0 = arith.constant 0 : i32
    %c0_i32_1 = arith.constant 0 : i32
    return %c0_i32, %c0_i32_0 : i32, i32
  }
  func.func @transform_9(%arg0: i32) -> (i32, i32) {
    %c0_i32 = arith.constant 0 : i32
    %c0_i32_0 = arith.constant 0 : i32
    %c0_i32_1 = arith.constant 0 : i32
    return %c0_i32, %c0_i32_0 : i32, i32
  }
  func.func @transform_10(%arg0: i32) -> (i32, i32) {
    %c0_i32 = arith.constant 0 : i32
    %c0_i32_0 = arith.constant 0 : i32
    %c0_i32_1 = arith.constant 0 : i32
    return %c0_i32, %c0_i32_0 : i32, i32
  }
  func.func @transform_11(%arg0: i32) -> (i32, i32) {
    %c0_i32 = arith.constant 0 : i32
    %c0_i32_0 = arith.constant 0 : i32
    %c0_i32_1 = arith.constant 0 : i32
    return %c0_i32, %c0_i32_0 : i32, i32
  }
  func.func @transform_12(%arg0: i32) -> (i32, i32) {
    %c0_i32 = arith.constant 0 : i32
    %c0_i32_0 = arith.constant 0 : i32
    %c0_i32_1 = arith.constant 0 : i32
    return %c0_i32, %c0_i32_0 : i32, i32
  }
  func.func @transform_13(%arg0: i32) -> (i32, i32) {
    %c0_i32 = arith.constant 0 : i32
    %c0_i32_0 = arith.constant 0 : i32
    %c0_i32_1 = arith.constant 0 : i32
    return %c0_i32, %c0_i32_0 : i32, i32
  }
  func.func @transform_14(%arg0: i32) -> (i32, i32) {
    %c0_i32 = arith.constant 0 : i32
    %c0_i32_0 = arith.constant 0 : i32
    %c0_i32_1 = arith.constant 0 : i32
    return %c0_i32, %c0_i32_0 : i32, i32
  }
  func.func @transform_15(%arg0: i32) -> (i32, i32) {
    %c0_i32 = arith.constant 0 : i32
    %c0_i32_0 = arith.constant 0 : i32
    %c0_i32_1 = arith.constant 0 : i32
    return %c0_i32, %c0_i32_0 : i32, i32
  }
  func.func @transform_16(%arg0: i32) -> (i32, i32) {
    %c0_i32 = arith.constant 0 : i32
    %c0_i32_0 = arith.constant 0 : i32
    %c0_i32_1 = arith.constant 0 : i32
    return %c0_i32, %c0_i32_0 : i32, i32
  }
  func.func @transform_17(%arg0: i32) -> (i32, i32) {
    %c0_i32 = arith.constant 0 : i32
    %c0_i32_0 = arith.constant 0 : i32
    %c0_i32_1 = arith.constant 0 : i32
    return %c0_i32, %c0_i32_0 : i32, i32
  }
  func.func @transform_18(%arg0: i32) -> (i32, i32) {
    %c0_i32 = arith.constant 0 : i32
    %c0_i32_0 = arith.constant 0 : i32
    %c0_i32_1 = arith.constant 0 : i32
    return %c0_i32, %c0_i32_0 : i32, i32
  }
  func.func @transform_19(%arg0: i32) -> (i32, i32) {
    %c0_i32 = arith.constant 0 : i32
    %c0_i32_0 = arith.constant 0 : i32
    %c0_i32_1 = arith.constant 0 : i32
    return %c0_i32, %c0_i32_0 : i32, i32
  }
  func.func @transform_20(%arg0: i32) -> (i32, i32) {
    %c0_i32 = arith.constant 0 : i32
    %c0_i32_0 = arith.constant 0 : i32
    %c0_i32_1 = arith.constant 0 : i32
    return %c0_i32, %c0_i32_0 : i32, i32
  }
  func.func @transform_21(%arg0: i32) -> (i32, i32) {
    %c0_i32 = arith.constant 0 : i32
    %c0_i32_0 = arith.constant 0 : i32
    %c0_i32_1 = arith.constant 0 : i32
    return %c0_i32, %c0_i32_0 : i32, i32
  }
  func.func @transform_22(%arg0: i32) -> (i32, i32) {
    %c0_i32 = arith.constant 0 : i32
    %c0_i32_0 = arith.constant 0 : i32
    return %arg0, %c0_i32 : i32, i32
  }
  func.func @transform_23(%arg0: i32) -> (i32, i32) {
    %c0_i32 = arith.constant 0 : i32
    %c0_i32_0 = arith.constant 0 : i32
    return %arg0, %c0_i32 : i32, i32
  }
  func.func @transform_24(%arg0: i32) -> (i32, i32) {
    %c0_i32 = arith.constant 0 : i32
    %c0_i32_0 = arith.constant 0 : i32
    return %arg0, %c0_i32 : i32, i32
  }
}

module attributes {stable_mosaic.version = 11 : i64} {
  func.func @_upsample_kernel(%arg0: i32, %arg1: memref<64x576xbf16, #tpu.memory_space<vmem>>, %arg2: memref<64x18xf32, #tpu.memory_space<vmem>>, %arg3: memref<64x128xf32, #tpu.memory_space<vmem>>) attributes {dimension_semantics = [#tpu.dimension_semantics<parallel>], iteration_bounds = array<i64: 2>, scalar_prefetch = 0 : i64, scratch_operands = 0 : i64, tpu.core_type = #tpu.core_type<tc>, window_params = [{transform_indices = @transform_0, window_bounds = array<i64: 64, 576>}, {transform_indices = @transform_1, window_bounds = array<i64: 64, 18>}, {transform_indices = @transform_2, window_bounds = array<i64: 64, 128>}]} {
    %c0 = arith.constant 0 : index
    %c0_0 = arith.constant 0 : index
    %0 = vector.load %arg1[%c0, %c0_0] : memref<64x576xbf16, #tpu.memory_space<vmem>>, vector<64x576xbf16>
    %1 = arith.extf %0 : vector<64x576xbf16> to vector<64x576xf32>
    %c0_1 = arith.constant 0 : index
    %c0_2 = arith.constant 0 : index
    %2 = vector.load %arg2[%c0_1, %c0_2] : memref<64x18xf32, #tpu.memory_space<vmem>>, vector<64x18xf32>
    %cst = arith.constant 0.000000e+00 : f32
    %3 = vector.broadcast %cst : f32 to vector<64x64xf32>
    %cst_3 = arith.constant 0.000000e+00 : f32
    %4 = vector.broadcast %cst_3 : f32 to vector<64x64xf32>
    %5 = vector.extract_strided_slice %1 {offsets = [0, 0], sizes = [64, 64], strides = [1, 1]} : vector<64x576xf32> to vector<64x64xf32>
    %6 = vector.extract_strided_slice %2 {offsets = [0, 0], sizes = [64, 1], strides = [1, 1]} : vector<64x18xf32> to vector<64x1xf32>
    %7 = vector.broadcast %6 : vector<64x1xf32> to vector<64x64xf32>
    %8 = arith.mulf %5, %7 : vector<64x64xf32>
    %9 = arith.addf %3, %8 : vector<64x64xf32>
    %10 = vector.extract_strided_slice %2 {offsets = [0, 9], sizes = [64, 1], strides = [1, 1]} : vector<64x18xf32> to vector<64x1xf32>
    %11 = vector.broadcast %10 : vector<64x1xf32> to vector<64x64xf32>
    %12 = arith.mulf %5, %11 : vector<64x64xf32>
    %13 = arith.addf %4, %12 : vector<64x64xf32>
    %14 = vector.extract_strided_slice %1 {offsets = [0, 64], sizes = [64, 64], strides = [1, 1]} : vector<64x576xf32> to vector<64x64xf32>
    %15 = vector.extract_strided_slice %2 {offsets = [0, 1], sizes = [64, 1], strides = [1, 1]} : vector<64x18xf32> to vector<64x1xf32>
    %16 = vector.broadcast %15 : vector<64x1xf32> to vector<64x64xf32>
    %17 = arith.mulf %14, %16 : vector<64x64xf32>
    %18 = arith.addf %9, %17 : vector<64x64xf32>
    %19 = vector.extract_strided_slice %2 {offsets = [0, 10], sizes = [64, 1], strides = [1, 1]} : vector<64x18xf32> to vector<64x1xf32>
    %20 = vector.broadcast %19 : vector<64x1xf32> to vector<64x64xf32>
    %21 = arith.mulf %14, %20 : vector<64x64xf32>
    %22 = arith.addf %13, %21 : vector<64x64xf32>
    %23 = vector.extract_strided_slice %1 {offsets = [0, 128], sizes = [64, 64], strides = [1, 1]} : vector<64x576xf32> to vector<64x64xf32>
    %24 = vector.extract_strided_slice %2 {offsets = [0, 2], sizes = [64, 1], strides = [1, 1]} : vector<64x18xf32> to vector<64x1xf32>
    %25 = vector.broadcast %24 : vector<64x1xf32> to vector<64x64xf32>
    %26 = arith.mulf %23, %25 : vector<64x64xf32>
    %27 = arith.addf %18, %26 : vector<64x64xf32>
    %28 = vector.extract_strided_slice %2 {offsets = [0, 11], sizes = [64, 1], strides = [1, 1]} : vector<64x18xf32> to vector<64x1xf32>
    %29 = vector.broadcast %28 : vector<64x1xf32> to vector<64x64xf32>
    %30 = arith.mulf %23, %29 : vector<64x64xf32>
    %31 = arith.addf %22, %30 : vector<64x64xf32>
    %32 = vector.extract_strided_slice %1 {offsets = [0, 192], sizes = [64, 64], strides = [1, 1]} : vector<64x576xf32> to vector<64x64xf32>
    %33 = vector.extract_strided_slice %2 {offsets = [0, 3], sizes = [64, 1], strides = [1, 1]} : vector<64x18xf32> to vector<64x1xf32>
    %34 = vector.broadcast %33 : vector<64x1xf32> to vector<64x64xf32>
    %35 = arith.mulf %32, %34 : vector<64x64xf32>
    %36 = arith.addf %27, %35 : vector<64x64xf32>
    %37 = vector.extract_strided_slice %2 {offsets = [0, 12], sizes = [64, 1], strides = [1, 1]} : vector<64x18xf32> to vector<64x1xf32>
    %38 = vector.broadcast %37 : vector<64x1xf32> to vector<64x64xf32>
    %39 = arith.mulf %32, %38 : vector<64x64xf32>
    %40 = arith.addf %31, %39 : vector<64x64xf32>
    %41 = vector.extract_strided_slice %1 {offsets = [0, 256], sizes = [64, 64], strides = [1, 1]} : vector<64x576xf32> to vector<64x64xf32>
    %42 = vector.extract_strided_slice %2 {offsets = [0, 4], sizes = [64, 1], strides = [1, 1]} : vector<64x18xf32> to vector<64x1xf32>
    %43 = vector.broadcast %42 : vector<64x1xf32> to vector<64x64xf32>
    %44 = arith.mulf %41, %43 : vector<64x64xf32>
    %45 = arith.addf %36, %44 : vector<64x64xf32>
    %46 = vector.extract_strided_slice %2 {offsets = [0, 13], sizes = [64, 1], strides = [1, 1]} : vector<64x18xf32> to vector<64x1xf32>
    %47 = vector.broadcast %46 : vector<64x1xf32> to vector<64x64xf32>
    %48 = arith.mulf %41, %47 : vector<64x64xf32>
    %49 = arith.addf %40, %48 : vector<64x64xf32>
    %50 = vector.extract_strided_slice %1 {offsets = [0, 320], sizes = [64, 64], strides = [1, 1]} : vector<64x576xf32> to vector<64x64xf32>
    %51 = vector.extract_strided_slice %2 {offsets = [0, 5], sizes = [64, 1], strides = [1, 1]} : vector<64x18xf32> to vector<64x1xf32>
    %52 = vector.broadcast %51 : vector<64x1xf32> to vector<64x64xf32>
    %53 = arith.mulf %50, %52 : vector<64x64xf32>
    %54 = arith.addf %45, %53 : vector<64x64xf32>
    %55 = vector.extract_strided_slice %2 {offsets = [0, 14], sizes = [64, 1], strides = [1, 1]} : vector<64x18xf32> to vector<64x1xf32>
    %56 = vector.broadcast %55 : vector<64x1xf32> to vector<64x64xf32>
    %57 = arith.mulf %50, %56 : vector<64x64xf32>
    %58 = arith.addf %49, %57 : vector<64x64xf32>
    %59 = vector.extract_strided_slice %1 {offsets = [0, 384], sizes = [64, 64], strides = [1, 1]} : vector<64x576xf32> to vector<64x64xf32>
    %60 = vector.extract_strided_slice %2 {offsets = [0, 6], sizes = [64, 1], strides = [1, 1]} : vector<64x18xf32> to vector<64x1xf32>
    %61 = vector.broadcast %60 : vector<64x1xf32> to vector<64x64xf32>
    %62 = arith.mulf %59, %61 : vector<64x64xf32>
    %63 = arith.addf %54, %62 : vector<64x64xf32>
    %64 = vector.extract_strided_slice %2 {offsets = [0, 15], sizes = [64, 1], strides = [1, 1]} : vector<64x18xf32> to vector<64x1xf32>
    %65 = vector.broadcast %64 : vector<64x1xf32> to vector<64x64xf32>
    %66 = arith.mulf %59, %65 : vector<64x64xf32>
    %67 = arith.addf %58, %66 : vector<64x64xf32>
    %68 = vector.extract_strided_slice %1 {offsets = [0, 448], sizes = [64, 64], strides = [1, 1]} : vector<64x576xf32> to vector<64x64xf32>
    %69 = vector.extract_strided_slice %2 {offsets = [0, 7], sizes = [64, 1], strides = [1, 1]} : vector<64x18xf32> to vector<64x1xf32>
    %70 = vector.broadcast %69 : vector<64x1xf32> to vector<64x64xf32>
    %71 = arith.mulf %68, %70 : vector<64x64xf32>
    %72 = arith.addf %63, %71 : vector<64x64xf32>
    %73 = vector.extract_strided_slice %2 {offsets = [0, 16], sizes = [64, 1], strides = [1, 1]} : vector<64x18xf32> to vector<64x1xf32>
    %74 = vector.broadcast %73 : vector<64x1xf32> to vector<64x64xf32>
    %75 = arith.mulf %68, %74 : vector<64x64xf32>
    %76 = arith.addf %67, %75 : vector<64x64xf32>
    %77 = vector.extract_strided_slice %1 {offsets = [0, 512], sizes = [64, 64], strides = [1, 1]} : vector<64x576xf32> to vector<64x64xf32>
    %78 = vector.extract_strided_slice %2 {offsets = [0, 8], sizes = [64, 1], strides = [1, 1]} : vector<64x18xf32> to vector<64x1xf32>
    %79 = vector.broadcast %78 : vector<64x1xf32> to vector<64x64xf32>
    %80 = arith.mulf %77, %79 : vector<64x64xf32>
    %81 = arith.addf %72, %80 : vector<64x64xf32>
    %82 = vector.extract_strided_slice %2 {offsets = [0, 17], sizes = [64, 1], strides = [1, 1]} : vector<64x18xf32> to vector<64x1xf32>
    %83 = vector.broadcast %82 : vector<64x1xf32> to vector<64x64xf32>
    %84 = arith.mulf %77, %83 : vector<64x64xf32>
    %85 = arith.addf %76, %84 : vector<64x64xf32>
    %86 = tpu.concatenate %81, %85 in 1 : vector<64x64xf32>, vector<64x64xf32> -> vector<64x128xf32>
    %c0_4 = arith.constant 0 : index
    %c0_5 = arith.constant 0 : index
    %87 = vector.load %arg3[%c0_4, %c0_5] : memref<64x128xf32, #tpu.memory_space<vmem>>, vector<64x128xf32>
    tpu.vector_store %arg3[%c0_4, %c0_5], %86 {strides = array<i32>} : memref<64x128xf32, #tpu.memory_space<vmem>>, vector<64x128xf32>,
    return
  }
  func.func @transform_0(%arg0: i32) -> (i32, i32) {
    %c0_i32 = arith.constant 0 : i32
    %c0_i32_0 = arith.constant 0 : i32
    return %arg0, %c0_i32 : i32, i32
  }
  func.func @transform_1(%arg0: i32) -> (i32, i32) {
    %c0_i32 = arith.constant 0 : i32
    %c0_i32_0 = arith.constant 0 : i32
    return %arg0, %c0_i32 : i32, i32
  }
  func.func @transform_2(%arg0: i32) -> (i32, i32) {
    %c0_i32 = arith.constant 0 : i32
    %c0_i32_0 = arith.constant 0 : i32
    return %arg0, %c0_i32 : i32, i32
  }
}

</mosaic_0001>

<llo_original>
// kernel: raft_forward.11
$region0: #{raft_forward.11}
  #allocation0 [shape = 'u32[]', space=smem, size = 0x4, offset = 0x4, fixed_abs, tag = 'smem constant byte address 0x4 - core index']
  #allocation1 [shape = 'u32[144,128]{1,0:T(1,128)}', space=vmem, size = 0x12000, scoped, tag = 'internal scratch']
  %s0 = inlined_call_operand.hbm [shape: bf16[256,192], index: 0, kind: input, shape index: {}]
  %s1 = inlined_call_operand.hbm [shape: bf16[192,128], index: 1, kind: input, shape index: {}]
  %s2 = inlined_call_operand.hbm [shape: f32[1,128], index: 2, kind: input, shape index: {}]
  %s3 = inlined_call_operand.hbm [shape: bf16[256,128], index: 3, kind: output, shape index: {}]
  %s4 = sld [smem:[#allocation0]]
  $region57: #{raft_forward.11} parent=0
    _
  %s6 = ssub.s32 1, %s4
  %s7 = scalar_select 0, %s6, %s4
  $region1: #{raft_forward.11} parent=0
    #allocation2 [shape = 'u8[65536]{0}', space=vmem, size = 0x10000, scoped, tag = 'input window, operand 0']
    #allocation3 [shape = 's32[2]{0}', space=sflag, size = 0x8, scoped, tag = 'scoped memory for raft_forward.11']
    #allocation4 [shape = 's32[2]{0}', space=sflag, size = 0x8, scoped, tag = 'scoped memory for raft_forward.11']
    #allocation5 [shape = 'u8[49152]{0}', space=vmem, size = 0xc000, scoped, tag = 'input window, operand 1, single buffered']
    #allocation6 [shape = 's32[1]{0}', space=sflag, size = 0x4, scoped, tag = 'scoped memory for raft_forward.11']
    #allocation7 [shape = 'u8[512]{0}', space=vmem, size = 0x400, scoped, tag = 'input window, operand 2, single buffered']
    #allocation8 [shape = 'u8[32768]{0}', space=vmem, size = 0x8000, scoped, tag = 'output window, operand 0']
    %8 = vsyncpa [#allocation3], 0
    %s9 = scalar_lea.sflag [#allocation3], 1
    %10 = vsyncpa %s9, 0
    %11 = vsyncpa [#allocation6], 0
    %12 = vsyncpa [#allocation4], 0
    %s13 = scalar_lea.sflag [#allocation4], 1
    %14 = vsyncpa %s13, 0
    loop: start=0, step=1, limit=6
    $region2: #{raft_forward.11} parent=1 // loop_pre_header
      _
    $region3: #{raft_forward.11} parent=1 // loop_header
      %s16 = sphi 0, %s20
      %p17 = scmp.ge.s32.totalorder %s16, 6
      %s26 = sphi 0, %s28
      %s29 = sphi 0, %s26
      %s30 = sphi 0, %s29
      %s46 = sphi 0, %s30
      %s50 = sphi 0, %s50
      %s52 = sphi 0, %s50
      %s53 = sphi 0, %s52
      %s67 = sphi 0, %s53
      %s71 = sphi 0, %s71
      %s73 = sphi 0, %s71
      %s74 = sphi 0, %s73
      %s88 = sphi 0, %s74
      %s94 = sphi 0, %s96
      %s97 = sphi 0, %s94
      %s98 = sphi 0, %s97
      %s114 = sphi 0, %s98
    $region4: #{raft_forward.11} parent=1 // loop_header_branch
      %19 = sbr.rel (%p17) target = $region8
    $region5: #{raft_forward.11} parent=1 // loop_body
      %s21 = ssub.s32 %s16, 1
      %s22 = ssub.s32 %s16, 2
      %s23 = sadd.s32 %s16, 1
      %s24 = ssub.s32 %s16, %s23
      %p25 = scmp.eq.s32.totalorder %s24, 0
      %s27 = sadd.s32 %s26, 1
      %s28 = scalar_select %p25, %s26, %s27
      %p31 = pneg %p25
      %p32 = scmp.eq.s32.totalorder %s16, 3
      %p33 = por %p31, %p32
      %p34 = scmp.ne.s32.totalorder %s26, %s29
      %p35 = scmp.eq.s32.totalorder %s16, 0
      %p36 = por %p34, %p35
      %p37 = scmp.ne.s32.totalorder %s26, %s29
      %p38 = scmp.eq.s32.totalorder %s21, 3
      %p39 = por %p37, %p38
      %p40 = scmp.ne.s32.totalorder %s29, %s30
      %p41 = scmp.eq.s32.totalorder %s21, 0
      %p42 = por %p40, %p41
      %p43 = scmp.ne.s32.totalorder %s29, %s30
      %p44 = scmp.eq.s32.totalorder %s22, 3
      %p45 = por %p43, %p44
      %p47 = scmp.ne.s32.totalorder %s30, %s46
      %p48 = scmp.eq.s32.totalorder %s22, 0
      %p49 = por %p47, %p48
      %s51 = sadd.s32 %s50, 1
      %p54 = scmp.eq.s32.totalorder %s16, 3
      %p55 = scmp.ne.s32.totalorder %s50, %s52
      %p56 = scmp.eq.s32.totalorder %s16, 0
      %p57 = por %p55, %p56
      %p58 = scmp.ne.s32.totalorder %s50, %s52
      %p59 = scmp.eq.s32.totalorder %s21, 3
      %p60 = por %p58, %p59
      %p61 = scmp.ne.s32.totalorder %s52, %s53
      %p62 = scmp.eq.s32.totalorder %s21, 0
      %p63 = por %p61, %p62
      %p64 = scmp.ne.s32.totalorder %s52, %s53
      %p65 = scmp.eq.s32.totalorder %s22, 3
      %p66 = por %p64, %p65
      %p68 = scmp.ne.s32.totalorder %s53, %s67
      %p69 = scmp.eq.s32.totalorder %s22, 0
      %p70 = por %p68, %p69
      %s72 = sadd.s32 %s71, 1
      %p75 = scmp.eq.s32.totalorder %s16, 3
      %p76 = scmp.ne.s32.totalorder %s71, %s73
      %p77 = scmp.eq.s32.totalorder %s16, 0
      %p78 = por %p76, %p77
      %p79 = scmp.ne.s32.totalorder %s71, %s73
      %p80 = scmp.eq.s32.totalorder %s21, 3
      %p81 = por %p79, %p80
      %p82 = scmp.ne.s32.totalorder %s73, %s74
      %p83 = scmp.eq.s32.totalorder %s21, 0
      %p84 = por %p82, %p83
      %p85 = scmp.ne.s32.totalorder %s73, %s74
      %p86 = scmp.eq.s32.totalorder %s22, 3
      %p87 = por %p85, %p86
      %p89 = scmp.ne.s32.totalorder %s74, %s88
      %p90 = scmp.eq.s32.totalorder %s22, 0
      %p91 = por %p89, %p90
      %s92 = ssub.s32 %s16, %s23
      %p93 = scmp.eq.s32.totalorder %s92, 0
      %s95 = sadd.s32 %s94, 1
      %s96 = scalar_select %p93, %s94, %s95
      %p99 = pneg %p93
      %p100 = scmp.eq.s32.totalorder %s16, 3
      %p101 = por %p99, %p100
      %p102 = scmp.ne.s32.totalorder %s94, %s97
      %p103 = scmp.eq.s32.totalorder %s16, 0
      %p104 = por %p102, %p103
      %p105 = scmp.ne.s32.totalorder %s94, %s97
      %p106 = scmp.eq.s32.totalorder %s21, 3
      %p107 = por %p105, %p106
      %p108 = scmp.ne.s32.totalorder %s97, %s98
      %p109 = scmp.eq.s32.totalorder %s21, 0
      %p110 = por %p108, %p109
      %p111 = scmp.ne.s32.totalorder %s97, %s98
      %p112 = scmp.eq.s32.totalorder %s22, 3
      %p113 = por %p111, %p112
      %p115 = scmp.ne.s32.totalorder %s98, %s114
      %p116 = scmp.eq.s32.totalorder %s22, 0
      %p117 = por %p115, %p116
      %p118 = scmp.le.s32.totalorder 1, %s16
      %p119 = scmp.lt.s32.totalorder %s16, 5
      %p120 = pnand %p118, %p119
      %p121 = pneg %p120
      // Predicated region
      $region9: #{raft_forward.11} parent=5 // pred_check
        _
      $region10: #{raft_forward.11} parent=5 // pred_check_branch
        %123 = sbr.rel (%p120) target = $region12
      $region11: #{raft_forward.11} parent=5 // pred_region
        %s124 = ssub.s32 %s16, 1
        // Predicated region
        $region13: #{raft_forward.11} parent=11 // pred_check
          %p125 = pneg %p63
        $region14: #{raft_forward.11} parent=11 // pred_check_branch
          %127 = sbr.rel (%p125) target = $region16
        $region15: #{raft_forward.11} parent=11 // pred_region
          %s129 = ssub.s32 1536, 1536
          %130 = vsyncadd [#allocation6], %s129
          %s131 = sshll.u32 [#allocation5], 4
          %s132 = int_to_ptr.vmem [resolvable:$true] %s131
          %137 = dma.hbm_to_vmem [thread:$0]  %s1, 1536, %s132, [#allocation6], 64, 64, 4
        $region16: #{raft_forward.11} parent=11 // pred_fallthru
          _
        // Predicated region
        $region17: #{raft_forward.11} parent=11 // pred_check
          %p138 = pneg %p84
        $region18: #{raft_forward.11} parent=11 // pred_check_branch
          %140 = sbr.rel (%p138) target = $region20
        $region19: #{raft_forward.11} parent=11 // pred_region
          %s142 = ssub.s32 16, 16
          %143 = vsyncadd [#allocation6], %s142
          %s145 = sshll.u32 [#allocation7], 4
          %s146 = int_to_ptr.vmem [resolvable:$true] %s145
          %148 = dma.hbm_to_vmem [thread:$0]  %s2, 16, %s146, [#allocation6]
        $region20: #{raft_forward.11} parent=11 // pred_fallthru
          _
      $region12: #{raft_forward.11} parent=5 // pred_fallthru
        _
      %p149 = scmp.lt.s32.totalorder %s16, 4
      // Predicated region
      $region21: #{raft_forward.11} parent=5 // pred_check
        %p150 = pneg %p149
      $region22: #{raft_forward.11} parent=5 // pred_check_branch
        %152 = sbr.rel (%p150) target = $region24
      $region23: #{raft_forward.11} parent=5 // pred_region
        // Predicated region
        $region25: #{raft_forward.11} parent=23 // pred_check
          %p153 = pneg %p36
        $region26: #{raft_forward.11} parent=23 // pred_check_branch
          %155 = sbr.rel (%p153) target = $region28
        $region27: #{raft_forward.11} parent=23 // pred_region
          %s156 = sand.u32 %s26, 1
          %s157 = scalar_lea.sflag [#allocation3], %s156
          %s158 = sand.u32 %s26, 1
          %s159 = smul.addr %s158, 64
          %s160 = scalar_lea.vmem [#allocation2], %s159
          %s161 = smul.u32 8, %s16
          %s163 = ssub.s32 1024, 1024
          %164 = vsyncadd %s157, %s163
          %s165 = smul.addr %s161, 2
          %s166 = smul.addr %s165, 64
          %s167 = scalar_lea.hbm %s0, %s166
          %s168 = sshll.u32 %s160, 4
          %s169 = int_to_ptr.vmem [resolvable:$true] %s168
          %174 = dma.hbm_to_vmem [thread:$0]  %s167, 1024, %s169, %s157, 128, 128, 8
        $region28: #{raft_forward.11} parent=23 // pred_fallthru
          _
      $region24: #{raft_forward.11} parent=5 // pred_fallthru
        _
      %p175 = scmp.le.s32.totalorder 1, %s16
      %p176 = scmp.lt.s32.totalorder %s16, 5
      %p177 = pnand %p175, %p176
      %p178 = pneg %p177
      // Predicated region
      $region29: #{raft_forward.11} parent=5 // pred_check
        _
      $region30: #{raft_forward.11} parent=5 // pred_check_branch
        %180 = sbr.rel (%p177) target = $region32
      $region31: #{raft_forward.11} parent=5 // pred_region
        %s181 = ssub.s32 %s16, 1
        %s182 = sand.u32 %s29, 1
        %s183 = scalar_lea.sflag [#allocation3], %s182
        %s184 = sand.u32 %s29, 1
        %s185 = smul.addr %s184, 64
        %s186 = scalar_lea.vmem [#allocation2], %s185
        // Predicated region
        $region33: #{raft_forward.11} parent=31 // pred_check
          %p187 = pneg %p42
        $region34: #{raft_forward.11} parent=31 // pred_check_branch
          %189 = sbr.rel (%p187) target = $region36
        $region35: #{raft_forward.11} parent=31 // pred_region
          %190 = dma.done %s183, 1024
        $region36: #{raft_forward.11} parent=31 // pred_fallthru
          _
        // Predicated region
        $region37: #{raft_forward.11} parent=31 // pred_check
          %p191 = pneg %p63
        $region38: #{raft_forward.11} parent=31 // pred_check_branch
          %193 = sbr.rel (%p191) target = $region40
        $region39: #{raft_forward.11} parent=31 // pred_region
          %194 = dma.done [#allocation6], 1536
        $region40: #{raft_forward.11} parent=31 // pred_fallthru
          _
        // Predicated region
        $region41: #{raft_forward.11} parent=31 // pred_check
          %p195 = pneg %p84
        $region42: #{raft_forward.11} parent=31 // pred_check_branch
          %197 = sbr.rel (%p195) target = $region44
        $region43: #{raft_forward.11} parent=31 // pred_region
          %198 = dma.done [#allocation6], 16
        $region44: #{raft_forward.11} parent=31 // pred_fallthru
          _
        %s199 = sand.u32 %s29, 1
        %s200 = scalar_lea.sflag [#allocation3], %s199
        %s201 = sand.u32 %s29, 1
        %s202 = smul.addr %s201, 64
        %s203 = scalar_lea.vmem [#allocation2], %s202
        %p204 = pneg %p42
        %p205 = pneg %p39
        %p206 = pneg %p63
        %p207 = pneg %p60
        %p208 = pneg %p84
        %p209 = pneg %p81
        %p210 = pneg %p110
        %p211 = pneg %p107
        %s212 = sand.u32 %s97, 1
        %s213 = scalar_lea.sflag [#allocation4], %s212
        %s214 = sand.u32 %s97, 1
        %s215 = smul.addr %s214, 32
        %s216 = scalar_lea.vmem [#allocation8], %s215
        %s217 = smul.u32 8, %s21
        %s218 = smul.u32 8, %s21
        %v220 = vld [vmem:[%s186] sm:$0xff]
        %v221 = vld [vmem:[%s186 + $0x8] sm:$0xff]
        %v222 = vld [vmem:[%s186 + $0x10] sm:$0xff]
        %v223 = vld [vmem:[%s186 + $0x18] sm:$0xff]
        %v224 = vld [vmem:[%s186 + $0x20] sm:$0xff]
        %v225 = vld [vmem:[%s186 + $0x28] sm:$0xff]
        %v226 = vld [vmem:[%s186 + $0x30] sm:$0xff]
        %v227 = vld [vmem:[%s186 + $0x38] sm:$0xff]
        %v228 = vld [vmem:[#allocation5] sm:$0xf]
        %v229 = vld [vmem:[#allocation5 + $0x4] sm:$0xf]
        %v230 = vld [vmem:[#allocation5 + $0x8] sm:$0xf]
        %v231 = vld [vmem:[#allocation5 + $0xc] sm:$0xf]
        %v232 = vld [vmem:[#allocation5 + $0x10] sm:$0xf]
        %v233 = vld [vmem:[#allocation5 + $0x14] sm:$0xf]
        %v234 = vld [vmem:[#allocation5 + $0x18] sm:$0xf]
        %v235 = vld [vmem:[#allocation5 + $0x1c] sm:$0xf]
        %v236 = vld [vmem:[#allocation5 + $0x20] sm:$0xf]
        %v237 = vld [vmem:[#allocation5 + $0x24] sm:$0xf]
        %v238 = vld [vmem:[#allocation5 + $0x28] sm:$0xf]
        %v239 = vld [vmem:[#allocation5 + $0x2c] sm:$0xf]
        %v240 = vld [vmem:[#allocation5 + $0x30] sm:$0xf]
        %v241 = vld [vmem:[#allocation5 + $0x34] sm:$0xf]
        %v242 = vld [vmem:[#allocation5 + $0x38] sm:$0xf]
        %v243 = vld [vmem:[#allocation5 + $0x3c] sm:$0xf]
        %v244 = vld [vmem:[#allocation5 + $0x40] sm:$0xf]
        %v245 = vld [vmem:[#allocation5 + $0x44] sm:$0xf]
        %v246 = vld [vmem:[#allocation5 + $0x48] sm:$0xf]
        %v247 = vld [vmem:[#allocation5 + $0x4c] sm:$0xf]
        %v248 = vld [vmem:[#allocation5 + $0x50] sm:$0xf]
        %v249 = vld [vmem:[#allocation5 + $0x54] sm:$0xf]
        %v250 = vld [vmem:[#allocation5 + $0x58] sm:$0xf]
        %v251 = vld [vmem:[#allocation5 + $0x5c] sm:$0xf]
        %v252 = vld [vmem:[#allocation7] sm:$0x1]
        %v254 = vlaneseq
        %v255 = vshrl.u32 %v254, 7
        %v256 = vsub.s32 0, %v255
        %v257 = vrot.slane %v252, %v256
        %v267 = vunpack.c.l.b16 %v220
        %v268 = vunpack.c.h.b16 %v220
        %v269 = vunpack.c.l.b16 %v221
        %v270 = vunpack.c.h.b16 %v221
        %v271 = vunpack.c.l.b16 %v222
        %v272 = vunpack.c.h.b16 %v222
        %v273 = vunpack.c.l.b16 %v223
        %v274 = vunpack.c.h.b16 %v223
        %v275 = vunpack.c.l.b16 %v224
        %v276 = vunpack.c.h.b16 %v224
        %v277 = vunpack.c.l.b16 %v225
        %v278 = vunpack.c.h.b16 %v225
        %v279 = vunpack.c.l.b16 %v226
        %v280 = vunpack.c.h.b16 %v226
        %v281 = vunpack.c.l.b16 %v227
        %v282 = vunpack.c.h.b16 %v227
        %v283 = vpack.c.b16 %v269, %v267
        %v284 = vpack.c.b16 %v270, %v268
        %v285 = vpack.c.b16 %v273, %v271
        %v286 = vpack.c.b16 %v274, %v272
        %v287 = vpack.c.b16 %v277, %v275
        %v288 = vpack.c.b16 %v278, %v276
        %v289 = vpack.c.b16 %v281, %v279
        %v290 = vpack.c.b16 %v282, %v280
        %v319 = vunpack.c.l.b16 %v228
        %v320 = vunpack.c.l.b16 %v229
        %v321 = vunpack.c.l.b16 %v230
        %v322 = vunpack.c.l.b16 %v231
        %v323 = vunpack.c.l.b16 %v232
        %v324 = vunpack.c.l.b16 %v233
        %v325 = vunpack.c.l.b16 %v234
        %v326 = vunpack.c.l.b16 %v235
        %v327 = vunpack.c.l.b16 %v236
        %v328 = vunpack.c.l.b16 %v237
        %v329 = vunpack.c.l.b16 %v238
        %v330 = vunpack.c.l.b16 %v239
        %v331 = vunpack.c.l.b16 %v240
        %v332 = vunpack.c.l.b16 %v241
        %v333 = vunpack.c.l.b16 %v242
        %v334 = vunpack.c.l.b16 %v243
        %v335 = vunpack.c.l.b16 %v244
        %v336 = vunpack.c.l.b16 %v245
        %v337 = vunpack.c.l.b16 %v246
        %v338 = vunpack.c.l.b16 %v247
        %v339 = vunpack.c.l.b16 %v248
        %v340 = vunpack.c.l.b16 %v249
        %v341 = vunpack.c.l.b16 %v250
        %v342 = vunpack.c.l.b16 %v251
        %v343 = vpack.c.b16 %v320, %v319
        %v344 = vpack.c.b16 %v322, %v321
        %v345 = vpack.c.b16 %v324, %v323
        %v346 = vpack.c.b16 %v326, %v325
        %v347 = vpack.c.b16 %v328, %v327
        %v348 = vpack.c.b16 %v330, %v329
        %v349 = vpack.c.b16 %v332, %v331
        %v350 = vpack.c.b16 %v334, %v333
        %v351 = vpack.c.b16 %v336, %v335
        %v352 = vpack.c.b16 %v338, %v337
        %v353 = vpack.c.b16 %v340, %v339
        %v354 = vpack.c.b16 %v342, %v341
        %vm367 = vcmask 523264
        %v369 = vsel %vm367, %v284, 0
        %v372 = vsel %vm367, %v286, 0
        %v375 = vsel %vm367, %v288, 0
        %v378 = vsel %vm367, %v290, 0
        %380 = vmatprep.subr.bf16.mxu0 0
        %381 = vmatpush1.bf16.msra.mxu0 %v343
        %382 = vmatprep.subr.bf16.mxu0 0
        %383 = vmatpush1.bf16.msra.mxu0 %v344
        %384 = vmatprep.subr.bf16.mxu0 0
        %385 = vmatpush1.bf16.msra.mxu0 %v345
        %386 = vmatprep.subr.bf16.mxu0 0
        %387 = vmatpush1.bf16.msra.mxu0 %v346
        %388 = vmatprep.subr.bf16.mxu0 0
        %389 = vmatpush1.bf16.msra.mxu0 %v347
        %390 = vmatprep.subr.bf16.mxu0 0
        %391 = vmatpush1.bf16.msra.mxu0 %v348
        %392 = vmatprep.subr.bf16.mxu0 0
        %393 = vmatpush1.bf16.msra.mxu0 %v349
        %394 = vmatprep.subr.bf16.mxu0 0
        %395 = vmatpush1.bf16.msra.mxu0 %v350
        %396 = vmatprep.subr.bf16.mxu0 0
        %397 = vmatpush1.bf16.msra.mxu0 %v351
        %398 = vmatprep.subr.bf16.mxu0 0
        %399 = vmatpush1.bf16.msra.mxu0 %v352
        %400 = vmatprep.subr.bf16.mxu0 0
        %401 = vmatpush1.bf16.msra.mxu0 %v353
        %402 = vmatprep.subr.bf16.mxu0 0
        %403 = vmatpush1.bf16.msra.mxu0 %v354
        %404 = vmatprep.subr.bf16.mxu0 0
        %405 = vmatpush1.bf16.msra.mxu0 0
        %406 = vmatprep.subr.bf16.mxu0 0
        %407 = vmatpush1.bf16.msra.mxu0 0
        %408 = vmatprep.subr.bf16.mxu0 0
        %409 = vmatpush1.bf16.msra.mxu0 0
        %410 = vmatprep.subr.bf16.mxu0 0
        %411 = vmatpush1.bf16.msra.mxu0 0
        %412 = vmatprep.mubr.bf16.mxu0 %v369
        %413 = vmatmul.mubr.bf16.gmra.mrb[0].mxu0 %v283
        %v414 = vpop.f32.mrb[0].mxu0
        %v415 = vadd.f32 %v257, %v414
        %v416 = vpop.f32.mrb[0].mxu0
        %v417 = vpop.f32.mrb[0].mxu0
        %v418 = vadd.f32 %v257, %v417
        %v419 = vpop.f32.mrb[0].mxu0
        %420 = vmatprep.mubr.bf16.mxu0 %v372
        %421 = vmatmul.mubr.bf16.gmra.mrb[0].mxu0 %v285
        %v422 = vpop.f32.mrb[0].mxu0
        %v423 = vadd.f32 %v257, %v422
        %v424 = vpop.f32.mrb[0].mxu0
        %v425 = vpop.f32.mrb[0].mxu0
        %v426 = vadd.f32 %v257, %v425
        %v427 = vpop.f32.mrb[0].mxu0
        %428 = vmatprep.mubr.bf16.mxu0 %v375
        %429 = vmatmul.mubr.bf16.gmra.mrb[0].mxu0 %v287
        %v430 = vpop.f32.mrb[0].mxu0
        %v431 = vadd.f32 %v257, %v430
        %v432 = vpop.f32.mrb[0].mxu0
        %v433 = vpop.f32.mrb[0].mxu0
        %v434 = vadd.f32 %v257, %v433
        %v435 = vpop.f32.mrb[0].mxu0
        %436 = vmatprep.mubr.bf16.mxu0 %v378
        %437 = vmatmul.mubr.bf16.gmra.mrb[0].mxu0 %v289
        %v438 = vpop.f32.mrb[0].mxu0
        %v439 = vadd.f32 %v257, %v438
        %v440 = vpop.f32.mrb[0].mxu0
        %v441 = vpop.f32.mrb[0].mxu0
        %v442 = vadd.f32 %v257, %v441
        %v443 = vpop.f32.mrb[0].mxu0
        %444 = vdwg.mxu0
        %v445 = vmax.f32 %v415, 0.0
        %v446 = vmax.f32 %v418, 0.0
        %v447 = vmax.f32 %v423, 0.0
        %v448 = vmax.f32 %v426, 0.0
        %v449 = vmax.f32 %v431, 0.0
        %v450 = vmax.f32 %v434, 0.0
        %v451 = vmax.f32 %v439, 0.0
        %v452 = vmax.f32 %v442, 0.0
        %v453 = vpack.c.bf16 %v446, %v445
        %v454 = vpack.c.bf16 %v448, %v447
        %v455 = vpack.c.bf16 %v450, %v449
        %v456 = vpack.c.bf16 %v452, %v451
        %v461 = vunpack.c.l.b16 %v453
        %v462 = vunpack.c.h.b16 %v453
        %v463 = vunpack.c.l.b16 %v454
        %v464 = vunpack.c.h.b16 %v454
        %v465 = vunpack.c.l.b16 %v455
        %v466 = vunpack.c.h.b16 %v455
        %v467 = vunpack.c.l.b16 %v456
        %v468 = vunpack.c.h.b16 %v456
        %v469 = vpack.c.b16 %v461, %v461
        %v470 = vpack.c.b16 %v462, %v462
        %v471 = vpack.c.b16 %v463, %v463
        %v472 = vpack.c.b16 %v464, %v464
        %v473 = vpack.c.b16 %v465, %v465
        %v474 = vpack.c.b16 %v466, %v466
        %v475 = vpack.c.b16 %v467, %v467
        %v476 = vpack.c.b16 %v468, %v468
        %485 = vst [vmem:[%s216] sm:$0xf] %v469
        %486 = vst [vmem:[%s216 + $0x4] sm:$0xf] %v470
        %487 = vst [vmem:[%s216 + $0x8] sm:$0xf] %v471
        %488 = vst [vmem:[%s216 + $0xc] sm:$0xf] %v472
        %489 = vst [vmem:[%s216 + $0x10] sm:$0xf] %v473
        %490 = vst [vmem:[%s216 + $0x14] sm:$0xf] %v474
        %491 = vst [vmem:[%s216 + $0x18] sm:$0xf] %v475
        %492 = vst [vmem:[%s216 + $0x1c] sm:$0xf] %v476
        %s493 = sand.u32 %s97, 1
        %s494 = scalar_lea.sflag [#allocation4], %s493
        %s495 = sand.u32 %s97, 1
        %s496 = smul.addr %s495, 32
        %s497 = scalar_lea.vmem [#allocation8], %s496
        // Predicated region
        $region45: #{raft_forward.11} parent=31 // pred_check
          %p498 = pneg %p107
        $region46: #{raft_forward.11} parent=31 // pred_check_branch
          %500 = sbr.rel (%p498) target = $region48
        $region47: #{raft_forward.11} parent=31 // pred_region
          %s501 = smul.u32 8, %s21
          %s503 = ssub.s32 512, 512
          %504 = vsyncadd %s494, %s503
          %s505 = smul.addr %s501, 64
          %s506 = scalar_lea.hbm %s3, %s505
          %s507 = sshll.u32 %s497, 4
          %s508 = int_to_ptr.vmem [resolvable:$true] %s507
          %513 = dma.vmem_to_hbm [thread:$0]  %s508, 512, %s506, %s494, 64, 64, 4
        $region48: #{raft_forward.11} parent=31 // pred_fallthru
          _
      $region32: #{raft_forward.11} parent=5 // pred_fallthru
        _
      %p514 = scmp.le.s32.totalorder 2, %s16
      // Predicated region
      $region49: #{raft_forward.11} parent=5 // pred_check
        %p515 = pneg %p514
      $region50: #{raft_forward.11} parent=5 // pred_check_branch
        %517 = sbr.rel (%p515) target = $region52
      $region51: #{raft_forward.11} parent=5 // pred_region
        %s518 = ssub.s32 %s16, 2
        // Predicated region
        $region53: #{raft_forward.11} parent=51 // pred_check
          %p519 = pneg %p113
        $region54: #{raft_forward.11} parent=51 // pred_check_branch
          %521 = sbr.rel (%p519) target = $region56
        $region55: #{raft_forward.11} parent=51 // pred_region
          %s522 = sand.u32 %s98, 1
          %s523 = scalar_lea.sflag [#allocation4], %s522
          %s524 = sand.u32 %s98, 1
          %s525 = smul.addr %s524, 32
          %s526 = scalar_lea.vmem [#allocation8], %s525
          %527 = dma.done %s523, 512
        $region56: #{raft_forward.11} parent=51 // pred_fallthru
          _
      $region52: #{raft_forward.11} parent=5 // pred_fallthru
        _
    $region6: #{raft_forward.11} parent=1 // loop_footer
      %s20 = sadd.s32 1, %s16
    $region7: #{raft_forward.11} parent=1 // loop_footer_branch
      %15 = sbr.rel target = $region3
    $region8: #{raft_forward.11} parent=1 // loop_exit
      _
    %528 = vsyncpa [#allocation3], 1
    %s529 = scalar_lea.sflag [#allocation3], 1
    %530 = vsyncpa %s529, 1
    %531 = vsyncpa [#allocation6], 1
    %532 = vsyncpa [#allocation4], 1
    %s533 = scalar_lea.sflag [#allocation4], 1
    %534 = vsyncpa %s533, 1

// kernel: raft_forward.12
$region0: #{raft_forward.12}
  #allocation0 [shape = 'u32[]', space=smem, size = 0x4, offset = 0x4, fixed_abs, tag = 'smem constant byte address 0x4 - core index']
  #allocation1 [shape = 'u32[144,128]{1,0:T(1,128)}', space=vmem, size = 0x12000, scoped, tag = 'internal scratch']
  %s0 = inlined_call_operand.hbm [shape: bf16[2,64,128], index: 0, kind: input, shape index: {}]
  %s1 = inlined_call_operand.hbm [shape: bf16[2,64,128], index: 1, kind: input, shape index: {}]
  %s2 = inlined_call_operand.hbm [shape: bf16[2,64,64], index: 2, kind: output, shape index: {}]
  %s3 = sld [smem:[#allocation0]]
  $region49: #{raft_forward.12} parent=0
    _
  %s5 = ssub.s32 1, %s3
  %s6 = scalar_select 0, %s5, %s3
  $region1: #{raft_forward.12} parent=0
    #allocation2 [shape = 'u8[32768]{0}', space=vmem, size = 0x8000, scoped, tag = 'input window, operand 0']
    #allocation3 [shape = 's32[2]{0}', space=sflag, size = 0x8, scoped, tag = 'scoped memory for raft_forward.12']
    #allocation4 [shape = 's32[2]{0}', space=sflag, size = 0x8, scoped, tag = 'scoped memory for raft_forward.12']
    #allocation5 [shape = 'u8[32768]{0}', space=vmem, size = 0x8000, scoped, tag = 'input window, operand 1']
    #allocation6 [shape = 's32[2]{0}', space=sflag, size = 0x8, scoped, tag = 'scoped memory for raft_forward.12']
    #allocation7 [shape = 'u8[32768]{0}', space=vmem, size = 0x8000, scoped, tag = 'output window, operand 0']
    %7 = vsyncpa [#allocation3], 0
    %s8 = scalar_lea.sflag [#allocation3], 1
    %9 = vsyncpa %s8, 0
    %10 = vsyncpa [#allocation6], 0
    %s11 = scalar_lea.sflag [#allocation6], 1
    %12 = vsyncpa %s11, 0
    %13 = vsyncpa [#allocation4], 0
    %s14 = scalar_lea.sflag [#allocation4], 1
    %15 = vsyncpa %s14, 0
    loop: start=0, step=1, limit=4
    $region2: #{raft_forward.12} parent=1 // loop_pre_header
      _
    $region3: #{raft_forward.12} parent=1 // loop_header
      %s17 = sphi 0, %s21
      %p18 = scmp.ge.s32.totalorder %s17, 4
      %s24 = sphi 0, %s43
      %s25 = sphi 0, %s39
      %s26 = sphi 0, %s35
      %s27 = sphi 0, %s24
      %s28 = sphi 0, %s25
      %s29 = sphi 0, %s26
      %s30 = sphi 0, %s27
      %s31 = sphi 0, %s28
      %s32 = sphi 0, %s29
      %s48 = sphi 0, %s50
      %s51 = sphi 0, %s48
      %s52 = sphi 0, %s51
      %s68 = sphi 0, %s52
      %s76 = sphi 0, %s78
      %s79 = sphi 0, %s76
      %s80 = sphi 0, %s79
      %s96 = sphi 0, %s80
      %s106 = sphi 0, %s108
      %s109 = sphi 0, %s106
      %s110 = sphi 0, %s109
      %s126 = sphi 0, %s110
    $region4: #{raft_forward.12} parent=1 // loop_header_branch
      %20 = sbr.rel (%p18) target = $region8
    $region5: #{raft_forward.12} parent=1 // loop_body
      %s22 = ssub.s32 %s17, 1
      %s23 = ssub.s32 %s17, 2
      %s33 = sadd.s32 1, %s26
      %p34 = scmp.ge.s32.totalorder %s33, 1
      %s35 = scalar_select %p34, 0, %s33
      %s36 = sadd.s32 1, %s25
      %s37 = scalar_select %p34, %s36, %s25
      %p38 = scmp.ge.s32.totalorder %s37, 1
      %s39 = scalar_select %p38, 0, %s37
      %s40 = sadd.s32 1, %s24
      %s41 = scalar_select %p38, %s40, %s24
      %p42 = scmp.ge.s32.totalorder %s41, 2
      %s43 = scalar_select %p42, 0, %s41
      %s44 = ssub.s32 %s24, %s43
      %s45 = ssub.s32 %s25, %s39
      %s46 = sor.u32 %s44, %s45
      %p47 = scmp.eq.s32.totalorder %s46, 0
      %s49 = sadd.s32 %s48, 1
      %s50 = scalar_select %p47, %s48, %s49
      %p53 = pneg %p47
      %p54 = scmp.eq.s32.totalorder %s17, 1
      %p55 = por %p53, %p54
      %p56 = scmp.ne.s32.totalorder %s48, %s51
      %p57 = scmp.eq.s32.totalorder %s17, 0
      %p58 = por %p56, %p57
      %p59 = scmp.ne.s32.totalorder %s48, %s51
      %p60 = scmp.eq.s32.totalorder %s22, 1
      %p61 = por %p59, %p60
      %p62 = scmp.ne.s32.totalorder %s51, %s52
      %p63 = scmp.eq.s32.totalorder %s22, 0
      %p64 = por %p62, %p63
      %p65 = scmp.ne.s32.totalorder %s51, %s52
      %p66 = scmp.eq.s32.totalorder %s23, 1
      %p67 = por %p65, %p66
      %p69 = scmp.ne.s32.totalorder %s52, %s68
      %p70 = scmp.eq.s32.totalorder %s23, 0
      %p71 = por %p69, %p70
      %s72 = ssub.s32 %s24, %s43
      %s73 = ssub.s32 %s26, %s35
      %s74 = sor.u32 %s72, %s73
      %p75 = scmp.eq.s32.totalorder %s74, 0
      %s77 = sadd.s32 %s76, 1
      %s78 = scalar_select %p75, %s76, %s77
      %p81 = pneg %p75
      %p82 = scmp.eq.s32.totalorder %s17, 1
      %p83 = por %p81, %p82
      %p84 = scmp.ne.s32.totalorder %s76, %s79
      %p85 = scmp.eq.s32.totalorder %s17, 0
      %p86 = por %p84, %p85
      %p87 = scmp.ne.s32.totalorder %s76, %s79
      %p88 = scmp.eq.s32.totalorder %s22, 1
      %p89 = por %p87, %p88
      %p90 = scmp.ne.s32.totalorder %s79, %s80
      %p91 = scmp.eq.s32.totalorder %s22, 0
      %p92 = por %p90, %p91
      %p93 = scmp.ne.s32.totalorder %s79, %s80
      %p94 = scmp.eq.s32.totalorder %s23, 1
      %p95 = por %p93, %p94
      %p97 = scmp.ne.s32.totalorder %s80, %s96
      %p98 = scmp.eq.s32.totalorder %s23, 0
      %p99 = por %p97, %p98
      %s100 = ssub.s32 %s24, %s43
      %s101 = ssub.s32 %s25, %s39
      %s102 = sor.u32 %s100, %s101
      %s103 = ssub.s32 %s26, %s35
      %s104 = sor.u32 %s102, %s103
      %p105 = scmp.eq.s32.totalorder %s104, 0
      %s107 = sadd.s32 %s106, 1
      %s108 = scalar_select %p105, %s106, %s107
      %p111 = pneg %p105
      %p112 = scmp.eq.s32.totalorder %s17, 1
      %p113 = por %p111, %p112
      %p114 = scmp.ne.s32.totalorder %s106, %s109
      %p115 = scmp.eq.s32.totalorder %s17, 0
      %p116 = por %p114, %p115
      %p117 = scmp.ne.s32.totalorder %s106, %s109
      %p118 = scmp.eq.s32.totalorder %s22, 1
      %p119 = por %p117, %p118
      %p120 = scmp.ne.s32.totalorder %s109, %s110
      %p121 = scmp.eq.s32.totalorder %s22, 0
      %p122 = por %p120, %p121
      %p123 = scmp.ne.s32.totalorder %s109, %s110
      %p124 = scmp.eq.s32.totalorder %s23, 1
      %p125 = por %p123, %p124
      %p127 = scmp.ne.s32.totalorder %s110, %s126
      %p128 = scmp.eq.s32.totalorder %s23, 0
      %p129 = por %p127, %p128
      %p130 = scmp.le.s32.totalorder 1, %s17
      %p131 = scmp.lt.s32.totalorder %s17, 3
      %p132 = pnand %p130, %p131
      %p133 = pneg %p132
      // Predicated region
      $region9: #{raft_forward.12} parent=5 // pred_check
        _
      $region10: #{raft_forward.12} parent=5 // pred_check_branch
        %135 = sbr.rel (%p132) target = $region12
      $region11: #{raft_forward.12} parent=5 // pred_region
        %s136 = ssub.s32 %s17, 1
      $region12: #{raft_forward.12} parent=5 // pred_fallthru
        _
      %p137 = scmp.lt.s32.totalorder %s17, 2
      // Predicated region
      $region13: #{raft_forward.12} parent=5 // pred_check
        %p138 = pneg %p137
      $region14: #{raft_forward.12} parent=5 // pred_check_branch
        %140 = sbr.rel (%p138) target = $region16
      $region15: #{raft_forward.12} parent=5 // pred_region
        // Predicated region
        $region17: #{raft_forward.12} parent=15 // pred_check
          %p141 = pneg %p58
        $region18: #{raft_forward.12} parent=15 // pred_check_branch
          %143 = sbr.rel (%p141) target = $region20
        $region19: #{raft_forward.12} parent=15 // pred_region
          %s144 = sand.u32 %s48, 1
          %s145 = scalar_lea.sflag [#allocation3], %s144
          %s146 = sand.u32 %s48, 1
          %s147 = smul.addr %s146, 32
          %s148 = scalar_lea.vmem [#allocation2], %s147
          %s149 = smul.u32 8, %s25
          %s151 = ssub.s32 512, 512
          %152 = vsyncadd %s145, %s151
          %s153 = smul.addr %s24, 8
          %s154 = sadd.s32 %s149, %s153
          %s155 = smul.addr %s154, 64
          %s156 = scalar_lea.hbm %s0, %s155
          %s157 = sshll.u32 %s148, 4
          %s158 = int_to_ptr.vmem [resolvable:$true] %s157
          %163 = dma.hbm_to_vmem [thread:$0]  %s156, 512, %s158, %s145, 64, 64, 4
        $region20: #{raft_forward.12} parent=15 // pred_fallthru
          _
        // Predicated region
        $region21: #{raft_forward.12} parent=15 // pred_check
          %p164 = pneg %p86
        $region22: #{raft_forward.12} parent=15 // pred_check_branch
          %166 = sbr.rel (%p164) target = $region24
        $region23: #{raft_forward.12} parent=15 // pred_region
          %s167 = sand.u32 %s76, 1
          %s168 = scalar_lea.sflag [#allocation6], %s167
          %s169 = sand.u32 %s76, 1
          %s170 = smul.addr %s169, 32
          %s171 = scalar_lea.vmem [#allocation5], %s170
          %s172 = smul.u32 8, %s26
          %s174 = ssub.s32 512, 512
          %175 = vsyncadd %s168, %s174
          %s176 = smul.addr %s24, 8
          %s177 = sadd.s32 %s172, %s176
          %s178 = smul.addr %s177, 64
          %s179 = scalar_lea.hbm %s1, %s178
          %s180 = sshll.u32 %s171, 4
          %s181 = int_to_ptr.vmem [resolvable:$true] %s180
          %186 = dma.hbm_to_vmem [thread:$0]  %s179, 512, %s181, %s168, 64, 64, 4
        $region24: #{raft_forward.12} parent=15 // pred_fallthru
          _
      $region16: #{raft_forward.12} parent=5 // pred_fallthru
        _
      %p187 = scmp.le.s32.totalorder 1, %s17
      %p188 = scmp.lt.s32.totalorder %s17, 3
      %p189 = pnand %p187, %p188
      %p190 = pneg %p189
      // Predicated region
      $region25: #{raft_forward.12} parent=5 // pred_check
        _
      $region26: #{raft_forward.12} parent=5 // pred_check_branch
        %192 = sbr.rel (%p189) target = $region28
      $region27: #{raft_forward.12} parent=5 // pred_region
        %s193 = ssub.s32 %s17, 1
        %s194 = sand.u32 %s51, 1
        %s195 = scalar_lea.sflag [#allocation3], %s194
        %s196 = sand.u32 %s51, 1
        %s197 = smul.addr %s196, 32
        %s198 = scalar_lea.vmem [#allocation2], %s197
        // Predicated region
        $region29: #{raft_forward.12} parent=27 // pred_check
          %p199 = pneg %p64
        $region30: #{raft_forward.12} parent=27 // pred_check_branch
          %201 = sbr.rel (%p199) target = $region32
        $region31: #{raft_forward.12} parent=27 // pred_region
          %202 = dma.done %s195, 512
        $region32: #{raft_forward.12} parent=27 // pred_fallthru
          _
        %s203 = sand.u32 %s79, 1
        %s204 = scalar_lea.sflag [#allocation6], %s203
        %s205 = sand.u32 %s79, 1
        %s206 = smul.addr %s205, 32
        %s207 = scalar_lea.vmem [#allocation5], %s206
        // Predicated region
        $region33: #{raft_forward.12} parent=27 // pred_check
          %p208 = pneg %p92
        $region34: #{raft_forward.12} parent=27 // pred_check_branch
          %210 = sbr.rel (%p208) target = $region36
        $region35: #{raft_forward.12} parent=27 // pred_region
          %211 = dma.done %s204, 512
        $region36: #{raft_forward.12} parent=27 // pred_fallthru
          _
        %s212 = sand.u32 %s51, 1
        %s213 = scalar_lea.sflag [#allocation3], %s212
        %s214 = sand.u32 %s51, 1
        %s215 = smul.addr %s214, 32
        %s216 = scalar_lea.vmem [#allocation2], %s215
        %p217 = pneg %p64
        %p218 = pneg %p61
        %s219 = sand.u32 %s79, 1
        %s220 = scalar_lea.sflag [#allocation6], %s219
        %s221 = sand.u32 %s79, 1
        %s222 = smul.addr %s221, 32
        %s223 = scalar_lea.vmem [#allocation5], %s222
        %p224 = pneg %p92
        %p225 = pneg %p89
        %p226 = pneg %p122
        %p227 = pneg %p119
        %s228 = sand.u32 %s109, 1
        %s229 = scalar_lea.sflag [#allocation4], %s228
        %s230 = sand.u32 %s109, 1
        %s231 = smul.addr %s230, 32
        %s232 = scalar_lea.vmem [#allocation7], %s231
        %s233 = smul.u32 8, %s28
        %s234 = smul.u32 8, %s29
        %s235 = smul.u32 8, %s28
        %v237 = vld [vmem:[%s198] sm:$0xf]
        %v238 = vld [vmem:[%s198 + $0x4] sm:$0xf]
        %v239 = vld [vmem:[%s198 + $0x8] sm:$0xf]
        %v240 = vld [vmem:[%s198 + $0xc] sm:$0xf]
        %v241 = vld [vmem:[%s198 + $0x10] sm:$0xf]
        %v242 = vld [vmem:[%s198 + $0x14] sm:$0xf]
        %v243 = vld [vmem:[%s198 + $0x18] sm:$0xf]
        %v244 = vld [vmem:[%s198 + $0x1c] sm:$0xf]
        %v245 = vld [vmem:[%s207] sm:$0xf]
        %v246 = vld [vmem:[%s207 + $0x4] sm:$0xf]
        %v247 = vld [vmem:[%s207 + $0x8] sm:$0xf]
        %v248 = vld [vmem:[%s207 + $0xc] sm:$0xf]
        %v249 = vld [vmem:[%s207 + $0x10] sm:$0xf]
        %v250 = vld [vmem:[%s207 + $0x14] sm:$0xf]
        %v251 = vld [vmem:[%s207 + $0x18] sm:$0xf]
        %v252 = vld [vmem:[%s207 + $0x1c] sm:$0xf]
        %v261 = vunpack.c.l.b16 %v237
        %v262 = vunpack.c.l.b16 %v238
        %v263 = vunpack.c.l.b16 %v239
        %v264 = vunpack.c.l.b16 %v240
        %v265 = vunpack.c.l.b16 %v241
        %v266 = vunpack.c.l.b16 %v242
        %v267 = vunpack.c.l.b16 %v243
        %v268 = vunpack.c.l.b16 %v244
        %v269 = vpack.c.b16 %v262, %v261
        %v270 = vpack.c.b16 %v264, %v263
        %v271 = vpack.c.b16 %v266, %v265
        %v272 = vpack.c.b16 %v268, %v267
        %v285 = vunpack.c.l.b16 %v245
        %v286 = vunpack.c.l.b16 %v246
        %v287 = vunpack.c.l.b16 %v247
        %v288 = vunpack.c.l.b16 %v248
        %v289 = vunpack.c.l.b16 %v249
        %v290 = vunpack.c.l.b16 %v250
        %v291 = vunpack.c.l.b16 %v251
        %v292 = vunpack.c.l.b16 %v252
        %v293 = vpack.c.b16 %v286, %v285
        %v294 = vpack.c.b16 %v288, %v287
        %v295 = vpack.c.b16 %v290, %v289
        %v296 = vpack.c.b16 %v292, %v291
        %301 = vmatprep.subr.bf16.mxu0 0
        %302 = vmatpush1.bf16.xpose.msra.mxu0 %v293
        %303 = vmatprep.subr.bf16.mxu0 0
        %304 = vmatpush1.bf16.xpose.msra.mxu0 %v294
        %305 = vmatprep.subr.bf16.mxu0 0
        %306 = vmatpush1.bf16.xpose.msra.mxu0 %v295
        %307 = vmatprep.subr.bf16.mxu0 0
        %308 = vmatpush1.bf16.xpose.msra.mxu0 %v296
        %309 = vmatprep.subr.bf16.mxu0 0
        %310 = vmatpush1.bf16.xpose.msra.mxu0 0
        %311 = vmatprep.subr.bf16.mxu0 0
        %312 = vmatpush1.bf16.xpose.msra.mxu0 0
        %313 = vmatprep.subr.bf16.mxu0 0
        %314 = vmatpush1.bf16.xpose.msra.mxu0 0
        %315 = vmatprep.subr.bf16.mxu0 0
        %316 = vmatpush1.bf16.xpose.msra.mxu0 0
        %317 = vmatprep.subr.bf16.mxu0 0
        %318 = vmatpush1.bf16.xpose.msra.mxu0 0
        %319 = vmatprep.subr.bf16.mxu0 0
        %320 = vmatpush1.bf16.xpose.msra.mxu0 0
        %321 = vmatprep.subr.bf16.mxu0 0
        %322 = vmatpush1.bf16.xpose.msra.mxu0 0
        %323 = vmatprep.subr.bf16.mxu0 0
        %324 = vmatpush1.bf16.xpose.msra.mxu0 0
        %325 = vmatprep.subr.bf16.mxu0 0
        %326 = vmatpush1.bf16.xpose.msra.mxu0 0
        %327 = vmatprep.subr.bf16.mxu0 0
        %328 = vmatpush1.bf16.xpose.msra.mxu0 0
        %329 = vmatprep.subr.bf16.mxu0 0
        %330 = vmatpush1.bf16.xpose.msra.mxu0 0
        %331 = vmatprep.subr.bf16.mxu0 0
        %332 = vmatpush1.bf16.xpose.msra.mxu0 0
        %333 = vmatprep.mubr.bf16.mxu0 0
        %334 = vmatmul.mubr.bf16.gmra.mrb[0].mxu0 %v269
        %v335 = vpop.f32.mrb[0].mxu0
        %v336 = vadd.f32 0.0, %v335
        %v337 = vpop.f32.mrb[0].mxu0
        %v338 = vpop.f32.mrb[0].mxu0
        %v339 = vadd.f32 0.0, %v338
        %v340 = vpop.f32.mrb[0].mxu0
        %341 = vmatprep.mubr.bf16.mxu0 0
        %342 = vmatmul.mubr.bf16.gmra.mrb[0].mxu0 %v270
        %v343 = vpop.f32.mrb[0].mxu0
        %v344 = vadd.f32 0.0, %v343
        %v345 = vpop.f32.mrb[0].mxu0
        %v346 = vpop.f32.mrb[0].mxu0
        %v347 = vadd.f32 0.0, %v346
        %v348 = vpop.f32.mrb[0].mxu0
        %349 = vmatprep.mubr.bf16.mxu0 0
        %350 = vmatmul.mubr.bf16.gmra.mrb[0].mxu0 %v271
        %v351 = vpop.f32.mrb[0].mxu0
        %v352 = vadd.f32 0.0, %v351
        %v353 = vpop.f32.mrb[0].mxu0
        %v354 = vpop.f32.mrb[0].mxu0
        %v355 = vadd.f32 0.0, %v354
        %v356 = vpop.f32.mrb[0].mxu0
        %357 = vmatprep.mubr.bf16.mxu0 0
        %358 = vmatmul.mubr.bf16.gmra.mrb[0].mxu0 %v272
        %v359 = vpop.f32.mrb[0].mxu0
        %v360 = vadd.f32 0.0, %v359
        %v361 = vpop.f32.mrb[0].mxu0
        %v362 = vpop.f32.mrb[0].mxu0
        %v363 = vadd.f32 0.0, %v362
        %v364 = vpop.f32.mrb[0].mxu0
        %365 = vdwg.mxu0
        %v366 = vmul.f32 %v336, 0.088388346
        %v367 = vmul.f32 %v339, 0.088388346
        %v368 = vmul.f32 %v344, 0.088388346
        %v369 = vmul.f32 %v347, 0.088388346
        %v370 = vmul.f32 %v352, 0.088388346
        %v371 = vmul.f32 %v355, 0.088388346
        %v372 = vmul.f32 %v360, 0.088388346
        %v373 = vmul.f32 %v363, 0.088388346
        %v374 = vpack.c.bf16 %v367, %v366
        %v375 = vpack.c.bf16 %v369, %v368
        %v376 = vpack.c.bf16 %v371, %v370
        %v377 = vpack.c.bf16 %v373, %v372
        %v382 = vunpack.c.l.b16 %v374
        %v383 = vunpack.c.h.b16 %v374
        %v384 = vunpack.c.l.b16 %v375
        %v385 = vunpack.c.h.b16 %v375
        %v386 = vunpack.c.l.b16 %v376
        %v387 = vunpack.c.h.b16 %v376
        %v388 = vunpack.c.l.b16 %v377
        %v389 = vunpack.c.h.b16 %v377
        %v390 = vpack.c.b16 %v382, %v382
        %v391 = vpack.c.b16 %v383, %v383
        %v392 = vpack.c.b16 %v384, %v384
        %v393 = vpack.c.b16 %v385, %v385
        %v394 = vpack.c.b16 %v386, %v386
        %v395 = vpack.c.b16 %v387, %v387
        %v396 = vpack.c.b16 %v388, %v388
        %v397 = vpack.c.b16 %v389, %v389
        %vm406 = vcmask 519168
        %407 = vst.msk [vmem:[%s232] sm:$0xf] %vm406, %v390
        %408 = vst.msk [vmem:[%s232 + $0x4] sm:$0xf] %vm406, %v391
        %409 = vst.msk [vmem:[%s232 + $0x8] sm:$0xf] %vm406, %v392
        %410 = vst.msk [vmem:[%s232 + $0xc] sm:$0xf] %vm406, %v393
        %411 = vst.msk [vmem:[%s232 + $0x10] sm:$0xf] %vm406, %v394
        %412 = vst.msk [vmem:[%s232 + $0x14] sm:$0xf] %vm406, %v395
        %413 = vst.msk [vmem:[%s232 + $0x18] sm:$0xf] %vm406, %v396
        %414 = vst.msk [vmem:[%s232 + $0x1c] sm:$0xf] %vm406, %v397
        %s415 = sand.u32 %s109, 1
        %s416 = scalar_lea.sflag [#allocation4], %s415
        %s417 = sand.u32 %s109, 1
        %s418 = smul.addr %s417, 32
        %s419 = scalar_lea.vmem [#allocation7], %s418
        // Predicated region
        $region37: #{raft_forward.12} parent=27 // pred_check
          %p420 = pneg %p119
        $region38: #{raft_forward.12} parent=27 // pred_check_branch
          %422 = sbr.rel (%p420) target = $region40
        $region39: #{raft_forward.12} parent=27 // pred_region
          %s423 = smul.u32 8, %s28
          %s425 = ssub.s32 512, 512
          %426 = vsyncadd %s416, %s425
          %s427 = sadd.s32 %s29, %s423
          %s428 = smul.addr %s27, 8
          %s429 = sadd.s32 %s427, %s428
          %s430 = smul.addr %s429, 64
          %s431 = scalar_lea.hbm %s2, %s430
          %s432 = sshll.u32 %s419, 4
          %s433 = int_to_ptr.vmem [resolvable:$true] %s432
          %438 = dma.vmem_to_hbm [thread:$0]  %s433, 512, %s431, %s416, 64, 64, 4
        $region40: #{raft_forward.12} parent=27 // pred_fallthru
          _
      $region28: #{raft_forward.12} parent=5 // pred_fallthru
        _
      %p439 = scmp.le.s32.totalorder 2, %s17
      // Predicated region
      $region41: #{raft_forward.12} parent=5 // pred_check
        %p440 = pneg %p439
      $region42: #{raft_forward.12} parent=5 // pred_check_branch
        %442 = sbr.rel (%p440) target = $region44
      $region43: #{raft_forward.12} parent=5 // pred_region
        %s443 = ssub.s32 %s17, 2
        // Predicated region
        $region45: #{raft_forward.12} parent=43 // pred_check
          %p444 = pneg %p125
        $region46: #{raft_forward.12} parent=43 // pred_check_branch
          %446 = sbr.rel (%p444) target = $region48
        $region47: #{raft_forward.12} parent=43 // pred_region
          %s447 = sand.u32 %s110, 1
          %s448 = scalar_lea.sflag [#allocation4], %s447
          %s449 = sand.u32 %s110, 1
          %s450 = smul.addr %s449, 32
          %s451 = scalar_lea.vmem [#allocation7], %s450
          %452 = dma.done %s448, 512
        $region48: #{raft_forward.12} parent=43 // pred_fallthru
          _
      $region44: #{raft_forward.12} parent=5 // pred_fallthru
        _
    $region6: #{raft_forward.12} parent=1 // loop_footer
      %s21 = sadd.s32 1, %s17
    $region7: #{raft_forward.12} parent=1 // loop_footer_branch
      %16 = sbr.rel target = $region3
    $region8: #{raft_forward.12} parent=1 // loop_exit
      _
    %453 = vsyncpa [#allocation3], 1
    %s454 = scalar_lea.sflag [#allocation3], 1
    %455 = vsyncpa %s454, 1
    %456 = vsyncpa [#allocation6], 1
    %s457 = scalar_lea.sflag [#allocation6], 1
    %458 = vsyncpa %s457, 1
    %459 = vsyncpa [#allocation4], 1
    %s460 = scalar_lea.sflag [#allocation4], 1
    %461 = vsyncpa %s460, 1

// kernel: raft_forward.13
$region0: #{raft_forward.13}
  #allocation0 [shape = 'u32[]', space=smem, size = 0x4, offset = 0x4, fixed_abs, tag = 'smem constant byte address 0x4 - core index']
  #allocation1 [shape = 'u32[144,128]{1,0:T(1,128)}', space=vmem, size = 0x12000, scoped, tag = 'internal scratch']
  %s0 = inlined_call_operand.hbm [shape: bf16[128,192], index: 0, kind: input, shape index: {}]
  %s1 = inlined_call_operand.hbm [shape: bf16[192,160], index: 1, kind: input, shape index: {}]
  %s2 = inlined_call_operand.hbm [shape: f32[1,160], index: 2, kind: input, shape index: {}]
  %s3 = inlined_call_operand.hbm [shape: f32[128,96], index: 3, kind: output, shape index: {0}]
  %s4 = inlined_call_operand.hbm [shape: bf16[128,64], index: 4, kind: output, shape index: {1}]
  %5 = xla_tuple %s3, %s4
  %s6 = sld [smem:[#allocation0]]
  $region65: #{raft_forward.13} parent=0
    _
  %s8 = ssub.s32 1, %s6
  %s9 = scalar_select 0, %s8, %s6
  $region1: #{raft_forward.13} parent=0
    #allocation2 [shape = 'u8[65536]{0}', space=vmem, size = 0x10000, scoped, tag = 'input window, operand 0']
    #allocation3 [shape = 's32[2]{0}', space=sflag, size = 0x8, scoped, tag = 'scoped memory for raft_forward.13']
    #allocation4 [shape = 's32[2]{0}', space=sflag, size = 0x8, scoped, tag = 'scoped memory for raft_forward.13']
    #allocation5 [shape = 'u8[98304]{0}', space=vmem, size = 0x18000, scoped, tag = 'input window, operand 1, single buffered']
    #allocation6 [shape = 's32[1]{0}', space=sflag, size = 0x4, scoped, tag = 'scoped memory for raft_forward.13']
    #allocation7 [shape = 'u8[1024]{0}', space=vmem, size = 0x400, scoped, tag = 'input window, operand 2, single buffered']
    #allocation8 [shape = 'u8[65536]{0}', space=vmem, size = 0x10000, scoped, tag = 'output window, operand 0']
    #allocation9 [shape = 'u8[32768]{0}', space=vmem, size = 0x8000, scoped, tag = 'output window, operand 1']
    #allocation10 [shape = 's32[2]{0}', space=sflag, size = 0x8, scoped, tag = 'scoped memory for raft_forward.13']
    %10 = vsyncpa [#allocation3], 0
    %s11 = scalar_lea.sflag [#allocation3], 1
    %12 = vsyncpa %s11, 0
    %13 = vsyncpa [#allocation6], 0
    %14 = vsyncpa [#allocation4], 0
    %s15 = scalar_lea.sflag [#allocation4], 1
    %16 = vsyncpa %s15, 0
    %17 = vsyncpa [#allocation10], 0
    %s18 = scalar_lea.sflag [#allocation10], 1
    %19 = vsyncpa %s18, 0
    loop: start=0, step=1, limit=4
    $region2: #{raft_forward.13} parent=1 // loop_pre_header
      _
    $region3: #{raft_forward.13} parent=1 // loop_header
      %s21 = sphi 0, %s25
      %p22 = scmp.ge.s32.totalorder %s21, 4
      %s31 = sphi 0, %s33
      %s34 = sphi 0, %s31
      %s35 = sphi 0, %s34
      %s51 = sphi 0, %s35
      %s55 = sphi 0, %s55
      %s57 = sphi 0, %s55
      %s58 = sphi 0, %s57
      %s72 = sphi 0, %s58
      %s76 = sphi 0, %s76
      %s78 = sphi 0, %s76
      %s79 = sphi 0, %s78
      %s93 = sphi 0, %s79
      %s99 = sphi 0, %s101
      %s102 = sphi 0, %s99
      %s103 = sphi 0, %s102
      %s119 = sphi 0, %s103
      %s125 = sphi 0, %s127
      %s128 = sphi 0, %s125
      %s129 = sphi 0, %s128
      %s145 = sphi 0, %s129
    $region4: #{raft_forward.13} parent=1 // loop_header_branch
      %24 = sbr.rel (%p22) target = $region8
    $region5: #{raft_forward.13} parent=1 // loop_body
      %s26 = ssub.s32 %s21, 1
      %s27 = ssub.s32 %s21, 2
      %s28 = sadd.s32 %s21, 1
      %s29 = ssub.s32 %s21, %s28
      %p30 = scmp.eq.s32.totalorder %s29, 0
      %s32 = sadd.s32 %s31, 1
      %s33 = scalar_select %p30, %s31, %s32
      %p36 = pneg %p30
      %p37 = scmp.eq.s32.totalorder %s21, 1
      %p38 = por %p36, %p37
      %p39 = scmp.ne.s32.totalorder %s31, %s34
      %p40 = scmp.eq.s32.totalorder %s21, 0
      %p41 = por %p39, %p40
      %p42 = scmp.ne.s32.totalorder %s31, %s34
      %p43 = scmp.eq.s32.totalorder %s26, 1
      %p44 = por %p42, %p43
      %p45 = scmp.ne.s32.totalorder %s34, %s35
      %p46 = scmp.eq.s32.totalorder %s26, 0
      %p47 = por %p45, %p46
      %p48 = scmp.ne.s32.totalorder %s34, %s35
      %p49 = scmp.eq.s32.totalorder %s27, 1
      %p50 = por %p48, %p49
      %p52 = scmp.ne.s32.totalorder %s35, %s51
      %p53 = scmp.eq.s32.totalorder %s27, 0
      %p54 = por %p52, %p53
      %s56 = sadd.s32 %s55, 1
      %p59 = scmp.eq.s32.totalorder %s21, 1
      %p60 = scmp.ne.s32.totalorder %s55, %s57
      %p61 = scmp.eq.s32.totalorder %s21, 0
      %p62 = por %p60, %p61
      %p63 = scmp.ne.s32.totalorder %s55, %s57
      %p64 = scmp.eq.s32.totalorder %s26, 1
      %p65 = por %p63, %p64
      %p66 = scmp.ne.s32.totalorder %s57, %s58
      %p67 = scmp.eq.s32.totalorder %s26, 0
      %p68 = por %p66, %p67
      %p69 = scmp.ne.s32.totalorder %s57, %s58
      %p70 = scmp.eq.s32.totalorder %s27, 1
      %p71 = por %p69, %p70
      %p73 = scmp.ne.s32.totalorder %s58, %s72
      %p74 = scmp.eq.s32.totalorder %s27, 0
      %p75 = por %p73, %p74
      %s77 = sadd.s32 %s76, 1
      %p80 = scmp.eq.s32.totalorder %s21, 1
      %p81 = scmp.ne.s32.totalorder %s76, %s78
      %p82 = scmp.eq.s32.totalorder %s21, 0
      %p83 = por %p81, %p82
      %p84 = scmp.ne.s32.totalorder %s76, %s78
      %p85 = scmp.eq.s32.totalorder %s26, 1
      %p86 = por %p84, %p85
      %p87 = scmp.ne.s32.totalorder %s78, %s79
      %p88 = scmp.eq.s32.totalorder %s26, 0
      %p89 = por %p87, %p88
      %p90 = scmp.ne.s32.totalorder %s78, %s79
      %p91 = scmp.eq.s32.totalorder %s27, 1
      %p92 = por %p90, %p91
      %p94 = scmp.ne.s32.totalorder %s79, %s93
      %p95 = scmp.eq.s32.totalorder %s27, 0
      %p96 = por %p94, %p95
      %s97 = ssub.s32 %s21, %s28
      %p98 = scmp.eq.s32.totalorder %s97, 0
      %s100 = sadd.s32 %s99, 1
      %s101 = scalar_select %p98, %s99, %s100
      %p104 = pneg %p98
      %p105 = scmp.eq.s32.totalorder %s21, 1
      %p106 = por %p104, %p105
      %p107 = scmp.ne.s32.totalorder %s99, %s102
      %p108 = scmp.eq.s32.totalorder %s21, 0
      %p109 = por %p107, %p108
      %p110 = scmp.ne.s32.totalorder %s99, %s102
      %p111 = scmp.eq.s32.totalorder %s26, 1
      %p112 = por %p110, %p111
      %p113 = scmp.ne.s32.totalorder %s102, %s103
      %p114 = scmp.eq.s32.totalorder %s26, 0
      %p115 = por %p113, %p114
      %p116 = scmp.ne.s32.totalorder %s102, %s103
      %p117 = scmp.eq.s32.totalorder %s27, 1
      %p118 = por %p116, %p117
      %p120 = scmp.ne.s32.totalorder %s103, %s119
      %p121 = scmp.eq.s32.totalorder %s27, 0
      %p122 = por %p120, %p121
      %s123 = ssub.s32 %s21, %s28
      %p124 = scmp.eq.s32.totalorder %s123, 0
      %s126 = sadd.s32 %s125, 1
      %s127 = scalar_select %p124, %s125, %s126
      %p130 = pneg %p124
      %p131 = scmp.eq.s32.totalorder %s21, 1
      %p132 = por %p130, %p131
      %p133 = scmp.ne.s32.totalorder %s125, %s128
      %p134 = scmp.eq.s32.totalorder %s21, 0
      %p135 = por %p133, %p134
      %p136 = scmp.ne.s32.totalorder %s125, %s128
      %p137 = scmp.eq.s32.totalorder %s26, 1
      %p138 = por %p136, %p137
      %p139 = scmp.ne.s32.totalorder %s128, %s129
      %p140 = scmp.eq.s32.totalorder %s26, 0
      %p141 = por %p139, %p140
      %p142 = scmp.ne.s32.totalorder %s128, %s129
      %p143 = scmp.eq.s32.totalorder %s27, 1
      %p144 = por %p142, %p143
      %p146 = scmp.ne.s32.totalorder %s129, %s145
      %p147 = scmp.eq.s32.totalorder %s27, 0
      %p148 = por %p146, %p147
      %p149 = scmp.le.s32.totalorder 1, %s21
      %p150 = scmp.lt.s32.totalorder %s21, 3
      %p151 = pnand %p149, %p150
      %p152 = pneg %p151
      // Predicated region
      $region9: #{raft_forward.13} parent=5 // pred_check
        _
      $region10: #{raft_forward.13} parent=5 // pred_check_branch
        %154 = sbr.rel (%p151) target = $region12
      $region11: #{raft_forward.13} parent=5 // pred_region
        %s155 = ssub.s32 %s21, 1
        // Predicated region
        $region13: #{raft_forward.13} parent=11 // pred_check
          %p156 = pneg %p68
        $region14: #{raft_forward.13} parent=11 // pred_check_branch
          %158 = sbr.rel (%p156) target = $region16
        $region15: #{raft_forward.13} parent=11 // pred_region
          %s160 = ssub.s32 3072, 3072
          %161 = vsyncadd [#allocation6], %s160
          %s162 = sshll.u32 [#allocation5], 4
          %s163 = int_to_ptr.vmem [resolvable:$true] %s162
          %168 = dma.hbm_to_vmem [thread:$0]  %s1, 3072, %s163, [#allocation6], 128, 128, 8
        $region16: #{raft_forward.13} parent=11 // pred_fallthru
          _
        // Predicated region
        $region17: #{raft_forward.13} parent=11 // pred_check
          %p169 = pneg %p89
        $region18: #{raft_forward.13} parent=11 // pred_check_branch
          %171 = sbr.rel (%p169) target = $region20
        $region19: #{raft_forward.13} parent=11 // pred_region
          %s173 = ssub.s32 32, 32
          %174 = vsyncadd [#allocation6], %s173
          %s176 = sshll.u32 [#allocation7], 4
          %s177 = int_to_ptr.vmem [resolvable:$true] %s176
          %179 = dma.hbm_to_vmem [thread:$0]  %s2, 32, %s177, [#allocation6]
        $region20: #{raft_forward.13} parent=11 // pred_fallthru
          _
      $region12: #{raft_forward.13} parent=5 // pred_fallthru
        _
      %p180 = scmp.lt.s32.totalorder %s21, 2
      // Predicated region
      $region21: #{raft_forward.13} parent=5 // pred_check
        %p181 = pneg %p180
      $region22: #{raft_forward.13} parent=5 // pred_check_branch
        %183 = sbr.rel (%p181) target = $region24
      $region23: #{raft_forward.13} parent=5 // pred_region
        // Predicated region
        $region25: #{raft_forward.13} parent=23 // pred_check
          %p184 = pneg %p41
        $region26: #{raft_forward.13} parent=23 // pred_check_branch
          %186 = sbr.rel (%p184) target = $region28
        $region27: #{raft_forward.13} parent=23 // pred_region
          %s187 = sand.u32 %s31, 1
          %s188 = scalar_lea.sflag [#allocation3], %s187
          %s189 = sand.u32 %s31, 1
          %s190 = smul.addr %s189, 64
          %s191 = scalar_lea.vmem [#allocation2], %s190
          %s192 = smul.u32 8, %s21
          %s194 = ssub.s32 1024, 1024
          %195 = vsyncadd %s188, %s194
          %s196 = smul.addr %s192, 2
          %s197 = smul.addr %s196, 64
          %s198 = scalar_lea.hbm %s0, %s197
          %s199 = sshll.u32 %s191, 4
          %s200 = int_to_ptr.vmem [resolvable:$true] %s199
          %205 = dma.hbm_to_vmem [thread:$0]  %s198, 1024, %s200, %s188, 128, 128, 8
        $region28: #{raft_forward.13} parent=23 // pred_fallthru
          _
      $region24: #{raft_forward.13} parent=5 // pred_fallthru
        _
      %p206 = scmp.le.s32.totalorder 1, %s21
      %p207 = scmp.lt.s32.totalorder %s21, 3
      %p208 = pnand %p206, %p207
      %p209 = pneg %p208
      // Predicated region
      $region29: #{raft_forward.13} parent=5 // pred_check
        _
      $region30: #{raft_forward.13} parent=5 // pred_check_branch
        %211 = sbr.rel (%p208) target = $region32
      $region31: #{raft_forward.13} parent=5 // pred_region
        %s212 = ssub.s32 %s21, 1
        %s213 = sand.u32 %s34, 1
        %s214 = scalar_lea.sflag [#allocation3], %s213
        %s215 = sand.u32 %s34, 1
        %s216 = smul.addr %s215, 64
        %s217 = scalar_lea.vmem [#allocation2], %s216
        // Predicated region
        $region33: #{raft_forward.13} parent=31 // pred_check
          %p218 = pneg %p47
        $region34: #{raft_forward.13} parent=31 // pred_check_branch
          %220 = sbr.rel (%p218) target = $region36
        $region35: #{raft_forward.13} parent=31 // pred_region
          %221 = dma.done %s214, 1024
        $region36: #{raft_forward.13} parent=31 // pred_fallthru
          _
        // Predicated region
        $region37: #{raft_forward.13} parent=31 // pred_check
          %p222 = pneg %p68
        $region38: #{raft_forward.13} parent=31 // pred_check_branch
          %224 = sbr.rel (%p222) target = $region40
        $region39: #{raft_forward.13} parent=31 // pred_region
          %225 = dma.done [#allocation6], 3072
        $region40: #{raft_forward.13} parent=31 // pred_fallthru
          _
        // Predicated region
        $region41: #{raft_forward.13} parent=31 // pred_check
          %p226 = pneg %p89
        $region42: #{raft_forward.13} parent=31 // pred_check_branch
          %228 = sbr.rel (%p226) target = $region44
        $region43: #{raft_forward.13} parent=31 // pred_region
          %229 = dma.done [#allocation6], 32
        $region44: #{raft_forward.13} parent=31 // pred_fallthru
          _
        %s230 = sand.u32 %s34, 1
        %s231 = scalar_lea.sflag [#allocation3], %s230
        %s232 = sand.u32 %s34, 1
        %s233 = smul.addr %s232, 64
        %s234 = scalar_lea.vmem [#allocation2], %s233
        %p235 = pneg %p47
        %p236 = pneg %p44
        %p237 = pneg %p68
        %p238 = pneg %p65
        %p239 = pneg %p89
        %p240 = pneg %p86
        %p241 = pneg %p115
        %p242 = pneg %p112
        %s243 = sand.u32 %s102, 1
        %s244 = scalar_lea.sflag [#allocation4], %s243
        %s245 = sand.u32 %s102, 1
        %s246 = smul.addr %s245, 64
        %s247 = scalar_lea.vmem [#allocation8], %s246
        %p248 = pneg %p141
        %p249 = pneg %p138
        %s250 = sand.u32 %s128, 1
        %s251 = scalar_lea.sflag [#allocation10], %s250
        %s252 = sand.u32 %s128, 1
        %s253 = smul.addr %s252, 32
        %s254 = scalar_lea.vmem [#allocation9], %s253
        %s255 = smul.u32 8, %s26
        %s256 = smul.u32 8, %s26
        %s257 = smul.u32 8, %s26
        %v259 = vld [vmem:[%s217] sm:$0xff]
        %v260 = vld [vmem:[%s217 + $0x8] sm:$0xff]
        %v261 = vld [vmem:[%s217 + $0x10] sm:$0xff]
        %v262 = vld [vmem:[%s217 + $0x18] sm:$0xff]
        %v263 = vld [vmem:[%s217 + $0x20] sm:$0xff]
        %v264 = vld [vmem:[%s217 + $0x28] sm:$0xff]
        %v265 = vld [vmem:[%s217 + $0x30] sm:$0xff]
        %v266 = vld [vmem:[%s217 + $0x38] sm:$0xff]
        %v267 = vld [vmem:[#allocation5] sm:$0xff]
        %v268 = vld [vmem:[#allocation5 + $0x8] sm:$0xff]
        %v269 = vld [vmem:[#allocation5 + $0x10] sm:$0xff]
        %v270 = vld [vmem:[#allocation5 + $0x18] sm:$0xff]
        %v271 = vld [vmem:[#allocation5 + $0x20] sm:$0xff]
        %v272 = vld [vmem:[#allocation5 + $0x28] sm:$0xff]
        %v273 = vld [vmem:[#allocation5 + $0x30] sm:$0xff]
        %v274 = vld [vmem:[#allocation5 + $0x38] sm:$0xff]
        %v275 = vld [vmem:[#allocation5 + $0x40] sm:$0xff]
        %v276 = vld [vmem:[#allocation5 + $0x48] sm:$0xff]
        %v277 = vld [vmem:[#allocation5 + $0x50] sm:$0xff]
        %v278 = vld [vmem:[#allocation5 + $0x58] sm:$0xff]
        %v279 = vld [vmem:[#allocation5 + $0x60] sm:$0xff]
        %v280 = vld [vmem:[#allocation5 + $0x68] sm:$0xff]
        %v281 = vld [vmem:[#allocation5 + $0x70] sm:$0xff]
        %v282 = vld [vmem:[#allocation5 + $0x78] sm:$0xff]
        %v283 = vld [vmem:[#allocation5 + $0x80] sm:$0xff]
        %v284 = vld [vmem:[#allocation5 + $0x88] sm:$0xff]
        %v285 = vld [vmem:[#allocation5 + $0x90] sm:$0xff]
        %v286 = vld [vmem:[#allocation5 + $0x98] sm:$0xff]
        %v287 = vld [vmem:[#allocation5 + $0xa0] sm:$0xff]
        %v288 = vld [vmem:[#allocation5 + $0xa8] sm:$0xff]
        %v289 = vld [vmem:[#allocation5 + $0xb0] sm:$0xff]
        %v290 = vld [vmem:[#allocation5 + $0xb8] sm:$0xff]
        %v291 = vld [vmem:[#allocation7] sm:$0x3]
        %v293 = vlaneseq
        %v294 = vshrl.u32 %v293, 7
        %v295 = vsub.s32 0, %v294
        %v296 = vrot.slane %v291, %v295
        %v297 = vlaneseq
        %v298 = vshrl.u32 %v297, 7
        %v299 = vsub.s32 1, %v298
        %v300 = vrot.slane %v291, %v299
        %v311 = vunpack.c.l.b16 %v259
        %v312 = vunpack.c.h.b16 %v259
        %v313 = vunpack.c.l.b16 %v260
        %v314 = vunpack.c.h.b16 %v260
        %v315 = vunpack.c.l.b16 %v261
        %v316 = vunpack.c.h.b16 %v261
        %v317 = vunpack.c.l.b16 %v262
        %v318 = vunpack.c.h.b16 %v262
        %v319 = vunpack.c.l.b16 %v263
        %v320 = vunpack.c.h.b16 %v263
        %v321 = vunpack.c.l.b16 %v264
        %v322 = vunpack.c.h.b16 %v264
        %v323 = vunpack.c.l.b16 %v265
        %v324 = vunpack.c.h.b16 %v265
        %v325 = vunpack.c.l.b16 %v266
        %v326 = vunpack.c.h.b16 %v266
        %v327 = vpack.c.b16 %v313, %v311
        %v328 = vpack.c.b16 %v314, %v312
        %v329 = vpack.c.b16 %v317, %v315
        %v330 = vpack.c.b16 %v318, %v316
        %v331 = vpack.c.b16 %v321, %v319
        %v332 = vpack.c.b16 %v322, %v320
        %v333 = vpack.c.b16 %v325, %v323
        %v334 = vpack.c.b16 %v326, %v324
        %v363 = vunpack.c.l.b16 %v267
        %v364 = vunpack.c.h.b16 %v267
        %v365 = vunpack.c.l.b16 %v268
        %v366 = vunpack.c.h.b16 %v268
        %v367 = vunpack.c.l.b16 %v269
        %v368 = vunpack.c.h.b16 %v269
        %v369 = vunpack.c.l.b16 %v270
        %v370 = vunpack.c.h.b16 %v270
        %v371 = vunpack.c.l.b16 %v271
        %v372 = vunpack.c.h.b16 %v271
        %v373 = vunpack.c.l.b16 %v272
        %v374 = vunpack.c.h.b16 %v272
        %v375 = vunpack.c.l.b16 %v273
        %v376 = vunpack.c.h.b16 %v273
        %v377 = vunpack.c.l.b16 %v274
        %v378 = vunpack.c.h.b16 %v274
        %v379 = vunpack.c.l.b16 %v275
        %v380 = vunpack.c.h.b16 %v275
        %v381 = vunpack.c.l.b16 %v276
        %v382 = vunpack.c.h.b16 %v276
        %v383 = vunpack.c.l.b16 %v277
        %v384 = vunpack.c.h.b16 %v277
        %v385 = vunpack.c.l.b16 %v278
        %v386 = vunpack.c.h.b16 %v278
        %v387 = vunpack.c.l.b16 %v279
        %v388 = vunpack.c.h.b16 %v279
        %v389 = vunpack.c.l.b16 %v280
        %v390 = vunpack.c.h.b16 %v280
        %v391 = vunpack.c.l.b16 %v281
        %v392 = vunpack.c.h.b16 %v281
        %v393 = vunpack.c.l.b16 %v282
        %v394 = vunpack.c.h.b16 %v282
        %v395 = vunpack.c.l.b16 %v283
        %v396 = vunpack.c.h.b16 %v283
        %v397 = vunpack.c.l.b16 %v284
        %v398 = vunpack.c.h.b16 %v284
        %v399 = vunpack.c.l.b16 %v285
        %v400 = vunpack.c.h.b16 %v285
        %v401 = vunpack.c.l.b16 %v286
        %v402 = vunpack.c.h.b16 %v286
        %v403 = vunpack.c.l.b16 %v287
        %v404 = vunpack.c.h.b16 %v287
        %v405 = vunpack.c.l.b16 %v288
        %v406 = vunpack.c.h.b16 %v288
        %v407 = vunpack.c.l.b16 %v289
        %v408 = vunpack.c.h.b16 %v289
        %v409 = vunpack.c.l.b16 %v290
        %v410 = vunpack.c.h.b16 %v290
        %v411 = vpack.c.b16 %v365, %v363
        %v412 = vpack.c.b16 %v366, %v364
        %v413 = vpack.c.b16 %v369, %v367
        %v414 = vpack.c.b16 %v370, %v368
        %v415 = vpack.c.b16 %v373, %v371
        %v416 = vpack.c.b16 %v374, %v372
        %v417 = vpack.c.b16 %v377, %v375
        %v418 = vpack.c.b16 %v378, %v376
        %v419 = vpack.c.b16 %v381, %v379
        %v420 = vpack.c.b16 %v382, %v380
        %v421 = vpack.c.b16 %v385, %v383
        %v422 = vpack.c.b16 %v386, %v384
        %v423 = vpack.c.b16 %v389, %v387
        %v424 = vpack.c.b16 %v390, %v388
        %v425 = vpack.c.b16 %v393, %v391
        %v426 = vpack.c.b16 %v394, %v392
        %v427 = vpack.c.b16 %v397, %v395
        %v428 = vpack.c.b16 %v398, %v396
        %v429 = vpack.c.b16 %v401, %v399
        %v430 = vpack.c.b16 %v402, %v400
        %v431 = vpack.c.b16 %v405, %v403
        %v432 = vpack.c.b16 %v406, %v404
        %v433 = vpack.c.b16 %v409, %v407
        %v434 = vpack.c.b16 %v410, %v408
        %vm459 = vcmask 523264
        %v461 = vsel %vm459, %v328, 0
        %v464 = vsel %vm459, %v330, 0
        %v467 = vsel %vm459, %v332, 0
        %v470 = vsel %vm459, %v334, 0
        %472 = vmatprep.subr.bf16.mxu0 %v412
        %473 = vmatpush1.bf16.msra.mxu0 %v411
        %474 = vmatprep.subr.bf16.mxu0 %v414
        %475 = vmatpush1.bf16.msra.mxu0 %v413
        %476 = vmatprep.subr.bf16.mxu0 %v416
        %477 = vmatpush1.bf16.msra.mxu0 %v415
        %478 = vmatprep.subr.bf16.mxu0 %v418
        %479 = vmatpush1.bf16.msra.mxu0 %v417
        %480 = vmatprep.subr.bf16.mxu0 %v420
        %481 = vmatpush1.bf16.msra.mxu0 %v419
        %482 = vmatprep.subr.bf16.mxu0 %v422
        %483 = vmatpush1.bf16.msra.mxu0 %v421
        %484 = vmatprep.subr.bf16.mxu0 %v424
        %485 = vmatpush1.bf16.msra.mxu0 %v423
        %486 = vmatprep.subr.bf16.mxu0 %v426
        %487 = vmatpush1.bf16.msra.mxu0 %v425
        %488 = vmatprep.subr.bf16.mxu0 %v428
        %489 = vmatpush1.bf16.msra.mxu0 %v427
        %490 = vmatprep.subr.bf16.mxu0 %v430
        %491 = vmatpush1.bf16.msra.mxu0 %v429
        %492 = vmatprep.subr.bf16.mxu0 %v432
        %493 = vmatpush1.bf16.msra.mxu0 %v431
        %494 = vmatprep.subr.bf16.mxu0 %v434
        %495 = vmatpush1.bf16.msra.mxu0 %v433
        %496 = vmatprep.subr.bf16.mxu0 0
        %497 = vmatpush1.bf16.msra.mxu0 0
        %498 = vmatprep.subr.bf16.mxu0 0
        %499 = vmatpush1.bf16.msra.mxu0 0
        %500 = vmatprep.subr.bf16.mxu0 0
        %501 = vmatpush1.bf16.msra.mxu0 0
        %502 = vmatprep.subr.bf16.mxu0 0
        %503 = vmatpush1.bf16.msra.mxu0 0
        %504 = vmatprep.mubr.bf16.mxu0 %v461
        %505 = vmatmul.mubr.bf16.gmra.mrb[0].mxu0 %v327
        %v506 = vpop.f32.mrb[0].mxu0
        %v507 = vadd.f32 %v296, %v506
        %v508 = vpop.f32.mrb[0].mxu0
        %v509 = vadd.f32 %v300, %v508
        %v510 = vpop.f32.mrb[0].mxu0
        %v511 = vadd.f32 %v296, %v510
        %v512 = vpop.f32.mrb[0].mxu0
        %v513 = vadd.f32 %v300, %v512
        %514 = vmatprep.mubr.bf16.mxu0 %v464
        %515 = vmatmul.mubr.bf16.gmra.mrb[0].mxu0 %v329
        %v516 = vpop.f32.mrb[0].mxu0
        %v517 = vadd.f32 %v296, %v516
        %v518 = vpop.f32.mrb[0].mxu0
        %v519 = vadd.f32 %v300, %v518
        %v520 = vpop.f32.mrb[0].mxu0
        %v521 = vadd.f32 %v296, %v520
        %v522 = vpop.f32.mrb[0].mxu0
        %v523 = vadd.f32 %v300, %v522
        %524 = vmatprep.mubr.bf16.mxu0 %v467
        %525 = vmatmul.mubr.bf16.gmra.mrb[0].mxu0 %v331
        %v526 = vpop.f32.mrb[0].mxu0
        %v527 = vadd.f32 %v296, %v526
        %v528 = vpop.f32.mrb[0].mxu0
        %v529 = vadd.f32 %v300, %v528
        %v530 = vpop.f32.mrb[0].mxu0
        %v531 = vadd.f32 %v296, %v530
        %v532 = vpop.f32.mrb[0].mxu0
        %v533 = vadd.f32 %v300, %v532
        %534 = vmatprep.mubr.bf16.mxu0 %v470
        %535 = vmatmul.mubr.bf16.gmra.mrb[0].mxu0 %v333
        %v536 = vpop.f32.mrb[0].mxu0
        %v537 = vadd.f32 %v296, %v536
        %v538 = vpop.f32.mrb[0].mxu0
        %v539 = vadd.f32 %v300, %v538
        %v540 = vpop.f32.mrb[0].mxu0
        %v541 = vadd.f32 %v296, %v540
        %v542 = vpop.f32.mrb[0].mxu0
        %v543 = vadd.f32 %v300, %v542
        %544 = vdwg.mxu0
        %v545 = vtanh.pop %v507
        %v546 = vtanh.pop %v511
        %v547 = vtanh.pop %v517
        %v548 = vtanh.pop %v521
        %v549 = vtanh.pop %v527
        %v550 = vtanh.pop %v531
        %v551 = vtanh.pop %v537
        %v552 = vtanh.pop %v541
        %vm553 = vcmask 785408
        %554 = vst.msk [vmem:[%s247] sm:$0xff] %vm553, %v545
        %555 = vst.msk [vmem:[%s247 + $0x8] sm:$0xff] %vm553, %v546
        %556 = vst.msk [vmem:[%s247 + $0x10] sm:$0xff] %vm553, %v547
        %557 = vst.msk [vmem:[%s247 + $0x18] sm:$0xff] %vm553, %v548
        %558 = vst.msk [vmem:[%s247 + $0x20] sm:$0xff] %vm553, %v549
        %559 = vst.msk [vmem:[%s247 + $0x28] sm:$0xff] %vm553, %v550
        %560 = vst.msk [vmem:[%s247 + $0x30] sm:$0xff] %vm553, %v551
        %561 = vst.msk [vmem:[%s247 + $0x38] sm:$0xff] %vm553, %v552
        %v562 = vmax.f32 %v507, 0.0
        %v563 = vmax.f32 %v509, 0.0
        %v564 = vmax.f32 %v511, 0.0
        %v565 = vmax.f32 %v513, 0.0
        %v566 = vmax.f32 %v517, 0.0
        %v567 = vmax.f32 %v519, 0.0
        %v568 = vmax.f32 %v521, 0.0
        %v569 = vmax.f32 %v523, 0.0
        %v570 = vmax.f32 %v527, 0.0
        %v571 = vmax.f32 %v529, 0.0
        %v572 = vmax.f32 %v531, 0.0
        %v573 = vmax.f32 %v533, 0.0
        %v574 = vmax.f32 %v537, 0.0
        %v575 = vmax.f32 %v539, 0.0
        %v576 = vmax.f32 %v541, 0.0
        %v577 = vmax.f32 %v543, 0.0
        %v578 = vpack.c.bf16 %v564, %v562
        %v579 = vpack.c.bf16 %v565, %v563
        %v580 = vpack.c.bf16 %v568, %v566
        %v581 = vpack.c.bf16 %v569, %v567
        %v582 = vpack.c.bf16 %v572, %v570
        %v583 = vpack.c.bf16 %v573, %v571
        %v584 = vpack.c.bf16 %v576, %v574
        %v585 = vpack.c.bf16 %v577, %v575
        %v594 = vunpack.c.l.b16 %v578
        %v595 = vunpack.c.l.b16 %v579
        %v596 = vunpack.c.h.b16 %v578
        %v597 = vunpack.c.h.b16 %v579
        %v598 = vunpack.c.l.b16 %v580
        %v599 = vunpack.c.l.b16 %v581
        %v600 = vunpack.c.h.b16 %v580
        %v601 = vunpack.c.h.b16 %v581
        %v602 = vunpack.c.l.b16 %v582
        %v603 = vunpack.c.l.b16 %v583
        %v604 = vunpack.c.h.b16 %v582
        %v605 = vunpack.c.h.b16 %v583
        %v606 = vunpack.c.l.b16 %v584
        %v607 = vunpack.c.l.b16 %v585
        %v608 = vunpack.c.h.b16 %v584
        %v609 = vunpack.c.h.b16 %v585
        %v610 = vpack.c.b16 %v595, %v594
        %v611 = vpack.c.b16 %v597, %v596
        %v612 = vpack.c.b16 %v599, %v598
        %v613 = vpack.c.b16 %v601, %v600
        %v614 = vpack.c.b16 %v603, %v602
        %v615 = vpack.c.b16 %v605, %v604
        %v616 = vpack.c.b16 %v607, %v606
        %v617 = vpack.c.b16 %v609, %v608
        %618 = vrot.lane.b32.xlu0 %v610, 32
        %v619 = vpop.permute.xlu0 %618
        %620 = vrot.lane.b32.xlu0 %v611, 32
        %v621 = vpop.permute.xlu0 %620
        %622 = vrot.lane.b32.xlu0 %v612, 32
        %v623 = vpop.permute.xlu0 %622
        %624 = vrot.lane.b32.xlu0 %v613, 32
        %v625 = vpop.permute.xlu0 %624
        %626 = vrot.lane.b32.xlu0 %v614, 32
        %v627 = vpop.permute.xlu0 %626
        %628 = vrot.lane.b32.xlu0 %v615, 32
        %v629 = vpop.permute.xlu0 %628
        %630 = vrot.lane.b32.xlu0 %v616, 32
        %v631 = vpop.permute.xlu0 %630
        %632 = vrot.lane.b32.xlu0 %v617, 32
        %v633 = vpop.permute.xlu0 %632
        %v634 = vrot.slane %v619, 4
        %v635 = vrot.slane %v621, 4
        %v636 = vrot.slane %v623, 4
        %v637 = vrot.slane %v625, 4
        %v638 = vrot.slane %v627, 4
        %v639 = vrot.slane %v629, 4
        %v640 = vrot.slane %v631, 4
        %v641 = vrot.slane %v633, 4
        %vm642 = vcmask 261120
        %v643 = vsel %vm642, %v619, %v634
        %v644 = vsel %vm642, %v621, %v635
        %v645 = vsel %vm642, %v623, %v636
        %v646 = vsel %vm642, %v625, %v637
        %v647 = vsel %vm642, %v627, %v638
        %v648 = vsel %vm642, %v629, %v639
        %v649 = vsel %vm642, %v631, %v640
        %v650 = vsel %vm642, %v633, %v641
        %vm659 = vcmask 519168
        %660 = vst.msk [vmem:[%s254] sm:$0xf] %vm659, %v643
        %661 = vst.msk [vmem:[%s254 + $0x4] sm:$0xf] %vm659, %v644
        %662 = vst.msk [vmem:[%s254 + $0x8] sm:$0xf] %vm659, %v645
        %663 = vst.msk [vmem:[%s254 + $0xc] sm:$0xf] %vm659, %v646
        %664 = vst.msk [vmem:[%s254 + $0x10] sm:$0xf] %vm659, %v647
        %665 = vst.msk [vmem:[%s254 + $0x14] sm:$0xf] %vm659, %v648
        %666 = vst.msk [vmem:[%s254 + $0x18] sm:$0xf] %vm659, %v649
        %667 = vst.msk [vmem:[%s254 + $0x1c] sm:$0xf] %vm659, %v650
        %s668 = sand.u32 %s102, 1
        %s669 = scalar_lea.sflag [#allocation4], %s668
        %s670 = sand.u32 %s102, 1
        %s671 = smul.addr %s670, 64
        %s672 = scalar_lea.vmem [#allocation8], %s671
        %s673 = sand.u32 %s128, 1
        %s674 = scalar_lea.sflag [#allocation10], %s673
        %s675 = sand.u32 %s128, 1
        %s676 = smul.addr %s675, 32
        %s677 = scalar_lea.vmem [#allocation9], %s676
        // Predicated region
        $region45: #{raft_forward.13} parent=31 // pred_check
          %p678 = pneg %p112
        $region46: #{raft_forward.13} parent=31 // pred_check_branch
          %680 = sbr.rel (%p678) target = $region48
        $region47: #{raft_forward.13} parent=31 // pred_region
          %s681 = smul.u32 8, %s26
          %s683 = ssub.s32 1024, 1024
          %684 = vsyncadd %s669, %s683
          %s685 = smul.addr %s681, 128
          %s686 = scalar_lea.hbm %s3, %s685
          %s687 = sshll.u32 %s672, 4
          %s688 = int_to_ptr.vmem [resolvable:$true] %s687
          %693 = dma.vmem_to_hbm [thread:$0]  %s688, 1024, %s686, %s669, 128, 128, 8
        $region48: #{raft_forward.13} parent=31 // pred_fallthru
          _
        // Predicated region
        $region49: #{raft_forward.13} parent=31 // pred_check
          %p694 = pneg %p138
        $region50: #{raft_forward.13} parent=31 // pred_check_branch
          %696 = sbr.rel (%p694) target = $region52
        $region51: #{raft_forward.13} parent=31 // pred_region
          %s697 = smul.u32 8, %s26
          %s699 = ssub.s32 512, 512
          %700 = vsyncadd %s674, %s699
          %s701 = smul.addr %s697, 64
          %s702 = scalar_lea.hbm %s4, %s701
          %s703 = sshll.u32 %s677, 4
          %s704 = int_to_ptr.vmem [resolvable:$true] %s703
          %709 = dma.vmem_to_hbm [thread:$0]  %s704, 512, %s702, %s674, 64, 64, 4
        $region52: #{raft_forward.13} parent=31 // pred_fallthru
          _
      $region32: #{raft_forward.13} parent=5 // pred_fallthru
        _
      %p710 = scmp.le.s32.totalorder 2, %s21
      // Predicated region
      $region53: #{raft_forward.13} parent=5 // pred_check
        %p711 = pneg %p710
      $region54: #{raft_forward.13} parent=5 // pred_check_branch
        %713 = sbr.rel (%p711) target = $region56
      $region55: #{raft_forward.13} parent=5 // pred_region
        %s714 = ssub.s32 %s21, 2
        // Predicated region
        $region57: #{raft_forward.13} parent=55 // pred_check
          %p715 = pneg %p118
        $region58: #{raft_forward.13} parent=55 // pred_check_branch
          %717 = sbr.rel (%p715) target = $region60
        $region59: #{raft_forward.13} parent=55 // pred_region
          %s718 = sand.u32 %s103, 1
          %s719 = scalar_lea.sflag [#allocation4], %s718
          %s720 = sand.u32 %s103, 1
          %s721 = smul.addr %s720, 64
          %s722 = scalar_lea.vmem [#allocation8], %s721
          %723 = dma.done %s719, 1024
        $region60: #{raft_forward.13} parent=55 // pred_fallthru
          _
        // Predicated region
        $region61: #{raft_forward.13} parent=55 // pred_check
          %p724 = pneg %p144
        $region62: #{raft_forward.13} parent=55 // pred_check_branch
          %726 = sbr.rel (%p724) target = $region64
        $region63: #{raft_forward.13} parent=55 // pred_region
          %s727 = sand.u32 %s129, 1
          %s728 = scalar_lea.sflag [#allocation10], %s727
          %s729 = sand.u32 %s129, 1
          %s730 = smul.addr %s729, 32
          %s731 = scalar_lea.vmem [#allocation9], %s730
          %732 = dma.done %s728, 512
        $region64: #{raft_forward.13} parent=55 // pred_fallthru
          _
      $region56: #{raft_forward.13} parent=5 // pred_fallthru
        _
    $region6: #{raft_forward.13} parent=1 // loop_footer
      %s25 = sadd.s32 1, %s21
    $region7: #{raft_forward.13} parent=1 // loop_footer_branch
      %20 = sbr.rel target = $region3
    $region8: #{raft_forward.13} parent=1 // loop_exit
      _
    %733 = vsyncpa [#allocation3], 1
    %s734 = scalar_lea.sflag [#allocation3], 1
    %735 = vsyncpa %s734, 1
    %736 = vsyncpa [#allocation6], 1
    %737 = vsyncpa [#allocation4], 1
    %s738 = scalar_lea.sflag [#allocation4], 1
    %739 = vsyncpa %s738, 1
    %740 = vsyncpa [#allocation10], 1
    %s741 = scalar_lea.sflag [#allocation10], 1
    %742 = vsyncpa %s741, 1

// kernel: raft_forward.14
$region0: #{raft_forward.14}
  #allocation0 [shape = 'u32[]', space=smem, size = 0x4, offset = 0x4, fixed_abs, tag = 'smem constant byte address 0x4 - core index']
  #allocation1 [shape = 'u32[144,128]{1,0:T(1,128)}', space=vmem, size = 0x12000, scoped, tag = 'internal scratch']
  %s0 = inlined_call_operand.hbm [shape: bf16[128,196], index: 0, kind: input, shape index: {}]
  %s1 = inlined_call_operand.hbm [shape: f32[128,96], index: 1, kind: input, shape index: {}, may-alias: {1,22}]
  %s2 = inlined_call_operand.hbm [shape: bf16[128,64], index: 2, kind: input, shape index: {}]
  %s3 = inlined_call_operand.hbm [shape: f32[128,2], index: 3, kind: input, shape index: {}]
  %s4 = inlined_call_operand.hbm [shape: f32[128,2], index: 4, kind: input, shape index: {}, may-alias: {4,24}]
  %s5 = inlined_call_operand.hbm [shape: bf16[196,96], index: 5, kind: input, shape index: {}]
  %s6 = inlined_call_operand.hbm [shape: f32[1,96], index: 6, kind: input, shape index: {}]
  %s7 = inlined_call_operand.hbm [shape: f32[2,64], index: 7, kind: input, shape index: {}]
  %s8 = inlined_call_operand.hbm [shape: f32[1,64], index: 8, kind: input, shape index: {}]
  %s9 = inlined_call_operand.hbm [shape: bf16[160,80], index: 9, kind: input, shape index: {}]
  %s10 = inlined_call_operand.hbm [shape: f32[1,80], index: 10, kind: input, shape index: {}]
  %s11 = inlined_call_operand.hbm [shape: bf16[256,384], index: 11, kind: input, shape index: {}]
  %s12 = inlined_call_operand.hbm [shape: f32[1,96], index: 12, kind: input, shape index: {}]
  %s13 = inlined_call_operand.hbm [shape: f32[1,96], index: 13, kind: input, shape index: {}]
  %s14 = inlined_call_operand.hbm [shape: f32[1,96], index: 14, kind: input, shape index: {}]
  %s15 = inlined_call_operand.hbm [shape: bf16[96,96], index: 15, kind: input, shape index: {}]
  %s16 = inlined_call_operand.hbm [shape: bf16[96,256], index: 16, kind: input, shape index: {}]
  %s17 = inlined_call_operand.hbm [shape: f32[1,256], index: 17, kind: input, shape index: {}]
  %s18 = inlined_call_operand.hbm [shape: bf16[128,9], index: 18, kind: input, shape index: {}]
  %s19 = inlined_call_operand.hbm [shape: f32[1,9], index: 19, kind: input, shape index: {}]
  %s20 = inlined_call_operand.hbm [shape: bf16[128,576], index: 20, kind: input, shape index: {}]
  %s21 = inlined_call_operand.hbm [shape: f32[1,576], index: 21, kind: input, shape index: {}]
  %s22 = inlined_call_operand.hbm [shape: f32[128,96], index: 22, kind: output, shape index: {0}, may-alias: {1,22}]
  %s23 = inlined_call_operand.hbm [shape: bf16[128,576], index: 23, kind: output, shape index: {1}]
  %s24 = inlined_call_operand.hbm [shape: f32[128,2], index: 24, kind: output, shape index: {2}, may-alias: {4,24}]
  %25 = xla_tuple %s22, %s23, %s24
  %s26 = sld [smem:[#allocation0]]
  $region225: #{raft_forward.14} parent=0
    _
  %s28 = ssub.s32 1, %s26
  %s29 = scalar_select 0, %s28, %s26
  $region1: #{raft_forward.14} parent=0
    #allocation2 [shape = 'u8[65536]{0}', space=vmem, size = 0x10000, scoped, tag = 'input window, operand 0']
    #allocation3 [shape = 's32[2]{0}', space=sflag, size = 0x8, scoped, tag = 'scoped memory for raft_forward.14']
    #allocation4 [shape = 's32[2]{0}', space=sflag, size = 0x8, scoped, tag = 'scoped memory for raft_forward.14']
    #allocation5 [shape = 'u8[65536]{0}', space=vmem, size = 0x10000, scoped, tag = 'input window, operand 1']
    #allocation6 [shape = 's32[2]{0}', space=sflag, size = 0x8, scoped, tag = 'scoped memory for raft_forward.14']
    #allocation7 [shape = 'u8[32768]{0}', space=vmem, size = 0x8000, scoped, tag = 'input window, operand 2']
    #allocation8 [shape = 'u8[65536]{0}', space=vmem, size = 0x10000, scoped, tag = 'input window, operand 3']
    #allocation9 [shape = 's32[2]{0}', space=sflag, size = 0x8, scoped, tag = 'scoped memory for raft_forward.14']
    #allocation10 [shape = 'u8[65536]{0}', space=vmem, size = 0x10000, scoped, tag = 'input window, operand 4']
    #allocation11 [shape = 'u8[51200]{0}', space=vmem, size = 0xc800, scoped, tag = 'input window, operand 5, single buffered']
    #allocation12 [shape = 's32[1]{0}', space=sflag, size = 0x4, scoped, tag = 'scoped memory for raft_forward.14']
    #allocation13 [shape = 'u8[512]{0}', space=vmem, size = 0x400, scoped, tag = 'input window, operand 6, single buffered']
    #allocation14 [shape = 'u8[1024]{0}', space=vmem, size = 0x400, scoped, tag = 'input window, operand 7, single buffered']
    #allocation15 [shape = 's32[1]{0}', space=sflag, size = 0x4, scoped, tag = 'scoped memory for raft_forward.14']
    #allocation16 [shape = 'u8[512]{0}', space=vmem, size = 0x400, scoped, tag = 'input window, operand 8, single buffered']
    #allocation17 [shape = 'u8[40960]{0}', space=vmem, size = 0xa000, scoped, tag = 'input window, operand 9, single buffered']
    #allocation18 [shape = 's32[1]{0}', space=sflag, size = 0x4, scoped, tag = 'scoped memory for raft_forward.14']
    #allocation19 [shape = 'u8[512]{0}', space=vmem, size = 0x400, scoped, tag = 'input window, operand 10, single buffered']
    #allocation20 [shape = 'u8[196608]{0}', space=vmem, size = 0x30000, scoped, tag = 'input window, operand 11, single buffered']
    #allocation21 [shape = 's32[1]{0}', space=sflag, size = 0x4, scoped, tag = 'scoped memory for raft_forward.14']
    #allocation22 [shape = 'u8[512]{0}', space=vmem, size = 0x400, scoped, tag = 'input window, operand 12, single buffered']
    #allocation23 [shape = 'u8[512]{0}', space=vmem, size = 0x400, scoped, tag = 'input window, operand 13, single buffered']
    #allocation24 [shape = 's32[1]{0}', space=sflag, size = 0x4, scoped, tag = 'scoped memory for raft_forward.14']
    #allocation25 [shape = 'u8[512]{0}', space=vmem, size = 0x400, scoped, tag = 'input window, operand 14, single buffered']
    #allocation26 [shape = 'u8[24576]{0}', space=vmem, size = 0x6000, scoped, tag = 'input window, operand 15, single buffered']
    #allocation27 [shape = 's32[1]{0}', space=sflag, size = 0x4, scoped, tag = 'scoped memory for raft_forward.14']
    #allocation28 [shape = 'u8[49152]{0}', space=vmem, size = 0xc000, scoped, tag = 'input window, operand 16, single buffered']
    #allocation29 [shape = 'u8[1024]{0}', space=vmem, size = 0x400, scoped, tag = 'input window, operand 17, single buffered']
    #allocation30 [shape = 's32[1]{0}', space=sflag, size = 0x4, scoped, tag = 'scoped memory for raft_forward.14']
    #allocation31 [shape = 'u8[32768]{0}', space=vmem, size = 0x8000, scoped, tag = 'input window, operand 18, single buffered']
    #allocation32 [shape = 'u8[512]{0}', space=vmem, size = 0x400, scoped, tag = 'input window, operand 19, single buffered']
    #allocation33 [shape = 's32[1]{0}', space=sflag, size = 0x4, scoped, tag = 'scoped memory for raft_forward.14']
    #allocation34 [shape = 'u8[163840]{0}', space=vmem, size = 0x28000, scoped, tag = 'input window, operand 20, single buffered']
    #allocation35 [shape = 'u8[2560]{0}', space=vmem, size = 0xc00, scoped, tag = 'input window, operand 21, single buffered']
    #allocation36 [shape = 's32[1]{0}', space=sflag, size = 0x4, scoped, tag = 'scoped memory for raft_forward.14']
    #allocation37 [shape = 'u8[65536]{0}', space=vmem, size = 0x10000, scoped, tag = 'output window, operand 0']
    #allocation38 [shape = 'u8[163840]{0}', space=vmem, size = 0x28000, scoped, tag = 'output window, operand 1']
    #allocation39 [shape = 's32[2]{0}', space=sflag, size = 0x8, scoped, tag = 'scoped memory for raft_forward.14']
    #allocation40 [shape = 'u8[65536]{0}', space=vmem, size = 0x10000, scoped, tag = 'output window, operand 2']
    %30 = vsyncpa [#allocation3], 0
    %s31 = scalar_lea.sflag [#allocation3], 1
    %32 = vsyncpa %s31, 0
    %33 = vsyncpa [#allocation6], 0
    %s34 = scalar_lea.sflag [#allocation6], 1
    %35 = vsyncpa %s34, 0
    %36 = vsyncpa [#allocation9], 0
    %s37 = scalar_lea.sflag [#allocation9], 1
    %38 = vsyncpa %s37, 0
    %39 = vsyncpa [#allocation12], 0
    %40 = vsyncpa [#allocation15], 0
    %41 = vsyncpa [#allocation18], 0
    %42 = vsyncpa [#allocation21], 0
    %43 = vsyncpa [#allocation24], 0
    %44 = vsyncpa [#allocation27], 0
    %45 = vsyncpa [#allocation30], 0
    %46 = vsyncpa [#allocation33], 0
    %47 = vsyncpa [#allocation36], 0
    %48 = vsyncpa [#allocation4], 0
    %s49 = scalar_lea.sflag [#allocation4], 1
    %50 = vsyncpa %s49, 0
    %51 = vsyncpa [#allocation39], 0
    %s52 = scalar_lea.sflag [#allocation39], 1
    %53 = vsyncpa %s52, 0
    loop: start=0, step=1, limit=4
    $region2: #{raft_forward.14} parent=1 // loop_pre_header
      _
    $region3: #{raft_forward.14} parent=1 // loop_header
      %s55 = sphi 0, %s59
      %p56 = scmp.ge.s32.totalorder %s55, 4
      %s65 = sphi 0, %s67
      %s68 = sphi 0, %s65
      %s69 = sphi 0, %s68
      %s85 = sphi 0, %s69
      %s91 = sphi 0, %s93
      %s94 = sphi 0, %s91
      %s95 = sphi 0, %s94
      %s111 = sphi 0, %s95
      %s117 = sphi 0, %s119
      %s120 = sphi 0, %s117
      %s121 = sphi 0, %s120
      %s137 = sphi 0, %s121
      %s143 = sphi 0, %s145
      %s146 = sphi 0, %s143
      %s147 = sphi 0, %s146
      %s163 = sphi 0, %s147
      %s169 = sphi 0, %s171
      %s172 = sphi 0, %s169
      %s173 = sphi 0, %s172
      %s189 = sphi 0, %s173
      %s193 = sphi 0, %s193
      %s195 = sphi 0, %s193
      %s196 = sphi 0, %s195
      %s210 = sphi 0, %s196
      %s214 = sphi 0, %s214
      %s216 = sphi 0, %s214
      %s217 = sphi 0, %s216
      %s231 = sphi 0, %s217
      %s235 = sphi 0, %s235
      %s237 = sphi 0, %s235
      %s238 = sphi 0, %s237
      %s252 = sphi 0, %s238
      %s256 = sphi 0, %s256
      %s258 = sphi 0, %s256
      %s259 = sphi 0, %s258
      %s273 = sphi 0, %s259
      %s277 = sphi 0, %s277
      %s279 = sphi 0, %s277
      %s280 = sphi 0, %s279
      %s294 = sphi 0, %s280
      %s298 = sphi 0, %s298
      %s300 = sphi 0, %s298
      %s301 = sphi 0, %s300
      %s315 = sphi 0, %s301
      %s319 = sphi 0, %s319
      %s321 = sphi 0, %s319
      %s322 = sphi 0, %s321
      %s336 = sphi 0, %s322
      %s340 = sphi 0, %s340
      %s342 = sphi 0, %s340
      %s343 = sphi 0, %s342
      %s357 = sphi 0, %s343
      %s361 = sphi 0, %s361
      %s363 = sphi 0, %s361
      %s364 = sphi 0, %s363
      %s378 = sphi 0, %s364
      %s382 = sphi 0, %s382
      %s384 = sphi 0, %s382
      %s385 = sphi 0, %s384
      %s399 = sphi 0, %s385
      %s403 = sphi 0, %s403
      %s405 = sphi 0, %s403
      %s406 = sphi 0, %s405
      %s420 = sphi 0, %s406
      %s424 = sphi 0, %s424
      %s426 = sphi 0, %s424
      %s427 = sphi 0, %s426
      %s441 = sphi 0, %s427
      %s445 = sphi 0, %s445
      %s447 = sphi 0, %s445
      %s448 = sphi 0, %s447
      %s462 = sphi 0, %s448
      %s466 = sphi 0, %s466
      %s468 = sphi 0, %s466
      %s469 = sphi 0, %s468
      %s483 = sphi 0, %s469
      %s487 = sphi 0, %s487
      %s489 = sphi 0, %s487
      %s490 = sphi 0, %s489
      %s504 = sphi 0, %s490
      %s508 = sphi 0, %s508
      %s510 = sphi 0, %s508
      %s511 = sphi 0, %s510
      %s525 = sphi 0, %s511
      %s529 = sphi 0, %s529
      %s531 = sphi 0, %s529
      %s532 = sphi 0, %s531
      %s546 = sphi 0, %s532
      %s552 = sphi 0, %s554
      %s555 = sphi 0, %s552
      %s556 = sphi 0, %s555
      %s572 = sphi 0, %s556
      %s578 = sphi 0, %s580
      %s581 = sphi 0, %s578
      %s582 = sphi 0, %s581
      %s598 = sphi 0, %s582
      %s604 = sphi 0, %s606
      %s607 = sphi 0, %s604
      %s608 = sphi 0, %s607
      %s624 = sphi 0, %s608
    $region4: #{raft_forward.14} parent=1 // loop_header_branch
      %58 = sbr.rel (%p56) target = $region8
    $region5: #{raft_forward.14} parent=1 // loop_body
      %s60 = ssub.s32 %s55, 1
      %s61 = ssub.s32 %s55, 2
      %s62 = sadd.s32 %s55, 1
      %s63 = ssub.s32 %s55, %s62
      %p64 = scmp.eq.s32.totalorder %s63, 0
      %s66 = sadd.s32 %s65, 1
      %s67 = scalar_select %p64, %s65, %s66
      %p70 = pneg %p64
      %p71 = scmp.eq.s32.totalorder %s55, 1
      %p72 = por %p70, %p71
      %p73 = scmp.ne.s32.totalorder %s65, %s68
      %p74 = scmp.eq.s32.totalorder %s55, 0
      %p75 = por %p73, %p74
      %p76 = scmp.ne.s32.totalorder %s65, %s68
      %p77 = scmp.eq.s32.totalorder %s60, 1
      %p78 = por %p76, %p77
      %p79 = scmp.ne.s32.totalorder %s68, %s69
      %p80 = scmp.eq.s32.totalorder %s60, 0
      %p81 = por %p79, %p80
      %p82 = scmp.ne.s32.totalorder %s68, %s69
      %p83 = scmp.eq.s32.totalorder %s61, 1
      %p84 = por %p82, %p83
      %p86 = scmp.ne.s32.totalorder %s69, %s85
      %p87 = scmp.eq.s32.totalorder %s61, 0
      %p88 = por %p86, %p87
      %s89 = ssub.s32 %s55, %s62
      %p90 = scmp.eq.s32.totalorder %s89, 0
      %s92 = sadd.s32 %s91, 1
      %s93 = scalar_select %p90, %s91, %s92
      %p96 = pneg %p90
      %p97 = scmp.eq.s32.totalorder %s55, 1
      %p98 = por %p96, %p97
      %p99 = scmp.ne.s32.totalorder %s91, %s94
      %p100 = scmp.eq.s32.totalorder %s55, 0
      %p101 = por %p99, %p100
      %p102 = scmp.ne.s32.totalorder %s91, %s94
      %p103 = scmp.eq.s32.totalorder %s60, 1
      %p104 = por %p102, %p103
      %p105 = scmp.ne.s32.totalorder %s94, %s95
      %p106 = scmp.eq.s32.totalorder %s60, 0
      %p107 = por %p105, %p106
      %p108 = scmp.ne.s32.totalorder %s94, %s95
      %p109 = scmp.eq.s32.totalorder %s61, 1
      %p110 = por %p108, %p109
      %p112 = scmp.ne.s32.totalorder %s95, %s111
      %p113 = scmp.eq.s32.totalorder %s61, 0
      %p114 = por %p112, %p113
      %s115 = ssub.s32 %s55, %s62
      %p116 = scmp.eq.s32.totalorder %s115, 0
      %s118 = sadd.s32 %s117, 1
      %s119 = scalar_select %p116, %s117, %s118
      %p122 = pneg %p116
      %p123 = scmp.eq.s32.totalorder %s55, 1
      %p124 = por %p122, %p123
      %p125 = scmp.ne.s32.totalorder %s117, %s120
      %p126 = scmp.eq.s32.totalorder %s55, 0
      %p127 = por %p125, %p126
      %p128 = scmp.ne.s32.totalorder %s117, %s120
      %p129 = scmp.eq.s32.totalorder %s60, 1
      %p130 = por %p128, %p129
      %p131 = scmp.ne.s32.totalorder %s120, %s121
      %p132 = scmp.eq.s32.totalorder %s60, 0
      %p133 = por %p131, %p132
      %p134 = scmp.ne.s32.totalorder %s120, %s121
      %p135 = scmp.eq.s32.totalorder %s61, 1
      %p136 = por %p134, %p135
      %p138 = scmp.ne.s32.totalorder %s121, %s137
      %p139 = scmp.eq.s32.totalorder %s61, 0
      %p140 = por %p138, %p139
      %s141 = ssub.s32 %s55, %s62
      %p142 = scmp.eq.s32.totalorder %s141, 0
      %s144 = sadd.s32 %s143, 1
      %s145 = scalar_select %p142, %s143, %s144
      %p148 = pneg %p142
      %p149 = scmp.eq.s32.totalorder %s55, 1
      %p150 = por %p148, %p149
      %p151 = scmp.ne.s32.totalorder %s143, %s146
      %p152 = scmp.eq.s32.totalorder %s55, 0
      %p153 = por %p151, %p152
      %p154 = scmp.ne.s32.totalorder %s143, %s146
      %p155 = scmp.eq.s32.totalorder %s60, 1
      %p156 = por %p154, %p155
      %p157 = scmp.ne.s32.totalorder %s146, %s147
      %p158 = scmp.eq.s32.totalorder %s60, 0
      %p159 = por %p157, %p158
      %p160 = scmp.ne.s32.totalorder %s146, %s147
      %p161 = scmp.eq.s32.totalorder %s61, 1
      %p162 = por %p160, %p161
      %p164 = scmp.ne.s32.totalorder %s147, %s163
      %p165 = scmp.eq.s32.totalorder %s61, 0
      %p166 = por %p164, %p165
      %s167 = ssub.s32 %s55, %s62
      %p168 = scmp.eq.s32.totalorder %s167, 0
      %s170 = sadd.s32 %s169, 1
      %s171 = scalar_select %p168, %s169, %s170
      %p174 = pneg %p168
      %p175 = scmp.eq.s32.totalorder %s55, 1
      %p176 = por %p174, %p175
      %p177 = scmp.ne.s32.totalorder %s169, %s172
      %p178 = scmp.eq.s32.totalorder %s55, 0
      %p179 = por %p177, %p178
      %p180 = scmp.ne.s32.totalorder %s169, %s172
      %p181 = scmp.eq.s32.totalorder %s60, 1
      %p182 = por %p180, %p181
      %p183 = scmp.ne.s32.totalorder %s172, %s173
      %p184 = scmp.eq.s32.totalorder %s60, 0
      %p185 = por %p183, %p184
      %p186 = scmp.ne.s32.totalorder %s172, %s173
      %p187 = scmp.eq.s32.totalorder %s61, 1
      %p188 = por %p186, %p187
      %p190 = scmp.ne.s32.totalorder %s173, %s189
      %p191 = scmp.eq.s32.totalorder %s61, 0
      %p192 = por %p190, %p191
      %s194 = sadd.s32 %s193, 1
      %p197 = scmp.eq.s32.totalorder %s55, 1
      %p198 = scmp.ne.s32.totalorder %s193, %s195
      %p199 = scmp.eq.s32.totalorder %s55, 0
      %p200 = por %p198, %p199
      %p201 = scmp.ne.s32.totalorder %s193, %s195
      %p202 = scmp.eq.s32.totalorder %s60, 1
      %p203 = por %p201, %p202
      %p204 = scmp.ne.s32.totalorder %s195, %s196
      %p205 = scmp.eq.s32.totalorder %s60, 0
      %p206 = por %p204, %p205
      %p207 = scmp.ne.s32.totalorder %s195, %s196
      %p208 = scmp.eq.s32.totalorder %s61, 1
      %p209 = por %p207, %p208
      %p211 = scmp.ne.s32.totalorder %s196, %s210
      %p212 = scmp.eq.s32.totalorder %s61, 0
      %p213 = por %p211, %p212
      %s215 = sadd.s32 %s214, 1
      %p218 = scmp.eq.s32.totalorder %s55, 1
      %p219 = scmp.ne.s32.totalorder %s214, %s216
      %p220 = scmp.eq.s32.totalorder %s55, 0
      %p221 = por %p219, %p220
      %p222 = scmp.ne.s32.totalorder %s214, %s216
      %p223 = scmp.eq.s32.totalorder %s60, 1
      %p224 = por %p222, %p223
      %p225 = scmp.ne.s32.totalorder %s216, %s217
      %p226 = scmp.eq.s32.totalorder %s60, 0
      %p227 = por %p225, %p226
      %p228 = scmp.ne.s32.totalorder %s216, %s217
      %p229 = scmp.eq.s32.totalorder %s61, 1
      %p230 = por %p228, %p229
      %p232 = scmp.ne.s32.totalorder %s217, %s231
      %p233 = scmp.eq.s32.totalorder %s61, 0
      %p234 = por %p232, %p233
      %s236 = sadd.s32 %s235, 1
      %p239 = scmp.eq.s32.totalorder %s55, 1
      %p240 = scmp.ne.s32.totalorder %s235, %s237
      %p241 = scmp.eq.s32.totalorder %s55, 0
      %p242 = por %p240, %p241
      %p243 = scmp.ne.s32.totalorder %s235, %s237
      %p244 = scmp.eq.s32.totalorder %s60, 1
      %p245 = por %p243, %p244
      %p246 = scmp.ne.s32.totalorder %s237, %s238
      %p247 = scmp.eq.s32.totalorder %s60, 0
      %p248 = por %p246, %p247
      %p249 = scmp.ne.s32.totalorder %s237, %s238
      %p250 = scmp.eq.s32.totalorder %s61, 1
      %p251 = por %p249, %p250
      %p253 = scmp.ne.s32.totalorder %s238, %s252
      %p254 = scmp.eq.s32.totalorder %s61, 0
      %p255 = por %p253, %p254
      %s257 = sadd.s32 %s256, 1
      %p260 = scmp.eq.s32.totalorder %s55, 1
      %p261 = scmp.ne.s32.totalorder %s256, %s258
      %p262 = scmp.eq.s32.totalorder %s55, 0
      %p263 = por %p261, %p262
      %p264 = scmp.ne.s32.totalorder %s256, %s258
      %p265 = scmp.eq.s32.totalorder %s60, 1
      %p266 = por %p264, %p265
      %p267 = scmp.ne.s32.totalorder %s258, %s259
      %p268 = scmp.eq.s32.totalorder %s60, 0
      %p269 = por %p267, %p268
      %p270 = scmp.ne.s32.totalorder %s258, %s259
      %p271 = scmp.eq.s32.totalorder %s61, 1
      %p272 = por %p270, %p271
      %p274 = scmp.ne.s32.totalorder %s259, %s273
      %p275 = scmp.eq.s32.totalorder %s61, 0
      %p276 = por %p274, %p275
      %s278 = sadd.s32 %s277, 1
      %p281 = scmp.eq.s32.totalorder %s55, 1
      %p282 = scmp.ne.s32.totalorder %s277, %s279
      %p283 = scmp.eq.s32.totalorder %s55, 0
      %p284 = por %p282, %p283
      %p285 = scmp.ne.s32.totalorder %s277, %s279
      %p286 = scmp.eq.s32.totalorder %s60, 1
      %p287 = por %p285, %p286
      %p288 = scmp.ne.s32.totalorder %s279, %s280
      %p289 = scmp.eq.s32.totalorder %s60, 0
      %p290 = por %p288, %p289
      %p291 = scmp.ne.s32.totalorder %s279, %s280
      %p292 = scmp.eq.s32.totalorder %s61, 1
      %p293 = por %p291, %p292
      %p295 = scmp.ne.s32.totalorder %s280, %s294
      %p296 = scmp.eq.s32.totalorder %s61, 0
      %p297 = por %p295, %p296
      %s299 = sadd.s32 %s298, 1
      %p302 = scmp.eq.s32.totalorder %s55, 1
      %p303 = scmp.ne.s32.totalorder %s298, %s300
      %p304 = scmp.eq.s32.totalorder %s55, 0
      %p305 = por %p303, %p304
      %p306 = scmp.ne.s32.totalorder %s298, %s300
      %p307 = scmp.eq.s32.totalorder %s60, 1
      %p308 = por %p306, %p307
      %p309 = scmp.ne.s32.totalorder %s300, %s301
      %p310 = scmp.eq.s32.totalorder %s60, 0
      %p311 = por %p309, %p310
      %p312 = scmp.ne.s32.totalorder %s300, %s301
      %p313 = scmp.eq.s32.totalorder %s61, 1
      %p314 = por %p312, %p313
      %p316 = scmp.ne.s32.totalorder %s301, %s315
      %p317 = scmp.eq.s32.totalorder %s61, 0
      %p318 = por %p316, %p317
      %s320 = sadd.s32 %s319, 1
      %p323 = scmp.eq.s32.totalorder %s55, 1
      %p324 = scmp.ne.s32.totalorder %s319, %s321
      %p325 = scmp.eq.s32.totalorder %s55, 0
      %p326 = por %p324, %p325
      %p327 = scmp.ne.s32.totalorder %s319, %s321
      %p328 = scmp.eq.s32.totalorder %s60, 1
      %p329 = por %p327, %p328
      %p330 = scmp.ne.s32.totalorder %s321, %s322
      %p331 = scmp.eq.s32.totalorder %s60, 0
      %p332 = por %p330, %p331
      %p333 = scmp.ne.s32.totalorder %s321, %s322
      %p334 = scmp.eq.s32.totalorder %s61, 1
      %p335 = por %p333, %p334
      %p337 = scmp.ne.s32.totalorder %s322, %s336
      %p338 = scmp.eq.s32.totalorder %s61, 0
      %p339 = por %p337, %p338
      %s341 = sadd.s32 %s340, 1
      %p344 = scmp.eq.s32.totalorder %s55, 1
      %p345 = scmp.ne.s32.totalorder %s340, %s342
      %p346 = scmp.eq.s32.totalorder %s55, 0
      %p347 = por %p345, %p346
      %p348 = scmp.ne.s32.totalorder %s340, %s342
      %p349 = scmp.eq.s32.totalorder %s60, 1
      %p350 = por %p348, %p349
      %p351 = scmp.ne.s32.totalorder %s342, %s343
      %p352 = scmp.eq.s32.totalorder %s60, 0
      %p353 = por %p351, %p352
      %p354 = scmp.ne.s32.totalorder %s342, %s343
      %p355 = scmp.eq.s32.totalorder %s61, 1
      %p356 = por %p354, %p355
      %p358 = scmp.ne.s32.totalorder %s343, %s357
      %p359 = scmp.eq.s32.totalorder %s61, 0
      %p360 = por %p358, %p359
      %s362 = sadd.s32 %s361, 1
      %p365 = scmp.eq.s32.totalorder %s55, 1
      %p366 = scmp.ne.s32.totalorder %s361, %s363
      %p367 = scmp.eq.s32.totalorder %s55, 0
      %p368 = por %p366, %p367
      %p369 = scmp.ne.s32.totalorder %s361, %s363
      %p370 = scmp.eq.s32.totalorder %s60, 1
      %p371 = por %p369, %p370
      %p372 = scmp.ne.s32.totalorder %s363, %s364
      %p373 = scmp.eq.s32.totalorder %s60, 0
      %p374 = por %p372, %p373
      %p375 = scmp.ne.s32.totalorder %s363, %s364
      %p376 = scmp.eq.s32.totalorder %s61, 1
      %p377 = por %p375, %p376
      %p379 = scmp.ne.s32.totalorder %s364, %s378
      %p380 = scmp.eq.s32.totalorder %s61, 0
      %p381 = por %p379, %p380
      %s383 = sadd.s32 %s382, 1
      %p386 = scmp.eq.s32.totalorder %s55, 1
      %p387 = scmp.ne.s32.totalorder %s382, %s384
      %p388 = scmp.eq.s32.totalorder %s55, 0
      %p389 = por %p387, %p388
      %p390 = scmp.ne.s32.totalorder %s382, %s384
      %p391 = scmp.eq.s32.totalorder %s60, 1
      %p392 = por %p390, %p391
      %p393 = scmp.ne.s32.totalorder %s384, %s385
      %p394 = scmp.eq.s32.totalorder %s60, 0
      %p395 = por %p393, %p394
      %p396 = scmp.ne.s32.totalorder %s384, %s385
      %p397 = scmp.eq.s32.totalorder %s61, 1
      %p398 = por %p396, %p397
      %p400 = scmp.ne.s32.totalorder %s385, %s399
      %p401 = scmp.eq.s32.totalorder %s61, 0
      %p402 = por %p400, %p401
      %s404 = sadd.s32 %s403, 1
      %p407 = scmp.eq.s32.totalorder %s55, 1
      %p408 = scmp.ne.s32.totalorder %s403, %s405
      %p409 = scmp.eq.s32.totalorder %s55, 0
      %p410 = por %p408, %p409
      %p411 = scmp.ne.s32.totalorder %s403, %s405
      %p412 = scmp.eq.s32.totalorder %s60, 1
      %p413 = por %p411, %p412
      %p414 = scmp.ne.s32.totalorder %s405, %s406
      %p415 = scmp.eq.s32.totalorder %s60, 0
      %p416 = por %p414, %p415
      %p417 = scmp.ne.s32.totalorder %s405, %s406
      %p418 = scmp.eq.s32.totalorder %s61, 1
      %p419 = por %p417, %p418
      %p421 = scmp.ne.s32.totalorder %s406, %s420
      %p422 = scmp.eq.s32.totalorder %s61, 0
      %p423 = por %p421, %p422
      %s425 = sadd.s32 %s424, 1
      %p428 = scmp.eq.s32.totalorder %s55, 1
      %p429 = scmp.ne.s32.totalorder %s424, %s426
      %p430 = scmp.eq.s32.totalorder %s55, 0
      %p431 = por %p429, %p430
      %p432 = scmp.ne.s32.totalorder %s424, %s426
      %p433 = scmp.eq.s32.totalorder %s60, 1
      %p434 = por %p432, %p433
      %p435 = scmp.ne.s32.totalorder %s426, %s427
      %p436 = scmp.eq.s32.totalorder %s60, 0
      %p437 = por %p435, %p436
      %p438 = scmp.ne.s32.totalorder %s426, %s427
      %p439 = scmp.eq.s32.totalorder %s61, 1
      %p440 = por %p438, %p439
      %p442 = scmp.ne.s32.totalorder %s427, %s441
      %p443 = scmp.eq.s32.totalorder %s61, 0
      %p444 = por %p442, %p443
      %s446 = sadd.s32 %s445, 1
      %p449 = scmp.eq.s32.totalorder %s55, 1
      %p450 = scmp.ne.s32.totalorder %s445, %s447
      %p451 = scmp.eq.s32.totalorder %s55, 0
      %p452 = por %p450, %p451
      %p453 = scmp.ne.s32.totalorder %s445, %s447
      %p454 = scmp.eq.s32.totalorder %s60, 1
      %p455 = por %p453, %p454
      %p456 = scmp.ne.s32.totalorder %s447, %s448
      %p457 = scmp.eq.s32.totalorder %s60, 0
      %p458 = por %p456, %p457
      %p459 = scmp.ne.s32.totalorder %s447, %s448
      %p460 = scmp.eq.s32.totalorder %s61, 1
      %p461 = por %p459, %p460
      %p463 = scmp.ne.s32.totalorder %s448, %s462
      %p464 = scmp.eq.s32.totalorder %s61, 0
      %p465 = por %p463, %p464
      %s467 = sadd.s32 %s466, 1
      %p470 = scmp.eq.s32.totalorder %s55, 1
      %p471 = scmp.ne.s32.totalorder %s466, %s468
      %p472 = scmp.eq.s32.totalorder %s55, 0
      %p473 = por %p471, %p472
      %p474 = scmp.ne.s32.totalorder %s466, %s468
      %p475 = scmp.eq.s32.totalorder %s60, 1
      %p476 = por %p474, %p475
      %p477 = scmp.ne.s32.totalorder %s468, %s469
      %p478 = scmp.eq.s32.totalorder %s60, 0
      %p479 = por %p477, %p478
      %p480 = scmp.ne.s32.totalorder %s468, %s469
      %p481 = scmp.eq.s32.totalorder %s61, 1
      %p482 = por %p480, %p481
      %p484 = scmp.ne.s32.totalorder %s469, %s483
      %p485 = scmp.eq.s32.totalorder %s61, 0
      %p486 = por %p484, %p485
      %s488 = sadd.s32 %s487, 1
      %p491 = scmp.eq.s32.totalorder %s55, 1
      %p492 = scmp.ne.s32.totalorder %s487, %s489
      %p493 = scmp.eq.s32.totalorder %s55, 0
      %p494 = por %p492, %p493
      %p495 = scmp.ne.s32.totalorder %s487, %s489
      %p496 = scmp.eq.s32.totalorder %s60, 1
      %p497 = por %p495, %p496
      %p498 = scmp.ne.s32.totalorder %s489, %s490
      %p499 = scmp.eq.s32.totalorder %s60, 0
      %p500 = por %p498, %p499
      %p501 = scmp.ne.s32.totalorder %s489, %s490
      %p502 = scmp.eq.s32.totalorder %s61, 1
      %p503 = por %p501, %p502
      %p505 = scmp.ne.s32.totalorder %s490, %s504
      %p506 = scmp.eq.s32.totalorder %s61, 0
      %p507 = por %p505, %p506
      %s509 = sadd.s32 %s508, 1
      %p512 = scmp.eq.s32.totalorder %s55, 1
      %p513 = scmp.ne.s32.totalorder %s508, %s510
      %p514 = scmp.eq.s32.totalorder %s55, 0
      %p515 = por %p513, %p514
      %p516 = scmp.ne.s32.totalorder %s508, %s510
      %p517 = scmp.eq.s32.totalorder %s60, 1
      %p518 = por %p516, %p517
      %p519 = scmp.ne.s32.totalorder %s510, %s511
      %p520 = scmp.eq.s32.totalorder %s60, 0
      %p521 = por %p519, %p520
      %p522 = scmp.ne.s32.totalorder %s510, %s511
      %p523 = scmp.eq.s32.totalorder %s61, 1
      %p524 = por %p522, %p523
      %p526 = scmp.ne.s32.totalorder %s511, %s525
      %p527 = scmp.eq.s32.totalorder %s61, 0
      %p528 = por %p526, %p527
      %s530 = sadd.s32 %s529, 1
      %p533 = scmp.eq.s32.totalorder %s55, 1
      %p534 = scmp.ne.s32.totalorder %s529, %s531
      %p535 = scmp.eq.s32.totalorder %s55, 0
      %p536 = por %p534, %p535
      %p537 = scmp.ne.s32.totalorder %s529, %s531
      %p538 = scmp.eq.s32.totalorder %s60, 1
      %p539 = por %p537, %p538
      %p540 = scmp.ne.s32.totalorder %s531, %s532
      %p541 = scmp.eq.s32.totalorder %s60, 0
      %p542 = por %p540, %p541
      %p543 = scmp.ne.s32.totalorder %s531, %s532
      %p544 = scmp.eq.s32.totalorder %s61, 1
      %p545 = por %p543, %p544
      %p547 = scmp.ne.s32.totalorder %s532, %s546
      %p548 = scmp.eq.s32.totalorder %s61, 0
      %p549 = por %p547, %p548
      %s550 = ssub.s32 %s55, %s62
      %p551 = scmp.eq.s32.totalorder %s550, 0
      %s553 = sadd.s32 %s552, 1
      %s554 = scalar_select %p551, %s552, %s553
      %p557 = pneg %p551
      %p558 = scmp.eq.s32.totalorder %s55, 1
      %p559 = por %p557, %p558
      %p560 = scmp.ne.s32.totalorder %s552, %s555
      %p561 = scmp.eq.s32.totalorder %s55, 0
      %p562 = por %p560, %p561
      %p563 = scmp.ne.s32.totalorder %s552, %s555
      %p564 = scmp.eq.s32.totalorder %s60, 1
      %p565 = por %p563, %p564
      %p566 = scmp.ne.s32.totalorder %s555, %s556
      %p567 = scmp.eq.s32.totalorder %s60, 0
      %p568 = por %p566, %p567
      %p569 = scmp.ne.s32.totalorder %s555, %s556
      %p570 = scmp.eq.s32.totalorder %s61, 1
      %p571 = por %p569, %p570
      %p573 = scmp.ne.s32.totalorder %s556, %s572
      %p574 = scmp.eq.s32.totalorder %s61, 0
      %p575 = por %p573, %p574
      %s576 = ssub.s32 %s55, %s62
      %p577 = scmp.eq.s32.totalorder %s576, 0
      %s579 = sadd.s32 %s578, 1
      %s580 = scalar_select %p577, %s578, %s579
      %p583 = pneg %p577
      %p584 = scmp.eq.s32.totalorder %s55, 1
      %p585 = por %p583, %p584
      %p586 = scmp.ne.s32.totalorder %s578, %s581
      %p587 = scmp.eq.s32.totalorder %s55, 0
      %p588 = por %p586, %p587
      %p589 = scmp.ne.s32.totalorder %s578, %s581
      %p590 = scmp.eq.s32.totalorder %s60, 1
      %p591 = por %p589, %p590
      %p592 = scmp.ne.s32.totalorder %s581, %s582
      %p593 = scmp.eq.s32.totalorder %s60, 0
      %p594 = por %p592, %p593
      %p595 = scmp.ne.s32.totalorder %s581, %s582
      %p596 = scmp.eq.s32.totalorder %s61, 1
      %p597 = por %p595, %p596
      %p599 = scmp.ne.s32.totalorder %s582, %s598
      %p600 = scmp.eq.s32.totalorder %s61, 0
      %p601 = por %p599, %p600
      %s602 = ssub.s32 %s55, %s62
      %p603 = scmp.eq.s32.totalorder %s602, 0
      %s605 = sadd.s32 %s604, 1
      %s606 = scalar_select %p603, %s604, %s605
      %p609 = pneg %p603
      %p610 = scmp.eq.s32.totalorder %s55, 1
      %p611 = por %p609, %p610
      %p612 = scmp.ne.s32.totalorder %s604, %s607
      %p613 = scmp.eq.s32.totalorder %s55, 0
      %p614 = por %p612, %p613
      %p615 = scmp.ne.s32.totalorder %s604, %s607
      %p616 = scmp.eq.s32.totalorder %s60, 1
      %p617 = por %p615, %p616
      %p618 = scmp.ne.s32.totalorder %s607, %s608
      %p619 = scmp.eq.s32.totalorder %s60, 0
      %p620 = por %p618, %p619
      %p621 = scmp.ne.s32.totalorder %s607, %s608
      %p622 = scmp.eq.s32.totalorder %s61, 1
      %p623 = por %p621, %p622
      %p625 = scmp.ne.s32.totalorder %s608, %s624
      %p626 = scmp.eq.s32.totalorder %s61, 0
      %p627 = por %p625, %p626
      %p628 = scmp.le.s32.totalorder 1, %s55
      %p629 = scmp.lt.s32.totalorder %s55, 3
      %p630 = pnand %p628, %p629
      %p631 = pneg %p630
      // Predicated region
      $region9: #{raft_forward.14} parent=5 // pred_check
        _
      $region10: #{raft_forward.14} parent=5 // pred_check_branch
        %633 = sbr.rel (%p630) target = $region12
      $region11: #{raft_forward.14} parent=5 // pred_region
        %s634 = ssub.s32 %s55, 1
        // Predicated region
        $region13: #{raft_forward.14} parent=11 // pred_check
          %p635 = pneg %p206
        $region14: #{raft_forward.14} parent=11 // pred_check_branch
          %637 = sbr.rel (%p635) target = $region16
        $region15: #{raft_forward.14} parent=11 // pred_region
          %s639 = ssub.s32 1600, 1600
          %640 = vsyncadd [#allocation12], %s639
          %s641 = sshll.u32 [#allocation11], 4
          %s642 = int_to_ptr.vmem [resolvable:$true] %s641
          %647 = dma.hbm_to_vmem [thread:$0]  %s5, 1600, %s642, [#allocation12], 64, 64, 4
        $region16: #{raft_forward.14} parent=11 // pred_fallthru
          _
        // Predicated region
        $region17: #{raft_forward.14} parent=11 // pred_check
          %p648 = pneg %p227
        $region18: #{raft_forward.14} parent=11 // pred_check_branch
          %650 = sbr.rel (%p648) target = $region20
        $region19: #{raft_forward.14} parent=11 // pred_region
          %s652 = ssub.s32 16, 16
          %653 = vsyncadd [#allocation12], %s652
          %s655 = sshll.u32 [#allocation13], 4
          %s656 = int_to_ptr.vmem [resolvable:$true] %s655
          %658 = dma.hbm_to_vmem [thread:$0]  %s6, 16, %s656, [#allocation12]
        $region20: #{raft_forward.14} parent=11 // pred_fallthru
          _
        // Predicated region
        $region21: #{raft_forward.14} parent=11 // pred_check
          %p659 = pneg %p248
        $region22: #{raft_forward.14} parent=11 // pred_check_branch
          %661 = sbr.rel (%p659) target = $region24
        $region23: #{raft_forward.14} parent=11 // pred_region
          %s663 = ssub.s32 32, 32
          %664 = vsyncadd [#allocation15], %s663
          %s666 = sshll.u32 [#allocation14], 4
          %s667 = int_to_ptr.vmem [resolvable:$true] %s666
          %669 = dma.hbm_to_vmem [thread:$0]  %s7, 32, %s667, [#allocation15]
        $region24: #{raft_forward.14} parent=11 // pred_fallthru
          _
        // Predicated region
        $region25: #{raft_forward.14} parent=11 // pred_check
          %p670 = pneg %p269
        $region26: #{raft_forward.14} parent=11 // pred_check_branch
          %672 = sbr.rel (%p670) target = $region28
        $region27: #{raft_forward.14} parent=11 // pred_region
          %s674 = ssub.s32 16, 16
          %675 = vsyncadd [#allocation15], %s674
          %s677 = sshll.u32 [#allocation16], 4
          %s678 = int_to_ptr.vmem [resolvable:$true] %s677
          %680 = dma.hbm_to_vmem [thread:$0]  %s8, 16, %s678, [#allocation15]
        $region28: #{raft_forward.14} parent=11 // pred_fallthru
          _
        // Predicated region
        $region29: #{raft_forward.14} parent=11 // pred_check
          %p681 = pneg %p290
        $region30: #{raft_forward.14} parent=11 // pred_check_branch
          %683 = sbr.rel (%p681) target = $region32
        $region31: #{raft_forward.14} parent=11 // pred_region
          %s685 = ssub.s32 1280, 1280
          %686 = vsyncadd [#allocation18], %s685
          %s687 = sshll.u32 [#allocation17], 4
          %s688 = int_to_ptr.vmem [resolvable:$true] %s687
          %693 = dma.hbm_to_vmem [thread:$0]  %s9, 1280, %s688, [#allocation18], 64, 64, 4
        $region32: #{raft_forward.14} parent=11 // pred_fallthru
          _
        // Predicated region
        $region33: #{raft_forward.14} parent=11 // pred_check
          %p694 = pneg %p311
        $region34: #{raft_forward.14} parent=11 // pred_check_branch
          %696 = sbr.rel (%p694) target = $region36
        $region35: #{raft_forward.14} parent=11 // pred_region
          %s698 = ssub.s32 16, 16
          %699 = vsyncadd [#allocation18], %s698
          %s701 = sshll.u32 [#allocation19], 4
          %s702 = int_to_ptr.vmem [resolvable:$true] %s701
          %704 = dma.hbm_to_vmem [thread:$0]  %s10, 16, %s702, [#allocation18]
        $region36: #{raft_forward.14} parent=11 // pred_fallthru
          _
        // Predicated region
        $region37: #{raft_forward.14} parent=11 // pred_check
          %p705 = pneg %p332
        $region38: #{raft_forward.14} parent=11 // pred_check_branch
          %707 = sbr.rel (%p705) target = $region40
        $region39: #{raft_forward.14} parent=11 // pred_region
          %s709 = ssub.s32 6144, 6144
          %710 = vsyncadd [#allocation21], %s709
          %s711 = sshll.u32 [#allocation20], 4
          %s712 = int_to_ptr.vmem [resolvable:$true] %s711
          %717 = dma.hbm_to_vmem [thread:$0]  %s11, 6144, %s712, [#allocation21], 192, 192, 12
        $region40: #{raft_forward.14} parent=11 // pred_fallthru
          _
        // Predicated region
        $region41: #{raft_forward.14} parent=11 // pred_check
          %p718 = pneg %p353
        $region42: #{raft_forward.14} parent=11 // pred_check_branch
          %720 = sbr.rel (%p718) target = $region44
        $region43: #{raft_forward.14} parent=11 // pred_region
          %s722 = ssub.s32 16, 16
          %723 = vsyncadd [#allocation21], %s722
          %s725 = sshll.u32 [#allocation22], 4
          %s726 = int_to_ptr.vmem [resolvable:$true] %s725
          %728 = dma.hbm_to_vmem [thread:$0]  %s12, 16, %s726, [#allocation21]
        $region44: #{raft_forward.14} parent=11 // pred_fallthru
          _
        // Predicated region
        $region45: #{raft_forward.14} parent=11 // pred_check
          %p729 = pneg %p374
        $region46: #{raft_forward.14} parent=11 // pred_check_branch
          %731 = sbr.rel (%p729) target = $region48
        $region47: #{raft_forward.14} parent=11 // pred_region
          %s733 = ssub.s32 16, 16
          %734 = vsyncadd [#allocation24], %s733
          %s736 = sshll.u32 [#allocation23], 4
          %s737 = int_to_ptr.vmem [resolvable:$true] %s736
          %739 = dma.hbm_to_vmem [thread:$0]  %s13, 16, %s737, [#allocation24]
        $region48: #{raft_forward.14} parent=11 // pred_fallthru
          _
        // Predicated region
        $region49: #{raft_forward.14} parent=11 // pred_check
          %p740 = pneg %p395
        $region50: #{raft_forward.14} parent=11 // pred_check_branch
          %742 = sbr.rel (%p740) target = $region52
        $region51: #{raft_forward.14} parent=11 // pred_region
          %s744 = ssub.s32 16, 16
          %745 = vsyncadd [#allocation24], %s744
          %s747 = sshll.u32 [#allocation25], 4
          %s748 = int_to_ptr.vmem [resolvable:$true] %s747
          %750 = dma.hbm_to_vmem [thread:$0]  %s14, 16, %s748, [#allocation24]
        $region52: #{raft_forward.14} parent=11 // pred_fallthru
          _
        // Predicated region
        $region53: #{raft_forward.14} parent=11 // pred_check
          %p751 = pneg %p416
        $region54: #{raft_forward.14} parent=11 // pred_check_branch
          %753 = sbr.rel (%p751) target = $region56
        $region55: #{raft_forward.14} parent=11 // pred_region
          %s755 = ssub.s32 768, 768
          %756 = vsyncadd [#allocation27], %s755
          %s757 = sshll.u32 [#allocation26], 4
          %s758 = int_to_ptr.vmem [resolvable:$true] %s757
          %763 = dma.hbm_to_vmem [thread:$0]  %s15, 768, %s758, [#allocation27], 64, 64, 4
        $region56: #{raft_forward.14} parent=11 // pred_fallthru
          _
        // Predicated region
        $region57: #{raft_forward.14} parent=11 // pred_check
          %p764 = pneg %p437
        $region58: #{raft_forward.14} parent=11 // pred_check_branch
          %766 = sbr.rel (%p764) target = $region60
        $region59: #{raft_forward.14} parent=11 // pred_region
          %s768 = ssub.s32 1536, 1536
          %769 = vsyncadd [#allocation27], %s768
          %s770 = sshll.u32 [#allocation28], 4
          %s771 = int_to_ptr.vmem [resolvable:$true] %s770
          %776 = dma.hbm_to_vmem [thread:$0]  %s16, 1536, %s771, [#allocation27], 128, 128, 8
        $region60: #{raft_forward.14} parent=11 // pred_fallthru
          _
        // Predicated region
        $region61: #{raft_forward.14} parent=11 // pred_check
          %p777 = pneg %p458
        $region62: #{raft_forward.14} parent=11 // pred_check_branch
          %779 = sbr.rel (%p777) target = $region64
        $region63: #{raft_forward.14} parent=11 // pred_region
          %s781 = ssub.s32 32, 32
          %782 = vsyncadd [#allocation30], %s781
          %s784 = sshll.u32 [#allocation29], 4
          %s785 = int_to_ptr.vmem [resolvable:$true] %s784
          %787 = dma.hbm_to_vmem [thread:$0]  %s17, 32, %s785, [#allocation30]
        $region64: #{raft_forward.14} parent=11 // pred_fallthru
          _
        // Predicated region
        $region65: #{raft_forward.14} parent=11 // pred_check
          %p788 = pneg %p479
        $region66: #{raft_forward.14} parent=11 // pred_check_branch
          %790 = sbr.rel (%p788) target = $region68
        $region67: #{raft_forward.14} parent=11 // pred_region
          %s792 = ssub.s32 1024, 1024
          %793 = vsyncadd [#allocation30], %s792
          %s794 = sshll.u32 [#allocation31], 4
          %s795 = int_to_ptr.vmem [resolvable:$true] %s794
          %800 = dma.hbm_to_vmem [thread:$0]  %s18, 1024, %s795, [#allocation30], 64, 64, 4
        $region68: #{raft_forward.14} parent=11 // pred_fallthru
          _
        // Predicated region
        $region69: #{raft_forward.14} parent=11 // pred_check
          %p801 = pneg %p500
        $region70: #{raft_forward.14} parent=11 // pred_check_branch
          %803 = sbr.rel (%p801) target = $region72
        $region71: #{raft_forward.14} parent=11 // pred_region
          %s805 = ssub.s32 16, 16
          %806 = vsyncadd [#allocation33], %s805
          %s808 = sshll.u32 [#allocation32], 4
          %s809 = int_to_ptr.vmem [resolvable:$true] %s808
          %811 = dma.hbm_to_vmem [thread:$0]  %s19, 16, %s809, [#allocation33]
        $region72: #{raft_forward.14} parent=11 // pred_fallthru
          _
        // Predicated region
        $region73: #{raft_forward.14} parent=11 // pred_check
          %p812 = pneg %p521
        $region74: #{raft_forward.14} parent=11 // pred_check_branch
          %814 = sbr.rel (%p812) target = $region76
        $region75: #{raft_forward.14} parent=11 // pred_region
          %s816 = ssub.s32 5120, 5120
          %817 = vsyncadd [#allocation33], %s816
          %s818 = sshll.u32 [#allocation34], 4
          %s819 = int_to_ptr.vmem [resolvable:$true] %s818
          %824 = dma.hbm_to_vmem [thread:$0]  %s20, 5120, %s819, [#allocation33], 320, 320, 20
        $region76: #{raft_forward.14} parent=11 // pred_fallthru
          _
        // Predicated region
        $region77: #{raft_forward.14} parent=11 // pred_check
          %p825 = pneg %p542
        $region78: #{raft_forward.14} parent=11 // pred_check_branch
          %827 = sbr.rel (%p825) target = $region80
        $region79: #{raft_forward.14} parent=11 // pred_region
          %s829 = ssub.s32 80, 80
          %830 = vsyncadd [#allocation36], %s829
          %s832 = sshll.u32 [#allocation35], 4
          %s833 = int_to_ptr.vmem [resolvable:$true] %s832
          %835 = dma.hbm_to_vmem [thread:$0]  %s21, 80, %s833, [#allocation36]
        $region80: #{raft_forward.14} parent=11 // pred_fallthru
          _
      $region12: #{raft_forward.14} parent=5 // pred_fallthru
        _
      %p836 = scmp.lt.s32.totalorder %s55, 2
      // Predicated region
      $region81: #{raft_forward.14} parent=5 // pred_check
        %p837 = pneg %p836
      $region82: #{raft_forward.14} parent=5 // pred_check_branch
        %839 = sbr.rel (%p837) target = $region84
      $region83: #{raft_forward.14} parent=5 // pred_region
        // Predicated region
        $region85: #{raft_forward.14} parent=83 // pred_check
          %p840 = pneg %p75
        $region86: #{raft_forward.14} parent=83 // pred_check_branch
          %842 = sbr.rel (%p840) target = $region88
        $region87: #{raft_forward.14} parent=83 // pred_region
          %s843 = sand.u32 %s65, 1
          %s844 = scalar_lea.sflag [#allocation3], %s843
          %s845 = sand.u32 %s65, 1
          %s846 = smul.addr %s845, 64
          %s847 = scalar_lea.vmem [#allocation2], %s846
          %s848 = smul.u32 8, %s55
          %s850 = ssub.s32 1024, 1024
          %851 = vsyncadd %s844, %s850
          %s852 = smul.addr %s848, 2
          %s853 = smul.addr %s852, 64
          %s854 = scalar_lea.hbm %s0, %s853
          %s855 = sshll.u32 %s847, 4
          %s856 = int_to_ptr.vmem [resolvable:$true] %s855
          %861 = dma.hbm_to_vmem [thread:$0]  %s854, 1024, %s856, %s844, 128, 128, 8
        $region88: #{raft_forward.14} parent=83 // pred_fallthru
          _
        // Predicated region
        $region89: #{raft_forward.14} parent=83 // pred_check
          %p862 = pneg %p101
        $region90: #{raft_forward.14} parent=83 // pred_check_branch
          %864 = sbr.rel (%p862) target = $region92
        $region91: #{raft_forward.14} parent=83 // pred_region
          %s865 = sand.u32 %s55, 1
          %s866 = scalar_lea.sflag [#allocation6], %s865
          %s867 = sand.u32 %s91, 1
          %s868 = smul.addr %s867, 64
          %s869 = scalar_lea.vmem [#allocation5], %s868
          %s870 = smul.u32 8, %s55
          %s872 = ssub.s32 1024, 1024
          %873 = vsyncadd %s866, %s872
          %s874 = smul.addr %s870, 128
          %s875 = scalar_lea.hbm %s1, %s874
          %s876 = sshll.u32 %s869, 4
          %s877 = int_to_ptr.vmem [resolvable:$true] %s876
          %882 = dma.hbm_to_vmem [thread:$0]  %s875, 1024, %s877, %s866, 128, 128, 8
        $region92: #{raft_forward.14} parent=83 // pred_fallthru
          _
        // Predicated region
        $region93: #{raft_forward.14} parent=83 // pred_check
          %p883 = pneg %p127
        $region94: #{raft_forward.14} parent=83 // pred_check_branch
          %885 = sbr.rel (%p883) target = $region96
        $region95: #{raft_forward.14} parent=83 // pred_region
          %s886 = sand.u32 %s55, 1
          %s887 = scalar_lea.sflag [#allocation6], %s886
          %s888 = sand.u32 %s117, 1
          %s889 = smul.addr %s888, 32
          %s890 = scalar_lea.vmem [#allocation7], %s889
          %s891 = smul.u32 8, %s55
          %s893 = ssub.s32 512, 512
          %894 = vsyncadd %s887, %s893
          %s895 = smul.addr %s891, 64
          %s896 = scalar_lea.hbm %s2, %s895
          %s897 = sshll.u32 %s890, 4
          %s898 = int_to_ptr.vmem [resolvable:$true] %s897
          %903 = dma.hbm_to_vmem [thread:$0]  %s896, 512, %s898, %s887, 64, 64, 4
        $region96: #{raft_forward.14} parent=83 // pred_fallthru
          _
        // Predicated region
        $region97: #{raft_forward.14} parent=83 // pred_check
          %p904 = pneg %p153
        $region98: #{raft_forward.14} parent=83 // pred_check_branch
          %906 = sbr.rel (%p904) target = $region100
        $region99: #{raft_forward.14} parent=83 // pred_region
          %s907 = sand.u32 %s55, 1
          %s908 = scalar_lea.sflag [#allocation9], %s907
          %s909 = sand.u32 %s143, 1
          %s910 = smul.addr %s909, 64
          %s911 = scalar_lea.vmem [#allocation8], %s910
          %s912 = smul.u32 8, %s55
          %s914 = ssub.s32 1024, 1024
          %915 = vsyncadd %s908, %s914
          %s916 = smul.addr %s912, 128
          %s917 = scalar_lea.hbm %s3, %s916
          %s918 = sshll.u32 %s911, 4
          %s919 = int_to_ptr.vmem [resolvable:$true] %s918
          %924 = dma.hbm_to_vmem [thread:$0]  %s917, 1024, %s919, %s908, 128, 128, 8
        $region100: #{raft_forward.14} parent=83 // pred_fallthru
          _
        // Predicated region
        $region101: #{raft_forward.14} parent=83 // pred_check
          %p925 = pneg %p179
        $region102: #{raft_forward.14} parent=83 // pred_check_branch
          %927 = sbr.rel (%p925) target = $region104
        $region103: #{raft_forward.14} parent=83 // pred_region
          %s928 = sand.u32 %s55, 1
          %s929 = scalar_lea.sflag [#allocation9], %s928
          %s930 = sand.u32 %s169, 1
          %s931 = smul.addr %s930, 64
          %s932 = scalar_lea.vmem [#allocation10], %s931
          %s933 = smul.u32 8, %s55
          %s935 = ssub.s32 1024, 1024
          %936 = vsyncadd %s929, %s935
          %s937 = smul.addr %s933, 128
          %s938 = scalar_lea.hbm %s4, %s937
          %s939 = sshll.u32 %s932, 4
          %s940 = int_to_ptr.vmem [resolvable:$true] %s939
          %945 = dma.hbm_to_vmem [thread:$0]  %s938, 1024, %s940, %s929, 128, 128, 8
        $region104: #{raft_forward.14} parent=83 // pred_fallthru
          _
      $region84: #{raft_forward.14} parent=5 // pred_fallthru
        _
      %p946 = scmp.le.s32.totalorder 1, %s55
      %p947 = scmp.lt.s32.totalorder %s55, 3
      %p948 = pnand %p946, %p947
      %p949 = pneg %p948
      // Predicated region
      $region105: #{raft_forward.14} parent=5 // pred_check
        _
      $region106: #{raft_forward.14} parent=5 // pred_check_branch
        %951 = sbr.rel (%p948) target = $region108
      $region107: #{raft_forward.14} parent=5 // pred_region
        %s952 = ssub.s32 %s55, 1
        %s953 = sand.u32 %s68, 1
        %s954 = scalar_lea.sflag [#allocation3], %s953
        %s955 = sand.u32 %s68, 1
        %s956 = smul.addr %s955, 64
        %s957 = scalar_lea.vmem [#allocation2], %s956
        // Predicated region
        $region109: #{raft_forward.14} parent=107 // pred_check
          %p958 = pneg %p81
        $region110: #{raft_forward.14} parent=107 // pred_check_branch
          %960 = sbr.rel (%p958) target = $region112
        $region111: #{raft_forward.14} parent=107 // pred_region
          %961 = dma.done %s954, 1024
        $region112: #{raft_forward.14} parent=107 // pred_fallthru
          _
        %s962 = sand.u32 %s60, 1
        %s963 = scalar_lea.sflag [#allocation6], %s962
        %s964 = sand.u32 %s94, 1
        %s965 = smul.addr %s964, 64
        %s966 = scalar_lea.vmem [#allocation5], %s965
        // Predicated region
        $region113: #{raft_forward.14} parent=107 // pred_check
          %p967 = pneg %p107
        $region114: #{raft_forward.14} parent=107 // pred_check_branch
          %969 = sbr.rel (%p967) target = $region116
        $region115: #{raft_forward.14} parent=107 // pred_region
          %970 = dma.done %s963, 1024
        $region116: #{raft_forward.14} parent=107 // pred_fallthru
          _
        %s971 = sand.u32 %s60, 1
        %s972 = scalar_lea.sflag [#allocation6], %s971
        %s973 = sand.u32 %s120, 1
        %s974 = smul.addr %s973, 32
        %s975 = scalar_lea.vmem [#allocation7], %s974
        // Predicated region
        $region117: #{raft_forward.14} parent=107 // pred_check
          %p976 = pneg %p133
        $region118: #{raft_forward.14} parent=107 // pred_check_branch
          %978 = sbr.rel (%p976) target = $region120
        $region119: #{raft_forward.14} parent=107 // pred_region
          %979 = dma.done %s972, 512
        $region120: #{raft_forward.14} parent=107 // pred_fallthru
          _
        %s980 = sand.u32 %s60, 1
        %s981 = scalar_lea.sflag [#allocation9], %s980
        %s982 = sand.u32 %s146, 1
        %s983 = smul.addr %s982, 64
        %s984 = scalar_lea.vmem [#allocation8], %s983
        // Predicated region
        $region121: #{raft_forward.14} parent=107 // pred_check
          %p985 = pneg %p159
        $region122: #{raft_forward.14} parent=107 // pred_check_branch
          %987 = sbr.rel (%p985) target = $region124
        $region123: #{raft_forward.14} parent=107 // pred_region
          %988 = dma.done %s981, 1024
        $region124: #{raft_forward.14} parent=107 // pred_fallthru
          _
        %s989 = sand.u32 %s60, 1
        %s990 = scalar_lea.sflag [#allocation9], %s989
        %s991 = sand.u32 %s172, 1
        %s992 = smul.addr %s991, 64
        %s993 = scalar_lea.vmem [#allocation10], %s992
        // Predicated region
        $region125: #{raft_forward.14} parent=107 // pred_check
          %p994 = pneg %p185
        $region126: #{raft_forward.14} parent=107 // pred_check_branch
          %996 = sbr.rel (%p994) target = $region128
        $region127: #{raft_forward.14} parent=107 // pred_region
          %997 = dma.done %s990, 1024
        $region128: #{raft_forward.14} parent=107 // pred_fallthru
          _
        // Predicated region
        $region129: #{raft_forward.14} parent=107 // pred_check
          %p998 = pneg %p206
        $region130: #{raft_forward.14} parent=107 // pred_check_branch
          %1000 = sbr.rel (%p998) target = $region132
        $region131: #{raft_forward.14} parent=107 // pred_region
          %1001 = dma.done [#allocation12], 1600
        $region132: #{raft_forward.14} parent=107 // pred_fallthru
          _
        // Predicated region
        $region133: #{raft_forward.14} parent=107 // pred_check
          %p1002 = pneg %p227
        $region134: #{raft_forward.14} parent=107 // pred_check_branch
          %1004 = sbr.rel (%p1002) target = $region136
        $region135: #{raft_forward.14} parent=107 // pred_region
          %1005 = dma.done [#allocation12], 16
        $region136: #{raft_forward.14} parent=107 // pred_fallthru
          _
        // Predicated region
        $region137: #{raft_forward.14} parent=107 // pred_check
          %p1006 = pneg %p248
        $region138: #{raft_forward.14} parent=107 // pred_check_branch
          %1008 = sbr.rel (%p1006) target = $region140
        $region139: #{raft_forward.14} parent=107 // pred_region
          %1009 = dma.done [#allocation15], 32
        $region140: #{raft_forward.14} parent=107 // pred_fallthru
          _
        // Predicated region
        $region141: #{raft_forward.14} parent=107 // pred_check
          %p1010 = pneg %p269
        $region142: #{raft_forward.14} parent=107 // pred_check_branch
          %1012 = sbr.rel (%p1010) target = $region144
        $region143: #{raft_forward.14} parent=107 // pred_region
          %1013 = dma.done [#allocation15], 16
        $region144: #{raft_forward.14} parent=107 // pred_fallthru
          _
        // Predicated region
        $region145: #{raft_forward.14} parent=107 // pred_check
          %p1014 = pneg %p290
        $region146: #{raft_forward.14} parent=107 // pred_check_branch
          %1016 = sbr.rel (%p1014) target = $region148
        $region147: #{raft_forward.14} parent=107 // pred_region
          %1017 = dma.done [#allocation18], 1280
        $region148: #{raft_forward.14} parent=107 // pred_fallthru
          _
        // Predicated region
        $region149: #{raft_forward.14} parent=107 // pred_check
          %p1018 = pneg %p311
        $region150: #{raft_forward.14} parent=107 // pred_check_branch
          %1020 = sbr.rel (%p1018) target = $region152
        $region151: #{raft_forward.14} parent=107 // pred_region
          %1021 = dma.done [#allocation18], 16
        $region152: #{raft_forward.14} parent=107 // pred_fallthru
          _
        // Predicated region
        $region153: #{raft_forward.14} parent=107 // pred_check
          %p1022 = pneg %p332
        $region154: #{raft_forward.14} parent=107 // pred_check_branch
          %1024 = sbr.rel (%p1022) target = $region156
        $region155: #{raft_forward.14} parent=107 // pred_region
          %1025 = dma.done [#allocation21], 6144
        $region156: #{raft_forward.14} parent=107 // pred_fallthru
          _
        // Predicated region
        $region157: #{raft_forward.14} parent=107 // pred_check
          %p1026 = pneg %p353
        $region158: #{raft_forward.14} parent=107 // pred_check_branch
          %1028 = sbr.rel (%p1026) target = $region160
        $region159: #{raft_forward.14} parent=107 // pred_region
          %1029 = dma.done [#allocation21], 16
        $region160: #{raft_forward.14} parent=107 // pred_fallthru
          _
        // Predicated region
        $region161: #{raft_forward.14} parent=107 // pred_check
          %p1030 = pneg %p374
        $region162: #{raft_forward.14} parent=107 // pred_check_branch
          %1032 = sbr.rel (%p1030) target = $region164
        $region163: #{raft_forward.14} parent=107 // pred_region
          %1033 = dma.done [#allocation24], 16
        $region164: #{raft_forward.14} parent=107 // pred_fallthru
          _
        // Predicated region
        $region165: #{raft_forward.14} parent=107 // pred_check
          %p1034 = pneg %p395
        $region166: #{raft_forward.14} parent=107 // pred_check_branch
          %1036 = sbr.rel (%p1034) target = $region168
        $region167: #{raft_forward.14} parent=107 // pred_region
          %1037 = dma.done [#allocation24], 16
        $region168: #{raft_forward.14} parent=107 // pred_fallthru
          _
        // Predicated region
        $region169: #{raft_forward.14} parent=107 // pred_check
          %p1038 = pneg %p416
        $region170: #{raft_forward.14} parent=107 // pred_check_branch
          %1040 = sbr.rel (%p1038) target = $region172
        $region171: #{raft_forward.14} parent=107 // pred_region
          %1041 = dma.done [#allocation27], 768
        $region172: #{raft_forward.14} parent=107 // pred_fallthru
          _
        // Predicated region
        $region173: #{raft_forward.14} parent=107 // pred_check
          %p1042 = pneg %p437
        $region174: #{raft_forward.14} parent=107 // pred_check_branch
          %1044 = sbr.rel (%p1042) target = $region176
        $region175: #{raft_forward.14} parent=107 // pred_region
          %1045 = dma.done [#allocation27], 1536
        $region176: #{raft_forward.14} parent=107 // pred_fallthru
          _
        // Predicated region
        $region177: #{raft_forward.14} parent=107 // pred_check
          %p1046 = pneg %p458
        $region178: #{raft_forward.14} parent=107 // pred_check_branch
          %1048 = sbr.rel (%p1046) target = $region180
        $region179: #{raft_forward.14} parent=107 // pred_region
          %1049 = dma.done [#allocation30], 32
        $region180: #{raft_forward.14} parent=107 // pred_fallthru
          _
        // Predicated region
        $region181: #{raft_forward.14} parent=107 // pred_check
          %p1050 = pneg %p479
        $region182: #{raft_forward.14} parent=107 // pred_check_branch
          %1052 = sbr.rel (%p1050) target = $region184
        $region183: #{raft_forward.14} parent=107 // pred_region
          %1053 = dma.done [#allocation30], 1024
        $region184: #{raft_forward.14} parent=107 // pred_fallthru
          _
        // Predicated region
        $region185: #{raft_forward.14} parent=107 // pred_check
          %p1054 = pneg %p500
        $region186: #{raft_forward.14} parent=107 // pred_check_branch
          %1056 = sbr.rel (%p1054) target = $region188
        $region187: #{raft_forward.14} parent=107 // pred_region
          %1057 = dma.done [#allocation33], 16
        $region188: #{raft_forward.14} parent=107 // pred_fallthru
          _
        // Predicated region
        $region189: #{raft_forward.14} parent=107 // pred_check
          %p1058 = pneg %p521
        $region190: #{raft_forward.14} parent=107 // pred_check_branch
          %1060 = sbr.rel (%p1058) target = $region192
        $region191: #{raft_forward.14} parent=107 // pred_region
          %1061 = dma.done [#allocation33], 5120
        $region192: #{raft_forward.14} parent=107 // pred_fallthru
          _
        // Predicated region
        $region193: #{raft_forward.14} parent=107 // pred_check
          %p1062 = pneg %p542
        $region194: #{raft_forward.14} parent=107 // pred_check_branch
          %1064 = sbr.rel (%p1062) target = $region196
        $region195: #{raft_forward.14} parent=107 // pred_region
          %1065 = dma.done [#allocation36], 80
        $region196: #{raft_forward.14} parent=107 // pred_fallthru
          _
        %s1066 = sand.u32 %s68, 1
        %s1067 = scalar_lea.sflag [#allocation3], %s1066
        %s1068 = sand.u32 %s68, 1
        %s1069 = smul.addr %s1068, 64
        %s1070 = scalar_lea.vmem [#allocation2], %s1069
        %p1071 = pneg %p81
        %p1072 = pneg %p78
        %s1073 = sand.u32 %s60, 1
        %s1074 = scalar_lea.sflag [#allocation6], %s1073
        %s1075 = sand.u32 %s94, 1
        %s1076 = smul.addr %s1075, 64
        %s1077 = scalar_lea.vmem [#allocation5], %s1076
        %p1078 = pneg %p107
        %p1079 = pneg %p104
        %s1080 = sand.u32 %s60, 1
        %s1081 = scalar_lea.sflag [#allocation6], %s1080
        %s1082 = sand.u32 %s120, 1
        %s1083 = smul.addr %s1082, 32
        %s1084 = scalar_lea.vmem [#allocation7], %s1083
        %p1085 = pneg %p133
        %p1086 = pneg %p130
        %s1087 = sand.u32 %s60, 1
        %s1088 = scalar_lea.sflag [#allocation9], %s1087
        %s1089 = sand.u32 %s146, 1
        %s1090 = smul.addr %s1089, 64
        %s1091 = scalar_lea.vmem [#allocation8], %s1090
        %p1092 = pneg %p159
        %p1093 = pneg %p156
        %s1094 = sand.u32 %s60, 1
        %s1095 = scalar_lea.sflag [#allocation9], %s1094
        %s1096 = sand.u32 %s172, 1
        %s1097 = smul.addr %s1096, 64
        %s1098 = scalar_lea.vmem [#allocation10], %s1097
        %p1099 = pneg %p185
        %p1100 = pneg %p182
        %p1101 = pneg %p206
        %p1102 = pneg %p203
        %p1103 = pneg %p227
        %p1104 = pneg %p224
        %p1105 = pneg %p248
        %p1106 = pneg %p245
        %p1107 = pneg %p269
        %p1108 = pneg %p266
        %p1109 = pneg %p290
        %p1110 = pneg %p287
        %p1111 = pneg %p311
        %p1112 = pneg %p308
        %p1113 = pneg %p332
        %p1114 = pneg %p329
        %p1115 = pneg %p353
        %p1116 = pneg %p350
        %p1117 = pneg %p374
        %p1118 = pneg %p371
        %p1119 = pneg %p395
        %p1120 = pneg %p392
        %p1121 = pneg %p416
        %p1122 = pneg %p413
        %p1123 = pneg %p437
        %p1124 = pneg %p434
        %p1125 = pneg %p458
        %p1126 = pneg %p455
        %p1127 = pneg %p479
        %p1128 = pneg %p476
        %p1129 = pneg %p500
        %p1130 = pneg %p497
        %p1131 = pneg %p521
        %p1132 = pneg %p518
        %p1133 = pneg %p542
        %p1134 = pneg %p539
        %p1135 = pneg %p568
        %p1136 = pneg %p565
        %s1137 = sand.u32 %s555, 1
        %s1138 = scalar_lea.sflag [#allocation4], %s1137
        %s1139 = sand.u32 %s555, 1
        %s1140 = smul.addr %s1139, 64
        %s1141 = scalar_lea.vmem [#allocation37], %s1140
        %p1142 = pneg %p594
        %p1143 = pneg %p591
        %s1144 = sand.u32 %s60, 1
        %s1145 = scalar_lea.sflag [#allocation39], %s1144
        %s1146 = sand.u32 %s581, 1
        %s1147 = smul.addr %s1146, 160
        %s1148 = scalar_lea.vmem [#allocation38], %s1147
        %p1149 = pneg %p620
        %p1150 = pneg %p617
        %s1151 = sand.u32 %s60, 1
        %s1152 = scalar_lea.sflag [#allocation39], %s1151
        %s1153 = sand.u32 %s607, 1
        %s1154 = smul.addr %s1153, 64
        %s1155 = scalar_lea.vmem [#allocation40], %s1154
        %s1156 = smul.u32 8, %s60
        %s1157 = smul.u32 8, %s60
        %s1158 = smul.u32 8, %s60
        %s1159 = smul.u32 8, %s60
        %s1160 = smul.u32 8, %s60
        %s1161 = smul.u32 8, %s60
        %s1162 = smul.u32 8, %s60
        %s1163 = smul.u32 8, %s60
        %v1165 = vld [vmem:[%s966] sm:$0xff]
        %v1166 = vld [vmem:[%s966 + $0x8] sm:$0xff]
        %v1167 = vld [vmem:[%s966 + $0x10] sm:$0xff]
        %v1168 = vld [vmem:[%s966 + $0x18] sm:$0xff]
        %v1169 = vld [vmem:[%s966 + $0x20] sm:$0xff]
        %v1170 = vld [vmem:[%s966 + $0x28] sm:$0xff]
        %v1171 = vld [vmem:[%s966 + $0x30] sm:$0xff]
        %v1172 = vld [vmem:[%s966 + $0x38] sm:$0xff]
        %v1173 = vld [vmem:[%s984] sm:$0xff]
        %v1174 = vld [vmem:[%s984 + $0x8] sm:$0xff]
        %v1175 = vld [vmem:[%s984 + $0x10] sm:$0xff]
        %v1176 = vld [vmem:[%s984 + $0x18] sm:$0xff]
        %v1177 = vld [vmem:[%s984 + $0x20] sm:$0xff]
        %v1178 = vld [vmem:[%s984 + $0x28] sm:$0xff]
        %v1179 = vld [vmem:[%s984 + $0x30] sm:$0xff]
        %v1180 = vld [vmem:[%s984 + $0x38] sm:$0xff]
        %v1181 = vld [vmem:[%s993] sm:$0xff]
        %v1182 = vld [vmem:[%s993 + $0x8] sm:$0xff]
        %v1183 = vld [vmem:[%s993 + $0x10] sm:$0xff]
        %v1184 = vld [vmem:[%s993 + $0x18] sm:$0xff]
        %v1185 = vld [vmem:[%s993 + $0x20] sm:$0xff]
        %v1186 = vld [vmem:[%s993 + $0x28] sm:$0xff]
        %v1187 = vld [vmem:[%s993 + $0x30] sm:$0xff]
        %v1188 = vld [vmem:[%s993 + $0x38] sm:$0xff]
        %v1189 = vsub.f32 %v1181, %v1173
        %v1190 = vsub.f32 %v1182, %v1174
        %v1191 = vsub.f32 %v1183, %v1175
        %v1192 = vsub.f32 %v1184, %v1176
        %v1193 = vsub.f32 %v1185, %v1177
        %v1194 = vsub.f32 %v1186, %v1178
        %v1195 = vsub.f32 %v1187, %v1179
        %v1196 = vsub.f32 %v1188, %v1180
        %v1197 = vld [vmem:[%s957] sm:$0xff]
        %v1198 = vld [vmem:[%s957 + $0x8] sm:$0xff]
        %v1199 = vld [vmem:[%s957 + $0x10] sm:$0xff]
        %v1200 = vld [vmem:[%s957 + $0x18] sm:$0xff]
        %v1201 = vld [vmem:[%s957 + $0x20] sm:$0xff]
        %v1202 = vld [vmem:[%s957 + $0x28] sm:$0xff]
        %v1203 = vld [vmem:[%s957 + $0x30] sm:$0xff]
        %v1204 = vld [vmem:[%s957 + $0x38] sm:$0xff]
        %v1205 = vld [vmem:[#allocation11] sm:$0xf]
        %v1206 = vld [vmem:[#allocation11 + $0x4] sm:$0xf]
        %v1207 = vld [vmem:[#allocation11 + $0x8] sm:$0xf]
        %v1208 = vld [vmem:[#allocation11 + $0xc] sm:$0xf]
        %v1209 = vld [vmem:[#allocation11 + $0x10] sm:$0xf]
        %v1210 = vld [vmem:[#allocation11 + $0x14] sm:$0xf]
        %v1211 = vld [vmem:[#allocation11 + $0x18] sm:$0xf]
        %v1212 = vld [vmem:[#allocation11 + $0x1c] sm:$0xf]
        %v1213 = vld [vmem:[#allocation11 + $0x20] sm:$0xf]
        %v1214 = vld [vmem:[#allocation11 + $0x24] sm:$0xf]
        %v1215 = vld [vmem:[#allocation11 + $0x28] sm:$0xf]
        %v1216 = vld [vmem:[#allocation11 + $0x2c] sm:$0xf]
        %v1217 = vld [vmem:[#allocation11 + $0x30] sm:$0xf]
        %v1218 = vld [vmem:[#allocation11 + $0x34] sm:$0xf]
        %v1219 = vld [vmem:[#allocation11 + $0x38] sm:$0xf]
        %v1220 = vld [vmem:[#allocation11 + $0x3c] sm:$0xf]
        %v1221 = vld [vmem:[#allocation11 + $0x40] sm:$0xf]
        %v1222 = vld [vmem:[#allocation11 + $0x44] sm:$0xf]
        %v1223 = vld [vmem:[#allocation11 + $0x48] sm:$0xf]
        %v1224 = vld [vmem:[#allocation11 + $0x4c] sm:$0xf]
        %v1225 = vld [vmem:[#allocation11 + $0x50] sm:$0xf]
        %v1226 = vld [vmem:[#allocation11 + $0x54] sm:$0xf]
        %v1227 = vld [vmem:[#allocation11 + $0x58] sm:$0xf]
        %v1228 = vld [vmem:[#allocation11 + $0x5c] sm:$0xf]
        %v1229 = vld [vmem:[#allocation11 + $0x60] sm:$0x3]
        %v1230 = vld [vmem:[#allocation13] sm:$0x1]
        %v1232 = vlaneseq
        %v1233 = vshrl.u32 %v1232, 7
        %v1234 = vsub.s32 0, %v1233
        %v1235 = vrot.slane %v1230, %v1234
        %v1245 = vunpack.c.l.b16 %v1197
        %v1246 = vunpack.c.h.b16 %v1197
        %v1247 = vunpack.c.l.b16 %v1198
        %v1248 = vunpack.c.h.b16 %v1198
        %v1249 = vunpack.c.l.b16 %v1199
        %v1250 = vunpack.c.h.b16 %v1199
        %v1251 = vunpack.c.l.b16 %v1200
        %v1252 = vunpack.c.h.b16 %v1200
        %v1253 = vunpack.c.l.b16 %v1201
        %v1254 = vunpack.c.h.b16 %v1201
        %v1255 = vunpack.c.l.b16 %v1202
        %v1256 = vunpack.c.h.b16 %v1202
        %v1257 = vunpack.c.l.b16 %v1203
        %v1258 = vunpack.c.h.b16 %v1203
        %v1259 = vunpack.c.l.b16 %v1204
        %v1260 = vunpack.c.h.b16 %v1204
        %v1261 = vpack.c.b16 %v1247, %v1245
        %v1262 = vpack.c.b16 %v1248, %v1246
        %v1263 = vpack.c.b16 %v1251, %v1249
        %v1264 = vpack.c.b16 %v1252, %v1250
        %v1265 = vpack.c.b16 %v1255, %v1253
        %v1266 = vpack.c.b16 %v1256, %v1254
        %v1267 = vpack.c.b16 %v1259, %v1257
        %v1268 = vpack.c.b16 %v1260, %v1258
        %v1298 = vunpack.c.l.b16 %v1205
        %v1299 = vunpack.c.l.b16 %v1206
        %v1300 = vunpack.c.l.b16 %v1207
        %v1301 = vunpack.c.l.b16 %v1208
        %v1302 = vunpack.c.l.b16 %v1209
        %v1303 = vunpack.c.l.b16 %v1210
        %v1304 = vunpack.c.l.b16 %v1211
        %v1305 = vunpack.c.l.b16 %v1212
        %v1306 = vunpack.c.l.b16 %v1213
        %v1307 = vunpack.c.l.b16 %v1214
        %v1308 = vunpack.c.l.b16 %v1215
        %v1309 = vunpack.c.l.b16 %v1216
        %v1310 = vunpack.c.l.b16 %v1217
        %v1311 = vunpack.c.l.b16 %v1218
        %v1312 = vunpack.c.l.b16 %v1219
        %v1313 = vunpack.c.l.b16 %v1220
        %v1314 = vunpack.c.l.b16 %v1221
        %v1315 = vunpack.c.l.b16 %v1222
        %v1316 = vunpack.c.l.b16 %v1223
        %v1317 = vunpack.c.l.b16 %v1224
        %v1318 = vunpack.c.l.b16 %v1225
        %v1319 = vunpack.c.l.b16 %v1226
        %v1320 = vunpack.c.l.b16 %v1227
        %v1321 = vunpack.c.l.b16 %v1228
        %v1322 = vunpack.c.l.b16 %v1229
        %v1323 = vpack.c.b16 %v1299, %v1298
        %v1324 = vpack.c.b16 %v1301, %v1300
        %v1325 = vpack.c.b16 %v1303, %v1302
        %v1326 = vpack.c.b16 %v1305, %v1304
        %v1327 = vpack.c.b16 %v1307, %v1306
        %v1328 = vpack.c.b16 %v1309, %v1308
        %v1329 = vpack.c.b16 %v1311, %v1310
        %v1330 = vpack.c.b16 %v1313, %v1312
        %v1331 = vpack.c.b16 %v1315, %v1314
        %v1332 = vpack.c.b16 %v1317, %v1316
        %v1333 = vpack.c.b16 %v1319, %v1318
        %v1334 = vpack.c.b16 %v1321, %v1320
        %v1335 = vpack.c.b16 %v1322, %v1322
        %vm1348 = vcmask 556032
        %v1350 = vsel %vm1348, %v1262, 0
        %v1353 = vsel %vm1348, %v1264, 0
        %v1356 = vsel %vm1348, %v1266, 0
        %v1359 = vsel %vm1348, %v1268, 0
        %vm1361 = vcmask 1041408
        %v1363 = vsel %vm1361, %v1335, 0
        %1365 = vmatprep.subr.bf16.mxu0 0
        %1366 = vmatpush1.bf16.msra.mxu0 %v1323
        %1367 = vmatprep.subr.bf16.mxu0 0
        %1368 = vmatpush1.bf16.msra.mxu0 %v1324
        %1369 = vmatprep.subr.bf16.mxu0 0
        %1370 = vmatpush1.bf16.msra.mxu0 %v1325
        %1371 = vmatprep.subr.bf16.mxu0 0
        %1372 = vmatpush1.bf16.msra.mxu0 %v1326
        %1373 = vmatprep.subr.bf16.mxu0 0
        %1374 = vmatpush1.bf16.msra.mxu0 %v1327
        %1375 = vmatprep.subr.bf16.mxu0 0
        %1376 = vmatpush1.bf16.msra.mxu0 %v1328
        %1377 = vmatprep.subr.bf16.mxu0 0
        %1378 = vmatpush1.bf16.msra.mxu0 %v1329
        %1379 = vmatprep.subr.bf16.mxu0 0
        %1380 = vmatpush1.bf16.msra.mxu0 %v1330
        %1381 = vmatprep.subr.bf16.mxu0 0
        %1382 = vmatpush1.bf16.msra.mxu0 %v1331
        %1383 = vmatprep.subr.bf16.mxu0 0
        %1384 = vmatpush1.bf16.msra.mxu0 %v1332
        %1385 = vmatprep.subr.bf16.mxu0 0
        %1386 = vmatpush1.bf16.msra.mxu0 %v1333
        %1387 = vmatprep.subr.bf16.mxu0 0
        %1388 = vmatpush1.bf16.msra.mxu0 %v1334
        %1389 = vmatprep.subr.bf16.mxu0 0
        %1390 = vmatpush1.bf16.msra.mxu0 %v1363
        %1391 = vmatprep.subr.bf16.mxu0 0
        %1392 = vmatpush1.bf16.msra.mxu0 0
        %1393 = vmatprep.subr.bf16.mxu0 0
        %1394 = vmatpush1.bf16.msra.mxu0 0
        %1395 = vmatprep.subr.bf16.mxu0 0
        %1396 = vmatpush1.bf16.msra.mxu0 0
        %1397 = vmatprep.mubr.bf16.mxu0 %v1350
        %1398 = vmatmul.mubr.bf16.gmra.mrb[0].mxu0 %v1261
        %v1399 = vpop.f32.mrb[0].mxu0
        %v1400 = vadd.f32 %v1235, %v1399
        %v1401 = vpop.f32.mrb[0].mxu0
        %v1402 = vpop.f32.mrb[0].mxu0
        %v1403 = vadd.f32 %v1235, %v1402
        %v1404 = vpop.f32.mrb[0].mxu0
        %1405 = vmatprep.mubr.bf16.mxu0 %v1353
        %1406 = vmatmul.mubr.bf16.gmra.mrb[0].mxu0 %v1263
        %v1407 = vpop.f32.mrb[0].mxu0
        %v1408 = vadd.f32 %v1235, %v1407
        %v1409 = vpop.f32.mrb[0].mxu0
        %v1410 = vpop.f32.mrb[0].mxu0
        %v1411 = vadd.f32 %v1235, %v1410
        %v1412 = vpop.f32.mrb[0].mxu0
        %1413 = vmatprep.mubr.bf16.mxu0 %v1356
        %1414 = vmatmul.mubr.bf16.gmra.mrb[0].mxu0 %v1265
        %v1415 = vpop.f32.mrb[0].mxu0
        %v1416 = vadd.f32 %v1235, %v1415
        %v1417 = vpop.f32.mrb[0].mxu0
        %v1418 = vpop.f32.mrb[0].mxu0
        %v1419 = vadd.f32 %v1235, %v1418
        %v1420 = vpop.f32.mrb[0].mxu0
        %1421 = vmatprep.mubr.bf16.mxu0 %v1359
        %1422 = vmatmul.mubr.bf16.gmra.mrb[0].mxu0 %v1267
        %v1423 = vpop.f32.mrb[0].mxu0
        %v1424 = vadd.f32 %v1235, %v1423
        %v1425 = vpop.f32.mrb[0].mxu0
        %v1426 = vpop.f32.mrb[0].mxu0
        %v1427 = vadd.f32 %v1235, %v1426
        %v1428 = vpop.f32.mrb[0].mxu0
        %1429 = vdwg.mxu0
        %v1430 = vmax.f32 %v1400, 0.0
        %v1431 = vmax.f32 %v1403, 0.0
        %v1432 = vmax.f32 %v1408, 0.0
        %v1433 = vmax.f32 %v1411, 0.0
        %v1434 = vmax.f32 %v1416, 0.0
        %v1435 = vmax.f32 %v1419, 0.0
        %v1436 = vmax.f32 %v1424, 0.0
        %v1437 = vmax.f32 %v1427, 0.0
        %v1438 = vld [vmem:[#allocation14] sm:$0x3]
        %1440 = vset.pattern.permute.xlu0 0
        %1441 = vperm.xlu0 %1440, %v1189
        %v1442 = vpop.permute.xlu0 %1441
        %1445 = vset.pattern.permute.xlu0 0
        %1446 = vperm.xlu0 %1445, %v1190
        %v1447 = vpop.permute.xlu0 %1446
        %1450 = vset.pattern.permute.xlu0 0
        %1451 = vperm.xlu0 %1450, %v1191
        %v1452 = vpop.permute.xlu0 %1451
        %1455 = vset.pattern.permute.xlu0 0
        %1456 = vperm.xlu0 %1455, %v1192
        %v1457 = vpop.permute.xlu0 %1456
        %1460 = vset.pattern.permute.xlu0 0
        %1461 = vperm.xlu0 %1460, %v1193
        %v1462 = vpop.permute.xlu0 %1461
        %1465 = vset.pattern.permute.xlu0 0
        %1466 = vperm.xlu0 %1465, %v1194
        %v1467 = vpop.permute.xlu0 %1466
        %1470 = vset.pattern.permute.xlu0 0
        %1471 = vperm.xlu0 %1470, %v1195
        %v1472 = vpop.permute.xlu0 %1471
        %1475 = vset.pattern.permute.xlu0 0
        %1476 = vperm.xlu0 %1475, %v1196
        %v1477 = vpop.permute.xlu0 %1476
        %v1479 = vlaneseq
        %v1480 = vshrl.u32 %v1479, 7
        %v1481 = vsub.s32 0, %v1480
        %v1482 = vrot.slane %v1438, %v1481
        %v1483 = vmul.f32 %v1442, %v1482
        %v1484 = vmul.f32 %v1447, %v1482
        %v1485 = vmul.f32 %v1452, %v1482
        %v1486 = vmul.f32 %v1457, %v1482
        %v1487 = vmul.f32 %v1462, %v1482
        %v1488 = vmul.f32 %v1467, %v1482
        %v1489 = vmul.f32 %v1472, %v1482
        %v1490 = vmul.f32 %v1477, %v1482
        %1491 = vset.pattern.permute.xlu0 1
        %1492 = vperm.xlu0 %1491, %v1189
        %v1493 = vpop.permute.xlu0 %1492
        %1495 = vset.pattern.permute.xlu0 1
        %1496 = vperm.xlu0 %1495, %v1190
        %v1497 = vpop.permute.xlu0 %1496
        %1499 = vset.pattern.permute.xlu0 1
        %1500 = vperm.xlu0 %1499, %v1191
        %v1501 = vpop.permute.xlu0 %1500
        %1503 = vset.pattern.permute.xlu0 1
        %1504 = vperm.xlu0 %1503, %v1192
        %v1505 = vpop.permute.xlu0 %1504
        %1507 = vset.pattern.permute.xlu0 1
        %1508 = vperm.xlu0 %1507, %v1193
        %v1509 = vpop.permute.xlu0 %1508
        %1511 = vset.pattern.permute.xlu0 1
        %1512 = vperm.xlu0 %1511, %v1194
        %v1513 = vpop.permute.xlu0 %1512
        %1515 = vset.pattern.permute.xlu0 1
        %1516 = vperm.xlu0 %1515, %v1195
        %v1517 = vpop.permute.xlu0 %1516
        %1519 = vset.pattern.permute.xlu0 1
        %1520 = vperm.xlu0 %1519, %v1196
        %v1521 = vpop.permute.xlu0 %1520
        %v1523 = vlaneseq
        %v1524 = vshrl.u32 %v1523, 7
        %v1525 = vsub.s32 1, %v1524
        %v1526 = vrot.slane %v1438, %v1525
        %v1527 = vmul.f32 %v1493, %v1526
        %v1528 = vmul.f32 %v1497, %v1526
        %v1529 = vmul.f32 %v1501, %v1526
        %v1530 = vmul.f32 %v1505, %v1526
        %v1531 = vmul.f32 %v1509, %v1526
        %v1532 = vmul.f32 %v1513, %v1526
        %v1533 = vmul.f32 %v1517, %v1526
        %v1534 = vmul.f32 %v1521, %v1526
        %v1535 = vadd.f32 %v1483, %v1527
        %v1536 = vadd.f32 %v1484, %v1528
        %v1537 = vadd.f32 %v1485, %v1529
        %v1538 = vadd.f32 %v1486, %v1530
        %v1539 = vadd.f32 %v1487, %v1531
        %v1540 = vadd.f32 %v1488, %v1532
        %v1541 = vadd.f32 %v1489, %v1533
        %v1542 = vadd.f32 %v1490, %v1534
        %v1543 = vld [vmem:[#allocation16] sm:$0x1]
        %v1545 = vlaneseq
        %v1546 = vshrl.u32 %v1545, 7
        %v1547 = vsub.s32 0, %v1546
        %v1548 = vrot.slane %v1543, %v1547
        %v1550 = vadd.f32 %v1535, %v1548
        %v1551 = vadd.f32 %v1536, %v1548
        %v1552 = vadd.f32 %v1537, %v1548
        %v1553 = vadd.f32 %v1538, %v1548
        %v1554 = vadd.f32 %v1539, %v1548
        %v1555 = vadd.f32 %v1540, %v1548
        %v1556 = vadd.f32 %v1541, %v1548
        %v1557 = vadd.f32 %v1542, %v1548
        %v1558 = vmax.f32 %v1550, 0.0
        %v1559 = vmax.f32 %v1551, 0.0
        %v1560 = vmax.f32 %v1552, 0.0
        %v1561 = vmax.f32 %v1553, 0.0
        %v1562 = vmax.f32 %v1554, 0.0
        %v1563 = vmax.f32 %v1555, 0.0
        %v1564 = vmax.f32 %v1556, 0.0
        %v1565 = vmax.f32 %v1557, 0.0
        %v1566 = vpack.c.bf16 %v1431, %v1430
        %v1567 = vpack.c.bf16 %v1433, %v1432
        %v1568 = vpack.c.bf16 %v1435, %v1434
        %v1569 = vpack.c.bf16 %v1437, %v1436
        %v1570 = vpack.c.bf16 %v1559, %v1558
        %v1571 = vpack.c.bf16 %v1561, %v1560
        %v1572 = vpack.c.bf16 %v1563, %v1562
        %v1573 = vpack.c.bf16 %v1565, %v1564
        %1578 = vrot.lane.b32.xlu0 %v1570, 96
        %v1579 = vpop.permute.xlu0 %1578
        %1580 = vrot.lane.b32.xlu0 %v1571, 96
        %v1581 = vpop.permute.xlu0 %1580
        %1582 = vrot.lane.b32.xlu0 %v1572, 96
        %v1583 = vpop.permute.xlu0 %1582
        %1584 = vrot.lane.b32.xlu0 %v1573, 96
        %v1585 = vpop.permute.xlu0 %1584
        %vm1586 = vcmask 785408
        %v1589 = vsel %vm1586, %v1566, %v1579
        %v1593 = vsel %vm1586, %v1567, %v1581
        %v1597 = vsel %vm1586, %v1568, %v1583
        %v1601 = vsel %vm1586, %v1569, %v1585
        %v1603 = vld [vmem:[#allocation17] sm:$0xf]
        %v1604 = vld [vmem:[#allocation17 + $0x4] sm:$0xf]
        %v1605 = vld [vmem:[#allocation17 + $0x8] sm:$0xf]
        %v1606 = vld [vmem:[#allocation17 + $0xc] sm:$0xf]
        %v1607 = vld [vmem:[#allocation17 + $0x10] sm:$0xf]
        %v1608 = vld [vmem:[#allocation17 + $0x14] sm:$0xf]
        %v1609 = vld [vmem:[#allocation17 + $0x18] sm:$0xf]
        %v1610 = vld [vmem:[#allocation17 + $0x1c] sm:$0xf]
        %v1611 = vld [vmem:[#allocation17 + $0x20] sm:$0xf]
        %v1612 = vld [vmem:[#allocation17 + $0x24] sm:$0xf]
        %v1613 = vld [vmem:[#allocation17 + $0x28] sm:$0xf]
        %v1614 = vld [vmem:[#allocation17 + $0x2c] sm:$0xf]
        %v1615 = vld [vmem:[#allocation17 + $0x30] sm:$0xf]
        %v1616 = vld [vmem:[#allocation17 + $0x34] sm:$0xf]
        %v1617 = vld [vmem:[#allocation17 + $0x38] sm:$0xf]
        %v1618 = vld [vmem:[#allocation17 + $0x3c] sm:$0xf]
        %v1619 = vld [vmem:[#allocation17 + $0x40] sm:$0xf]
        %v1620 = vld [vmem:[#allocation17 + $0x44] sm:$0xf]
        %v1621 = vld [vmem:[#allocation17 + $0x48] sm:$0xf]
        %v1622 = vld [vmem:[#allocation17 + $0x4c] sm:$0xf]
        %v1623 = vld [vmem:[#allocation19] sm:$0x1]
        %v1625 = vlaneseq
        %v1626 = vshrl.u32 %v1625, 7
        %v1627 = vsub.s32 0, %v1626
        %v1628 = vrot.slane %v1623, %v1627
        %v1650 = vunpack.c.l.b16 %v1603
        %v1651 = vunpack.c.l.b16 %v1604
        %v1652 = vunpack.c.l.b16 %v1605
        %v1653 = vunpack.c.l.b16 %v1606
        %v1654 = vunpack.c.l.b16 %v1607
        %v1655 = vunpack.c.l.b16 %v1608
        %v1656 = vunpack.c.l.b16 %v1609
        %v1657 = vunpack.c.l.b16 %v1610
        %v1658 = vunpack.c.l.b16 %v1611
        %v1659 = vunpack.c.l.b16 %v1612
        %v1660 = vunpack.c.l.b16 %v1613
        %v1661 = vunpack.c.l.b16 %v1614
        %v1662 = vunpack.c.l.b16 %v1615
        %v1663 = vunpack.c.l.b16 %v1616
        %v1664 = vunpack.c.l.b16 %v1617
        %v1665 = vunpack.c.l.b16 %v1618
        %v1666 = vunpack.c.l.b16 %v1619
        %v1667 = vunpack.c.l.b16 %v1620
        %v1668 = vunpack.c.l.b16 %v1621
        %v1669 = vunpack.c.l.b16 %v1622
        %v1670 = vpack.c.b16 %v1651, %v1650
        %v1671 = vpack.c.b16 %v1653, %v1652
        %v1672 = vpack.c.b16 %v1655, %v1654
        %v1673 = vpack.c.b16 %v1657, %v1656
        %v1674 = vpack.c.b16 %v1659, %v1658
        %v1675 = vpack.c.b16 %v1661, %v1660
        %v1676 = vpack.c.b16 %v1663, %v1662
        %v1677 = vpack.c.b16 %v1665, %v1664
        %v1678 = vpack.c.b16 %v1667, %v1666
        %v1679 = vpack.c.b16 %v1669, %v1668
        %vm1690 = vcmask 261120
        %v1691 = vsel %vm1690, %v1579, 0
        %v1693 = vsel %vm1690, %v1581, 0
        %v1695 = vsel %vm1690, %v1583, 0
        %v1697 = vsel %vm1690, %v1585, 0
        %1699 = vmatprep.subr.bf16.mxu0 0
        %1700 = vmatpush1.bf16.msra.mxu0 %v1670
        %1701 = vmatprep.subr.bf16.mxu0 0
        %1702 = vmatpush1.bf16.msra.mxu0 %v1671
        %1703 = vmatprep.subr.bf16.mxu0 0
        %1704 = vmatpush1.bf16.msra.mxu0 %v1672
        %1705 = vmatprep.subr.bf16.mxu0 0
        %1706 = vmatpush1.bf16.msra.mxu0 %v1673
        %1707 = vmatprep.subr.bf16.mxu0 0
        %1708 = vmatpush1.bf16.msra.mxu0 %v1674
        %1709 = vmatprep.subr.bf16.mxu0 0
        %1710 = vmatpush1.bf16.msra.mxu0 %v1675
        %1711 = vmatprep.subr.bf16.mxu0 0
        %1712 = vmatpush1.bf16.msra.mxu0 %v1676
        %1713 = vmatprep.subr.bf16.mxu0 0
        %1714 = vmatpush1.bf16.msra.mxu0 %v1677
        %1715 = vmatprep.subr.bf16.mxu0 0
        %1716 = vmatpush1.bf16.msra.mxu0 %v1678
        %1717 = vmatprep.subr.bf16.mxu0 0
        %1718 = vmatpush1.bf16.msra.mxu0 %v1679
        %1719 = vmatprep.subr.bf16.mxu0 0
        %1720 = vmatpush1.bf16.msra.mxu0 0
        %1721 = vmatprep.subr.bf16.mxu0 0
        %1722 = vmatpush1.bf16.msra.mxu0 0
        %1723 = vmatprep.subr.bf16.mxu0 0
        %1724 = vmatpush1.bf16.msra.mxu0 0
        %1725 = vmatprep.subr.bf16.mxu0 0
        %1726 = vmatpush1.bf16.msra.mxu0 0
        %1727 = vmatprep.subr.bf16.mxu0 0
        %1728 = vmatpush1.bf16.msra.mxu0 0
        %1729 = vmatprep.subr.bf16.mxu0 0
        %1730 = vmatpush1.bf16.msra.mxu0 0
        %1731 = vmatprep.mubr.bf16.mxu0 %v1691
        %1732 = vmatmul.mubr.bf16.gmra.mrb[0].mxu0 %v1589
        %v1733 = vpop.f32.mrb[0].mxu0
        %v1734 = vadd.f32 %v1628, %v1733
        %v1735 = vpop.f32.mrb[0].mxu0
        %v1736 = vpop.f32.mrb[0].mxu0
        %v1737 = vadd.f32 %v1628, %v1736
        %v1738 = vpop.f32.mrb[0].mxu0
        %1739 = vmatprep.mubr.bf16.mxu0 %v1693
        %1740 = vmatmul.mubr.bf16.gmra.mrb[0].mxu0 %v1593
        %v1741 = vpop.f32.mrb[0].mxu0
        %v1742 = vadd.f32 %v1628, %v1741
        %v1743 = vpop.f32.mrb[0].mxu0
        %v1744 = vpop.f32.mrb[0].mxu0
        %v1745 = vadd.f32 %v1628, %v1744
        %v1746 = vpop.f32.mrb[0].mxu0
        %1747 = vmatprep.mubr.bf16.mxu0 %v1695
        %1748 = vmatmul.mubr.bf16.gmra.mrb[0].mxu0 %v1597
        %v1749 = vpop.f32.mrb[0].mxu0
        %v1750 = vadd.f32 %v1628, %v1749
        %v1751 = vpop.f32.mrb[0].mxu0
        %v1752 = vpop.f32.mrb[0].mxu0
        %v1753 = vadd.f32 %v1628, %v1752
        %v1754 = vpop.f32.mrb[0].mxu0
        %1755 = vmatprep.mubr.bf16.mxu0 %v1697
        %1756 = vmatmul.mubr.bf16.gmra.mrb[0].mxu0 %v1601
        %v1757 = vpop.f32.mrb[0].mxu0
        %v1758 = vadd.f32 %v1628, %v1757
        %v1759 = vpop.f32.mrb[0].mxu0
        %v1760 = vpop.f32.mrb[0].mxu0
        %v1761 = vadd.f32 %v1628, %v1760
        %v1762 = vpop.f32.mrb[0].mxu0
        %1763 = vdwg.mxu0
        %v1764 = vmax.f32 %v1734, 0.0
        %v1765 = vmax.f32 %v1737, 0.0
        %v1766 = vmax.f32 %v1742, 0.0
        %v1767 = vmax.f32 %v1745, 0.0
        %v1768 = vmax.f32 %v1750, 0.0
        %v1769 = vmax.f32 %v1753, 0.0
        %v1770 = vmax.f32 %v1758, 0.0
        %v1771 = vmax.f32 %v1761, 0.0
        %v1772 = vpack.c.bf16 %v1166, %v1165
        %v1773 = vpack.c.bf16 %v1168, %v1167
        %v1774 = vpack.c.bf16 %v1170, %v1169
        %v1775 = vpack.c.bf16 %v1172, %v1171
        %v1776 = vld [vmem:[%s975] sm:$0xf]
        %v1777 = vld [vmem:[%s975 + $0x4] sm:$0xf]
        %v1778 = vld [vmem:[%s975 + $0x8] sm:$0xf]
        %v1779 = vld [vmem:[%s975 + $0xc] sm:$0xf]
        %v1780 = vld [vmem:[%s975 + $0x10] sm:$0xf]
        %v1781 = vld [vmem:[%s975 + $0x14] sm:$0xf]
        %v1782 = vld [vmem:[%s975 + $0x18] sm:$0xf]
        %v1783 = vld [vmem:[%s975 + $0x1c] sm:$0xf]
        %v1784 = vpack.c.bf16 %v1765, %v1764
        %v1785 = vpack.c.bf16 %v1767, %v1766
        %v1786 = vpack.c.bf16 %v1769, %v1768
        %v1787 = vpack.c.bf16 %v1771, %v1770
        %v1788 = vpack.c.bf16 %v1190, %v1189
        %v1789 = vpack.c.bf16 %v1192, %v1191
        %v1790 = vpack.c.bf16 %v1194, %v1193
        %v1791 = vpack.c.bf16 %v1196, %v1195
        %v1800 = vunpack.c.l.b16 %v1776
        %v1801 = vunpack.c.l.b16 %v1777
        %v1802 = vunpack.c.l.b16 %v1778
        %v1803 = vunpack.c.l.b16 %v1779
        %v1804 = vunpack.c.l.b16 %v1780
        %v1805 = vunpack.c.l.b16 %v1781
        %v1806 = vunpack.c.l.b16 %v1782
        %v1807 = vunpack.c.l.b16 %v1783
        %v1808 = vpack.c.b16 %v1801, %v1800
        %v1809 = vpack.c.b16 %v1803, %v1802
        %v1810 = vpack.c.b16 %v1805, %v1804
        %v1811 = vpack.c.b16 %v1807, %v1806
        %1812 = vrot.lane.b32.xlu0 %v1808, 96
        %v1813 = vpop.permute.xlu0 %1812
        %1814 = vrot.lane.b32.xlu0 %v1809, 96
        %v1815 = vpop.permute.xlu0 %1814
        %1816 = vrot.lane.b32.xlu0 %v1810, 96
        %v1817 = vpop.permute.xlu0 %1816
        %1818 = vrot.lane.b32.xlu0 %v1811, 96
        %v1819 = vpop.permute.xlu0 %1818
        %1824 = vrot.lane.b32.xlu0 %v1784, 32
        %v1825 = vpop.permute.xlu0 %1824
        %1826 = vrot.lane.b32.xlu0 %v1785, 32
        %v1827 = vpop.permute.xlu0 %1826
        %1828 = vrot.lane.b32.xlu0 %v1786, 32
        %v1829 = vpop.permute.xlu0 %1828
        %1830 = vrot.lane.b32.xlu0 %v1787, 32
        %v1831 = vpop.permute.xlu0 %1830
        %1836 = vrot.lane.b32.xlu0 %v1788, 112
        %v1837 = vpop.permute.xlu0 %1836
        %1838 = vrot.lane.b32.xlu0 %v1789, 112
        %v1839 = vpop.permute.xlu0 %1838
        %1840 = vrot.lane.b32.xlu0 %v1790, 112
        %v1841 = vpop.permute.xlu0 %1840
        %1842 = vrot.lane.b32.xlu0 %v1791, 112
        %v1843 = vpop.permute.xlu0 %1842
        %v1846 = vsel %vm1586, %v1772, %v1813
        %v1850 = vsel %vm1586, %v1773, %v1815
        %v1854 = vsel %vm1586, %v1774, %v1817
        %v1858 = vsel %vm1586, %v1775, %v1819
        %v1861 = vsel %vm1690, %v1813, %v1825
        %v1863 = vsel %vm1690, %v1815, %v1827
        %v1865 = vsel %vm1690, %v1817, %v1829
        %v1867 = vsel %vm1690, %v1819, %v1831
        %vm1868 = vcmask 916480
        %v1870 = vsel %vm1868, %v1861, %v1837
        %v1872 = vsel %vm1868, %v1863, %v1839
        %v1874 = vsel %vm1868, %v1865, %v1841
        %v1876 = vsel %vm1868, %v1867, %v1843
        %vm1877 = vcmask 932864
        %v1879 = vsel %vm1877, %v1870, 0
        %v1881 = vsel %vm1877, %v1872, 0
        %v1883 = vsel %vm1877, %v1874, 0
        %v1885 = vsel %vm1877, %v1876, 0
        %v1887 = vld [vmem:[#allocation20] sm:$0xff]
        %v1888 = vld [vmem:[#allocation20 + $0x8] sm:$0xf]
        %v1889 = vld [vmem:[#allocation20 + $0xc] sm:$0xff]
        %v1890 = vld [vmem:[#allocation20 + $0x14] sm:$0xf]
        %v1891 = vld [vmem:[#allocation20 + $0x18] sm:$0xff]
        %v1892 = vld [vmem:[#allocation20 + $0x20] sm:$0xf]
        %v1893 = vld [vmem:[#allocation20 + $0x24] sm:$0xff]
        %v1894 = vld [vmem:[#allocation20 + $0x2c] sm:$0xf]
        %v1895 = vld [vmem:[#allocation20 + $0x30] sm:$0xff]
        %v1896 = vld [vmem:[#allocation20 + $0x38] sm:$0xf]
        %v1897 = vld [vmem:[#allocation20 + $0x3c] sm:$0xff]
        %v1898 = vld [vmem:[#allocation20 + $0x44] sm:$0xf]
        %v1899 = vld [vmem:[#allocation20 + $0x48] sm:$0xff]
        %v1900 = vld [vmem:[#allocation20 + $0x50] sm:$0xf]
        %v1901 = vld [vmem:[#allocation20 + $0x54] sm:$0xff]
        %v1902 = vld [vmem:[#allocation20 + $0x5c] sm:$0xf]
        %v1903 = vld [vmem:[#allocation20 + $0x60] sm:$0xff]
        %v1904 = vld [vmem:[#allocation20 + $0x68] sm:$0xf]
        %v1905 = vld [vmem:[#allocation20 + $0x6c] sm:$0xff]
        %v1906 = vld [vmem:[#allocation20 + $0x74] sm:$0xf]
        %v1907 = vld [vmem:[#allocation20 + $0x78] sm:$0xff]
        %v1908 = vld [vmem:[#allocation20 + $0x80] sm:$0xf]
        %v1909 = vld [vmem:[#allocation20 + $0x84] sm:$0xff]
        %v1910 = vld [vmem:[#allocation20 + $0x8c] sm:$0xf]
        %v1911 = vld [vmem:[#allocation20 + $0x90] sm:$0xff]
        %v1912 = vld [vmem:[#allocation20 + $0x98] sm:$0xf]
        %v1913 = vld [vmem:[#allocation20 + $0x9c] sm:$0xff]
        %v1914 = vld [vmem:[#allocation20 + $0xa4] sm:$0xf]
        %v1915 = vld [vmem:[#allocation20 + $0xa8] sm:$0xff]
        %v1916 = vld [vmem:[#allocation20 + $0xb0] sm:$0xf]
        %v1917 = vld [vmem:[#allocation20 + $0xb4] sm:$0xff]
        %v1918 = vld [vmem:[#allocation20 + $0xbc] sm:$0xf]
        %v1919 = vld [vmem:[#allocation20 + $0xc0] sm:$0xff]
        %v1920 = vld [vmem:[#allocation20 + $0xc8] sm:$0xf]
        %v1921 = vld [vmem:[#allocation20 + $0xcc] sm:$0xff]
        %v1922 = vld [vmem:[#allocation20 + $0xd4] sm:$0xf]
        %v1923 = vld [vmem:[#allocation20 + $0xd8] sm:$0xff]
        %v1924 = vld [vmem:[#allocation20 + $0xe0] sm:$0xf]
        %v1925 = vld [vmem:[#allocation20 + $0xe4] sm:$0xff]
        %v1926 = vld [vmem:[#allocation20 + $0xec] sm:$0xf]
        %v1927 = vld [vmem:[#allocation20 + $0xf0] sm:$0xff]
        %v1928 = vld [vmem:[#allocation20 + $0xf8] sm:$0xf]
        %v1929 = vld [vmem:[#allocation20 + $0xfc] sm:$0xff]
        %v1930 = vld [vmem:[#allocation20 + $0x104] sm:$0xf]
        %v1931 = vld [vmem:[#allocation20 + $0x108] sm:$0xff]
        %v1932 = vld [vmem:[#allocation20 + $0x110] sm:$0xf]
        %v1933 = vld [vmem:[#allocation20 + $0x114] sm:$0xff]
        %v1934 = vld [vmem:[#allocation20 + $0x11c] sm:$0xf]
        %v1935 = vld [vmem:[#allocation20 + $0x120] sm:$0xff]
        %v1936 = vld [vmem:[#allocation20 + $0x128] sm:$0xf]
        %v1937 = vld [vmem:[#allocation20 + $0x12c] sm:$0xff]
        %v1938 = vld [vmem:[#allocation20 + $0x134] sm:$0xf]
        %v1939 = vld [vmem:[#allocation20 + $0x138] sm:$0xff]
        %v1940 = vld [vmem:[#allocation20 + $0x140] sm:$0xf]
        %v1941 = vld [vmem:[#allocation20 + $0x144] sm:$0xff]
        %v1942 = vld [vmem:[#allocation20 + $0x14c] sm:$0xf]
        %v1943 = vld [vmem:[#allocation20 + $0x150] sm:$0xff]
        %v1944 = vld [vmem:[#allocation20 + $0x158] sm:$0xf]
        %v1945 = vld [vmem:[#allocation20 + $0x15c] sm:$0xff]
        %v1946 = vld [vmem:[#allocation20 + $0x164] sm:$0xf]
        %v1947 = vld [vmem:[#allocation20 + $0x168] sm:$0xff]
        %v1948 = vld [vmem:[#allocation20 + $0x170] sm:$0xf]
        %v1949 = vld [vmem:[#allocation20 + $0x174] sm:$0xff]
        %v1950 = vld [vmem:[#allocation20 + $0x17c] sm:$0xf]
        %v2015 = vunpack.c.l.b16 %v1887
        %v2016 = vunpack.c.h.b16 %v1887
        %v2017 = vunpack.c.l.b16 %v1888
        %v2018 = vunpack.c.l.b16 %v1889
        %v2019 = vunpack.c.h.b16 %v1889
        %v2020 = vunpack.c.l.b16 %v1890
        %v2021 = vunpack.c.l.b16 %v1891
        %v2022 = vunpack.c.h.b16 %v1891
        %v2023 = vunpack.c.l.b16 %v1892
        %v2024 = vunpack.c.l.b16 %v1893
        %v2025 = vunpack.c.h.b16 %v1893
        %v2026 = vunpack.c.l.b16 %v1894
        %v2027 = vunpack.c.l.b16 %v1895
        %v2028 = vunpack.c.h.b16 %v1895
        %v2029 = vunpack.c.l.b16 %v1896
        %v2030 = vunpack.c.l.b16 %v1897
        %v2031 = vunpack.c.h.b16 %v1897
        %v2032 = vunpack.c.l.b16 %v1898
        %v2033 = vunpack.c.l.b16 %v1899
        %v2034 = vunpack.c.h.b16 %v1899
        %v2035 = vunpack.c.l.b16 %v1900
        %v2036 = vunpack.c.l.b16 %v1901
        %v2037 = vunpack.c.h.b16 %v1901
        %v2038 = vunpack.c.l.b16 %v1902
        %v2039 = vunpack.c.l.b16 %v1903
        %v2040 = vunpack.c.h.b16 %v1903
        %v2041 = vunpack.c.l.b16 %v1904
        %v2042 = vunpack.c.l.b16 %v1905
        %v2043 = vunpack.c.h.b16 %v1905
        %v2044 = vunpack.c.l.b16 %v1906
        %v2045 = vunpack.c.l.b16 %v1907
        %v2046 = vunpack.c.h.b16 %v1907
        %v2047 = vunpack.c.l.b16 %v1908
        %v2048 = vunpack.c.l.b16 %v1909
        %v2049 = vunpack.c.h.b16 %v1909
        %v2050 = vunpack.c.l.b16 %v1910
        %v2051 = vunpack.c.l.b16 %v1911
        %v2052 = vunpack.c.h.b16 %v1911
        %v2053 = vunpack.c.l.b16 %v1912
        %v2054 = vunpack.c.l.b16 %v1913
        %v2055 = vunpack.c.h.b16 %v1913
        %v2056 = vunpack.c.l.b16 %v1914
        %v2057 = vunpack.c.l.b16 %v1915
        %v2058 = vunpack.c.h.b16 %v1915
        %v2059 = vunpack.c.l.b16 %v1916
        %v2060 = vunpack.c.l.b16 %v1917
        %v2061 = vunpack.c.h.b16 %v1917
        %v2062 = vunpack.c.l.b16 %v1918
        %v2063 = vunpack.c.l.b16 %v1919
        %v2064 = vunpack.c.h.b16 %v1919
        %v2065 = vunpack.c.l.b16 %v1920
        %v2066 = vunpack.c.l.b16 %v1921
        %v2067 = vunpack.c.h.b16 %v1921
        %v2068 = vunpack.c.l.b16 %v1922
        %v2069 = vunpack.c.l.b16 %v1923
        %v2070 = vunpack.c.h.b16 %v1923
        %v2071 = vunpack.c.l.b16 %v1924
        %v2072 = vunpack.c.l.b16 %v1925
        %v2073 = vunpack.c.h.b16 %v1925
        %v2074 = vunpack.c.l.b16 %v1926
        %v2075 = vunpack.c.l.b16 %v1927
        %v2076 = vunpack.c.h.b16 %v1927
        %v2077 = vunpack.c.l.b16 %v1928
        %v2078 = vunpack.c.l.b16 %v1929
        %v2079 = vunpack.c.h.b16 %v1929
        %v2080 = vunpack.c.l.b16 %v1930
        %v2081 = vunpack.c.l.b16 %v1931
        %v2082 = vunpack.c.h.b16 %v1931
        %v2083 = vunpack.c.l.b16 %v1932
        %v2084 = vunpack.c.l.b16 %v1933
        %v2085 = vunpack.c.h.b16 %v1933
        %v2086 = vunpack.c.l.b16 %v1934
        %v2087 = vunpack.c.l.b16 %v1935
        %v2088 = vunpack.c.h.b16 %v1935
        %v2089 = vunpack.c.l.b16 %v1936
        %v2090 = vunpack.c.l.b16 %v1937
        %v2091 = vunpack.c.h.b16 %v1937
        %v2092 = vunpack.c.l.b16 %v1938
        %v2093 = vunpack.c.l.b16 %v1939
        %v2094 = vunpack.c.h.b16 %v1939
        %v2095 = vunpack.c.l.b16 %v1940
        %v2096 = vunpack.c.l.b16 %v1941
        %v2097 = vunpack.c.h.b16 %v1941
        %v2098 = vunpack.c.l.b16 %v1942
        %v2099 = vunpack.c.l.b16 %v1943
        %v2100 = vunpack.c.h.b16 %v1943
        %v2101 = vunpack.c.l.b16 %v1944
        %v2102 = vunpack.c.l.b16 %v1945
        %v2103 = vunpack.c.h.b16 %v1945
        %v2104 = vunpack.c.l.b16 %v1946
        %v2105 = vunpack.c.l.b16 %v1947
        %v2106 = vunpack.c.h.b16 %v1947
        %v2107 = vunpack.c.l.b16 %v1948
        %v2108 = vunpack.c.l.b16 %v1949
        %v2109 = vunpack.c.h.b16 %v1949
        %v2110 = vunpack.c.l.b16 %v1950
        %v2111 = vpack.c.b16 %v2018, %v2015
        %v2112 = vpack.c.b16 %v2019, %v2016
        %v2113 = vpack.c.b16 %v2020, %v2017
        %v2114 = vpack.c.b16 %v2024, %v2021
        %v2115 = vpack.c.b16 %v2025, %v2022
        %v2116 = vpack.c.b16 %v2026, %v2023
        %v2117 = vpack.c.b16 %v2030, %v2027
        %v2118 = vpack.c.b16 %v2031, %v2028
        %v2119 = vpack.c.b16 %v2032, %v2029
        %v2120 = vpack.c.b16 %v2036, %v2033
        %v2121 = vpack.c.b16 %v2037, %v2034
        %v2122 = vpack.c.b16 %v2038, %v2035
        %v2123 = vpack.c.b16 %v2042, %v2039
        %v2124 = vpack.c.b16 %v2043, %v2040
        %v2125 = vpack.c.b16 %v2044, %v2041
        %v2126 = vpack.c.b16 %v2048, %v2045
        %v2127 = vpack.c.b16 %v2049, %v2046
        %v2128 = vpack.c.b16 %v2050, %v2047
        %v2129 = vpack.c.b16 %v2054, %v2051
        %v2130 = vpack.c.b16 %v2055, %v2052
        %v2131 = vpack.c.b16 %v2056, %v2053
        %v2132 = vpack.c.b16 %v2060, %v2057
        %v2133 = vpack.c.b16 %v2061, %v2058
        %v2134 = vpack.c.b16 %v2062, %v2059
        %v2135 = vpack.c.b16 %v2066, %v2063
        %v2136 = vpack.c.b16 %v2067, %v2064
        %v2137 = vpack.c.b16 %v2068, %v2065
        %v2138 = vpack.c.b16 %v2072, %v2069
        %v2139 = vpack.c.b16 %v2073, %v2070
        %v2140 = vpack.c.b16 %v2074, %v2071
        %v2141 = vpack.c.b16 %v2078, %v2075
        %v2142 = vpack.c.b16 %v2079, %v2076
        %v2143 = vpack.c.b16 %v2080, %v2077
        %v2144 = vpack.c.b16 %v2084, %v2081
        %v2145 = vpack.c.b16 %v2085, %v2082
        %v2146 = vpack.c.b16 %v2086, %v2083
        %v2147 = vpack.c.b16 %v2090, %v2087
        %v2148 = vpack.c.b16 %v2091, %v2088
        %v2149 = vpack.c.b16 %v2092, %v2089
        %v2150 = vpack.c.b16 %v2096, %v2093
        %v2151 = vpack.c.b16 %v2097, %v2094
        %v2152 = vpack.c.b16 %v2098, %v2095
        %v2153 = vpack.c.b16 %v2102, %v2099
        %v2154 = vpack.c.b16 %v2103, %v2100
        %v2155 = vpack.c.b16 %v2104, %v2101
        %v2156 = vpack.c.b16 %v2108, %v2105
        %v2157 = vpack.c.b16 %v2109, %v2106
        %v2158 = vpack.c.b16 %v2110, %v2107
        %2207 = vmatprep.subr.bf16.mxu0 %v2112
        %2208 = vmatpush1.bf16.msra.mxu0 %v2111
        %2209 = vmatprep.subr.bf16.mxu0 %v2115
        %2210 = vmatpush1.bf16.msra.mxu0 %v2114
        %2211 = vmatprep.subr.bf16.mxu0 %v2118
        %2212 = vmatpush1.bf16.msra.mxu0 %v2117
        %2213 = vmatprep.subr.bf16.mxu0 %v2121
        %2214 = vmatpush1.bf16.msra.mxu0 %v2120
        %2215 = vmatprep.subr.bf16.mxu0 %v2124
        %2216 = vmatpush1.bf16.msra.mxu0 %v2123
        %2217 = vmatprep.subr.bf16.mxu0 %v2127
        %2218 = vmatpush1.bf16.msra.mxu0 %v2126
        %2219 = vmatprep.subr.bf16.mxu0 %v2130
        %2220 = vmatpush1.bf16.msra.mxu0 %v2129
        %2221 = vmatprep.subr.bf16.mxu0 %v2133
        %2222 = vmatpush1.bf16.msra.mxu0 %v2132
        %2223 = vmatprep.subr.bf16.mxu0 %v2136
        %2224 = vmatpush1.bf16.msra.mxu0 %v2135
        %2225 = vmatprep.subr.bf16.mxu0 %v2139
        %2226 = vmatpush1.bf16.msra.mxu0 %v2138
        %2227 = vmatprep.subr.bf16.mxu0 %v2142
        %2228 = vmatpush1.bf16.msra.mxu0 %v2141
        %2229 = vmatprep.subr.bf16.mxu0 %v2145
        %2230 = vmatpush1.bf16.msra.mxu0 %v2144
        %2231 = vmatprep.subr.bf16.mxu0 %v2148
        %2232 = vmatpush1.bf16.msra.mxu0 %v2147
        %2233 = vmatprep.subr.bf16.mxu0 %v2151
        %2234 = vmatpush1.bf16.msra.mxu0 %v2150
        %2235 = vmatprep.subr.bf16.mxu0 %v2154
        %2236 = vmatpush1.bf16.msra.mxu0 %v2153
        %2237 = vmatprep.subr.bf16.mxu0 %v2157
        %2238 = vmatpush1.bf16.msra.mxu0 %v2156
        %2239 = vmatprep.mubr.bf16.mxu0 %v1879
        %2240 = vmatmul.mubr.bf16.gmra.mrb[0].mxu0 %v1846
        %v2241 = vpop.f32.mrb[0].mxu0
        %v2242 = vadd.f32 0.0, %v2241
        %v2243 = vpop.f32.mrb[0].mxu0
        %v2244 = vadd.f32 0.0, %v2243
        %v2245 = vpop.f32.mrb[0].mxu0
        %v2246 = vadd.f32 0.0, %v2245
        %v2247 = vpop.f32.mrb[0].mxu0
        %v2248 = vadd.f32 0.0, %v2247
        %2249 = vmatprep.mubr.bf16.mxu0 %v1881
        %2250 = vmatmul.mubr.bf16.gmra.mrb[0].mxu0 %v1850
        %v2251 = vpop.f32.mrb[0].mxu0
        %v2252 = vadd.f32 0.0, %v2251
        %v2253 = vpop.f32.mrb[0].mxu0
        %v2254 = vadd.f32 0.0, %v2253
        %v2255 = vpop.f32.mrb[0].mxu0
        %v2256 = vadd.f32 0.0, %v2255
        %v2257 = vpop.f32.mrb[0].mxu0
        %v2258 = vadd.f32 0.0, %v2257
        %2259 = vmatprep.mubr.bf16.mxu0 %v1883
        %2260 = vmatmul.mubr.bf16.gmra.mrb[0].mxu0 %v1854
        %v2261 = vpop.f32.mrb[0].mxu0
        %v2262 = vadd.f32 0.0, %v2261
        %v2263 = vpop.f32.mrb[0].mxu0
        %v2264 = vadd.f32 0.0, %v2263
        %v2265 = vpop.f32.mrb[0].mxu0
        %v2266 = vadd.f32 0.0, %v2265
        %v2267 = vpop.f32.mrb[0].mxu0
        %v2268 = vadd.f32 0.0, %v2267
        %2269 = vmatprep.mubr.bf16.mxu0 %v1885
        %2270 = vmatmul.mubr.bf16.gmra.mrb[0].mxu0 %v1858
        %v2271 = vpop.f32.mrb[0].mxu0
        %v2272 = vadd.f32 0.0, %v2271
        %v2273 = vpop.f32.mrb[0].mxu0
        %v2274 = vadd.f32 0.0, %v2273
        %v2275 = vpop.f32.mrb[0].mxu0
        %v2276 = vadd.f32 0.0, %v2275
        %v2277 = vpop.f32.mrb[0].mxu0
        %v2278 = vadd.f32 0.0, %v2277
        %2279 = vdwg.mxu0
        %2280 = vmatprep.subr.bf16.mxu0 0
        %2281 = vmatpush1.bf16.msra.mxu0 %v2113
        %2282 = vmatprep.subr.bf16.mxu0 0
        %2283 = vmatpush1.bf16.msra.mxu0 %v2116
        %2284 = vmatprep.subr.bf16.mxu0 0
        %2285 = vmatpush1.bf16.msra.mxu0 %v2119
        %2286 = vmatprep.subr.bf16.mxu0 0
        %2287 = vmatpush1.bf16.msra.mxu0 %v2122
        %2288 = vmatprep.subr.bf16.mxu0 0
        %2289 = vmatpush1.bf16.msra.mxu0 %v2125
        %2290 = vmatprep.subr.bf16.mxu0 0
        %2291 = vmatpush1.bf16.msra.mxu0 %v2128
        %2292 = vmatprep.subr.bf16.mxu0 0
        %2293 = vmatpush1.bf16.msra.mxu0 %v2131
        %2294 = vmatprep.subr.bf16.mxu0 0
        %2295 = vmatpush1.bf16.msra.mxu0 %v2134
        %2296 = vmatprep.subr.bf16.mxu0 0
        %2297 = vmatpush1.bf16.msra.mxu0 %v2137
        %2298 = vmatprep.subr.bf16.mxu0 0
        %2299 = vmatpush1.bf16.msra.mxu0 %v2140
        %2300 = vmatprep.subr.bf16.mxu0 0
        %2301 = vmatpush1.bf16.msra.mxu0 %v2143
        %2302 = vmatprep.subr.bf16.mxu0 0
        %2303 = vmatpush1.bf16.msra.mxu0 %v2146
        %2304 = vmatprep.subr.bf16.mxu0 0
        %2305 = vmatpush1.bf16.msra.mxu0 %v2149
        %2306 = vmatprep.subr.bf16.mxu0 0
        %2307 = vmatpush1.bf16.msra.mxu0 %v2152
        %2308 = vmatprep.subr.bf16.mxu0 0
        %2309 = vmatpush1.bf16.msra.mxu0 %v2155
        %2310 = vmatprep.subr.bf16.mxu0 0
        %2311 = vmatpush1.bf16.msra.mxu0 %v2158
        %2312 = vmatprep.mubr.bf16.mxu0 %v1879
        %2313 = vmatmul.mubr.bf16.gmra.mrb[0].mxu0 %v1846
        %v2314 = vpop.f32.mrb[0].mxu0
        %v2315 = vadd.f32 0.0, %v2314
        %v2316 = vpop.f32.mrb[0].mxu0
        %v2317 = vpop.f32.mrb[0].mxu0
        %v2318 = vadd.f32 0.0, %v2317
        %v2319 = vpop.f32.mrb[0].mxu0
        %2320 = vmatprep.mubr.bf16.mxu0 %v1881
        %2321 = vmatmul.mubr.bf16.gmra.mrb[0].mxu0 %v1850
        %v2322 = vpop.f32.mrb[0].mxu0
        %v2323 = vadd.f32 0.0, %v2322
        %v2324 = vpop.f32.mrb[0].mxu0
        %v2325 = vpop.f32.mrb[0].mxu0
        %v2326 = vadd.f32 0.0, %v2325
        %v2327 = vpop.f32.mrb[0].mxu0
        %2328 = vmatprep.mubr.bf16.mxu0 %v1883
        %2329 = vmatmul.mubr.bf16.gmra.mrb[0].mxu0 %v1854
        %v2330 = vpop.f32.mrb[0].mxu0
        %v2331 = vadd.f32 0.0, %v2330
        %v2332 = vpop.f32.mrb[0].mxu0
        %v2333 = vpop.f32.mrb[0].mxu0
        %v2334 = vadd.f32 0.0, %v2333
        %v2335 = vpop.f32.mrb[0].mxu0
        %2336 = vmatprep.mubr.bf16.mxu0 %v1885
        %2337 = vmatmul.mubr.bf16.gmra.mrb[0].mxu0 %v1858
        %v2338 = vpop.f32.mrb[0].mxu0
        %v2339 = vadd.f32 0.0, %v2338
        %v2340 = vpop.f32.mrb[0].mxu0
        %v2341 = vpop.f32.mrb[0].mxu0
        %v2342 = vadd.f32 0.0, %v2341
        %v2343 = vpop.f32.mrb[0].mxu0
        %2344 = vdwg.mxu0
        %v2345 = vld [vmem:[#allocation22] sm:$0x1]
        %v2347 = vlaneseq
        %v2348 = vshrl.u32 %v2347, 7
        %v2349 = vsub.s32 0, %v2348
        %v2350 = vrot.slane %v2345, %v2349
        %v2352 = vadd.f32 %v2242, %v2350
        %v2353 = vadd.f32 %v2246, %v2350
        %v2354 = vadd.f32 %v2252, %v2350
        %v2355 = vadd.f32 %v2256, %v2350
        %v2356 = vadd.f32 %v2262, %v2350
        %v2357 = vadd.f32 %v2266, %v2350
        %v2358 = vadd.f32 %v2272, %v2350
        %v2359 = vadd.f32 %v2276, %v2350
        %v2360 = vxor.u32 %v2352, 2147483648
        %v2361 = vxor.u32 %v2353, 2147483648
        %v2362 = vxor.u32 %v2354, 2147483648
        %v2363 = vxor.u32 %v2355, 2147483648
        %v2364 = vxor.u32 %v2356, 2147483648
        %v2365 = vxor.u32 %v2357, 2147483648
        %v2366 = vxor.u32 %v2358, 2147483648
        %v2367 = vxor.u32 %v2359, 2147483648
        %v2368 = vmul.f32 %v2360, 1.442695
        %v2369 = vpow.pop %v2368
        %v2370 = vmul.f32 %v2361, 1.442695
        %v2371 = vpow.pop %v2370
        %v2372 = vmul.f32 %v2362, 1.442695
        %v2373 = vpow.pop %v2372
        %v2374 = vmul.f32 %v2363, 1.442695
        %v2375 = vpow.pop %v2374
        %v2376 = vmul.f32 %v2364, 1.442695
        %v2377 = vpow.pop %v2376
        %v2378 = vmul.f32 %v2365, 1.442695
        %v2379 = vpow.pop %v2378
        %v2380 = vmul.f32 %v2366, 1.442695
        %v2381 = vpow.pop %v2380
        %v2382 = vmul.f32 %v2367, 1.442695
        %v2383 = vpow.pop %v2382
        %v2384 = vadd.f32 %v2369, 1.0
        %v2385 = vadd.f32 %v2371, 1.0
        %v2386 = vadd.f32 %v2373, 1.0
        %v2387 = vadd.f32 %v2375, 1.0
        %v2388 = vadd.f32 %v2377, 1.0
        %v2389 = vadd.f32 %v2379, 1.0
        %v2390 = vadd.f32 %v2381, 1.0
        %v2391 = vadd.f32 %v2383, 1.0
        %v2392 = vrcp.pop %v2384
        %v2393 = vmul.f32 1.0, %v2392
        %v2394 = vrcp.pop %v2385
        %v2395 = vmul.f32 1.0, %v2394
        %v2396 = vrcp.pop %v2386
        %v2397 = vmul.f32 1.0, %v2396
        %v2398 = vrcp.pop %v2387
        %v2399 = vmul.f32 1.0, %v2398
        %v2400 = vrcp.pop %v2388
        %v2401 = vmul.f32 1.0, %v2400
        %v2402 = vrcp.pop %v2389
        %v2403 = vmul.f32 1.0, %v2402
        %v2404 = vrcp.pop %v2390
        %v2405 = vmul.f32 1.0, %v2404
        %v2406 = vrcp.pop %v2391
        %v2407 = vmul.f32 1.0, %v2406
        %v2408 = vld [vmem:[#allocation23] sm:$0x1]
        %v2410 = vlaneseq
        %v2411 = vshrl.u32 %v2410, 7
        %v2412 = vsub.s32 0, %v2411
        %v2413 = vrot.slane %v2408, %v2412
        %v2415 = vadd.f32 %v2244, %v2413
        %v2416 = vadd.f32 %v2248, %v2413
        %v2417 = vadd.f32 %v2254, %v2413
        %v2418 = vadd.f32 %v2258, %v2413
        %v2419 = vadd.f32 %v2264, %v2413
        %v2420 = vadd.f32 %v2268, %v2413
        %v2421 = vadd.f32 %v2274, %v2413
        %v2422 = vadd.f32 %v2278, %v2413
        %v2423 = vxor.u32 %v2415, 2147483648
        %v2424 = vxor.u32 %v2416, 2147483648
        %v2425 = vxor.u32 %v2417, 2147483648
        %v2426 = vxor.u32 %v2418, 2147483648
        %v2427 = vxor.u32 %v2419, 2147483648
        %v2428 = vxor.u32 %v2420, 2147483648
        %v2429 = vxor.u32 %v2421, 2147483648
        %v2430 = vxor.u32 %v2422, 2147483648
        %v2431 = vmul.f32 %v2423, 1.442695
        %v2432 = vpow.pop %v2431
        %v2433 = vmul.f32 %v2424, 1.442695
        %v2434 = vpow.pop %v2433
        %v2435 = vmul.f32 %v2425, 1.442695
        %v2436 = vpow.pop %v2435
        %v2437 = vmul.f32 %v2426, 1.442695
        %v2438 = vpow.pop %v2437
        %v2439 = vmul.f32 %v2427, 1.442695
        %v2440 = vpow.pop %v2439
        %v2441 = vmul.f32 %v2428, 1.442695
        %v2442 = vpow.pop %v2441
        %v2443 = vmul.f32 %v2429, 1.442695
        %v2444 = vpow.pop %v2443
        %v2445 = vmul.f32 %v2430, 1.442695
        %v2446 = vpow.pop %v2445
        %v2447 = vadd.f32 %v2432, 1.0
        %v2448 = vadd.f32 %v2434, 1.0
        %v2449 = vadd.f32 %v2436, 1.0
        %v2450 = vadd.f32 %v2438, 1.0
        %v2451 = vadd.f32 %v2440, 1.0
        %v2452 = vadd.f32 %v2442, 1.0
        %v2453 = vadd.f32 %v2444, 1.0
        %v2454 = vadd.f32 %v2446, 1.0
        %v2455 = vrcp.pop %v2447
        %v2456 = vmul.f32 1.0, %v2455
        %v2457 = vrcp.pop %v2448
        %v2458 = vmul.f32 1.0, %v2457
        %v2459 = vrcp.pop %v2449
        %v2460 = vmul.f32 1.0, %v2459
        %v2461 = vrcp.pop %v2450
        %v2462 = vmul.f32 1.0, %v2461
        %v2463 = vrcp.pop %v2451
        %v2464 = vmul.f32 1.0, %v2463
        %v2465 = vrcp.pop %v2452
        %v2466 = vmul.f32 1.0, %v2465
        %v2467 = vrcp.pop %v2453
        %v2468 = vmul.f32 1.0, %v2467
        %v2469 = vrcp.pop %v2454
        %v2470 = vmul.f32 1.0, %v2469
        %v2471 = vmul.f32 %v2456, %v1165
        %v2472 = vmul.f32 %v2458, %v1166
        %v2473 = vmul.f32 %v2460, %v1167
        %v2474 = vmul.f32 %v2462, %v1168
        %v2475 = vmul.f32 %v2464, %v1169
        %v2476 = vmul.f32 %v2466, %v1170
        %v2477 = vmul.f32 %v2468, %v1171
        %v2478 = vmul.f32 %v2470, %v1172
        %v2479 = vpack.c.bf16 %v2472, %v2471
        %v2480 = vpack.c.bf16 %v2474, %v2473
        %v2481 = vpack.c.bf16 %v2476, %v2475
        %v2482 = vpack.c.bf16 %v2478, %v2477
        %v2483 = vld [vmem:[#allocation26] sm:$0xf]
        %v2484 = vld [vmem:[#allocation26 + $0x4] sm:$0xf]
        %v2485 = vld [vmem:[#allocation26 + $0x8] sm:$0xf]
        %v2486 = vld [vmem:[#allocation26 + $0xc] sm:$0xf]
        %v2487 = vld [vmem:[#allocation26 + $0x10] sm:$0xf]
        %v2488 = vld [vmem:[#allocation26 + $0x14] sm:$0xf]
        %v2489 = vld [vmem:[#allocation26 + $0x18] sm:$0xf]
        %v2490 = vld [vmem:[#allocation26 + $0x1c] sm:$0xf]
        %v2491 = vld [vmem:[#allocation26 + $0x20] sm:$0xf]
        %v2492 = vld [vmem:[#allocation26 + $0x24] sm:$0xf]
        %v2493 = vld [vmem:[#allocation26 + $0x28] sm:$0xf]
        %v2494 = vld [vmem:[#allocation26 + $0x2c] sm:$0xf]
        %v2507 = vunpack.c.l.b16 %v2483
        %v2508 = vunpack.c.l.b16 %v2484
        %v2509 = vunpack.c.l.b16 %v2485
        %v2510 = vunpack.c.l.b16 %v2486
        %v2511 = vunpack.c.l.b16 %v2487
        %v2512 = vunpack.c.l.b16 %v2488
        %v2513 = vunpack.c.l.b16 %v2489
        %v2514 = vunpack.c.l.b16 %v2490
        %v2515 = vunpack.c.l.b16 %v2491
        %v2516 = vunpack.c.l.b16 %v2492
        %v2517 = vunpack.c.l.b16 %v2493
        %v2518 = vunpack.c.l.b16 %v2494
        %v2519 = vpack.c.b16 %v2508, %v2507
        %v2520 = vpack.c.b16 %v2510, %v2509
        %v2521 = vpack.c.b16 %v2512, %v2511
        %v2522 = vpack.c.b16 %v2514, %v2513
        %v2523 = vpack.c.b16 %v2516, %v2515
        %v2524 = vpack.c.b16 %v2518, %v2517
        %v2532 = vsel %vm1586, %v2479, 0
        %v2535 = vsel %vm1586, %v2480, 0
        %v2538 = vsel %vm1586, %v2481, 0
        %v2541 = vsel %vm1586, %v2482, 0
        %2543 = vmatprep.subr.bf16.mxu0 0
        %2544 = vmatpush1.bf16.msra.mxu0 %v2519
        %2545 = vmatprep.subr.bf16.mxu0 0
        %2546 = vmatpush1.bf16.msra.mxu0 %v2520
        %2547 = vmatprep.subr.bf16.mxu0 0
        %2548 = vmatpush1.bf16.msra.mxu0 %v2521
        %2549 = vmatprep.subr.bf16.mxu0 0
        %2550 = vmatpush1.bf16.msra.mxu0 %v2522
        %2551 = vmatprep.subr.bf16.mxu0 0
        %2552 = vmatpush1.bf16.msra.mxu0 %v2523
        %2553 = vmatprep.subr.bf16.mxu0 0
        %2554 = vmatpush1.bf16.msra.mxu0 %v2524
        %2555 = vmatprep.subr.bf16.mxu0 0
        %2556 = vmatpush1.bf16.msra.mxu0 0
        %2557 = vmatprep.subr.bf16.mxu0 0
        %2558 = vmatpush1.bf16.msra.mxu0 0
        %2559 = vmatprep.subr.bf16.mxu0 0
        %2560 = vmatpush1.bf16.msra.mxu0 0
        %2561 = vmatprep.subr.bf16.mxu0 0
        %2562 = vmatpush1.bf16.msra.mxu0 0
        %2563 = vmatprep.subr.bf16.mxu0 0
        %2564 = vmatpush1.bf16.msra.mxu0 0
        %2565 = vmatprep.subr.bf16.mxu0 0
        %2566 = vmatpush1.bf16.msra.mxu0 0
        %2567 = vmatprep.subr.bf16.mxu0 0
        %2568 = vmatpush1.bf16.msra.mxu0 0
        %2569 = vmatprep.subr.bf16.mxu0 0
        %2570 = vmatpush1.bf16.msra.mxu0 0
        %2571 = vmatprep.subr.bf16.mxu0 0
        %2572 = vmatpush1.bf16.msra.mxu0 0
        %2573 = vmatprep.subr.bf16.mxu0 0
        %2574 = vmatpush1.bf16.msra.mxu0 0
        %2575 = vmatprep.mubr.bf16.mxu0 0
        %2576 = vmatmul.mubr.bf16.gmra.mrb[0].mxu0 %v2532
        %v2577 = vpop.f32.mrb[0].mxu0
        %v2578 = vadd.f32 0.0, %v2577
        %v2579 = vpop.f32.mrb[0].mxu0
        %v2580 = vpop.f32.mrb[0].mxu0
        %v2581 = vadd.f32 0.0, %v2580
        %v2582 = vpop.f32.mrb[0].mxu0
        %2583 = vmatprep.mubr.bf16.mxu0 0
        %2584 = vmatmul.mubr.bf16.gmra.mrb[0].mxu0 %v2535
        %v2585 = vpop.f32.mrb[0].mxu0
        %v2586 = vadd.f32 0.0, %v2585
        %v2587 = vpop.f32.mrb[0].mxu0
        %v2588 = vpop.f32.mrb[0].mxu0
        %v2589 = vadd.f32 0.0, %v2588
        %v2590 = vpop.f32.mrb[0].mxu0
        %2591 = vmatprep.mubr.bf16.mxu0 0
        %2592 = vmatmul.mubr.bf16.gmra.mrb[0].mxu0 %v2538
        %v2593 = vpop.f32.mrb[0].mxu0
        %v2594 = vadd.f32 0.0, %v2593
        %v2595 = vpop.f32.mrb[0].mxu0
        %v2596 = vpop.f32.mrb[0].mxu0
        %v2597 = vadd.f32 0.0, %v2596
        %v2598 = vpop.f32.mrb[0].mxu0
        %2599 = vmatprep.mubr.bf16.mxu0 0
        %2600 = vmatmul.mubr.bf16.gmra.mrb[0].mxu0 %v2541
        %v2601 = vpop.f32.mrb[0].mxu0
        %v2602 = vadd.f32 0.0, %v2601
        %v2603 = vpop.f32.mrb[0].mxu0
        %v2604 = vpop.f32.mrb[0].mxu0
        %v2605 = vadd.f32 0.0, %v2604
        %v2606 = vpop.f32.mrb[0].mxu0
        %2607 = vdwg.mxu0
        %v2608 = vadd.f32 %v2315, %v2578
        %v2609 = vadd.f32 %v2318, %v2581
        %v2610 = vadd.f32 %v2323, %v2586
        %v2611 = vadd.f32 %v2326, %v2589
        %v2612 = vadd.f32 %v2331, %v2594
        %v2613 = vadd.f32 %v2334, %v2597
        %v2614 = vadd.f32 %v2339, %v2602
        %v2615 = vadd.f32 %v2342, %v2605
        %v2616 = vld [vmem:[#allocation25] sm:$0x1]
        %v2618 = vlaneseq
        %v2619 = vshrl.u32 %v2618, 7
        %v2620 = vsub.s32 0, %v2619
        %v2621 = vrot.slane %v2616, %v2620
        %v2623 = vadd.f32 %v2608, %v2621
        %v2624 = vadd.f32 %v2609, %v2621
        %v2625 = vadd.f32 %v2610, %v2621
        %v2626 = vadd.f32 %v2611, %v2621
        %v2627 = vadd.f32 %v2612, %v2621
        %v2628 = vadd.f32 %v2613, %v2621
        %v2629 = vadd.f32 %v2614, %v2621
        %v2630 = vadd.f32 %v2615, %v2621
        %v2631 = vtanh.pop %v2623
        %v2632 = vtanh.pop %v2624
        %v2633 = vtanh.pop %v2625
        %v2634 = vtanh.pop %v2626
        %v2635 = vtanh.pop %v2627
        %v2636 = vtanh.pop %v2628
        %v2637 = vtanh.pop %v2629
        %v2638 = vtanh.pop %v2630
        %v2639 = vsub.f32 1.0, %v2393
        %v2640 = vsub.f32 1.0, %v2395
        %v2641 = vsub.f32 1.0, %v2397
        %v2642 = vsub.f32 1.0, %v2399
        %v2643 = vsub.f32 1.0, %v2401
        %v2644 = vsub.f32 1.0, %v2403
        %v2645 = vsub.f32 1.0, %v2405
        %v2646 = vsub.f32 1.0, %v2407
        %v2647 = vmul.f32 %v2639, %v1165
        %v2648 = vmul.f32 %v2640, %v1166
        %v2649 = vmul.f32 %v2641, %v1167
        %v2650 = vmul.f32 %v2642, %v1168
        %v2651 = vmul.f32 %v2643, %v1169
        %v2652 = vmul.f32 %v2644, %v1170
        %v2653 = vmul.f32 %v2645, %v1171
        %v2654 = vmul.f32 %v2646, %v1172
        %v2655 = vmul.f32 %v2393, %v2631
        %v2656 = vmul.f32 %v2395, %v2632
        %v2657 = vmul.f32 %v2397, %v2633
        %v2658 = vmul.f32 %v2399, %v2634
        %v2659 = vmul.f32 %v2401, %v2635
        %v2660 = vmul.f32 %v2403, %v2636
        %v2661 = vmul.f32 %v2405, %v2637
        %v2662 = vmul.f32 %v2407, %v2638
        %v2663 = vadd.f32 %v2647, %v2655
        %v2664 = vadd.f32 %v2648, %v2656
        %v2665 = vadd.f32 %v2649, %v2657
        %v2666 = vadd.f32 %v2650, %v2658
        %v2667 = vadd.f32 %v2651, %v2659
        %v2668 = vadd.f32 %v2652, %v2660
        %v2669 = vadd.f32 %v2653, %v2661
        %v2670 = vadd.f32 %v2654, %v2662
        %2671 = vst.msk [vmem:[%s1141] sm:$0xff] %vm1586, %v2663
        %2672 = vst.msk [vmem:[%s1141 + $0x8] sm:$0xff] %vm1586, %v2664
        %2673 = vst.msk [vmem:[%s1141 + $0x10] sm:$0xff] %vm1586, %v2665
        %2674 = vst.msk [vmem:[%s1141 + $0x18] sm:$0xff] %vm1586, %v2666
        %2675 = vst.msk [vmem:[%s1141 + $0x20] sm:$0xff] %vm1586, %v2667
        %2676 = vst.msk [vmem:[%s1141 + $0x28] sm:$0xff] %vm1586, %v2668
        %2677 = vst.msk [vmem:[%s1141 + $0x30] sm:$0xff] %vm1586, %v2669
        %2678 = vst.msk [vmem:[%s1141 + $0x38] sm:$0xff] %vm1586, %v2670
        %v2679 = vpack.c.bf16 %v2664, %v2663
        %v2680 = vpack.c.bf16 %v2666, %v2665
        %v2681 = vpack.c.bf16 %v2668, %v2667
        %v2682 = vpack.c.bf16 %v2670, %v2669
        %v2683 = vld [vmem:[#allocation28] sm:$0xff]
        %v2684 = vld [vmem:[#allocation28 + $0x8] sm:$0xff]
        %v2685 = vld [vmem:[#allocation28 + $0x10] sm:$0xff]
        %v2686 = vld [vmem:[#allocation28 + $0x18] sm:$0xff]
        %v2687 = vld [vmem:[#allocation28 + $0x20] sm:$0xff]
        %v2688 = vld [vmem:[#allocation28 + $0x28] sm:$0xff]
        %v2689 = vld [vmem:[#allocation28 + $0x30] sm:$0xff]
        %v2690 = vld [vmem:[#allocation28 + $0x38] sm:$0xff]
        %v2691 = vld [vmem:[#allocation28 + $0x40] sm:$0xff]
        %v2692 = vld [vmem:[#allocation28 + $0x48] sm:$0xff]
        %v2693 = vld [vmem:[#allocation28 + $0x50] sm:$0xff]
        %v2694 = vld [vmem:[#allocation28 + $0x58] sm:$0xff]
        %v2695 = vld [vmem:[#allocation29] sm:$0x3]
        %v2697 = vlaneseq
        %v2698 = vshrl.u32 %v2697, 7
        %v2699 = vsub.s32 0, %v2698
        %v2700 = vrot.slane %v2695, %v2699
        %v2701 = vlaneseq
        %v2702 = vshrl.u32 %v2701, 7
        %v2703 = vsub.s32 1, %v2702
        %v2704 = vrot.slane %v2695, %v2703
        %v2719 = vunpack.c.l.b16 %v2683
        %v2720 = vunpack.c.h.b16 %v2683
        %v2721 = vunpack.c.l.b16 %v2684
        %v2722 = vunpack.c.h.b16 %v2684
        %v2723 = vunpack.c.l.b16 %v2685
        %v2724 = vunpack.c.h.b16 %v2685
        %v2725 = vunpack.c.l.b16 %v2686
        %v2726 = vunpack.c.h.b16 %v2686
        %v2727 = vunpack.c.l.b16 %v2687
        %v2728 = vunpack.c.h.b16 %v2687
        %v2729 = vunpack.c.l.b16 %v2688
        %v2730 = vunpack.c.h.b16 %v2688
        %v2731 = vunpack.c.l.b16 %v2689
        %v2732 = vunpack.c.h.b16 %v2689
        %v2733 = vunpack.c.l.b16 %v2690
        %v2734 = vunpack.c.h.b16 %v2690
        %v2735 = vunpack.c.l.b16 %v2691
        %v2736 = vunpack.c.h.b16 %v2691
        %v2737 = vunpack.c.l.b16 %v2692
        %v2738 = vunpack.c.h.b16 %v2692
        %v2739 = vunpack.c.l.b16 %v2693
        %v2740 = vunpack.c.h.b16 %v2693
        %v2741 = vunpack.c.l.b16 %v2694
        %v2742 = vunpack.c.h.b16 %v2694
        %v2743 = vpack.c.b16 %v2721, %v2719
        %v2744 = vpack.c.b16 %v2722, %v2720
        %v2745 = vpack.c.b16 %v2725, %v2723
        %v2746 = vpack.c.b16 %v2726, %v2724
        %v2747 = vpack.c.b16 %v2729, %v2727
        %v2748 = vpack.c.b16 %v2730, %v2728
        %v2749 = vpack.c.b16 %v2733, %v2731
        %v2750 = vpack.c.b16 %v2734, %v2732
        %v2751 = vpack.c.b16 %v2737, %v2735
        %v2752 = vpack.c.b16 %v2738, %v2736
        %v2753 = vpack.c.b16 %v2741, %v2739
        %v2754 = vpack.c.b16 %v2742, %v2740
        %v2768 = vsel %vm1586, %v2679, 0
        %v2771 = vsel %vm1586, %v2680, 0
        %v2774 = vsel %vm1586, %v2681, 0
        %v2777 = vsel %vm1586, %v2682, 0
        %2779 = vmatprep.subr.bf16.mxu0 %v2744
        %2780 = vmatpush1.bf16.msra.mxu0 %v2743
        %2781 = vmatprep.subr.bf16.mxu0 %v2746
        %2782 = vmatpush1.bf16.msra.mxu0 %v2745
        %2783 = vmatprep.subr.bf16.mxu0 %v2748
        %2784 = vmatpush1.bf16.msra.mxu0 %v2747
        %2785 = vmatprep.subr.bf16.mxu0 %v2750
        %2786 = vmatpush1.bf16.msra.mxu0 %v2749
        %2787 = vmatprep.subr.bf16.mxu0 %v2752
        %2788 = vmatpush1.bf16.msra.mxu0 %v2751
        %2789 = vmatprep.subr.bf16.mxu0 %v2754
        %2790 = vmatpush1.bf16.msra.mxu0 %v2753
        %2791 = vmatprep.subr.bf16.mxu0 0
        %2792 = vmatpush1.bf16.msra.mxu0 0
        %2793 = vmatprep.subr.bf16.mxu0 0
        %2794 = vmatpush1.bf16.msra.mxu0 0
        %2795 = vmatprep.subr.bf16.mxu0 0
        %2796 = vmatpush1.bf16.msra.mxu0 0
        %2797 = vmatprep.subr.bf16.mxu0 0
        %2798 = vmatpush1.bf16.msra.mxu0 0
        %2799 = vmatprep.subr.bf16.mxu0 0
        %2800 = vmatpush1.bf16.msra.mxu0 0
        %2801 = vmatprep.subr.bf16.mxu0 0
        %2802 = vmatpush1.bf16.msra.mxu0 0
        %2803 = vmatprep.subr.bf16.mxu0 0
        %2804 = vmatpush1.bf16.msra.mxu0 0
        %2805 = vmatprep.subr.bf16.mxu0 0
        %2806 = vmatpush1.bf16.msra.mxu0 0
        %2807 = vmatprep.subr.bf16.mxu0 0
        %2808 = vmatpush1.bf16.msra.mxu0 0
        %2809 = vmatprep.subr.bf16.mxu0 0
        %2810 = vmatpush1.bf16.msra.mxu0 0
        %2811 = vmatprep.mubr.bf16.mxu0 0
        %2812 = vmatmul.mubr.bf16.gmra.mrb[0].mxu0 %v2768
        %v2813 = vpop.f32.mrb[0].mxu0
        %v2814 = vadd.f32 %v2700, %v2813
        %v2815 = vpop.f32.mrb[0].mxu0
        %v2816 = vadd.f32 %v2704, %v2815
        %v2817 = vpop.f32.mrb[0].mxu0
        %v2818 = vadd.f32 %v2700, %v2817
        %v2819 = vpop.f32.mrb[0].mxu0
        %v2820 = vadd.f32 %v2704, %v2819
        %2821 = vmatprep.mubr.bf16.mxu0 0
        %2822 = vmatmul.mubr.bf16.gmra.mrb[0].mxu0 %v2771
        %v2823 = vpop.f32.mrb[0].mxu0
        %v2824 = vadd.f32 %v2700, %v2823
        %v2825 = vpop.f32.mrb[0].mxu0
        %v2826 = vadd.f32 %v2704, %v2825
        %v2827 = vpop.f32.mrb[0].mxu0
        %v2828 = vadd.f32 %v2700, %v2827
        %v2829 = vpop.f32.mrb[0].mxu0
        %v2830 = vadd.f32 %v2704, %v2829
        %2831 = vmatprep.mubr.bf16.mxu0 0
        %2832 = vmatmul.mubr.bf16.gmra.mrb[0].mxu0 %v2774
        %v2833 = vpop.f32.mrb[0].mxu0
        %v2834 = vadd.f32 %v2700, %v2833
        %v2835 = vpop.f32.mrb[0].mxu0
        %v2836 = vadd.f32 %v2704, %v2835
        %v2837 = vpop.f32.mrb[0].mxu0
        %v2838 = vadd.f32 %v2700, %v2837
        %v2839 = vpop.f32.mrb[0].mxu0
        %v2840 = vadd.f32 %v2704, %v2839
        %2841 = vmatprep.mubr.bf16.mxu0 0
        %2842 = vmatmul.mubr.bf16.gmra.mrb[0].mxu0 %v2777
        %v2843 = vpop.f32.mrb[0].mxu0
        %v2844 = vadd.f32 %v2700, %v2843
        %v2845 = vpop.f32.mrb[0].mxu0
        %v2846 = vadd.f32 %v2704, %v2845
        %v2847 = vpop.f32.mrb[0].mxu0
        %v2848 = vadd.f32 %v2700, %v2847
        %v2849 = vpop.f32.mrb[0].mxu0
        %v2850 = vadd.f32 %v2704, %v2849
        %2851 = vdwg.mxu0
        %v2852 = vmax.f32 %v2814, 0.0
        %v2853 = vmax.f32 %v2816, 0.0
        %v2854 = vmax.f32 %v2818, 0.0
        %v2855 = vmax.f32 %v2820, 0.0
        %v2856 = vmax.f32 %v2824, 0.0
        %v2857 = vmax.f32 %v2826, 0.0
        %v2858 = vmax.f32 %v2828, 0.0
        %v2859 = vmax.f32 %v2830, 0.0
        %v2860 = vmax.f32 %v2834, 0.0
        %v2861 = vmax.f32 %v2836, 0.0
        %v2862 = vmax.f32 %v2838, 0.0
        %v2863 = vmax.f32 %v2840, 0.0
        %v2864 = vmax.f32 %v2844, 0.0
        %v2865 = vmax.f32 %v2846, 0.0
        %v2866 = vmax.f32 %v2848, 0.0
        %v2867 = vmax.f32 %v2850, 0.0
        %v2868 = vpack.c.bf16 %v2854, %v2852
        %v2869 = vpack.c.bf16 %v2855, %v2853
        %v2870 = vpack.c.bf16 %v2858, %v2856
        %v2871 = vpack.c.bf16 %v2859, %v2857
        %v2872 = vpack.c.bf16 %v2862, %v2860
        %v2873 = vpack.c.bf16 %v2863, %v2861
        %v2874 = vpack.c.bf16 %v2866, %v2864
        %v2875 = vpack.c.bf16 %v2867, %v2865
        %v2876 = vld [vmem:[#allocation31] sm:$0xf]
        %v2877 = vld [vmem:[#allocation31 + $0x4] sm:$0xf]
        %v2878 = vld [vmem:[#allocation31 + $0x8] sm:$0xf]
        %v2879 = vld [vmem:[#allocation31 + $0xc] sm:$0xf]
        %v2880 = vld [vmem:[#allocation31 + $0x10] sm:$0xf]
        %v2881 = vld [vmem:[#allocation31 + $0x14] sm:$0xf]
        %v2882 = vld [vmem:[#allocation31 + $0x18] sm:$0xf]
        %v2883 = vld [vmem:[#allocation31 + $0x1c] sm:$0xf]
        %v2884 = vld [vmem:[#allocation31 + $0x20] sm:$0xf]
        %v2885 = vld [vmem:[#allocation31 + $0x24] sm:$0xf]
        %v2886 = vld [vmem:[#allocation31 + $0x28] sm:$0xf]
        %v2887 = vld [vmem:[#allocation31 + $0x2c] sm:$0xf]
        %v2888 = vld [vmem:[#allocation31 + $0x30] sm:$0xf]
        %v2889 = vld [vmem:[#allocation31 + $0x34] sm:$0xf]
        %v2890 = vld [vmem:[#allocation31 + $0x38] sm:$0xf]
        %v2891 = vld [vmem:[#allocation31 + $0x3c] sm:$0xf]
        %v2892 = vld [vmem:[#allocation32] sm:$0x1]
        %v2894 = vlaneseq
        %v2895 = vshrl.u32 %v2894, 7
        %v2896 = vsub.s32 0, %v2895
        %v2897 = vrot.slane %v2892, %v2896
        %v2915 = vunpack.c.l.b16 %v2876
        %v2916 = vunpack.c.l.b16 %v2877
        %v2917 = vunpack.c.l.b16 %v2878
        %v2918 = vunpack.c.l.b16 %v2879
        %v2919 = vunpack.c.l.b16 %v2880
        %v2920 = vunpack.c.l.b16 %v2881
        %v2921 = vunpack.c.l.b16 %v2882
        %v2922 = vunpack.c.l.b16 %v2883
        %v2923 = vunpack.c.l.b16 %v2884
        %v2924 = vunpack.c.l.b16 %v2885
        %v2925 = vunpack.c.l.b16 %v2886
        %v2926 = vunpack.c.l.b16 %v2887
        %v2927 = vunpack.c.l.b16 %v2888
        %v2928 = vunpack.c.l.b16 %v2889
        %v2929 = vunpack.c.l.b16 %v2890
        %v2930 = vunpack.c.l.b16 %v2891
        %v2931 = vpack.c.b16 %v2916, %v2915
        %v2932 = vpack.c.b16 %v2918, %v2917
        %v2933 = vpack.c.b16 %v2920, %v2919
        %v2934 = vpack.c.b16 %v2922, %v2921
        %v2935 = vpack.c.b16 %v2924, %v2923
        %v2936 = vpack.c.b16 %v2926, %v2925
        %v2937 = vpack.c.b16 %v2928, %v2927
        %v2938 = vpack.c.b16 %v2930, %v2929
        %2947 = vmatprep.subr.bf16.mxu0 0
        %2948 = vmatpush1.bf16.msra.mxu0 %v2931
        %2949 = vmatprep.subr.bf16.mxu0 0
        %2950 = vmatpush1.bf16.msra.mxu0 %v2932
        %2951 = vmatprep.subr.bf16.mxu0 0
        %2952 = vmatpush1.bf16.msra.mxu0 %v2933
        %2953 = vmatprep.subr.bf16.mxu0 0
        %2954 = vmatpush1.bf16.msra.mxu0 %v2934
        %2955 = vmatprep.subr.bf16.mxu0 0
        %2956 = vmatpush1.bf16.msra.mxu0 %v2935
        %2957 = vmatprep.subr.bf16.mxu0 0
        %2958 = vmatpush1.bf16.msra.mxu0 %v2936
        %2959 = vmatprep.subr.bf16.mxu0 0
        %2960 = vmatpush1.bf16.msra.mxu0 %v2937
        %2961 = vmatprep.subr.bf16.mxu0 0
        %2962 = vmatpush1.bf16.msra.mxu0 %v2938
        %2963 = vmatprep.subr.bf16.mxu0 0
        %2964 = vmatpush1.bf16.msra.mxu0 0
        %2965 = vmatprep.subr.bf16.mxu0 0
        %2966 = vmatpush1.bf16.msra.mxu0 0
        %2967 = vmatprep.subr.bf16.mxu0 0
        %2968 = vmatpush1.bf16.msra.mxu0 0
        %2969 = vmatprep.subr.bf16.mxu0 0
        %2970 = vmatpush1.bf16.msra.mxu0 0
        %2971 = vmatprep.subr.bf16.mxu0 0
        %2972 = vmatpush1.bf16.msra.mxu0 0
        %2973 = vmatprep.subr.bf16.mxu0 0
        %2974 = vmatpush1.bf16.msra.mxu0 0
        %2975 = vmatprep.subr.bf16.mxu0 0
        %2976 = vmatpush1.bf16.msra.mxu0 0
        %2977 = vmatprep.subr.bf16.mxu0 0
        %2978 = vmatpush1.bf16.msra.mxu0 0
        %2979 = vmatprep.mubr.bf16.mxu0 0
        %2980 = vmatmul.mubr.bf16.gmra.mrb[0].mxu0 %v2868
        %v2981 = vpop.f32.mrb[0].mxu0
        %v2982 = vadd.f32 %v2897, %v2981
        %v2983 = vpop.f32.mrb[0].mxu0
        %v2984 = vpop.f32.mrb[0].mxu0
        %v2985 = vadd.f32 %v2897, %v2984
        %v2986 = vpop.f32.mrb[0].mxu0
        %2987 = vmatprep.mubr.bf16.mxu0 0
        %2988 = vmatmul.mubr.bf16.gmra.mrb[0].mxu0 %v2870
        %v2989 = vpop.f32.mrb[0].mxu0
        %v2990 = vadd.f32 %v2897, %v2989
        %v2991 = vpop.f32.mrb[0].mxu0
        %v2992 = vpop.f32.mrb[0].mxu0
        %v2993 = vadd.f32 %v2897, %v2992
        %v2994 = vpop.f32.mrb[0].mxu0
        %2995 = vmatprep.mubr.bf16.mxu0 0
        %2996 = vmatmul.mubr.bf16.gmra.mrb[0].mxu0 %v2872
        %v2997 = vpop.f32.mrb[0].mxu0
        %v2998 = vadd.f32 %v2897, %v2997
        %v2999 = vpop.f32.mrb[0].mxu0
        %v3000 = vpop.f32.mrb[0].mxu0
        %v3001 = vadd.f32 %v2897, %v3000
        %v3002 = vpop.f32.mrb[0].mxu0
        %3003 = vmatprep.mubr.bf16.mxu0 0
        %3004 = vmatmul.mubr.bf16.gmra.mrb[0].mxu0 %v2874
        %v3005 = vpop.f32.mrb[0].mxu0
        %v3006 = vadd.f32 %v2897, %v3005
        %v3007 = vpop.f32.mrb[0].mxu0
        %v3008 = vpop.f32.mrb[0].mxu0
        %v3009 = vadd.f32 %v2897, %v3008
        %v3010 = vpop.f32.mrb[0].mxu0
        %3011 = vdwg.mxu0
        %v3012 = vld [vmem:[#allocation34] sm:$0xff]
        %v3013 = vld [vmem:[#allocation34 + $0x8] sm:$0xff]
        %v3014 = vld [vmem:[#allocation34 + $0x10] sm:$0xf]
        %v3015 = vld [vmem:[#allocation34 + $0x14] sm:$0xff]
        %v3016 = vld [vmem:[#allocation34 + $0x1c] sm:$0xff]
        %v3017 = vld [vmem:[#allocation34 + $0x24] sm:$0xf]
        %v3018 = vld [vmem:[#allocation34 + $0x28] sm:$0xff]
        %v3019 = vld [vmem:[#allocation34 + $0x30] sm:$0xff]
        %v3020 = vld [vmem:[#allocation34 + $0x38] sm:$0xf]
        %v3021 = vld [vmem:[#allocation34 + $0x3c] sm:$0xff]
        %v3022 = vld [vmem:[#allocation34 + $0x44] sm:$0xff]
        %v3023 = vld [vmem:[#allocation34 + $0x4c] sm:$0xf]
        %v3024 = vld [vmem:[#allocation34 + $0x50] sm:$0xff]
        %v3025 = vld [vmem:[#allocation34 + $0x58] sm:$0xff]
        %v3026 = vld [vmem:[#allocation34 + $0x60] sm:$0xf]
        %v3027 = vld [vmem:[#allocation34 + $0x64] sm:$0xff]
        %v3028 = vld [vmem:[#allocation34 + $0x6c] sm:$0xff]
        %v3029 = vld [vmem:[#allocation34 + $0x74] sm:$0xf]
        %v3030 = vld [vmem:[#allocation34 + $0x78] sm:$0xff]
        %v3031 = vld [vmem:[#allocation34 + $0x80] sm:$0xff]
        %v3032 = vld [vmem:[#allocation34 + $0x88] sm:$0xf]
        %v3033 = vld [vmem:[#allocation34 + $0x8c] sm:$0xff]
        %v3034 = vld [vmem:[#allocation34 + $0x94] sm:$0xff]
        %v3035 = vld [vmem:[#allocation34 + $0x9c] sm:$0xf]
        %v3036 = vld [vmem:[#allocation34 + $0xa0] sm:$0xff]
        %v3037 = vld [vmem:[#allocation34 + $0xa8] sm:$0xff]
        %v3038 = vld [vmem:[#allocation34 + $0xb0] sm:$0xf]
        %v3039 = vld [vmem:[#allocation34 + $0xb4] sm:$0xff]
        %v3040 = vld [vmem:[#allocation34 + $0xbc] sm:$0xff]
        %v3041 = vld [vmem:[#allocation34 + $0xc4] sm:$0xf]
        %v3042 = vld [vmem:[#allocation34 + $0xc8] sm:$0xff]
        %v3043 = vld [vmem:[#allocation34 + $0xd0] sm:$0xff]
        %v3044 = vld [vmem:[#allocation34 + $0xd8] sm:$0xf]
        %v3045 = vld [vmem:[#allocation34 + $0xdc] sm:$0xff]
        %v3046 = vld [vmem:[#allocation34 + $0xe4] sm:$0xff]
        %v3047 = vld [vmem:[#allocation34 + $0xec] sm:$0xf]
        %v3048 = vld [vmem:[#allocation34 + $0xf0] sm:$0xff]
        %v3049 = vld [vmem:[#allocation34 + $0xf8] sm:$0xff]
        %v3050 = vld [vmem:[#allocation34 + $0x100] sm:$0xf]
        %v3051 = vld [vmem:[#allocation34 + $0x104] sm:$0xff]
        %v3052 = vld [vmem:[#allocation34 + $0x10c] sm:$0xff]
        %v3053 = vld [vmem:[#allocation34 + $0x114] sm:$0xf]
        %v3054 = vld [vmem:[#allocation34 + $0x118] sm:$0xff]
        %v3055 = vld [vmem:[#allocation34 + $0x120] sm:$0xff]
        %v3056 = vld [vmem:[#allocation34 + $0x128] sm:$0xf]
        %v3057 = vld [vmem:[#allocation34 + $0x12c] sm:$0xff]
        %v3058 = vld [vmem:[#allocation34 + $0x134] sm:$0xff]
        %v3059 = vld [vmem:[#allocation34 + $0x13c] sm:$0xf]
        %v3060 = vld [vmem:[#allocation35] sm:$0x1f]
        %v3062 = vlaneseq
        %v3063 = vshrl.u32 %v3062, 7
        %v3064 = vsub.s32 0, %v3063
        %v3065 = vrot.slane %v3060, %v3064
        %v3066 = vlaneseq
        %v3067 = vshrl.u32 %v3066, 7
        %v3068 = vsub.s32 1, %v3067
        %v3069 = vrot.slane %v3060, %v3068
        %v3070 = vlaneseq
        %v3071 = vshrl.u32 %v3070, 7
        %v3072 = vsub.s32 2, %v3071
        %v3073 = vrot.slane %v3060, %v3072
        %v3074 = vlaneseq
        %v3075 = vshrl.u32 %v3074, 7
        %v3076 = vsub.s32 3, %v3075
        %v3077 = vrot.slane %v3060, %v3076
        %v3078 = vlaneseq
        %v3079 = vshrl.u32 %v3078, 7
        %v3080 = vsub.s32 4, %v3079
        %v3081 = vrot.slane %v3060, %v3080
        %v3135 = vunpack.c.l.b16 %v3012
        %v3136 = vunpack.c.h.b16 %v3012
        %v3137 = vunpack.c.l.b16 %v3013
        %v3138 = vunpack.c.h.b16 %v3013
        %v3139 = vunpack.c.l.b16 %v3014
        %v3140 = vunpack.c.l.b16 %v3015
        %v3141 = vunpack.c.h.b16 %v3015
        %v3142 = vunpack.c.l.b16 %v3016
        %v3143 = vunpack.c.h.b16 %v3016
        %v3144 = vunpack.c.l.b16 %v3017
        %v3145 = vunpack.c.l.b16 %v3018
        %v3146 = vunpack.c.h.b16 %v3018
        %v3147 = vunpack.c.l.b16 %v3019
        %v3148 = vunpack.c.h.b16 %v3019
        %v3149 = vunpack.c.l.b16 %v3020
        %v3150 = vunpack.c.l.b16 %v3021
        %v3151 = vunpack.c.h.b16 %v3021
        %v3152 = vunpack.c.l.b16 %v3022
        %v3153 = vunpack.c.h.b16 %v3022
        %v3154 = vunpack.c.l.b16 %v3023
        %v3155 = vunpack.c.l.b16 %v3024
        %v3156 = vunpack.c.h.b16 %v3024
        %v3157 = vunpack.c.l.b16 %v3025
        %v3158 = vunpack.c.h.b16 %v3025
        %v3159 = vunpack.c.l.b16 %v3026
        %v3160 = vunpack.c.l.b16 %v3027
        %v3161 = vunpack.c.h.b16 %v3027
        %v3162 = vunpack.c.l.b16 %v3028
        %v3163 = vunpack.c.h.b16 %v3028
        %v3164 = vunpack.c.l.b16 %v3029
        %v3165 = vunpack.c.l.b16 %v3030
        %v3166 = vunpack.c.h.b16 %v3030
        %v3167 = vunpack.c.l.b16 %v3031
        %v3168 = vunpack.c.h.b16 %v3031
        %v3169 = vunpack.c.l.b16 %v3032
        %v3170 = vunpack.c.l.b16 %v3033
        %v3171 = vunpack.c.h.b16 %v3033
        %v3172 = vunpack.c.l.b16 %v3034
        %v3173 = vunpack.c.h.b16 %v3034
        %v3174 = vunpack.c.l.b16 %v3035
        %v3175 = vunpack.c.l.b16 %v3036
        %v3176 = vunpack.c.h.b16 %v3036
        %v3177 = vunpack.c.l.b16 %v3037
        %v3178 = vunpack.c.h.b16 %v3037
        %v3179 = vunpack.c.l.b16 %v3038
        %v3180 = vunpack.c.l.b16 %v3039
        %v3181 = vunpack.c.h.b16 %v3039
        %v3182 = vunpack.c.l.b16 %v3040
        %v3183 = vunpack.c.h.b16 %v3040
        %v3184 = vunpack.c.l.b16 %v3041
        %v3185 = vunpack.c.l.b16 %v3042
        %v3186 = vunpack.c.h.b16 %v3042
        %v3187 = vunpack.c.l.b16 %v3043
        %v3188 = vunpack.c.h.b16 %v3043
        %v3189 = vunpack.c.l.b16 %v3044
        %v3190 = vunpack.c.l.b16 %v3045
        %v3191 = vunpack.c.h.b16 %v3045
        %v3192 = vunpack.c.l.b16 %v3046
        %v3193 = vunpack.c.h.b16 %v3046
        %v3194 = vunpack.c.l.b16 %v3047
        %v3195 = vunpack.c.l.b16 %v3048
        %v3196 = vunpack.c.h.b16 %v3048
        %v3197 = vunpack.c.l.b16 %v3049
        %v3198 = vunpack.c.h.b16 %v3049
        %v3199 = vunpack.c.l.b16 %v3050
        %v3200 = vunpack.c.l.b16 %v3051
        %v3201 = vunpack.c.h.b16 %v3051
        %v3202 = vunpack.c.l.b16 %v3052
        %v3203 = vunpack.c.h.b16 %v3052
        %v3204 = vunpack.c.l.b16 %v3053
        %v3205 = vunpack.c.l.b16 %v3054
        %v3206 = vunpack.c.h.b16 %v3054
        %v3207 = vunpack.c.l.b16 %v3055
        %v3208 = vunpack.c.h.b16 %v3055
        %v3209 = vunpack.c.l.b16 %v3056
        %v3210 = vunpack.c.l.b16 %v3057
        %v3211 = vunpack.c.h.b16 %v3057
        %v3212 = vunpack.c.l.b16 %v3058
        %v3213 = vunpack.c.h.b16 %v3058
        %v3214 = vunpack.c.l.b16 %v3059
        %v3215 = vpack.c.b16 %v3140, %v3135
        %v3216 = vpack.c.b16 %v3141, %v3136
        %v3217 = vpack.c.b16 %v3142, %v3137
        %v3218 = vpack.c.b16 %v3143, %v3138
        %v3219 = vpack.c.b16 %v3144, %v3139
        %v3220 = vpack.c.b16 %v3150, %v3145
        %v3221 = vpack.c.b16 %v3151, %v3146
        %v3222 = vpack.c.b16 %v3152, %v3147
        %v3223 = vpack.c.b16 %v3153, %v3148
        %v3224 = vpack.c.b16 %v3154, %v3149
        %v3225 = vpack.c.b16 %v3160, %v3155
        %v3226 = vpack.c.b16 %v3161, %v3156
        %v3227 = vpack.c.b16 %v3162, %v3157
        %v3228 = vpack.c.b16 %v3163, %v3158
        %v3229 = vpack.c.b16 %v3164, %v3159
        %v3230 = vpack.c.b16 %v3170, %v3165
        %v3231 = vpack.c.b16 %v3171, %v3166
        %v3232 = vpack.c.b16 %v3172, %v3167
        %v3233 = vpack.c.b16 %v3173, %v3168
        %v3234 = vpack.c.b16 %v3174, %v3169
        %v3235 = vpack.c.b16 %v3180, %v3175
        %v3236 = vpack.c.b16 %v3181, %v3176
        %v3237 = vpack.c.b16 %v3182, %v3177
        %v3238 = vpack.c.b16 %v3183, %v3178
        %v3239 = vpack.c.b16 %v3184, %v3179
        %v3240 = vpack.c.b16 %v3190, %v3185
        %v3241 = vpack.c.b16 %v3191, %v3186
        %v3242 = vpack.c.b16 %v3192, %v3187
        %v3243 = vpack.c.b16 %v3193, %v3188
        %v3244 = vpack.c.b16 %v3194, %v3189
        %v3245 = vpack.c.b16 %v3200, %v3195
        %v3246 = vpack.c.b16 %v3201, %v3196
        %v3247 = vpack.c.b16 %v3202, %v3197
        %v3248 = vpack.c.b16 %v3203, %v3198
        %v3249 = vpack.c.b16 %v3204, %v3199
        %v3250 = vpack.c.b16 %v3210, %v3205
        %v3251 = vpack.c.b16 %v3211, %v3206
        %v3252 = vpack.c.b16 %v3212, %v3207
        %v3253 = vpack.c.b16 %v3213, %v3208
        %v3254 = vpack.c.b16 %v3214, %v3209
        %3295 = vmatprep.subr.bf16.mxu0 %v3216
        %3296 = vmatpush1.bf16.msra.mxu0 %v3215
        %3297 = vmatprep.subr.bf16.mxu0 %v3221
        %3298 = vmatpush1.bf16.msra.mxu0 %v3220
        %3299 = vmatprep.subr.bf16.mxu0 %v3226
        %3300 = vmatpush1.bf16.msra.mxu0 %v3225
        %3301 = vmatprep.subr.bf16.mxu0 %v3231
        %3302 = vmatpush1.bf16.msra.mxu0 %v3230
        %3303 = vmatprep.subr.bf16.mxu0 %v3236
        %3304 = vmatpush1.bf16.msra.mxu0 %v3235
        %3305 = vmatprep.subr.bf16.mxu0 %v3241
        %3306 = vmatpush1.bf16.msra.mxu0 %v3240
        %3307 = vmatprep.subr.bf16.mxu0 %v3246
        %3308 = vmatpush1.bf16.msra.mxu0 %v3245
        %3309 = vmatprep.subr.bf16.mxu0 %v3251
        %3310 = vmatpush1.bf16.msra.mxu0 %v3250
        %3311 = vmatprep.subr.bf16.mxu0 0
        %3312 = vmatpush1.bf16.msra.mxu0 0
        %3313 = vmatprep.subr.bf16.mxu0 0
        %3314 = vmatpush1.bf16.msra.mxu0 0
        %3315 = vmatprep.subr.bf16.mxu0 0
        %3316 = vmatpush1.bf16.msra.mxu0 0
        %3317 = vmatprep.subr.bf16.mxu0 0
        %3318 = vmatpush1.bf16.msra.mxu0 0
        %3319 = vmatprep.subr.bf16.mxu0 0
        %3320 = vmatpush1.bf16.msra.mxu0 0
        %3321 = vmatprep.subr.bf16.mxu0 0
        %3322 = vmatpush1.bf16.msra.mxu0 0
        %3323 = vmatprep.subr.bf16.mxu0 0
        %3324 = vmatpush1.bf16.msra.mxu0 0
        %3325 = vmatprep.subr.bf16.mxu0 0
        %3326 = vmatpush1.bf16.msra.mxu0 0
        %3327 = vmatprep.mubr.bf16.mxu0 0
        %3328 = vmatmul.mubr.bf16.gmra.mrb[0].mxu0 %v2869
        %v3329 = vpop.f32.mrb[0].mxu0
        %v3330 = vadd.f32 %v3065, %v3329
        %v3331 = vpop.f32.mrb[0].mxu0
        %v3332 = vadd.f32 %v3069, %v3331
        %v3333 = vpop.f32.mrb[0].mxu0
        %v3334 = vadd.f32 %v3065, %v3333
        %v3335 = vpop.f32.mrb[0].mxu0
        %v3336 = vadd.f32 %v3069, %v3335
        %3337 = vmatprep.mubr.bf16.mxu0 0
        %3338 = vmatmul.mubr.bf16.gmra.mrb[0].mxu0 %v2871
        %v3339 = vpop.f32.mrb[0].mxu0
        %v3340 = vadd.f32 %v3065, %v3339
        %v3341 = vpop.f32.mrb[0].mxu0
        %v3342 = vadd.f32 %v3069, %v3341
        %v3343 = vpop.f32.mrb[0].mxu0
        %v3344 = vadd.f32 %v3065, %v3343
        %v3345 = vpop.f32.mrb[0].mxu0
        %v3346 = vadd.f32 %v3069, %v3345
        %3347 = vmatprep.mubr.bf16.mxu0 0
        %3348 = vmatmul.mubr.bf16.gmra.mrb[0].mxu0 %v2873
        %v3349 = vpop.f32.mrb[0].mxu0
        %v3350 = vadd.f32 %v3065, %v3349
        %v3351 = vpop.f32.mrb[0].mxu0
        %v3352 = vadd.f32 %v3069, %v3351
        %v3353 = vpop.f32.mrb[0].mxu0
        %v3354 = vadd.f32 %v3065, %v3353
        %v3355 = vpop.f32.mrb[0].mxu0
        %v3356 = vadd.f32 %v3069, %v3355
        %3357 = vmatprep.mubr.bf16.mxu0 0
        %3358 = vmatmul.mubr.bf16.gmra.mrb[0].mxu0 %v2875
        %v3359 = vpop.f32.mrb[0].mxu0
        %v3360 = vadd.f32 %v3065, %v3359
        %v3361 = vpop.f32.mrb[0].mxu0
        %v3362 = vadd.f32 %v3069, %v3361
        %v3363 = vpop.f32.mrb[0].mxu0
        %v3364 = vadd.f32 %v3065, %v3363
        %v3365 = vpop.f32.mrb[0].mxu0
        %v3366 = vadd.f32 %v3069, %v3365
        %3367 = vdwg.mxu0
        %3368 = vmatprep.subr.bf16.mxu0 %v3218
        %3369 = vmatpush1.bf16.msra.mxu0 %v3217
        %3370 = vmatprep.subr.bf16.mxu0 %v3223
        %3371 = vmatpush1.bf16.msra.mxu0 %v3222
        %3372 = vmatprep.subr.bf16.mxu0 %v3228
        %3373 = vmatpush1.bf16.msra.mxu0 %v3227
        %3374 = vmatprep.subr.bf16.mxu0 %v3233
        %3375 = vmatpush1.bf16.msra.mxu0 %v3232
        %3376 = vmatprep.subr.bf16.mxu0 %v3238
        %3377 = vmatpush1.bf16.msra.mxu0 %v3237
        %3378 = vmatprep.subr.bf16.mxu0 %v3243
        %3379 = vmatpush1.bf16.msra.mxu0 %v3242
        %3380 = vmatprep.subr.bf16.mxu0 %v3248
        %3381 = vmatpush1.bf16.msra.mxu0 %v3247
        %3382 = vmatprep.subr.bf16.mxu0 %v3253
        %3383 = vmatpush1.bf16.msra.mxu0 %v3252
        %3384 = vmatprep.subr.bf16.mxu0 0
        %3385 = vmatpush1.bf16.msra.mxu0 0
        %3386 = vmatprep.subr.bf16.mxu0 0
        %3387 = vmatpush1.bf16.msra.mxu0 0
        %3388 = vmatprep.subr.bf16.mxu0 0
        %3389 = vmatpush1.bf16.msra.mxu0 0
        %3390 = vmatprep.subr.bf16.mxu0 0
        %3391 = vmatpush1.bf16.msra.mxu0 0
        %3392 = vmatprep.subr.bf16.mxu0 0
        %3393 = vmatpush1.bf16.msra.mxu0 0
        %3394 = vmatprep.subr.bf16.mxu0 0
        %3395 = vmatpush1.bf16.msra.mxu0 0
        %3396 = vmatprep.subr.bf16.mxu0 0
        %3397 = vmatpush1.bf16.msra.mxu0 0
        %3398 = vmatprep.subr.bf16.mxu0 0
        %3399 = vmatpush1.bf16.msra.mxu0 0
        %3400 = vmatprep.mubr.bf16.mxu0 0
        %3401 = vmatmul.mubr.bf16.gmra.mrb[0].mxu0 %v2869
        %v3402 = vpop.f32.mrb[0].mxu0
        %v3403 = vadd.f32 %v3073, %v3402
        %v3404 = vpop.f32.mrb[0].mxu0
        %v3405 = vadd.f32 %v3077, %v3404
        %v3406 = vpop.f32.mrb[0].mxu0
        %v3407 = vadd.f32 %v3073, %v3406
        %v3408 = vpop.f32.mrb[0].mxu0
        %v3409 = vadd.f32 %v3077, %v3408
        %3410 = vmatprep.mubr.bf16.mxu0 0
        %3411 = vmatmul.mubr.bf16.gmra.mrb[0].mxu0 %v2871
        %v3412 = vpop.f32.mrb[0].mxu0
        %v3413 = vadd.f32 %v3073, %v3412
        %v3414 = vpop.f32.mrb[0].mxu0
        %v3415 = vadd.f32 %v3077, %v3414
        %v3416 = vpop.f32.mrb[0].mxu0
        %v3417 = vadd.f32 %v3073, %v3416
        %v3418 = vpop.f32.mrb[0].mxu0
        %v3419 = vadd.f32 %v3077, %v3418
        %3420 = vmatprep.mubr.bf16.mxu0 0
        %3421 = vmatmul.mubr.bf16.gmra.mrb[0].mxu0 %v2873
        %v3422 = vpop.f32.mrb[0].mxu0
        %v3423 = vadd.f32 %v3073, %v3422
        %v3424 = vpop.f32.mrb[0].mxu0
        %v3425 = vadd.f32 %v3077, %v3424
        %v3426 = vpop.f32.mrb[0].mxu0
        %v3427 = vadd.f32 %v3073, %v3426
        %v3428 = vpop.f32.mrb[0].mxu0
        %v3429 = vadd.f32 %v3077, %v3428
        %3430 = vmatprep.mubr.bf16.mxu0 0
        %3431 = vmatmul.mubr.bf16.gmra.mrb[0].mxu0 %v2875
        %v3432 = vpop.f32.mrb[0].mxu0
        %v3433 = vadd.f32 %v3073, %v3432
        %v3434 = vpop.f32.mrb[0].mxu0
        %v3435 = vadd.f32 %v3077, %v3434
        %v3436 = vpop.f32.mrb[0].mxu0
        %v3437 = vadd.f32 %v3073, %v3436
        %v3438 = vpop.f32.mrb[0].mxu0
        %v3439 = vadd.f32 %v3077, %v3438
        %3440 = vdwg.mxu0
        %3441 = vmatprep.subr.bf16.mxu0 0
        %3442 = vmatpush1.bf16.msra.mxu0 %v3219
        %3443 = vmatprep.subr.bf16.mxu0 0
        %3444 = vmatpush1.bf16.msra.mxu0 %v3224
        %3445 = vmatprep.subr.bf16.mxu0 0
        %3446 = vmatpush1.bf16.msra.mxu0 %v3229
        %3447 = vmatprep.subr.bf16.mxu0 0
        %3448 = vmatpush1.bf16.msra.mxu0 %v3234
        %3449 = vmatprep.subr.bf16.mxu0 0
        %3450 = vmatpush1.bf16.msra.mxu0 %v3239
        %3451 = vmatprep.subr.bf16.mxu0 0
        %3452 = vmatpush1.bf16.msra.mxu0 %v3244
        %3453 = vmatprep.subr.bf16.mxu0 0
        %3454 = vmatpush1.bf16.msra.mxu0 %v3249
        %3455 = vmatprep.subr.bf16.mxu0 0
        %3456 = vmatpush1.bf16.msra.mxu0 %v3254
        %3457 = vmatprep.subr.bf16.mxu0 0
        %3458 = vmatpush1.bf16.msra.mxu0 0
        %3459 = vmatprep.subr.bf16.mxu0 0
        %3460 = vmatpush1.bf16.msra.mxu0 0
        %3461 = vmatprep.subr.bf16.mxu0 0
        %3462 = vmatpush1.bf16.msra.mxu0 0
        %3463 = vmatprep.subr.bf16.mxu0 0
        %3464 = vmatpush1.bf16.msra.mxu0 0
        %3465 = vmatprep.subr.bf16.mxu0 0
        %3466 = vmatpush1.bf16.msra.mxu0 0
        %3467 = vmatprep.subr.bf16.mxu0 0
        %3468 = vmatpush1.bf16.msra.mxu0 0
        %3469 = vmatprep.subr.bf16.mxu0 0
        %3470 = vmatpush1.bf16.msra.mxu0 0
        %3471 = vmatprep.subr.bf16.mxu0 0
        %3472 = vmatpush1.bf16.msra.mxu0 0
        %3473 = vmatprep.mubr.bf16.mxu0 0
        %3474 = vmatmul.mubr.bf16.gmra.mrb[0].mxu0 %v2869
        %v3475 = vpop.f32.mrb[0].mxu0
        %v3476 = vadd.f32 %v3081, %v3475
        %v3477 = vpop.f32.mrb[0].mxu0
        %v3478 = vpop.f32.mrb[0].mxu0
        %v3479 = vadd.f32 %v3081, %v3478
        %v3480 = vpop.f32.mrb[0].mxu0
        %3481 = vmatprep.mubr.bf16.mxu0 0
        %3482 = vmatmul.mubr.bf16.gmra.mrb[0].mxu0 %v2871
        %v3483 = vpop.f32.mrb[0].mxu0
        %v3484 = vadd.f32 %v3081, %v3483
        %v3485 = vpop.f32.mrb[0].mxu0
        %v3486 = vpop.f32.mrb[0].mxu0
        %v3487 = vadd.f32 %v3081, %v3486
        %v3488 = vpop.f32.mrb[0].mxu0
        %3489 = vmatprep.mubr.bf16.mxu0 0
        %3490 = vmatmul.mubr.bf16.gmra.mrb[0].mxu0 %v2873
        %v3491 = vpop.f32.mrb[0].mxu0
        %v3492 = vadd.f32 %v3081, %v3491
        %v3493 = vpop.f32.mrb[0].mxu0
        %v3494 = vpop.f32.mrb[0].mxu0
        %v3495 = vadd.f32 %v3081, %v3494
        %v3496 = vpop.f32.mrb[0].mxu0
        %3497 = vmatprep.mubr.bf16.mxu0 0
        %3498 = vmatmul.mubr.bf16.gmra.mrb[0].mxu0 %v2875
        %v3499 = vpop.f32.mrb[0].mxu0
        %v3500 = vadd.f32 %v3081, %v3499
        %v3501 = vpop.f32.mrb[0].mxu0
        %v3502 = vpop.f32.mrb[0].mxu0
        %v3503 = vadd.f32 %v3081, %v3502
        %v3504 = vpop.f32.mrb[0].mxu0
        %3505 = vdwg.mxu0
        %v3506 = vmul.f32 %v3330, 0.25
        %v3507 = vmul.f32 %v3332, 0.25
        %v3508 = vmul.f32 %v3403, 0.25
        %v3509 = vmul.f32 %v3405, 0.25
        %v3510 = vmul.f32 %v3476, 0.25
        %v3511 = vmul.f32 %v3334, 0.25
        %v3512 = vmul.f32 %v3336, 0.25
        %v3513 = vmul.f32 %v3407, 0.25
        %v3514 = vmul.f32 %v3409, 0.25
        %v3515 = vmul.f32 %v3479, 0.25
        %v3516 = vmul.f32 %v3340, 0.25
        %v3517 = vmul.f32 %v3342, 0.25
        %v3518 = vmul.f32 %v3413, 0.25
        %v3519 = vmul.f32 %v3415, 0.25
        %v3520 = vmul.f32 %v3484, 0.25
        %v3521 = vmul.f32 %v3344, 0.25
        %v3522 = vmul.f32 %v3346, 0.25
        %v3523 = vmul.f32 %v3417, 0.25
        %v3524 = vmul.f32 %v3419, 0.25
        %v3525 = vmul.f32 %v3487, 0.25
        %v3526 = vmul.f32 %v3350, 0.25
        %v3527 = vmul.f32 %v3352, 0.25
        %v3528 = vmul.f32 %v3423, 0.25
        %v3529 = vmul.f32 %v3425, 0.25
        %v3530 = vmul.f32 %v3492, 0.25
        %v3531 = vmul.f32 %v3354, 0.25
        %v3532 = vmul.f32 %v3356, 0.25
        %v3533 = vmul.f32 %v3427, 0.25
        %v3534 = vmul.f32 %v3429, 0.25
        %v3535 = vmul.f32 %v3495, 0.25
        %v3536 = vmul.f32 %v3360, 0.25
        %v3537 = vmul.f32 %v3362, 0.25
        %v3538 = vmul.f32 %v3433, 0.25
        %v3539 = vmul.f32 %v3435, 0.25
        %v3540 = vmul.f32 %v3500, 0.25
        %v3541 = vmul.f32 %v3364, 0.25
        %v3542 = vmul.f32 %v3366, 0.25
        %v3543 = vmul.f32 %v3437, 0.25
        %v3544 = vmul.f32 %v3439, 0.25
        %v3545 = vmul.f32 %v3503, 0.25
        %3554 = vrot.lane.b32.xlu0 %v3506, 64
        %v3555 = vpop.permute.xlu0 %3554
        %3556 = vrot.lane.b32.xlu0 %v3511, 64
        %v3557 = vpop.permute.xlu0 %3556
        %3558 = vrot.lane.b32.xlu0 %v3516, 64
        %v3559 = vpop.permute.xlu0 %3558
        %3560 = vrot.lane.b32.xlu0 %v3521, 64
        %v3561 = vpop.permute.xlu0 %3560
        %3562 = vrot.lane.b32.xlu0 %v3526, 64
        %v3563 = vpop.permute.xlu0 %3562
        %3564 = vrot.lane.b32.xlu0 %v3531, 64
        %v3565 = vpop.permute.xlu0 %3564
        %3566 = vrot.lane.b32.xlu0 %v3536, 64
        %v3567 = vpop.permute.xlu0 %3566
        %3568 = vrot.lane.b32.xlu0 %v3541, 64
        %v3569 = vpop.permute.xlu0 %3568
        %v3578 = vmax.f32 %v3506, %v3555
        %v3579 = vmax.f32 %v3511, %v3557
        %v3580 = vmax.f32 %v3516, %v3559
        %v3581 = vmax.f32 %v3521, %v3561
        %v3582 = vmax.f32 %v3526, %v3563
        %v3583 = vmax.f32 %v3531, %v3565
        %v3584 = vmax.f32 %v3536, %v3567
        %v3585 = vmax.f32 %v3541, %v3569
        %v3586 = vmax.f32 %v3578, %v3507
        %v3587 = vmax.f32 %v3579, %v3512
        %v3588 = vmax.f32 %v3580, %v3517
        %v3589 = vmax.f32 %v3581, %v3522
        %v3590 = vmax.f32 %v3582, %v3527
        %v3591 = vmax.f32 %v3583, %v3532
        %v3592 = vmax.f32 %v3584, %v3537
        %v3593 = vmax.f32 %v3585, %v3542
        %3602 = vrot.lane.b32.xlu0 %v3507, 64
        %v3603 = vpop.permute.xlu0 %3602
        %3604 = vrot.lane.b32.xlu0 %v3512, 64
        %v3605 = vpop.permute.xlu0 %3604
        %3606 = vrot.lane.b32.xlu0 %v3517, 64
        %v3607 = vpop.permute.xlu0 %3606
        %3608 = vrot.lane.b32.xlu0 %v3522, 64
        %v3609 = vpop.permute.xlu0 %3608
        %3610 = vrot.lane.b32.xlu0 %v3527, 64
        %v3611 = vpop.permute.xlu0 %3610
        %3612 = vrot.lane.b32.xlu0 %v3532, 64
        %v3613 = vpop.permute.xlu0 %3612
        %3614 = vrot.lane.b32.xlu0 %v3537, 64
        %v3615 = vpop.permute.xlu0 %3614
        %3616 = vrot.lane.b32.xlu0 %v3542, 64
        %v3617 = vpop.permute.xlu0 %3616
        %v3626 = vmax.f32 %v3586, %v3603
        %v3627 = vmax.f32 %v3587, %v3605
        %v3628 = vmax.f32 %v3588, %v3607
        %v3629 = vmax.f32 %v3589, %v3609
        %v3630 = vmax.f32 %v3590, %v3611
        %v3631 = vmax.f32 %v3591, %v3613
        %v3632 = vmax.f32 %v3592, %v3615
        %v3633 = vmax.f32 %v3593, %v3617
        %v3634 = vmax.f32 %v3626, %v3508
        %v3635 = vmax.f32 %v3627, %v3513
        %v3636 = vmax.f32 %v3628, %v3518
        %v3637 = vmax.f32 %v3629, %v3523
        %v3638 = vmax.f32 %v3630, %v3528
        %v3639 = vmax.f32 %v3631, %v3533
        %v3640 = vmax.f32 %v3632, %v3538
        %v3641 = vmax.f32 %v3633, %v3543
        %3650 = vrot.lane.b32.xlu0 %v3508, 64
        %v3651 = vpop.permute.xlu0 %3650
        %3652 = vrot.lane.b32.xlu0 %v3513, 64
        %v3653 = vpop.permute.xlu0 %3652
        %3654 = vrot.lane.b32.xlu0 %v3518, 64
        %v3655 = vpop.permute.xlu0 %3654
        %3656 = vrot.lane.b32.xlu0 %v3523, 64
        %v3657 = vpop.permute.xlu0 %3656
        %3658 = vrot.lane.b32.xlu0 %v3528, 64
        %v3659 = vpop.permute.xlu0 %3658
        %3660 = vrot.lane.b32.xlu0 %v3533, 64
        %v3661 = vpop.permute.xlu0 %3660
        %3662 = vrot.lane.b32.xlu0 %v3538, 64
        %v3663 = vpop.permute.xlu0 %3662
        %3664 = vrot.lane.b32.xlu0 %v3543, 64
        %v3665 = vpop.permute.xlu0 %3664
        %v3674 = vmax.f32 %v3634, %v3651
        %v3675 = vmax.f32 %v3635, %v3653
        %v3676 = vmax.f32 %v3636, %v3655
        %v3677 = vmax.f32 %v3637, %v3657
        %v3678 = vmax.f32 %v3638, %v3659
        %v3679 = vmax.f32 %v3639, %v3661
        %v3680 = vmax.f32 %v3640, %v3663
        %v3681 = vmax.f32 %v3641, %v3665
        %v3682 = vmax.f32 %v3674, %v3509
        %v3683 = vmax.f32 %v3675, %v3514
        %v3684 = vmax.f32 %v3676, %v3519
        %v3685 = vmax.f32 %v3677, %v3524
        %v3686 = vmax.f32 %v3678, %v3529
        %v3687 = vmax.f32 %v3679, %v3534
        %v3688 = vmax.f32 %v3680, %v3539
        %v3689 = vmax.f32 %v3681, %v3544
        %3698 = vrot.lane.b32.xlu0 %v3509, 64
        %v3699 = vpop.permute.xlu0 %3698
        %3700 = vrot.lane.b32.xlu0 %v3514, 64
        %v3701 = vpop.permute.xlu0 %3700
        %3702 = vrot.lane.b32.xlu0 %v3519, 64
        %v3703 = vpop.permute.xlu0 %3702
        %3704 = vrot.lane.b32.xlu0 %v3524, 64
        %v3705 = vpop.permute.xlu0 %3704
        %3706 = vrot.lane.b32.xlu0 %v3529, 64
        %v3707 = vpop.permute.xlu0 %3706
        %3708 = vrot.lane.b32.xlu0 %v3534, 64
        %v3709 = vpop.permute.xlu0 %3708
        %3710 = vrot.lane.b32.xlu0 %v3539, 64
        %v3711 = vpop.permute.xlu0 %3710
        %3712 = vrot.lane.b32.xlu0 %v3544, 64
        %v3713 = vpop.permute.xlu0 %3712
        %v3722 = vmax.f32 %v3682, %v3699
        %v3723 = vmax.f32 %v3683, %v3701
        %v3724 = vmax.f32 %v3684, %v3703
        %v3725 = vmax.f32 %v3685, %v3705
        %v3726 = vmax.f32 %v3686, %v3707
        %v3727 = vmax.f32 %v3687, %v3709
        %v3728 = vmax.f32 %v3688, %v3711
        %v3729 = vmax.f32 %v3689, %v3713
        %v3730 = vmax.f32 %v3722, %v3510
        %v3731 = vmax.f32 %v3723, %v3515
        %v3732 = vmax.f32 %v3724, %v3520
        %v3733 = vmax.f32 %v3725, %v3525
        %v3734 = vmax.f32 %v3726, %v3530
        %v3735 = vmax.f32 %v3727, %v3535
        %v3736 = vmax.f32 %v3728, %v3540
        %v3737 = vmax.f32 %v3729, %v3545
        %v3738 = vsub.f32 %v3506, %v3730
        %v3739 = vsub.f32 %v3511, %v3731
        %v3740 = vsub.f32 %v3516, %v3732
        %v3741 = vsub.f32 %v3521, %v3733
        %v3742 = vsub.f32 %v3526, %v3734
        %v3743 = vsub.f32 %v3531, %v3735
        %v3744 = vsub.f32 %v3536, %v3736
        %v3745 = vsub.f32 %v3541, %v3737
        %v3746 = vmul.f32 %v3738, 1.442695
        %v3747 = vpow.pop %v3746
        %v3748 = vmul.f32 %v3739, 1.442695
        %v3749 = vpow.pop %v3748
        %v3750 = vmul.f32 %v3740, 1.442695
        %v3751 = vpow.pop %v3750
        %v3752 = vmul.f32 %v3741, 1.442695
        %v3753 = vpow.pop %v3752
        %v3754 = vmul.f32 %v3742, 1.442695
        %v3755 = vpow.pop %v3754
        %v3756 = vmul.f32 %v3743, 1.442695
        %v3757 = vpow.pop %v3756
        %v3758 = vmul.f32 %v3744, 1.442695
        %v3759 = vpow.pop %v3758
        %v3760 = vmul.f32 %v3745, 1.442695
        %v3761 = vpow.pop %v3760
        %3770 = vrot.lane.b32.xlu0 %v3730, 64
        %v3771 = vpop.permute.xlu0 %3770
        %3772 = vrot.lane.b32.xlu0 %v3731, 64
        %v3773 = vpop.permute.xlu0 %3772
        %3774 = vrot.lane.b32.xlu0 %v3732, 64
        %v3775 = vpop.permute.xlu0 %3774
        %3776 = vrot.lane.b32.xlu0 %v3733, 64
        %v3777 = vpop.permute.xlu0 %3776
        %3778 = vrot.lane.b32.xlu0 %v3734, 64
        %v3779 = vpop.permute.xlu0 %3778
        %3780 = vrot.lane.b32.xlu0 %v3735, 64
        %v3781 = vpop.permute.xlu0 %3780
        %3782 = vrot.lane.b32.xlu0 %v3736, 64
        %v3783 = vpop.permute.xlu0 %3782
        %3784 = vrot.lane.b32.xlu0 %v3737, 64
        %v3785 = vpop.permute.xlu0 %3784
        %v3794 = vsub.f32 %v3506, %v3771
        %v3795 = vsub.f32 %v3511, %v3773
        %v3796 = vsub.f32 %v3516, %v3775
        %v3797 = vsub.f32 %v3521, %v3777
        %v3798 = vsub.f32 %v3526, %v3779
        %v3799 = vsub.f32 %v3531, %v3781
        %v3800 = vsub.f32 %v3536, %v3783
        %v3801 = vsub.f32 %v3541, %v3785
        %v3802 = vmul.f32 %v3794, 1.442695
        %v3803 = vpow.pop %v3802
        %v3804 = vmul.f32 %v3795, 1.442695
        %v3805 = vpow.pop %v3804
        %v3806 = vmul.f32 %v3796, 1.442695
        %v3807 = vpow.pop %v3806
        %v3808 = vmul.f32 %v3797, 1.442695
        %v3809 = vpow.pop %v3808
        %v3810 = vmul.f32 %v3798, 1.442695
        %v3811 = vpow.pop %v3810
        %v3812 = vmul.f32 %v3799, 1.442695
        %v3813 = vpow.pop %v3812
        %v3814 = vmul.f32 %v3800, 1.442695
        %v3815 = vpow.pop %v3814
        %v3816 = vmul.f32 %v3801, 1.442695
        %v3817 = vpow.pop %v3816
        %v3818 = vsub.f32 %v3507, %v3730
        %v3819 = vsub.f32 %v3512, %v3731
        %v3820 = vsub.f32 %v3517, %v3732
        %v3821 = vsub.f32 %v3522, %v3733
        %v3822 = vsub.f32 %v3527, %v3734
        %v3823 = vsub.f32 %v3532, %v3735
        %v3824 = vsub.f32 %v3537, %v3736
        %v3825 = vsub.f32 %v3542, %v3737
        %v3826 = vmul.f32 %v3818, 1.442695
        %v3827 = vpow.pop %v3826
        %v3828 = vmul.f32 %v3819, 1.442695
        %v3829 = vpow.pop %v3828
        %v3830 = vmul.f32 %v3820, 1.442695
        %v3831 = vpow.pop %v3830
        %v3832 = vmul.f32 %v3821, 1.442695
        %v3833 = vpow.pop %v3832
        %v3834 = vmul.f32 %v3822, 1.442695
        %v3835 = vpow.pop %v3834
        %v3836 = vmul.f32 %v3823, 1.442695
        %v3837 = vpow.pop %v3836
        %v3838 = vmul.f32 %v3824, 1.442695
        %v3839 = vpow.pop %v3838
        %v3840 = vmul.f32 %v3825, 1.442695
        %v3841 = vpow.pop %v3840
        %v3842 = vsub.f32 %v3507, %v3771
        %v3843 = vsub.f32 %v3512, %v3773
        %v3844 = vsub.f32 %v3517, %v3775
        %v3845 = vsub.f32 %v3522, %v3777
        %v3846 = vsub.f32 %v3527, %v3779
        %v3847 = vsub.f32 %v3532, %v3781
        %v3848 = vsub.f32 %v3537, %v3783
        %v3849 = vsub.f32 %v3542, %v3785
        %v3850 = vmul.f32 %v3842, 1.442695
        %v3851 = vpow.pop %v3850
        %v3852 = vmul.f32 %v3843, 1.442695
        %v3853 = vpow.pop %v3852
        %v3854 = vmul.f32 %v3844, 1.442695
        %v3855 = vpow.pop %v3854
        %v3856 = vmul.f32 %v3845, 1.442695
        %v3857 = vpow.pop %v3856
        %v3858 = vmul.f32 %v3846, 1.442695
        %v3859 = vpow.pop %v3858
        %v3860 = vmul.f32 %v3847, 1.442695
        %v3861 = vpow.pop %v3860
        %v3862 = vmul.f32 %v3848, 1.442695
        %v3863 = vpow.pop %v3862
        %v3864 = vmul.f32 %v3849, 1.442695
        %v3865 = vpow.pop %v3864
        %v3866 = vsub.f32 %v3508, %v3730
        %v3867 = vsub.f32 %v3513, %v3731
        %v3868 = vsub.f32 %v3518, %v3732
        %v3869 = vsub.f32 %v3523, %v3733
        %v3870 = vsub.f32 %v3528, %v3734
        %v3871 = vsub.f32 %v3533, %v3735
        %v3872 = vsub.f32 %v3538, %v3736
        %v3873 = vsub.f32 %v3543, %v3737
        %v3874 = vmul.f32 %v3866, 1.442695
        %v3875 = vpow.pop %v3874
        %v3876 = vmul.f32 %v3867, 1.442695
        %v3877 = vpow.pop %v3876
        %v3878 = vmul.f32 %v3868, 1.442695
        %v3879 = vpow.pop %v3878
        %v3880 = vmul.f32 %v3869, 1.442695
        %v3881 = vpow.pop %v3880
        %v3882 = vmul.f32 %v3870, 1.442695
        %v3883 = vpow.pop %v3882
        %v3884 = vmul.f32 %v3871, 1.442695
        %v3885 = vpow.pop %v3884
        %v3886 = vmul.f32 %v3872, 1.442695
        %v3887 = vpow.pop %v3886
        %v3888 = vmul.f32 %v3873, 1.442695
        %v3889 = vpow.pop %v3888
        %v3890 = vsub.f32 %v3508, %v3771
        %v3891 = vsub.f32 %v3513, %v3773
        %v3892 = vsub.f32 %v3518, %v3775
        %v3893 = vsub.f32 %v3523, %v3777
        %v3894 = vsub.f32 %v3528, %v3779
        %v3895 = vsub.f32 %v3533, %v3781
        %v3896 = vsub.f32 %v3538, %v3783
        %v3897 = vsub.f32 %v3543, %v3785
        %v3898 = vmul.f32 %v3890, 1.442695
        %v3899 = vpow.pop %v3898
        %v3900 = vmul.f32 %v3891, 1.442695
        %v3901 = vpow.pop %v3900
        %v3902 = vmul.f32 %v3892, 1.442695
        %v3903 = vpow.pop %v3902
        %v3904 = vmul.f32 %v3893, 1.442695
        %v3905 = vpow.pop %v3904
        %v3906 = vmul.f32 %v3894, 1.442695
        %v3907 = vpow.pop %v3906
        %v3908 = vmul.f32 %v3895, 1.442695
        %v3909 = vpow.pop %v3908
        %v3910 = vmul.f32 %v3896, 1.442695
        %v3911 = vpow.pop %v3910
        %v3912 = vmul.f32 %v3897, 1.442695
        %v3913 = vpow.pop %v3912
        %v3914 = vsub.f32 %v3509, %v3730
        %v3915 = vsub.f32 %v3514, %v3731
        %v3916 = vsub.f32 %v3519, %v3732
        %v3917 = vsub.f32 %v3524, %v3733
        %v3918 = vsub.f32 %v3529, %v3734
        %v3919 = vsub.f32 %v3534, %v3735
        %v3920 = vsub.f32 %v3539, %v3736
        %v3921 = vsub.f32 %v3544, %v3737
        %v3922 = vmul.f32 %v3914, 1.442695
        %v3923 = vpow.pop %v3922
        %v3924 = vmul.f32 %v3915, 1.442695
        %v3925 = vpow.pop %v3924
        %v3926 = vmul.f32 %v3916, 1.442695
        %v3927 = vpow.pop %v3926
        %v3928 = vmul.f32 %v3917, 1.442695
        %v3929 = vpow.pop %v3928
        %v3930 = vmul.f32 %v3918, 1.442695
        %v3931 = vpow.pop %v3930
        %v3932 = vmul.f32 %v3919, 1.442695
        %v3933 = vpow.pop %v3932
        %v3934 = vmul.f32 %v3920, 1.442695
        %v3935 = vpow.pop %v3934
        %v3936 = vmul.f32 %v3921, 1.442695
        %v3937 = vpow.pop %v3936
        %v3938 = vsub.f32 %v3509, %v3771
        %v3939 = vsub.f32 %v3514, %v3773
        %v3940 = vsub.f32 %v3519, %v3775
        %v3941 = vsub.f32 %v3524, %v3777
        %v3942 = vsub.f32 %v3529, %v3779
        %v3943 = vsub.f32 %v3534, %v3781
        %v3944 = vsub.f32 %v3539, %v3783
        %v3945 = vsub.f32 %v3544, %v3785
        %v3946 = vmul.f32 %v3938, 1.442695
        %v3947 = vpow.pop %v3946
        %v3948 = vmul.f32 %v3939, 1.442695
        %v3949 = vpow.pop %v3948
        %v3950 = vmul.f32 %v3940, 1.442695
        %v3951 = vpow.pop %v3950
        %v3952 = vmul.f32 %v3941, 1.442695
        %v3953 = vpow.pop %v3952
        %v3954 = vmul.f32 %v3942, 1.442695
        %v3955 = vpow.pop %v3954
        %v3956 = vmul.f32 %v3943, 1.442695
        %v3957 = vpow.pop %v3956
        %v3958 = vmul.f32 %v3944, 1.442695
        %v3959 = vpow.pop %v3958
        %v3960 = vmul.f32 %v3945, 1.442695
        %v3961 = vpow.pop %v3960
        %v3962 = vsub.f32 %v3510, %v3730
        %v3963 = vsub.f32 %v3515, %v3731
        %v3964 = vsub.f32 %v3520, %v3732
        %v3965 = vsub.f32 %v3525, %v3733
        %v3966 = vsub.f32 %v3530, %v3734
        %v3967 = vsub.f32 %v3535, %v3735
        %v3968 = vsub.f32 %v3540, %v3736
        %v3969 = vsub.f32 %v3545, %v3737
        %v3970 = vmul.f32 %v3962, 1.442695
        %v3971 = vpow.pop %v3970
        %v3972 = vmul.f32 %v3963, 1.442695
        %v3973 = vpow.pop %v3972
        %v3974 = vmul.f32 %v3964, 1.442695
        %v3975 = vpow.pop %v3974
        %v3976 = vmul.f32 %v3965, 1.442695
        %v3977 = vpow.pop %v3976
        %v3978 = vmul.f32 %v3966, 1.442695
        %v3979 = vpow.pop %v3978
        %v3980 = vmul.f32 %v3967, 1.442695
        %v3981 = vpow.pop %v3980
        %v3982 = vmul.f32 %v3968, 1.442695
        %v3983 = vpow.pop %v3982
        %v3984 = vmul.f32 %v3969, 1.442695
        %v3985 = vpow.pop %v3984
        %3994 = vrot.lane.b32.xlu0 %v3803, 64
        %v3995 = vpop.permute.xlu0 %3994
        %3996 = vrot.lane.b32.xlu0 %v3805, 64
        %v3997 = vpop.permute.xlu0 %3996
        %3998 = vrot.lane.b32.xlu0 %v3807, 64
        %v3999 = vpop.permute.xlu0 %3998
        %4000 = vrot.lane.b32.xlu0 %v3809, 64
        %v4001 = vpop.permute.xlu0 %4000
        %4002 = vrot.lane.b32.xlu0 %v3811, 64
        %v4003 = vpop.permute.xlu0 %4002
        %4004 = vrot.lane.b32.xlu0 %v3813, 64
        %v4005 = vpop.permute.xlu0 %4004
        %4006 = vrot.lane.b32.xlu0 %v3815, 64
        %v4007 = vpop.permute.xlu0 %4006
        %4008 = vrot.lane.b32.xlu0 %v3817, 64
        %v4009 = vpop.permute.xlu0 %4008
        %v4018 = vadd.f32 %v3747, %v3995
        %v4019 = vadd.f32 %v3749, %v3997
        %v4020 = vadd.f32 %v3751, %v3999
        %v4021 = vadd.f32 %v3753, %v4001
        %v4022 = vadd.f32 %v3755, %v4003
        %v4023 = vadd.f32 %v3757, %v4005
        %v4024 = vadd.f32 %v3759, %v4007
        %v4025 = vadd.f32 %v3761, %v4009
        %v4026 = vadd.f32 %v4018, %v3827
        %v4027 = vadd.f32 %v4019, %v3829
        %v4028 = vadd.f32 %v4020, %v3831
        %v4029 = vadd.f32 %v4021, %v3833
        %v4030 = vadd.f32 %v4022, %v3835
        %v4031 = vadd.f32 %v4023, %v3837
        %v4032 = vadd.f32 %v4024, %v3839
        %v4033 = vadd.f32 %v4025, %v3841
        %4042 = vrot.lane.b32.xlu0 %v3851, 64
        %v4043 = vpop.permute.xlu0 %4042
        %4044 = vrot.lane.b32.xlu0 %v3853, 64
        %v4045 = vpop.permute.xlu0 %4044
        %4046 = vrot.lane.b32.xlu0 %v3855, 64
        %v4047 = vpop.permute.xlu0 %4046
        %4048 = vrot.lane.b32.xlu0 %v3857, 64
        %v4049 = vpop.permute.xlu0 %4048
        %4050 = vrot.lane.b32.xlu0 %v3859, 64
        %v4051 = vpop.permute.xlu0 %4050
        %4052 = vrot.lane.b32.xlu0 %v3861, 64
        %v4053 = vpop.permute.xlu0 %4052
        %4054 = vrot.lane.b32.xlu0 %v3863, 64
        %v4055 = vpop.permute.xlu0 %4054
        %4056 = vrot.lane.b32.xlu0 %v3865, 64
        %v4057 = vpop.permute.xlu0 %4056
        %v4066 = vadd.f32 %v4026, %v4043
        %v4067 = vadd.f32 %v4027, %v4045
        %v4068 = vadd.f32 %v4028, %v4047
        %v4069 = vadd.f32 %v4029, %v4049
        %v4070 = vadd.f32 %v4030, %v4051
        %v4071 = vadd.f32 %v4031, %v4053
        %v4072 = vadd.f32 %v4032, %v4055
        %v4073 = vadd.f32 %v4033, %v4057
        %v4074 = vadd.f32 %v4066, %v3875
        %v4075 = vadd.f32 %v4067, %v3877
        %v4076 = vadd.f32 %v4068, %v3879
        %v4077 = vadd.f32 %v4069, %v3881
        %v4078 = vadd.f32 %v4070, %v3883
        %v4079 = vadd.f32 %v4071, %v3885
        %v4080 = vadd.f32 %v4072, %v3887
        %v4081 = vadd.f32 %v4073, %v3889
        %4090 = vrot.lane.b32.xlu0 %v3899, 64
        %v4091 = vpop.permute.xlu0 %4090
        %4092 = vrot.lane.b32.xlu0 %v3901, 64
        %v4093 = vpop.permute.xlu0 %4092
        %4094 = vrot.lane.b32.xlu0 %v3903, 64
        %v4095 = vpop.permute.xlu0 %4094
        %4096 = vrot.lane.b32.xlu0 %v3905, 64
        %v4097 = vpop.permute.xlu0 %4096
        %4098 = vrot.lane.b32.xlu0 %v3907, 64
        %v4099 = vpop.permute.xlu0 %4098
        %4100 = vrot.lane.b32.xlu0 %v3909, 64
        %v4101 = vpop.permute.xlu0 %4100
        %4102 = vrot.lane.b32.xlu0 %v3911, 64
        %v4103 = vpop.permute.xlu0 %4102
        %4104 = vrot.lane.b32.xlu0 %v3913, 64
        %v4105 = vpop.permute.xlu0 %4104
        %v4114 = vadd.f32 %v4074, %v4091
        %v4115 = vadd.f32 %v4075, %v4093
        %v4116 = vadd.f32 %v4076, %v4095
        %v4117 = vadd.f32 %v4077, %v4097
        %v4118 = vadd.f32 %v4078, %v4099
        %v4119 = vadd.f32 %v4079, %v4101
        %v4120 = vadd.f32 %v4080, %v4103
        %v4121 = vadd.f32 %v4081, %v4105
        %v4122 = vadd.f32 %v4114, %v3923
        %v4123 = vadd.f32 %v4115, %v3925
        %v4124 = vadd.f32 %v4116, %v3927
        %v4125 = vadd.f32 %v4117, %v3929
        %v4126 = vadd.f32 %v4118, %v3931
        %v4127 = vadd.f32 %v4119, %v3933
        %v4128 = vadd.f32 %v4120, %v3935
        %v4129 = vadd.f32 %v4121, %v3937
        %4138 = vrot.lane.b32.xlu0 %v3947, 64
        %v4139 = vpop.permute.xlu0 %4138
        %4140 = vrot.lane.b32.xlu0 %v3949, 64
        %v4141 = vpop.permute.xlu0 %4140
        %4142 = vrot.lane.b32.xlu0 %v3951, 64
        %v4143 = vpop.permute.xlu0 %4142
        %4144 = vrot.lane.b32.xlu0 %v3953, 64
        %v4145 = vpop.permute.xlu0 %4144
        %4146 = vrot.lane.b32.xlu0 %v3955, 64
        %v4147 = vpop.permute.xlu0 %4146
        %4148 = vrot.lane.b32.xlu0 %v3957, 64
        %v4149 = vpop.permute.xlu0 %4148
        %4150 = vrot.lane.b32.xlu0 %v3959, 64
        %v4151 = vpop.permute.xlu0 %4150
        %4152 = vrot.lane.b32.xlu0 %v3961, 64
        %v4153 = vpop.permute.xlu0 %4152
        %v4162 = vadd.f32 %v4122, %v4139
        %v4163 = vadd.f32 %v4123, %v4141
        %v4164 = vadd.f32 %v4124, %v4143
        %v4165 = vadd.f32 %v4125, %v4145
        %v4166 = vadd.f32 %v4126, %v4147
        %v4167 = vadd.f32 %v4127, %v4149
        %v4168 = vadd.f32 %v4128, %v4151
        %v4169 = vadd.f32 %v4129, %v4153
        %v4170 = vadd.f32 %v4162, %v3971
        %v4171 = vadd.f32 %v4163, %v3973
        %v4172 = vadd.f32 %v4164, %v3975
        %v4173 = vadd.f32 %v4165, %v3977
        %v4174 = vadd.f32 %v4166, %v3979
        %v4175 = vadd.f32 %v4167, %v3981
        %v4176 = vadd.f32 %v4168, %v3983
        %v4177 = vadd.f32 %v4169, %v3985
        %v4178 = vrcp.pop %v4170
        %v4179 = vrcp.pop %v4171
        %v4180 = vrcp.pop %v4172
        %v4181 = vrcp.pop %v4173
        %v4182 = vrcp.pop %v4174
        %v4183 = vrcp.pop %v4175
        %v4184 = vrcp.pop %v4176
        %v4185 = vrcp.pop %v4177
        %v4186 = vmul.f32 %v3747, %v4178
        %v4187 = vmul.f32 %v3749, %v4179
        %v4188 = vmul.f32 %v3751, %v4180
        %v4189 = vmul.f32 %v3753, %v4181
        %v4190 = vmul.f32 %v3755, %v4182
        %v4191 = vmul.f32 %v3757, %v4183
        %v4192 = vmul.f32 %v3759, %v4184
        %v4193 = vmul.f32 %v3761, %v4185
        %4202 = vrot.lane.b32.xlu0 %v4178, 64
        %v4203 = vpop.permute.xlu0 %4202
        %4204 = vrot.lane.b32.xlu0 %v4179, 64
        %v4205 = vpop.permute.xlu0 %4204
        %4206 = vrot.lane.b32.xlu0 %v4180, 64
        %v4207 = vpop.permute.xlu0 %4206
        %4208 = vrot.lane.b32.xlu0 %v4181, 64
        %v4209 = vpop.permute.xlu0 %4208
        %4210 = vrot.lane.b32.xlu0 %v4182, 64
        %v4211 = vpop.permute.xlu0 %4210
        %4212 = vrot.lane.b32.xlu0 %v4183, 64
        %v4213 = vpop.permute.xlu0 %4212
        %4214 = vrot.lane.b32.xlu0 %v4184, 64
        %v4215 = vpop.permute.xlu0 %4214
        %4216 = vrot.lane.b32.xlu0 %v4185, 64
        %v4217 = vpop.permute.xlu0 %4216
        %v4226 = vmul.f32 %v3803, %v4203
        %v4227 = vmul.f32 %v3805, %v4205
        %v4228 = vmul.f32 %v3807, %v4207
        %v4229 = vmul.f32 %v3809, %v4209
        %v4230 = vmul.f32 %v3811, %v4211
        %v4231 = vmul.f32 %v3813, %v4213
        %v4232 = vmul.f32 %v3815, %v4215
        %v4233 = vmul.f32 %v3817, %v4217
        %v4234 = vmul.f32 %v3827, %v4178
        %v4235 = vmul.f32 %v3829, %v4179
        %v4236 = vmul.f32 %v3831, %v4180
        %v4237 = vmul.f32 %v3833, %v4181
        %v4238 = vmul.f32 %v3835, %v4182
        %v4239 = vmul.f32 %v3837, %v4183
        %v4240 = vmul.f32 %v3839, %v4184
        %v4241 = vmul.f32 %v3841, %v4185
        %v4242 = vmul.f32 %v3851, %v4203
        %v4243 = vmul.f32 %v3853, %v4205
        %v4244 = vmul.f32 %v3855, %v4207
        %v4245 = vmul.f32 %v3857, %v4209
        %v4246 = vmul.f32 %v3859, %v4211
        %v4247 = vmul.f32 %v3861, %v4213
        %v4248 = vmul.f32 %v3863, %v4215
        %v4249 = vmul.f32 %v3865, %v4217
        %v4250 = vmul.f32 %v3875, %v4178
        %v4251 = vmul.f32 %v3877, %v4179
        %v4252 = vmul.f32 %v3879, %v4180
        %v4253 = vmul.f32 %v3881, %v4181
        %v4254 = vmul.f32 %v3883, %v4182
        %v4255 = vmul.f32 %v3885, %v4183
        %v4256 = vmul.f32 %v3887, %v4184
        %v4257 = vmul.f32 %v3889, %v4185
        %v4258 = vmul.f32 %v3899, %v4203
        %v4259 = vmul.f32 %v3901, %v4205
        %v4260 = vmul.f32 %v3903, %v4207
        %v4261 = vmul.f32 %v3905, %v4209
        %v4262 = vmul.f32 %v3907, %v4211
        %v4263 = vmul.f32 %v3909, %v4213
        %v4264 = vmul.f32 %v3911, %v4215
        %v4265 = vmul.f32 %v3913, %v4217
        %v4266 = vmul.f32 %v3923, %v4178
        %v4267 = vmul.f32 %v3925, %v4179
        %v4268 = vmul.f32 %v3927, %v4180
        %v4269 = vmul.f32 %v3929, %v4181
        %v4270 = vmul.f32 %v3931, %v4182
        %v4271 = vmul.f32 %v3933, %v4183
        %v4272 = vmul.f32 %v3935, %v4184
        %v4273 = vmul.f32 %v3937, %v4185
        %v4274 = vmul.f32 %v3947, %v4203
        %v4275 = vmul.f32 %v3949, %v4205
        %v4276 = vmul.f32 %v3951, %v4207
        %v4277 = vmul.f32 %v3953, %v4209
        %v4278 = vmul.f32 %v3955, %v4211
        %v4279 = vmul.f32 %v3957, %v4213
        %v4280 = vmul.f32 %v3959, %v4215
        %v4281 = vmul.f32 %v3961, %v4217
        %v4282 = vmul.f32 %v3971, %v4178
        %v4283 = vmul.f32 %v3973, %v4179
        %v4284 = vmul.f32 %v3975, %v4180
        %v4285 = vmul.f32 %v3977, %v4181
        %v4286 = vmul.f32 %v3979, %v4182
        %v4287 = vmul.f32 %v3981, %v4183
        %v4288 = vmul.f32 %v3983, %v4184
        %v4289 = vmul.f32 %v3985, %v4185
        %vm4290 = vcmask 523264
        %v4291 = vsel %vm4290, %v4186, %v4226
        %v4292 = vsel %vm4290, %v4187, %v4227
        %v4293 = vsel %vm4290, %v4188, %v4228
        %v4294 = vsel %vm4290, %v4189, %v4229
        %v4295 = vsel %vm4290, %v4190, %v4230
        %v4296 = vsel %vm4290, %v4191, %v4231
        %v4297 = vsel %vm4290, %v4192, %v4232
        %v4298 = vsel %vm4290, %v4193, %v4233
        %v4299 = vsel %vm4290, %v4234, %v4242
        %v4300 = vsel %vm4290, %v4235, %v4243
        %v4301 = vsel %vm4290, %v4236, %v4244
        %v4302 = vsel %vm4290, %v4237, %v4245
        %v4303 = vsel %vm4290, %v4238, %v4246
        %v4304 = vsel %vm4290, %v4239, %v4247
        %v4305 = vsel %vm4290, %v4240, %v4248
        %v4306 = vsel %vm4290, %v4241, %v4249
        %v4307 = vsel %vm4290, %v4250, %v4258
        %v4308 = vsel %vm4290, %v4251, %v4259
        %v4309 = vsel %vm4290, %v4252, %v4260
        %v4310 = vsel %vm4290, %v4253, %v4261
        %v4311 = vsel %vm4290, %v4254, %v4262
        %v4312 = vsel %vm4290, %v4255, %v4263
        %v4313 = vsel %vm4290, %v4256, %v4264
        %v4314 = vsel %vm4290, %v4257, %v4265
        %v4315 = vsel %vm4290, %v4266, %v4274
        %v4316 = vsel %vm4290, %v4267, %v4275
        %v4317 = vsel %vm4290, %v4268, %v4276
        %v4318 = vsel %vm4290, %v4269, %v4277
        %v4319 = vsel %vm4290, %v4270, %v4278
        %v4320 = vsel %vm4290, %v4271, %v4279
        %v4321 = vsel %vm4290, %v4272, %v4280
        %v4322 = vsel %vm4290, %v4273, %v4281
        %v4323 = vpack.c.bf16 %v4292, %v4291
        %v4324 = vpack.c.bf16 %v4300, %v4299
        %v4325 = vpack.c.bf16 %v4308, %v4307
        %v4326 = vpack.c.bf16 %v4316, %v4315
        %v4327 = vpack.c.bf16 %v4283, %v4282
        %v4328 = vpack.c.bf16 %v4294, %v4293
        %v4329 = vpack.c.bf16 %v4302, %v4301
        %v4330 = vpack.c.bf16 %v4310, %v4309
        %v4331 = vpack.c.bf16 %v4318, %v4317
        %v4332 = vpack.c.bf16 %v4285, %v4284
        %v4333 = vpack.c.bf16 %v4296, %v4295
        %v4334 = vpack.c.bf16 %v4304, %v4303
        %v4335 = vpack.c.bf16 %v4312, %v4311
        %v4336 = vpack.c.bf16 %v4320, %v4319
        %v4337 = vpack.c.bf16 %v4287, %v4286
        %v4338 = vpack.c.bf16 %v4298, %v4297
        %v4339 = vpack.c.bf16 %v4306, %v4305
        %v4340 = vpack.c.bf16 %v4314, %v4313
        %v4341 = vpack.c.bf16 %v4322, %v4321
        %v4342 = vpack.c.bf16 %v4289, %v4288
        %v4363 = vunpack.c.l.b16 %v4323
        %v4364 = vunpack.c.l.b16 %v4324
        %v4365 = vunpack.c.l.b16 %v4325
        %v4366 = vunpack.c.l.b16 %v4326
        %v4367 = vunpack.c.l.b16 %v4327
        %v4368 = vunpack.c.h.b16 %v4323
        %v4369 = vunpack.c.h.b16 %v4324
        %v4370 = vunpack.c.h.b16 %v4325
        %v4371 = vunpack.c.h.b16 %v4326
        %v4372 = vunpack.c.h.b16 %v4327
        %v4373 = vunpack.c.l.b16 %v4328
        %v4374 = vunpack.c.l.b16 %v4329
        %v4375 = vunpack.c.l.b16 %v4330
        %v4376 = vunpack.c.l.b16 %v4331
        %v4377 = vunpack.c.l.b16 %v4332
        %v4378 = vunpack.c.h.b16 %v4328
        %v4379 = vunpack.c.h.b16 %v4329
        %v4380 = vunpack.c.h.b16 %v4330
        %v4381 = vunpack.c.h.b16 %v4331
        %v4382 = vunpack.c.h.b16 %v4332
        %v4383 = vunpack.c.l.b16 %v4333
        %v4384 = vunpack.c.l.b16 %v4334
        %v4385 = vunpack.c.l.b16 %v4335
        %v4386 = vunpack.c.l.b16 %v4336
        %v4387 = vunpack.c.l.b16 %v4337
        %v4388 = vunpack.c.h.b16 %v4333
        %v4389 = vunpack.c.h.b16 %v4334
        %v4390 = vunpack.c.h.b16 %v4335
        %v4391 = vunpack.c.h.b16 %v4336
        %v4392 = vunpack.c.h.b16 %v4337
        %v4393 = vunpack.c.l.b16 %v4338
        %v4394 = vunpack.c.l.b16 %v4339
        %v4395 = vunpack.c.l.b16 %v4340
        %v4396 = vunpack.c.l.b16 %v4341
        %v4397 = vunpack.c.l.b16 %v4342
        %v4398 = vunpack.c.h.b16 %v4338
        %v4399 = vunpack.c.h.b16 %v4339
        %v4400 = vunpack.c.h.b16 %v4340
        %v4401 = vunpack.c.h.b16 %v4341
        %v4402 = vunpack.c.h.b16 %v4342
        %v4403 = vpack.c.b16 %v4364, %v4363
        %v4404 = vpack.c.b16 %v4366, %v4365
        %v4405 = vpack.c.b16 %v4367, %v4367
        %v4406 = vpack.c.b16 %v4369, %v4368
        %v4407 = vpack.c.b16 %v4371, %v4370
        %v4408 = vpack.c.b16 %v4372, %v4372
        %v4409 = vpack.c.b16 %v4374, %v4373
        %v4410 = vpack.c.b16 %v4376, %v4375
        %v4411 = vpack.c.b16 %v4377, %v4377
        %v4412 = vpack.c.b16 %v4379, %v4378
        %v4413 = vpack.c.b16 %v4381, %v4380
        %v4414 = vpack.c.b16 %v4382, %v4382
        %v4415 = vpack.c.b16 %v4384, %v4383
        %v4416 = vpack.c.b16 %v4386, %v4385
        %v4417 = vpack.c.b16 %v4387, %v4387
        %v4418 = vpack.c.b16 %v4389, %v4388
        %v4419 = vpack.c.b16 %v4391, %v4390
        %v4420 = vpack.c.b16 %v4392, %v4392
        %v4421 = vpack.c.b16 %v4394, %v4393
        %v4422 = vpack.c.b16 %v4396, %v4395
        %v4423 = vpack.c.b16 %v4397, %v4397
        %v4424 = vpack.c.b16 %v4399, %v4398
        %v4425 = vpack.c.b16 %v4401, %v4400
        %v4426 = vpack.c.b16 %v4402, %v4402
        %4451 = vst [vmem:[%s1148] sm:$0xff] %v4403
        %4452 = vst [vmem:[%s1148 + $0x8] sm:$0xff] %v4404
        %vm4453 = vcmask 519168
        %4454 = vst.msk [vmem:[%s1148 + $0x10] sm:$0xf] %vm4453, %v4405
        %4455 = vst [vmem:[%s1148 + $0x14] sm:$0xff] %v4406
        %4456 = vst [vmem:[%s1148 + $0x1c] sm:$0xff] %v4407
        %4457 = vst.msk [vmem:[%s1148 + $0x24] sm:$0xf] %vm4453, %v4408
        %4458 = vst [vmem:[%s1148 + $0x28] sm:$0xff] %v4409
        %4459 = vst [vmem:[%s1148 + $0x30] sm:$0xff] %v4410
        %4460 = vst.msk [vmem:[%s1148 + $0x38] sm:$0xf] %vm4453, %v4411
        %4461 = vst [vmem:[%s1148 + $0x3c] sm:$0xff] %v4412
        %4462 = vst [vmem:[%s1148 + $0x44] sm:$0xff] %v4413
        %4463 = vst.msk [vmem:[%s1148 + $0x4c] sm:$0xf] %vm4453, %v4414
        %4464 = vst [vmem:[%s1148 + $0x50] sm:$0xff] %v4415
        %4465 = vst [vmem:[%s1148 + $0x58] sm:$0xff] %v4416
        %4466 = vst.msk [vmem:[%s1148 + $0x60] sm:$0xf] %vm4453, %v4417
        %4467 = vst [vmem:[%s1148 + $0x64] sm:$0xff] %v4418
        %4468 = vst [vmem:[%s1148 + $0x6c] sm:$0xff] %v4419
        %4469 = vst.msk [vmem:[%s1148 + $0x74] sm:$0xf] %vm4453, %v4420
        %4470 = vst [vmem:[%s1148 + $0x78] sm:$0xff] %v4421
        %4471 = vst [vmem:[%s1148 + $0x80] sm:$0xff] %v4422
        %4472 = vst.msk [vmem:[%s1148 + $0x88] sm:$0xf] %vm4453, %v4423
        %4473 = vst [vmem:[%s1148 + $0x8c] sm:$0xff] %v4424
        %4474 = vst [vmem:[%s1148 + $0x94] sm:$0xff] %v4425
        %4475 = vst.msk [vmem:[%s1148 + $0x9c] sm:$0xf] %vm4453, %v4426
        %v4476 = vmul.f32 %v2982, 0.003
        %v4477 = vmul.f32 %v2985, 0.003
        %v4478 = vmul.f32 %v2990, 0.003
        %v4479 = vmul.f32 %v2993, 0.003
        %v4480 = vmul.f32 %v2998, 0.003
        %v4481 = vmul.f32 %v3001, 0.003
        %v4482 = vmul.f32 %v3006, 0.003
        %v4483 = vmul.f32 %v3009, 0.003
        %v4484 = vadd.f32 %v4476, 1.0
        %v4485 = vadd.f32 %v4477, 1.0
        %v4486 = vadd.f32 %v4478, 1.0
        %v4487 = vadd.f32 %v4479, 1.0
        %v4488 = vadd.f32 %v4480, 1.0
        %v4489 = vadd.f32 %v4481, 1.0
        %v4490 = vadd.f32 %v4482, 1.0
        %v4491 = vadd.f32 %v4483, 1.0
        %v4492 = vmul.f32 %v4484, %v1173
        %v4493 = vmul.f32 %v4485, %v1174
        %v4494 = vmul.f32 %v4486, %v1175
        %v4495 = vmul.f32 %v4487, %v1176
        %v4496 = vmul.f32 %v4488, %v1177
        %v4497 = vmul.f32 %v4489, %v1178
        %v4498 = vmul.f32 %v4490, %v1179
        %v4499 = vmul.f32 %v4491, %v1180
        %v4500 = vmul.f32 %v4476, %v1173
        %v4501 = vmul.f32 %v4477, %v1174
        %v4502 = vmul.f32 %v4478, %v1175
        %v4503 = vmul.f32 %v4479, %v1176
        %v4504 = vmul.f32 %v4480, %v1177
        %v4505 = vmul.f32 %v4481, %v1178
        %v4506 = vmul.f32 %v4482, %v1179
        %v4507 = vmul.f32 %v4483, %v1180
        %4516 = vrot.lane.b32.xlu0 %v4500, 127
        %v4517 = vpop.permute.xlu0 %4516
        %4518 = vrot.lane.b32.xlu0 %v4501, 127
        %v4519 = vpop.permute.xlu0 %4518
        %4520 = vrot.lane.b32.xlu0 %v4502, 127
        %v4521 = vpop.permute.xlu0 %4520
        %4522 = vrot.lane.b32.xlu0 %v4503, 127
        %v4523 = vpop.permute.xlu0 %4522
        %4524 = vrot.lane.b32.xlu0 %v4504, 127
        %v4525 = vpop.permute.xlu0 %4524
        %4526 = vrot.lane.b32.xlu0 %v4505, 127
        %v4527 = vpop.permute.xlu0 %4526
        %4528 = vrot.lane.b32.xlu0 %v4506, 127
        %v4529 = vpop.permute.xlu0 %4528
        %4530 = vrot.lane.b32.xlu0 %v4507, 127
        %v4531 = vpop.permute.xlu0 %4530
        %v4540 = vadd.f32 %v4492, %v4517
        %v4541 = vadd.f32 %v4493, %v4519
        %v4542 = vadd.f32 %v4494, %v4521
        %v4543 = vadd.f32 %v4495, %v4523
        %v4544 = vadd.f32 %v4496, %v4525
        %v4545 = vadd.f32 %v4497, %v4527
        %v4546 = vadd.f32 %v4498, %v4529
        %v4547 = vadd.f32 %v4499, %v4531
        %4556 = vrot.lane.b32.xlu0 %v4476, 126
        %v4557 = vpop.permute.xlu0 %4556
        %4558 = vrot.lane.b32.xlu0 %v4477, 126
        %v4559 = vpop.permute.xlu0 %4558
        %4560 = vrot.lane.b32.xlu0 %v4478, 126
        %v4561 = vpop.permute.xlu0 %4560
        %4562 = vrot.lane.b32.xlu0 %v4479, 126
        %v4563 = vpop.permute.xlu0 %4562
        %4564 = vrot.lane.b32.xlu0 %v4480, 126
        %v4565 = vpop.permute.xlu0 %4564
        %4566 = vrot.lane.b32.xlu0 %v4481, 126
        %v4567 = vpop.permute.xlu0 %4566
        %4568 = vrot.lane.b32.xlu0 %v4482, 126
        %v4569 = vpop.permute.xlu0 %4568
        %4570 = vrot.lane.b32.xlu0 %v4483, 126
        %v4571 = vpop.permute.xlu0 %4570
        %v4580 = vadd.f32 %v4540, %v4557
        %v4581 = vadd.f32 %v4541, %v4559
        %v4582 = vadd.f32 %v4542, %v4561
        %v4583 = vadd.f32 %v4543, %v4563
        %v4584 = vadd.f32 %v4544, %v4565
        %v4585 = vadd.f32 %v4545, %v4567
        %v4586 = vadd.f32 %v4546, %v4569
        %v4587 = vadd.f32 %v4547, %v4571
        %4596 = vrot.lane.b32.xlu0 %v1173, 3
        %v4597 = vpop.permute.xlu0 %4596
        %4598 = vrot.lane.b32.xlu0 %v1174, 3
        %v4599 = vpop.permute.xlu0 %4598
        %4600 = vrot.lane.b32.xlu0 %v1175, 3
        %v4601 = vpop.permute.xlu0 %4600
        %4602 = vrot.lane.b32.xlu0 %v1176, 3
        %v4603 = vpop.permute.xlu0 %4602
        %4604 = vrot.lane.b32.xlu0 %v1177, 3
        %v4605 = vpop.permute.xlu0 %4604
        %4606 = vrot.lane.b32.xlu0 %v1178, 3
        %v4607 = vpop.permute.xlu0 %4606
        %4608 = vrot.lane.b32.xlu0 %v1179, 3
        %v4609 = vpop.permute.xlu0 %4608
        %4610 = vrot.lane.b32.xlu0 %v1180, 3
        %v4611 = vpop.permute.xlu0 %4610
        %v4620 = vmul.f32 %v4476, %v4597
        %v4621 = vmul.f32 %v4477, %v4599
        %v4622 = vmul.f32 %v4478, %v4601
        %v4623 = vmul.f32 %v4479, %v4603
        %v4624 = vmul.f32 %v4480, %v4605
        %v4625 = vmul.f32 %v4481, %v4607
        %v4626 = vmul.f32 %v4482, %v4609
        %v4627 = vmul.f32 %v4483, %v4611
        %v4628 = vmul.f32 %v4484, %v4597
        %v4629 = vmul.f32 %v4485, %v4599
        %v4630 = vmul.f32 %v4486, %v4601
        %v4631 = vmul.f32 %v4487, %v4603
        %v4632 = vmul.f32 %v4488, %v4605
        %v4633 = vmul.f32 %v4489, %v4607
        %v4634 = vmul.f32 %v4490, %v4609
        %v4635 = vmul.f32 %v4491, %v4611
        %4644 = vrot.lane.b32.xlu0 %v4628, 127
        %v4645 = vpop.permute.xlu0 %4644
        %4646 = vrot.lane.b32.xlu0 %v4629, 127
        %v4647 = vpop.permute.xlu0 %4646
        %4648 = vrot.lane.b32.xlu0 %v4630, 127
        %v4649 = vpop.permute.xlu0 %4648
        %4650 = vrot.lane.b32.xlu0 %v4631, 127
        %v4651 = vpop.permute.xlu0 %4650
        %4652 = vrot.lane.b32.xlu0 %v4632, 127
        %v4653 = vpop.permute.xlu0 %4652
        %4654 = vrot.lane.b32.xlu0 %v4633, 127
        %v4655 = vpop.permute.xlu0 %4654
        %4656 = vrot.lane.b32.xlu0 %v4634, 127
        %v4657 = vpop.permute.xlu0 %4656
        %4658 = vrot.lane.b32.xlu0 %v4635, 127
        %v4659 = vpop.permute.xlu0 %4658
        %v4668 = vadd.f32 %v4620, %v4645
        %v4669 = vadd.f32 %v4621, %v4647
        %v4670 = vadd.f32 %v4622, %v4649
        %v4671 = vadd.f32 %v4623, %v4651
        %v4672 = vadd.f32 %v4624, %v4653
        %v4673 = vadd.f32 %v4625, %v4655
        %v4674 = vadd.f32 %v4626, %v4657
        %v4675 = vadd.f32 %v4627, %v4659
        %v4676 = vadd.f32 %v4668, %v4557
        %v4677 = vadd.f32 %v4669, %v4559
        %v4678 = vadd.f32 %v4670, %v4561
        %v4679 = vadd.f32 %v4671, %v4563
        %v4680 = vadd.f32 %v4672, %v4565
        %v4681 = vadd.f32 %v4673, %v4567
        %v4682 = vadd.f32 %v4674, %v4569
        %v4683 = vadd.f32 %v4675, %v4571
        %4684 = vrot.lane.b32.xlu0 %v1173, 6
        %v4685 = vpop.permute.xlu0 %4684
        %4686 = vrot.lane.b32.xlu0 %v1174, 6
        %v4687 = vpop.permute.xlu0 %4686
        %4688 = vrot.lane.b32.xlu0 %v1175, 6
        %v4689 = vpop.permute.xlu0 %4688
        %4690 = vrot.lane.b32.xlu0 %v1176, 6
        %v4691 = vpop.permute.xlu0 %4690
        %4692 = vrot.lane.b32.xlu0 %v1177, 6
        %v4693 = vpop.permute.xlu0 %4692
        %4694 = vrot.lane.b32.xlu0 %v1178, 6
        %v4695 = vpop.permute.xlu0 %4694
        %4696 = vrot.lane.b32.xlu0 %v1179, 6
        %v4697 = vpop.permute.xlu0 %4696
        %4698 = vrot.lane.b32.xlu0 %v1180, 6
        %v4699 = vpop.permute.xlu0 %4698
        %v4708 = vmul.f32 %v4476, %v4685
        %v4709 = vmul.f32 %v4477, %v4687
        %v4710 = vmul.f32 %v4478, %v4689
        %v4711 = vmul.f32 %v4479, %v4691
        %v4712 = vmul.f32 %v4480, %v4693
        %v4713 = vmul.f32 %v4481, %v4695
        %v4714 = vmul.f32 %v4482, %v4697
        %v4715 = vmul.f32 %v4483, %v4699
        %4724 = vrot.lane.b32.xlu0 %v4708, 127
        %v4725 = vpop.permute.xlu0 %4724
        %4726 = vrot.lane.b32.xlu0 %v4709, 127
        %v4727 = vpop.permute.xlu0 %4726
        %4728 = vrot.lane.b32.xlu0 %v4710, 127
        %v4729 = vpop.permute.xlu0 %4728
        %4730 = vrot.lane.b32.xlu0 %v4711, 127
        %v4731 = vpop.permute.xlu0 %4730
        %4732 = vrot.lane.b32.xlu0 %v4712, 127
        %v4733 = vpop.permute.xlu0 %4732
        %4734 = vrot.lane.b32.xlu0 %v4713, 127
        %v4735 = vpop.permute.xlu0 %4734
        %4736 = vrot.lane.b32.xlu0 %v4714, 127
        %v4737 = vpop.permute.xlu0 %4736
        %4738 = vrot.lane.b32.xlu0 %v4715, 127
        %v4739 = vpop.permute.xlu0 %4738
        %v4748 = vadd.f32 %v4708, %v4725
        %v4749 = vadd.f32 %v4709, %v4727
        %v4750 = vadd.f32 %v4710, %v4729
        %v4751 = vadd.f32 %v4711, %v4731
        %v4752 = vadd.f32 %v4712, %v4733
        %v4753 = vadd.f32 %v4713, %v4735
        %v4754 = vadd.f32 %v4714, %v4737
        %v4755 = vadd.f32 %v4715, %v4739
        %4764 = vrot.lane.b32.xlu0 %v4484, 126
        %v4765 = vpop.permute.xlu0 %4764
        %4766 = vrot.lane.b32.xlu0 %v4485, 126
        %v4767 = vpop.permute.xlu0 %4766
        %4768 = vrot.lane.b32.xlu0 %v4486, 126
        %v4769 = vpop.permute.xlu0 %4768
        %4770 = vrot.lane.b32.xlu0 %v4487, 126
        %v4771 = vpop.permute.xlu0 %4770
        %4772 = vrot.lane.b32.xlu0 %v4488, 126
        %v4773 = vpop.permute.xlu0 %4772
        %4774 = vrot.lane.b32.xlu0 %v4489, 126
        %v4775 = vpop.permute.xlu0 %4774
        %4776 = vrot.lane.b32.xlu0 %v4490, 126
        %v4777 = vpop.permute.xlu0 %4776
        %4778 = vrot.lane.b32.xlu0 %v4491, 126
        %v4779 = vpop.permute.xlu0 %4778
        %v4788 = vadd.f32 %v4748, %v4765
        %v4789 = vadd.f32 %v4749, %v4767
        %v4790 = vadd.f32 %v4750, %v4769
        %v4791 = vadd.f32 %v4751, %v4771
        %v4792 = vadd.f32 %v4752, %v4773
        %v4793 = vadd.f32 %v4753, %v4775
        %v4794 = vadd.f32 %v4754, %v4777
        %v4795 = vadd.f32 %v4755, %v4779
        %4804 = vrot.lane.b32.xlu0 %v4788, 122
        %v4805 = vpop.permute.xlu0 %4804
        %4806 = vrot.lane.b32.xlu0 %v4789, 122
        %v4807 = vpop.permute.xlu0 %4806
        %4808 = vrot.lane.b32.xlu0 %v4790, 122
        %v4809 = vpop.permute.xlu0 %4808
        %4810 = vrot.lane.b32.xlu0 %v4791, 122
        %v4811 = vpop.permute.xlu0 %4810
        %4812 = vrot.lane.b32.xlu0 %v4792, 122
        %v4813 = vpop.permute.xlu0 %4812
        %4814 = vrot.lane.b32.xlu0 %v4793, 122
        %v4815 = vpop.permute.xlu0 %4814
        %4816 = vrot.lane.b32.xlu0 %v4794, 122
        %v4817 = vpop.permute.xlu0 %4816
        %4818 = vrot.lane.b32.xlu0 %v4795, 122
        %v4819 = vpop.permute.xlu0 %4818
        %v4828 = vrcp.pop %v4805
        %v4829 = vmul.f32 %v4580, %v4828
        %v4830 = vrcp.pop %v4807
        %v4831 = vmul.f32 %v4581, %v4830
        %v4832 = vrcp.pop %v4809
        %v4833 = vmul.f32 %v4582, %v4832
        %v4834 = vrcp.pop %v4811
        %v4835 = vmul.f32 %v4583, %v4834
        %v4836 = vrcp.pop %v4813
        %v4837 = vmul.f32 %v4584, %v4836
        %v4838 = vrcp.pop %v4815
        %v4839 = vmul.f32 %v4585, %v4838
        %v4840 = vrcp.pop %v4817
        %v4841 = vmul.f32 %v4586, %v4840
        %v4842 = vrcp.pop %v4819
        %v4843 = vmul.f32 %v4587, %v4842
        %v4844 = vsub.f32 %v4829, %v1173
        %v4845 = vsub.f32 %v4831, %v1174
        %v4846 = vsub.f32 %v4833, %v1175
        %v4847 = vsub.f32 %v4835, %v1176
        %v4848 = vsub.f32 %v4837, %v1177
        %v4849 = vsub.f32 %v4839, %v1178
        %v4850 = vsub.f32 %v4841, %v1179
        %v4851 = vsub.f32 %v4843, %v1180
        %4852 = vrot.lane.b32.xlu0 %v4788, 125
        %v4853 = vpop.permute.xlu0 %4852
        %4854 = vrot.lane.b32.xlu0 %v4789, 125
        %v4855 = vpop.permute.xlu0 %4854
        %4856 = vrot.lane.b32.xlu0 %v4790, 125
        %v4857 = vpop.permute.xlu0 %4856
        %4858 = vrot.lane.b32.xlu0 %v4791, 125
        %v4859 = vpop.permute.xlu0 %4858
        %4860 = vrot.lane.b32.xlu0 %v4792, 125
        %v4861 = vpop.permute.xlu0 %4860
        %4862 = vrot.lane.b32.xlu0 %v4793, 125
        %v4863 = vpop.permute.xlu0 %4862
        %4864 = vrot.lane.b32.xlu0 %v4794, 125
        %v4865 = vpop.permute.xlu0 %4864
        %4866 = vrot.lane.b32.xlu0 %v4795, 125
        %v4867 = vpop.permute.xlu0 %4866
        %v4876 = vrcp.pop %v4853
        %v4877 = vmul.f32 %v4676, %v4876
        %v4878 = vrcp.pop %v4855
        %v4879 = vmul.f32 %v4677, %v4878
        %v4880 = vrcp.pop %v4857
        %v4881 = vmul.f32 %v4678, %v4880
        %v4882 = vrcp.pop %v4859
        %v4883 = vmul.f32 %v4679, %v4882
        %v4884 = vrcp.pop %v4861
        %v4885 = vmul.f32 %v4680, %v4884
        %v4886 = vrcp.pop %v4863
        %v4887 = vmul.f32 %v4681, %v4886
        %v4888 = vrcp.pop %v4865
        %v4889 = vmul.f32 %v4682, %v4888
        %v4890 = vrcp.pop %v4867
        %v4891 = vmul.f32 %v4683, %v4890
        %4892 = vrot.lane.b32.xlu0 %v1173, 2
        %v4893 = vpop.permute.xlu0 %4892
        %4894 = vrot.lane.b32.xlu0 %v1174, 2
        %v4895 = vpop.permute.xlu0 %4894
        %4896 = vrot.lane.b32.xlu0 %v1175, 2
        %v4897 = vpop.permute.xlu0 %4896
        %4898 = vrot.lane.b32.xlu0 %v1176, 2
        %v4899 = vpop.permute.xlu0 %4898
        %4900 = vrot.lane.b32.xlu0 %v1177, 2
        %v4901 = vpop.permute.xlu0 %4900
        %4902 = vrot.lane.b32.xlu0 %v1178, 2
        %v4903 = vpop.permute.xlu0 %4902
        %4904 = vrot.lane.b32.xlu0 %v1179, 2
        %v4905 = vpop.permute.xlu0 %4904
        %4906 = vrot.lane.b32.xlu0 %v1180, 2
        %v4907 = vpop.permute.xlu0 %4906
        %v4916 = vsub.f32 %v4877, %v4893
        %v4917 = vsub.f32 %v4879, %v4895
        %v4918 = vsub.f32 %v4881, %v4897
        %v4919 = vsub.f32 %v4883, %v4899
        %v4920 = vsub.f32 %v4885, %v4901
        %v4921 = vsub.f32 %v4887, %v4903
        %v4922 = vsub.f32 %v4889, %v4905
        %v4923 = vsub.f32 %v4891, %v4907
        %4932 = vrot.lane.b32.xlu0 %v4916, 126
        %v4933 = vpop.permute.xlu0 %4932
        %4934 = vrot.lane.b32.xlu0 %v4917, 126
        %v4935 = vpop.permute.xlu0 %4934
        %4936 = vrot.lane.b32.xlu0 %v4918, 126
        %v4937 = vpop.permute.xlu0 %4936
        %4938 = vrot.lane.b32.xlu0 %v4919, 126
        %v4939 = vpop.permute.xlu0 %4938
        %4940 = vrot.lane.b32.xlu0 %v4920, 126
        %v4941 = vpop.permute.xlu0 %4940
        %4942 = vrot.lane.b32.xlu0 %v4921, 126
        %v4943 = vpop.permute.xlu0 %4942
        %4944 = vrot.lane.b32.xlu0 %v4922, 126
        %v4945 = vpop.permute.xlu0 %4944
        %4946 = vrot.lane.b32.xlu0 %v4923, 126
        %v4947 = vpop.permute.xlu0 %4946
        %vm4956 = vcmask 7168
        %v4957 = vsel %vm4956, %v4844, %v4933
        %v4958 = vsel %vm4956, %v4845, %v4935
        %v4959 = vsel %vm4956, %v4846, %v4937
        %v4960 = vsel %vm4956, %v4847, %v4939
        %v4961 = vsel %vm4956, %v4848, %v4941
        %v4962 = vsel %vm4956, %v4849, %v4943
        %v4963 = vsel %vm4956, %v4850, %v4945
        %v4964 = vsel %vm4956, %v4851, %v4947
        %v4965 = vadd.f32 %v1181, %v4957
        %v4966 = vadd.f32 %v1182, %v4958
        %v4967 = vadd.f32 %v1183, %v4959
        %v4968 = vadd.f32 %v1184, %v4960
        %v4969 = vadd.f32 %v1185, %v4961
        %v4970 = vadd.f32 %v1186, %v4962
        %v4971 = vadd.f32 %v1187, %v4963
        %v4972 = vadd.f32 %v1188, %v4964
        %vm4973 = vcmask 15360
        %4974 = vst.msk [vmem:[%s1155] sm:$0xff] %vm4973, %v4965
        %4975 = vst.msk [vmem:[%s1155 + $0x8] sm:$0xff] %vm4973, %v4966
        %4976 = vst.msk [vmem:[%s1155 + $0x10] sm:$0xff] %vm4973, %v4967
        %4977 = vst.msk [vmem:[%s1155 + $0x18] sm:$0xff] %vm4973, %v4968
        %4978 = vst.msk [vmem:[%s1155 + $0x20] sm:$0xff] %vm4973, %v4969
        %4979 = vst.msk [vmem:[%s1155 + $0x28] sm:$0xff] %vm4973, %v4970
        %4980 = vst.msk [vmem:[%s1155 + $0x30] sm:$0xff] %vm4973, %v4971
        %4981 = vst.msk [vmem:[%s1155 + $0x38] sm:$0xff] %vm4973, %v4972
        %s4982 = sand.u32 %s555, 1
        %s4983 = scalar_lea.sflag [#allocation4], %s4982
        %s4984 = sand.u32 %s555, 1
        %s4985 = smul.addr %s4984, 64
        %s4986 = scalar_lea.vmem [#allocation37], %s4985
        %s4987 = sand.u32 %s60, 1
        %s4988 = scalar_lea.sflag [#allocation39], %s4987
        %s4989 = sand.u32 %s581, 1
        %s4990 = smul.addr %s4989, 160
        %s4991 = scalar_lea.vmem [#allocation38], %s4990
        %s4992 = sand.u32 %s60, 1
        %s4993 = scalar_lea.sflag [#allocation39], %s4992
        %s4994 = sand.u32 %s607, 1
        %s4995 = smul.addr %s4994, 64
        %s4996 = scalar_lea.vmem [#allocation40], %s4995
        // Predicated region
        $region197: #{raft_forward.14} parent=107 // pred_check
          %p4997 = pneg %p565
        $region198: #{raft_forward.14} parent=107 // pred_check_branch
          %4999 = sbr.rel (%p4997) target = $region200
        $region199: #{raft_forward.14} parent=107 // pred_region
          %s5000 = smul.u32 8, %s60
          %s5002 = ssub.s32 1024, 1024
          %5003 = vsyncadd %s4983, %s5002
          %s5004 = smul.addr %s5000, 128
          %s5005 = scalar_lea.hbm %s22, %s5004
          %s5006 = sshll.u32 %s4986, 4
          %s5007 = int_to_ptr.vmem [resolvable:$true] %s5006
          %5012 = dma.vmem_to_hbm [thread:$0]  %s5007, 1024, %s5005, %s4983, 128, 128, 8
        $region200: #{raft_forward.14} parent=107 // pred_fallthru
          _
        // Predicated region
        $region201: #{raft_forward.14} parent=107 // pred_check
          %p5013 = pneg %p591
        $region202: #{raft_forward.14} parent=107 // pred_check_branch
          %5015 = sbr.rel (%p5013) target = $region204
        $region203: #{raft_forward.14} parent=107 // pred_region
          %s5016 = smul.u32 8, %s60
          %s5018 = ssub.s32 2560, 2560
          %5019 = vsyncadd %s4988, %s5018
          %s5020 = smul.addr %s5016, 5
          %s5021 = smul.addr %s5020, 64
          %s5022 = scalar_lea.hbm %s23, %s5021
          %s5023 = sshll.u32 %s4991, 4
          %s5024 = int_to_ptr.vmem [resolvable:$true] %s5023
          %5029 = dma.vmem_to_hbm [thread:$0]  %s5024, 2560, %s5022, %s4988, 320, 320, 20
        $region204: #{raft_forward.14} parent=107 // pred_fallthru
          _
        // Predicated region
        $region205: #{raft_forward.14} parent=107 // pred_check
          %p5030 = pneg %p617
        $region206: #{raft_forward.14} parent=107 // pred_check_branch
          %5032 = sbr.rel (%p5030) target = $region208
        $region207: #{raft_forward.14} parent=107 // pred_region
          %s5033 = smul.u32 8, %s60
          %s5035 = ssub.s32 1024, 1024
          %5036 = vsyncadd %s4993, %s5035
          %s5037 = smul.addr %s5033, 128
          %s5038 = scalar_lea.hbm %s24, %s5037
          %s5039 = sshll.u32 %s4996, 4
          %s5040 = int_to_ptr.vmem [resolvable:$true] %s5039
          %5045 = dma.vmem_to_hbm [thread:$0]  %s5040, 1024, %s5038, %s4993, 128, 128, 8
        $region208: #{raft_forward.14} parent=107 // pred_fallthru
          _
      $region108: #{raft_forward.14} parent=5 // pred_fallthru
        _
      %p5046 = scmp.le.s32.totalorder 2, %s55
      // Predicated region
      $region209: #{raft_forward.14} parent=5 // pred_check
        %p5047 = pneg %p5046
      $region210: #{raft_forward.14} parent=5 // pred_check_branch
        %5049 = sbr.rel (%p5047) target = $region212
      $region211: #{raft_forward.14} parent=5 // pred_region
        %s5050 = ssub.s32 %s55, 2
        // Predicated region
        $region213: #{raft_forward.14} parent=211 // pred_check
          %p5051 = pneg %p571
        $region214: #{raft_forward.14} parent=211 // pred_check_branch
          %5053 = sbr.rel (%p5051) target = $region216
        $region215: #{raft_forward.14} parent=211 // pred_region
          %s5054 = sand.u32 %s556, 1
          %s5055 = scalar_lea.sflag [#allocation4], %s5054
          %s5056 = sand.u32 %s556, 1
          %s5057 = smul.addr %s5056, 64
          %s5058 = scalar_lea.vmem [#allocation37], %s5057
          %5059 = dma.done %s5055, 1024
        $region216: #{raft_forward.14} parent=211 // pred_fallthru
          _
        // Predicated region
        $region217: #{raft_forward.14} parent=211 // pred_check
          %p5060 = pneg %p597
        $region218: #{raft_forward.14} parent=211 // pred_check_branch
          %5062 = sbr.rel (%p5060) target = $region220
        $region219: #{raft_forward.14} parent=211 // pred_region
          %s5063 = sand.u32 %s61, 1
          %s5064 = scalar_lea.sflag [#allocation39], %s5063
          %s5065 = sand.u32 %s582, 1
          %s5066 = smul.addr %s5065, 160
          %s5067 = scalar_lea.vmem [#allocation38], %s5066
          %5068 = dma.done %s5064, 2560
        $region220: #{raft_forward.14} parent=211 // pred_fallthru
          _
        // Predicated region
        $region221: #{raft_forward.14} parent=211 // pred_check
          %p5069 = pneg %p623
        $region222: #{raft_forward.14} parent=211 // pred_check_branch
          %5071 = sbr.rel (%p5069) target = $region224
        $region223: #{raft_forward.14} parent=211 // pred_region
          %s5072 = sand.u32 %s61, 1
          %s5073 = scalar_lea.sflag [#allocation39], %s5072
          %s5074 = sand.u32 %s608, 1
          %s5075 = smul.addr %s5074, 64
          %s5076 = scalar_lea.vmem [#allocation40], %s5075
          %5077 = dma.done %s5073, 1024
        $region224: #{raft_forward.14} parent=211 // pred_fallthru
          _
      $region212: #{raft_forward.14} parent=5 // pred_fallthru
        _
    $region6: #{raft_forward.14} parent=1 // loop_footer
      %s59 = sadd.s32 1, %s55
    $region7: #{raft_forward.14} parent=1 // loop_footer_branch
      %54 = sbr.rel target = $region3
    $region8: #{raft_forward.14} parent=1 // loop_exit
      _
    %5078 = vsyncpa [#allocation3], 1
    %s5079 = scalar_lea.sflag [#allocation3], 1
    %5080 = vsyncpa %s5079, 1
    %5081 = vsyncpa [#allocation6], 1
    %s5082 = scalar_lea.sflag [#allocation6], 1
    %5083 = vsyncpa %s5082, 1
    %5084 = vsyncpa [#allocation9], 1
    %s5085 = scalar_lea.sflag [#allocation9], 1
    %5086 = vsyncpa %s5085, 1
    %5087 = vsyncpa [#allocation12], 1
    %5088 = vsyncpa [#allocation15], 1
    %5089 = vsyncpa [#allocation18], 1
    %5090 = vsyncpa [#allocation21], 1
    %5091 = vsyncpa [#allocation24], 1
    %5092 = vsyncpa [#allocation27], 1
    %5093 = vsyncpa [#allocation30], 1
    %5094 = vsyncpa [#allocation33], 1
    %5095 = vsyncpa [#allocation36], 1
    %5096 = vsyncpa [#allocation4], 1
    %s5097 = scalar_lea.sflag [#allocation4], 1
    %5098 = vsyncpa %s5097, 1
    %5099 = vsyncpa [#allocation39], 1
    %s5100 = scalar_lea.sflag [#allocation39], 1
    %5101 = vsyncpa %s5100, 1

// kernel: raft_forward.21
$region0: #{raft_forward.21}
  #allocation0 [shape = 'u32[]', space=smem, size = 0x4, offset = 0x4, fixed_abs, tag = 'smem constant byte address 0x4 - core index']
  #allocation1 [shape = 'u32[144,128]{1,0:T(1,128)}', space=vmem, size = 0x12000, scoped, tag = 'internal scratch']
  %s0 = inlined_call_operand.hbm [shape: bf16[128,576], index: 0, kind: input, shape index: {}]
  %s1 = inlined_call_operand.hbm [shape: f32[128,18], index: 1, kind: input, shape index: {}]
  %s2 = inlined_call_operand.hbm [shape: f32[128,128], index: 2, kind: output, shape index: {}]
  %s3 = sld [smem:[#allocation0]]
  $region49: #{raft_forward.21} parent=0
    _
  %s5 = ssub.s32 1, %s3
  %s6 = scalar_select 0, %s5, %s3
  $region1: #{raft_forward.21} parent=0
    #allocation2 [shape = 'u8[163840]{0}', space=vmem, size = 0x28000, scoped, tag = 'input window, operand 0']
    #allocation3 [shape = 's32[2]{0}', space=sflag, size = 0x8, scoped, tag = 'scoped memory for raft_forward.21']
    #allocation4 [shape = 's32[2]{0}', space=sflag, size = 0x8, scoped, tag = 'scoped memory for raft_forward.21']
    #allocation5 [shape = 'u8[65536]{0}', space=vmem, size = 0x10000, scoped, tag = 'input window, operand 1']
    #allocation6 [shape = 's32[2]{0}', space=sflag, size = 0x8, scoped, tag = 'scoped memory for raft_forward.21']
    #allocation7 [shape = 'u8[65536]{0}', space=vmem, size = 0x10000, scoped, tag = 'output window, operand 0']
    %7 = vsyncpa [#allocation3], 0
    %s8 = scalar_lea.sflag [#allocation3], 1
    %9 = vsyncpa %s8, 0
    %10 = vsyncpa [#allocation6], 0
    %s11 = scalar_lea.sflag [#allocation6], 1
    %12 = vsyncpa %s11, 0
    %13 = vsyncpa [#allocation4], 0
    %s14 = scalar_lea.sflag [#allocation4], 1
    %15 = vsyncpa %s14, 0
    loop: start=0, step=1, limit=4
    $region2: #{raft_forward.21} parent=1 // loop_pre_header
      _
    $region3: #{raft_forward.21} parent=1 // loop_header
      %s17 = sphi 0, %s21
      %p18 = scmp.ge.s32.totalorder %s17, 4
      %s27 = sphi 0, %s29
      %s30 = sphi 0, %s27
      %s31 = sphi 0, %s30
      %s47 = sphi 0, %s31
      %s53 = sphi 0, %s55
      %s56 = sphi 0, %s53
      %s57 = sphi 0, %s56
      %s73 = sphi 0, %s57
      %s79 = sphi 0, %s81
      %s82 = sphi 0, %s79
      %s83 = sphi 0, %s82
      %s99 = sphi 0, %s83
    $region4: #{raft_forward.21} parent=1 // loop_header_branch
      %20 = sbr.rel (%p18) target = $region8
    $region5: #{raft_forward.21} parent=1 // loop_body
      %s22 = ssub.s32 %s17, 1
      %s23 = ssub.s32 %s17, 2
      %s24 = sadd.s32 %s17, 1
      %s25 = ssub.s32 %s17, %s24
      %p26 = scmp.eq.s32.totalorder %s25, 0
      %s28 = sadd.s32 %s27, 1
      %s29 = scalar_select %p26, %s27, %s28
      %p32 = pneg %p26
      %p33 = scmp.eq.s32.totalorder %s17, 1
      %p34 = por %p32, %p33
      %p35 = scmp.ne.s32.totalorder %s27, %s30
      %p36 = scmp.eq.s32.totalorder %s17, 0
      %p37 = por %p35, %p36
      %p38 = scmp.ne.s32.totalorder %s27, %s30
      %p39 = scmp.eq.s32.totalorder %s22, 1
      %p40 = por %p38, %p39
      %p41 = scmp.ne.s32.totalorder %s30, %s31
      %p42 = scmp.eq.s32.totalorder %s22, 0
      %p43 = por %p41, %p42
      %p44 = scmp.ne.s32.totalorder %s30, %s31
      %p45 = scmp.eq.s32.totalorder %s23, 1
      %p46 = por %p44, %p45
      %p48 = scmp.ne.s32.totalorder %s31, %s47
      %p49 = scmp.eq.s32.totalorder %s23, 0
      %p50 = por %p48, %p49
      %s51 = ssub.s32 %s17, %s24
      %p52 = scmp.eq.s32.totalorder %s51, 0
      %s54 = sadd.s32 %s53, 1
      %s55 = scalar_select %p52, %s53, %s54
      %p58 = pneg %p52
      %p59 = scmp.eq.s32.totalorder %s17, 1
      %p60 = por %p58, %p59
      %p61 = scmp.ne.s32.totalorder %s53, %s56
      %p62 = scmp.eq.s32.totalorder %s17, 0
      %p63 = por %p61, %p62
      %p64 = scmp.ne.s32.totalorder %s53, %s56
      %p65 = scmp.eq.s32.totalorder %s22, 1
      %p66 = por %p64, %p65
      %p67 = scmp.ne.s32.totalorder %s56, %s57
      %p68 = scmp.eq.s32.totalorder %s22, 0
      %p69 = por %p67, %p68
      %p70 = scmp.ne.s32.totalorder %s56, %s57
      %p71 = scmp.eq.s32.totalorder %s23, 1
      %p72 = por %p70, %p71
      %p74 = scmp.ne.s32.totalorder %s57, %s73
      %p75 = scmp.eq.s32.totalorder %s23, 0
      %p76 = por %p74, %p75
      %s77 = ssub.s32 %s17, %s24
      %p78 = scmp.eq.s32.totalorder %s77, 0
      %s80 = sadd.s32 %s79, 1
      %s81 = scalar_select %p78, %s79, %s80
      %p84 = pneg %p78
      %p85 = scmp.eq.s32.totalorder %s17, 1
      %p86 = por %p84, %p85
      %p87 = scmp.ne.s32.totalorder %s79, %s82
      %p88 = scmp.eq.s32.totalorder %s17, 0
      %p89 = por %p87, %p88
      %p90 = scmp.ne.s32.totalorder %s79, %s82
      %p91 = scmp.eq.s32.totalorder %s22, 1
      %p92 = por %p90, %p91
      %p93 = scmp.ne.s32.totalorder %s82, %s83
      %p94 = scmp.eq.s32.totalorder %s22, 0
      %p95 = por %p93, %p94
      %p96 = scmp.ne.s32.totalorder %s82, %s83
      %p97 = scmp.eq.s32.totalorder %s23, 1
      %p98 = por %p96, %p97
      %p100 = scmp.ne.s32.totalorder %s83, %s99
      %p101 = scmp.eq.s32.totalorder %s23, 0
      %p102 = por %p100, %p101
      %p103 = scmp.le.s32.totalorder 1, %s17
      %p104 = scmp.lt.s32.totalorder %s17, 3
      %p105 = pnand %p103, %p104
      %p106 = pneg %p105
      // Predicated region
      $region9: #{raft_forward.21} parent=5 // pred_check
        _
      $region10: #{raft_forward.21} parent=5 // pred_check_branch
        %108 = sbr.rel (%p105) target = $region12
      $region11: #{raft_forward.21} parent=5 // pred_region
        %s109 = ssub.s32 %s17, 1
      $region12: #{raft_forward.21} parent=5 // pred_fallthru
        _
      %p110 = scmp.lt.s32.totalorder %s17, 2
      // Predicated region
      $region13: #{raft_forward.21} parent=5 // pred_check
        %p111 = pneg %p110
      $region14: #{raft_forward.21} parent=5 // pred_check_branch
        %113 = sbr.rel (%p111) target = $region16
      $region15: #{raft_forward.21} parent=5 // pred_region
        // Predicated region
        $region17: #{raft_forward.21} parent=15 // pred_check
          %p114 = pneg %p37
        $region18: #{raft_forward.21} parent=15 // pred_check_branch
          %116 = sbr.rel (%p114) target = $region20
        $region19: #{raft_forward.21} parent=15 // pred_region
          %s117 = sand.u32 %s27, 1
          %s118 = scalar_lea.sflag [#allocation3], %s117
          %s119 = sand.u32 %s27, 1
          %s120 = smul.addr %s119, 160
          %s121 = scalar_lea.vmem [#allocation2], %s120
          %s122 = smul.u32 8, %s17
          %s124 = ssub.s32 2560, 2560
          %125 = vsyncadd %s118, %s124
          %s126 = smul.addr %s122, 5
          %s127 = smul.addr %s126, 64
          %s128 = scalar_lea.hbm %s0, %s127
          %s129 = sshll.u32 %s121, 4
          %s130 = int_to_ptr.vmem [resolvable:$true] %s129
          %135 = dma.hbm_to_vmem [thread:$0]  %s128, 2560, %s130, %s118, 320, 320, 20
        $region20: #{raft_forward.21} parent=15 // pred_fallthru
          _
        // Predicated region
        $region21: #{raft_forward.21} parent=15 // pred_check
          %p136 = pneg %p63
        $region22: #{raft_forward.21} parent=15 // pred_check_branch
          %138 = sbr.rel (%p136) target = $region24
        $region23: #{raft_forward.21} parent=15 // pred_region
          %s139 = sand.u32 %s53, 1
          %s140 = scalar_lea.sflag [#allocation6], %s139
          %s141 = sand.u32 %s53, 1
          %s142 = smul.addr %s141, 64
          %s143 = scalar_lea.vmem [#allocation5], %s142
          %s144 = smul.u32 8, %s17
          %s146 = ssub.s32 1024, 1024
          %147 = vsyncadd %s140, %s146
          %s148 = smul.addr %s144, 128
          %s149 = scalar_lea.hbm %s1, %s148
          %s150 = sshll.u32 %s143, 4
          %s151 = int_to_ptr.vmem [resolvable:$true] %s150
          %156 = dma.hbm_to_vmem [thread:$0]  %s149, 1024, %s151, %s140, 128, 128, 8
        $region24: #{raft_forward.21} parent=15 // pred_fallthru
          _
      $region16: #{raft_forward.21} parent=5 // pred_fallthru
        _
      %p157 = scmp.le.s32.totalorder 1, %s17
      %p158 = scmp.lt.s32.totalorder %s17, 3
      %p159 = pnand %p157, %p158
      %p160 = pneg %p159
      // Predicated region
      $region25: #{raft_forward.21} parent=5 // pred_check
        _
      $region26: #{raft_forward.21} parent=5 // pred_check_branch
        %162 = sbr.rel (%p159) target = $region28
      $region27: #{raft_forward.21} parent=5 // pred_region
        %s163 = ssub.s32 %s17, 1
        %s164 = sand.u32 %s30, 1
        %s165 = scalar_lea.sflag [#allocation3], %s164
        %s166 = sand.u32 %s30, 1
        %s167 = smul.addr %s166, 160
        %s168 = scalar_lea.vmem [#allocation2], %s167
        // Predicated region
        $region29: #{raft_forward.21} parent=27 // pred_check
          %p169 = pneg %p43
        $region30: #{raft_forward.21} parent=27 // pred_check_branch
          %171 = sbr.rel (%p169) target = $region32
        $region31: #{raft_forward.21} parent=27 // pred_region
          %172 = dma.done %s165, 2560
        $region32: #{raft_forward.21} parent=27 // pred_fallthru
          _
        %s173 = sand.u32 %s56, 1
        %s174 = scalar_lea.sflag [#allocation6], %s173
        %s175 = sand.u32 %s56, 1
        %s176 = smul.addr %s175, 64
        %s177 = scalar_lea.vmem [#allocation5], %s176
        // Predicated region
        $region33: #{raft_forward.21} parent=27 // pred_check
          %p178 = pneg %p69
        $region34: #{raft_forward.21} parent=27 // pred_check_branch
          %180 = sbr.rel (%p178) target = $region36
        $region35: #{raft_forward.21} parent=27 // pred_region
          %181 = dma.done %s174, 1024
        $region36: #{raft_forward.21} parent=27 // pred_fallthru
          _
        %s182 = sand.u32 %s30, 1
        %s183 = scalar_lea.sflag [#allocation3], %s182
        %s184 = sand.u32 %s30, 1
        %s185 = smul.addr %s184, 160
        %s186 = scalar_lea.vmem [#allocation2], %s185
        %p187 = pneg %p43
        %p188 = pneg %p40
        %s189 = sand.u32 %s56, 1
        %s190 = scalar_lea.sflag [#allocation6], %s189
        %s191 = sand.u32 %s56, 1
        %s192 = smul.addr %s191, 64
        %s193 = scalar_lea.vmem [#allocation5], %s192
        %p194 = pneg %p69
        %p195 = pneg %p66
        %p196 = pneg %p95
        %p197 = pneg %p92
        %s198 = sand.u32 %s82, 1
        %s199 = scalar_lea.sflag [#allocation4], %s198
        %s200 = sand.u32 %s82, 1
        %s201 = smul.addr %s200, 64
        %s202 = scalar_lea.vmem [#allocation7], %s201
        %s203 = smul.u32 8, %s22
        %s204 = smul.u32 8, %s22
        %s205 = smul.u32 8, %s22
        %v206 = vld [vmem:[%s168] sm:$0xff]
        %v207 = vld [vmem:[%s168 + $0x8] sm:$0xff]
        %v208 = vld [vmem:[%s168 + $0x10] sm:$0xf]
        %v209 = vld [vmem:[%s168 + $0x14] sm:$0xff]
        %v210 = vld [vmem:[%s168 + $0x1c] sm:$0xff]
        %v211 = vld [vmem:[%s168 + $0x24] sm:$0xf]
        %v212 = vld [vmem:[%s168 + $0x28] sm:$0xff]
        %v213 = vld [vmem:[%s168 + $0x30] sm:$0xff]
        %v214 = vld [vmem:[%s168 + $0x38] sm:$0xf]
        %v215 = vld [vmem:[%s168 + $0x3c] sm:$0xff]
        %v216 = vld [vmem:[%s168 + $0x44] sm:$0xff]
        %v217 = vld [vmem:[%s168 + $0x4c] sm:$0xf]
        %v218 = vld [vmem:[%s168 + $0x50] sm:$0xff]
        %v219 = vld [vmem:[%s168 + $0x58] sm:$0xff]
        %v220 = vld [vmem:[%s168 + $0x60] sm:$0xf]
        %v221 = vld [vmem:[%s168 + $0x64] sm:$0xff]
        %v222 = vld [vmem:[%s168 + $0x6c] sm:$0xff]
        %v223 = vld [vmem:[%s168 + $0x74] sm:$0xf]
        %v224 = vld [vmem:[%s168 + $0x78] sm:$0xff]
        %v225 = vld [vmem:[%s168 + $0x80] sm:$0xff]
        %v226 = vld [vmem:[%s168 + $0x88] sm:$0xf]
        %v227 = vld [vmem:[%s168 + $0x8c] sm:$0xff]
        %v228 = vld [vmem:[%s168 + $0x94] sm:$0xff]
        %v229 = vld [vmem:[%s168 + $0x9c] sm:$0xf]
        %v230 = vunpack.c.l.bf16 %v206
        %v231 = vunpack.c.h.bf16 %v206
        %v232 = vunpack.c.l.bf16 %v207
        %v233 = vunpack.c.h.bf16 %v207
        %v234 = vunpack.c.l.bf16 %v208
        %v235 = vunpack.c.l.bf16 %v209
        %v236 = vunpack.c.h.bf16 %v209
        %v237 = vunpack.c.l.bf16 %v210
        %v238 = vunpack.c.h.bf16 %v210
        %v239 = vunpack.c.l.bf16 %v211
        %v240 = vunpack.c.l.bf16 %v212
        %v241 = vunpack.c.h.bf16 %v212
        %v242 = vunpack.c.l.bf16 %v213
        %v243 = vunpack.c.h.bf16 %v213
        %v244 = vunpack.c.l.bf16 %v214
        %v245 = vunpack.c.l.bf16 %v215
        %v246 = vunpack.c.h.bf16 %v215
        %v247 = vunpack.c.l.bf16 %v216
        %v248 = vunpack.c.h.bf16 %v216
        %v249 = vunpack.c.l.bf16 %v217
        %v250 = vunpack.c.l.bf16 %v218
        %v251 = vunpack.c.h.bf16 %v218
        %v252 = vunpack.c.l.bf16 %v219
        %v253 = vunpack.c.h.bf16 %v219
        %v254 = vunpack.c.l.bf16 %v220
        %v255 = vunpack.c.l.bf16 %v221
        %v256 = vunpack.c.h.bf16 %v221
        %v257 = vunpack.c.l.bf16 %v222
        %v258 = vunpack.c.h.bf16 %v222
        %v259 = vunpack.c.l.bf16 %v223
        %v260 = vunpack.c.l.bf16 %v224
        %v261 = vunpack.c.h.bf16 %v224
        %v262 = vunpack.c.l.bf16 %v225
        %v263 = vunpack.c.h.bf16 %v225
        %v264 = vunpack.c.l.bf16 %v226
        %v265 = vunpack.c.l.bf16 %v227
        %v266 = vunpack.c.h.bf16 %v227
        %v267 = vunpack.c.l.bf16 %v228
        %v268 = vunpack.c.h.bf16 %v228
        %v269 = vunpack.c.l.bf16 %v229
        %v270 = vld [vmem:[%s177] sm:$0xff]
        %v271 = vld [vmem:[%s177 + $0x8] sm:$0xff]
        %v272 = vld [vmem:[%s177 + $0x10] sm:$0xff]
        %v273 = vld [vmem:[%s177 + $0x18] sm:$0xff]
        %v274 = vld [vmem:[%s177 + $0x20] sm:$0xff]
        %v275 = vld [vmem:[%s177 + $0x28] sm:$0xff]
        %v276 = vld [vmem:[%s177 + $0x30] sm:$0xff]
        %v277 = vld [vmem:[%s177 + $0x38] sm:$0xff]
        %279 = vset.pattern.permute.xlu0 0
        %280 = vperm.xlu0 %279, %v270
        %v281 = vpop.permute.xlu0 %280
        %284 = vset.pattern.permute.xlu0 0
        %285 = vperm.xlu0 %284, %v271
        %v286 = vpop.permute.xlu0 %285
        %289 = vset.pattern.permute.xlu0 0
        %290 = vperm.xlu0 %289, %v272
        %v291 = vpop.permute.xlu0 %290
        %294 = vset.pattern.permute.xlu0 0
        %295 = vperm.xlu0 %294, %v273
        %v296 = vpop.permute.xlu0 %295
        %299 = vset.pattern.permute.xlu0 0
        %300 = vperm.xlu0 %299, %v274
        %v301 = vpop.permute.xlu0 %300
        %304 = vset.pattern.permute.xlu0 0
        %305 = vperm.xlu0 %304, %v275
        %v306 = vpop.permute.xlu0 %305
        %309 = vset.pattern.permute.xlu0 0
        %310 = vperm.xlu0 %309, %v276
        %v311 = vpop.permute.xlu0 %310
        %314 = vset.pattern.permute.xlu0 0
        %315 = vperm.xlu0 %314, %v277
        %v316 = vpop.permute.xlu0 %315
        %v318 = vmul.f32 %v230, %v281
        %v319 = vmul.f32 %v235, %v286
        %v320 = vmul.f32 %v240, %v291
        %v321 = vmul.f32 %v245, %v296
        %v322 = vmul.f32 %v250, %v301
        %v323 = vmul.f32 %v255, %v306
        %v324 = vmul.f32 %v260, %v311
        %v325 = vmul.f32 %v265, %v316
        %v326 = vadd.f32 %v318, 0.0
        %v327 = vadd.f32 %v319, 0.0
        %v328 = vadd.f32 %v320, 0.0
        %v329 = vadd.f32 %v321, 0.0
        %v330 = vadd.f32 %v322, 0.0
        %v331 = vadd.f32 %v323, 0.0
        %v332 = vadd.f32 %v324, 0.0
        %v333 = vadd.f32 %v325, 0.0
        %334 = vset.pattern.permute.xlu0 9
        %335 = vperm.xlu0 %334, %v270
        %v336 = vpop.permute.xlu0 %335
        %338 = vset.pattern.permute.xlu0 9
        %339 = vperm.xlu0 %338, %v271
        %v340 = vpop.permute.xlu0 %339
        %342 = vset.pattern.permute.xlu0 9
        %343 = vperm.xlu0 %342, %v272
        %v344 = vpop.permute.xlu0 %343
        %346 = vset.pattern.permute.xlu0 9
        %347 = vperm.xlu0 %346, %v273
        %v348 = vpop.permute.xlu0 %347
        %350 = vset.pattern.permute.xlu0 9
        %351 = vperm.xlu0 %350, %v274
        %v352 = vpop.permute.xlu0 %351
        %354 = vset.pattern.permute.xlu0 9
        %355 = vperm.xlu0 %354, %v275
        %v356 = vpop.permute.xlu0 %355
        %358 = vset.pattern.permute.xlu0 9
        %359 = vperm.xlu0 %358, %v276
        %v360 = vpop.permute.xlu0 %359
        %362 = vset.pattern.permute.xlu0 9
        %363 = vperm.xlu0 %362, %v277
        %v364 = vpop.permute.xlu0 %363
        %v366 = vmul.f32 %v230, %v336
        %v367 = vmul.f32 %v235, %v340
        %v368 = vmul.f32 %v240, %v344
        %v369 = vmul.f32 %v245, %v348
        %v370 = vmul.f32 %v250, %v352
        %v371 = vmul.f32 %v255, %v356
        %v372 = vmul.f32 %v260, %v360
        %v373 = vmul.f32 %v265, %v364
        %v374 = vadd.f32 %v366, 0.0
        %v375 = vadd.f32 %v367, 0.0
        %v376 = vadd.f32 %v368, 0.0
        %v377 = vadd.f32 %v369, 0.0
        %v378 = vadd.f32 %v370, 0.0
        %v379 = vadd.f32 %v371, 0.0
        %v380 = vadd.f32 %v372, 0.0
        %v381 = vadd.f32 %v373, 0.0
        %382 = vset.pattern.permute.xlu0 1
        %383 = vperm.xlu0 %382, %v270
        %v384 = vpop.permute.xlu0 %383
        %386 = vset.pattern.permute.xlu0 1
        %387 = vperm.xlu0 %386, %v271
        %v388 = vpop.permute.xlu0 %387
        %390 = vset.pattern.permute.xlu0 1
        %391 = vperm.xlu0 %390, %v272
        %v392 = vpop.permute.xlu0 %391
        %394 = vset.pattern.permute.xlu0 1
        %395 = vperm.xlu0 %394, %v273
        %v396 = vpop.permute.xlu0 %395
        %398 = vset.pattern.permute.xlu0 1
        %399 = vperm.xlu0 %398, %v274
        %v400 = vpop.permute.xlu0 %399
        %402 = vset.pattern.permute.xlu0 1
        %403 = vperm.xlu0 %402, %v275
        %v404 = vpop.permute.xlu0 %403
        %406 = vset.pattern.permute.xlu0 1
        %407 = vperm.xlu0 %406, %v276
        %v408 = vpop.permute.xlu0 %407
        %410 = vset.pattern.permute.xlu0 1
        %411 = vperm.xlu0 %410, %v277
        %v412 = vpop.permute.xlu0 %411
        %v414 = vmul.f32 %v230, %v384
        %v415 = vmul.f32 %v235, %v388
        %v416 = vmul.f32 %v240, %v392
        %v417 = vmul.f32 %v245, %v396
        %v418 = vmul.f32 %v250, %v400
        %v419 = vmul.f32 %v255, %v404
        %v420 = vmul.f32 %v260, %v408
        %v421 = vmul.f32 %v265, %v412
        %430 = vrot.lane.b32.xlu0 %v414, 64
        %v431 = vpop.permute.xlu0 %430
        %432 = vrot.lane.b32.xlu0 %v415, 64
        %v433 = vpop.permute.xlu0 %432
        %434 = vrot.lane.b32.xlu0 %v416, 64
        %v435 = vpop.permute.xlu0 %434
        %436 = vrot.lane.b32.xlu0 %v417, 64
        %v437 = vpop.permute.xlu0 %436
        %438 = vrot.lane.b32.xlu0 %v418, 64
        %v439 = vpop.permute.xlu0 %438
        %440 = vrot.lane.b32.xlu0 %v419, 64
        %v441 = vpop.permute.xlu0 %440
        %442 = vrot.lane.b32.xlu0 %v420, 64
        %v443 = vpop.permute.xlu0 %442
        %444 = vrot.lane.b32.xlu0 %v421, 64
        %v445 = vpop.permute.xlu0 %444
        %v454 = vadd.f32 %v326, %v431
        %v455 = vadd.f32 %v327, %v433
        %v456 = vadd.f32 %v328, %v435
        %v457 = vadd.f32 %v329, %v437
        %v458 = vadd.f32 %v330, %v439
        %v459 = vadd.f32 %v331, %v441
        %v460 = vadd.f32 %v332, %v443
        %v461 = vadd.f32 %v333, %v445
        %462 = vset.pattern.permute.xlu0 10
        %463 = vperm.xlu0 %462, %v270
        %v464 = vpop.permute.xlu0 %463
        %466 = vset.pattern.permute.xlu0 10
        %467 = vperm.xlu0 %466, %v271
        %v468 = vpop.permute.xlu0 %467
        %470 = vset.pattern.permute.xlu0 10
        %471 = vperm.xlu0 %470, %v272
        %v472 = vpop.permute.xlu0 %471
        %474 = vset.pattern.permute.xlu0 10
        %475 = vperm.xlu0 %474, %v273
        %v476 = vpop.permute.xlu0 %475
        %478 = vset.pattern.permute.xlu0 10
        %479 = vperm.xlu0 %478, %v274
        %v480 = vpop.permute.xlu0 %479
        %482 = vset.pattern.permute.xlu0 10
        %483 = vperm.xlu0 %482, %v275
        %v484 = vpop.permute.xlu0 %483
        %486 = vset.pattern.permute.xlu0 10
        %487 = vperm.xlu0 %486, %v276
        %v488 = vpop.permute.xlu0 %487
        %490 = vset.pattern.permute.xlu0 10
        %491 = vperm.xlu0 %490, %v277
        %v492 = vpop.permute.xlu0 %491
        %v494 = vmul.f32 %v230, %v464
        %v495 = vmul.f32 %v235, %v468
        %v496 = vmul.f32 %v240, %v472
        %v497 = vmul.f32 %v245, %v476
        %v498 = vmul.f32 %v250, %v480
        %v499 = vmul.f32 %v255, %v484
        %v500 = vmul.f32 %v260, %v488
        %v501 = vmul.f32 %v265, %v492
        %510 = vrot.lane.b32.xlu0 %v494, 64
        %v511 = vpop.permute.xlu0 %510
        %512 = vrot.lane.b32.xlu0 %v495, 64
        %v513 = vpop.permute.xlu0 %512
        %514 = vrot.lane.b32.xlu0 %v496, 64
        %v515 = vpop.permute.xlu0 %514
        %516 = vrot.lane.b32.xlu0 %v497, 64
        %v517 = vpop.permute.xlu0 %516
        %518 = vrot.lane.b32.xlu0 %v498, 64
        %v519 = vpop.permute.xlu0 %518
        %520 = vrot.lane.b32.xlu0 %v499, 64
        %v521 = vpop.permute.xlu0 %520
        %522 = vrot.lane.b32.xlu0 %v500, 64
        %v523 = vpop.permute.xlu0 %522
        %524 = vrot.lane.b32.xlu0 %v501, 64
        %v525 = vpop.permute.xlu0 %524
        %v534 = vadd.f32 %v374, %v511
        %v535 = vadd.f32 %v375, %v513
        %v536 = vadd.f32 %v376, %v515
        %v537 = vadd.f32 %v377, %v517
        %v538 = vadd.f32 %v378, %v519
        %v539 = vadd.f32 %v379, %v521
        %v540 = vadd.f32 %v380, %v523
        %v541 = vadd.f32 %v381, %v525
        %542 = vset.pattern.permute.xlu0 2
        %543 = vperm.xlu0 %542, %v270
        %v544 = vpop.permute.xlu0 %543
        %546 = vset.pattern.permute.xlu0 2
        %547 = vperm.xlu0 %546, %v271
        %v548 = vpop.permute.xlu0 %547
        %550 = vset.pattern.permute.xlu0 2
        %551 = vperm.xlu0 %550, %v272
        %v552 = vpop.permute.xlu0 %551
        %554 = vset.pattern.permute.xlu0 2
        %555 = vperm.xlu0 %554, %v273
        %v556 = vpop.permute.xlu0 %555
        %558 = vset.pattern.permute.xlu0 2
        %559 = vperm.xlu0 %558, %v274
        %v560 = vpop.permute.xlu0 %559
        %562 = vset.pattern.permute.xlu0 2
        %563 = vperm.xlu0 %562, %v275
        %v564 = vpop.permute.xlu0 %563
        %566 = vset.pattern.permute.xlu0 2
        %567 = vperm.xlu0 %566, %v276
        %v568 = vpop.permute.xlu0 %567
        %570 = vset.pattern.permute.xlu0 2
        %571 = vperm.xlu0 %570, %v277
        %v572 = vpop.permute.xlu0 %571
        %v574 = vmul.f32 %v231, %v544
        %v575 = vmul.f32 %v236, %v548
        %v576 = vmul.f32 %v241, %v552
        %v577 = vmul.f32 %v246, %v556
        %v578 = vmul.f32 %v251, %v560
        %v579 = vmul.f32 %v256, %v564
        %v580 = vmul.f32 %v261, %v568
        %v581 = vmul.f32 %v266, %v572
        %v582 = vadd.f32 %v454, %v574
        %v583 = vadd.f32 %v455, %v575
        %v584 = vadd.f32 %v456, %v576
        %v585 = vadd.f32 %v457, %v577
        %v586 = vadd.f32 %v458, %v578
        %v587 = vadd.f32 %v459, %v579
        %v588 = vadd.f32 %v460, %v580
        %v589 = vadd.f32 %v461, %v581
        %590 = vset.pattern.permute.xlu0 11
        %591 = vperm.xlu0 %590, %v270
        %v592 = vpop.permute.xlu0 %591
        %594 = vset.pattern.permute.xlu0 11
        %595 = vperm.xlu0 %594, %v271
        %v596 = vpop.permute.xlu0 %595
        %598 = vset.pattern.permute.xlu0 11
        %599 = vperm.xlu0 %598, %v272
        %v600 = vpop.permute.xlu0 %599
        %602 = vset.pattern.permute.xlu0 11
        %603 = vperm.xlu0 %602, %v273
        %v604 = vpop.permute.xlu0 %603
        %606 = vset.pattern.permute.xlu0 11
        %607 = vperm.xlu0 %606, %v274
        %v608 = vpop.permute.xlu0 %607
        %610 = vset.pattern.permute.xlu0 11
        %611 = vperm.xlu0 %610, %v275
        %v612 = vpop.permute.xlu0 %611
        %614 = vset.pattern.permute.xlu0 11
        %615 = vperm.xlu0 %614, %v276
        %v616 = vpop.permute.xlu0 %615
        %618 = vset.pattern.permute.xlu0 11
        %619 = vperm.xlu0 %618, %v277
        %v620 = vpop.permute.xlu0 %619
        %v622 = vmul.f32 %v231, %v592
        %v623 = vmul.f32 %v236, %v596
        %v624 = vmul.f32 %v241, %v600
        %v625 = vmul.f32 %v246, %v604
        %v626 = vmul.f32 %v251, %v608
        %v627 = vmul.f32 %v256, %v612
        %v628 = vmul.f32 %v261, %v616
        %v629 = vmul.f32 %v266, %v620
        %v630 = vadd.f32 %v534, %v622
        %v631 = vadd.f32 %v535, %v623
        %v632 = vadd.f32 %v536, %v624
        %v633 = vadd.f32 %v537, %v625
        %v634 = vadd.f32 %v538, %v626
        %v635 = vadd.f32 %v539, %v627
        %v636 = vadd.f32 %v540, %v628
        %v637 = vadd.f32 %v541, %v629
        %638 = vset.pattern.permute.xlu0 3
        %639 = vperm.xlu0 %638, %v270
        %v640 = vpop.permute.xlu0 %639
        %642 = vset.pattern.permute.xlu0 3
        %643 = vperm.xlu0 %642, %v271
        %v644 = vpop.permute.xlu0 %643
        %646 = vset.pattern.permute.xlu0 3
        %647 = vperm.xlu0 %646, %v272
        %v648 = vpop.permute.xlu0 %647
        %650 = vset.pattern.permute.xlu0 3
        %651 = vperm.xlu0 %650, %v273
        %v652 = vpop.permute.xlu0 %651
        %654 = vset.pattern.permute.xlu0 3
        %655 = vperm.xlu0 %654, %v274
        %v656 = vpop.permute.xlu0 %655
        %658 = vset.pattern.permute.xlu0 3
        %659 = vperm.xlu0 %658, %v275
        %v660 = vpop.permute.xlu0 %659
        %662 = vset.pattern.permute.xlu0 3
        %663 = vperm.xlu0 %662, %v276
        %v664 = vpop.permute.xlu0 %663
        %666 = vset.pattern.permute.xlu0 3
        %667 = vperm.xlu0 %666, %v277
        %v668 = vpop.permute.xlu0 %667
        %v670 = vmul.f32 %v231, %v640
        %v671 = vmul.f32 %v236, %v644
        %v672 = vmul.f32 %v241, %v648
        %v673 = vmul.f32 %v246, %v652
        %v674 = vmul.f32 %v251, %v656
        %v675 = vmul.f32 %v256, %v660
        %v676 = vmul.f32 %v261, %v664
        %v677 = vmul.f32 %v266, %v668
        %686 = vrot.lane.b32.xlu0 %v670, 64
        %v687 = vpop.permute.xlu0 %686
        %688 = vrot.lane.b32.xlu0 %v671, 64
        %v689 = vpop.permute.xlu0 %688
        %690 = vrot.lane.b32.xlu0 %v672, 64
        %v691 = vpop.permute.xlu0 %690
        %692 = vrot.lane.b32.xlu0 %v673, 64
        %v693 = vpop.permute.xlu0 %692
        %694 = vrot.lane.b32.xlu0 %v674, 64
        %v695 = vpop.permute.xlu0 %694
        %696 = vrot.lane.b32.xlu0 %v675, 64
        %v697 = vpop.permute.xlu0 %696
        %698 = vrot.lane.b32.xlu0 %v676, 64
        %v699 = vpop.permute.xlu0 %698
        %700 = vrot.lane.b32.xlu0 %v677, 64
        %v701 = vpop.permute.xlu0 %700
        %v710 = vadd.f32 %v582, %v687
        %v711 = vadd.f32 %v583, %v689
        %v712 = vadd.f32 %v584, %v691
        %v713 = vadd.f32 %v585, %v693
        %v714 = vadd.f32 %v586, %v695
        %v715 = vadd.f32 %v587, %v697
        %v716 = vadd.f32 %v588, %v699
        %v717 = vadd.f32 %v589, %v701
        %718 = vset.pattern.permute.xlu0 12
        %719 = vperm.xlu0 %718, %v270
        %v720 = vpop.permute.xlu0 %719
        %722 = vset.pattern.permute.xlu0 12
        %723 = vperm.xlu0 %722, %v271
        %v724 = vpop.permute.xlu0 %723
        %726 = vset.pattern.permute.xlu0 12
        %727 = vperm.xlu0 %726, %v272
        %v728 = vpop.permute.xlu0 %727
        %730 = vset.pattern.permute.xlu0 12
        %731 = vperm.xlu0 %730, %v273
        %v732 = vpop.permute.xlu0 %731
        %734 = vset.pattern.permute.xlu0 12
        %735 = vperm.xlu0 %734, %v274
        %v736 = vpop.permute.xlu0 %735
        %738 = vset.pattern.permute.xlu0 12
        %739 = vperm.xlu0 %738, %v275
        %v740 = vpop.permute.xlu0 %739
        %742 = vset.pattern.permute.xlu0 12
        %743 = vperm.xlu0 %742, %v276
        %v744 = vpop.permute.xlu0 %743
        %746 = vset.pattern.permute.xlu0 12
        %747 = vperm.xlu0 %746, %v277
        %v748 = vpop.permute.xlu0 %747
        %v750 = vmul.f32 %v231, %v720
        %v751 = vmul.f32 %v236, %v724
        %v752 = vmul.f32 %v241, %v728
        %v753 = vmul.f32 %v246, %v732
        %v754 = vmul.f32 %v251, %v736
        %v755 = vmul.f32 %v256, %v740
        %v756 = vmul.f32 %v261, %v744
        %v757 = vmul.f32 %v266, %v748
        %766 = vrot.lane.b32.xlu0 %v750, 64
        %v767 = vpop.permute.xlu0 %766
        %768 = vrot.lane.b32.xlu0 %v751, 64
        %v769 = vpop.permute.xlu0 %768
        %770 = vrot.lane.b32.xlu0 %v752, 64
        %v771 = vpop.permute.xlu0 %770
        %772 = vrot.lane.b32.xlu0 %v753, 64
        %v773 = vpop.permute.xlu0 %772
        %774 = vrot.lane.b32.xlu0 %v754, 64
        %v775 = vpop.permute.xlu0 %774
        %776 = vrot.lane.b32.xlu0 %v755, 64
        %v777 = vpop.permute.xlu0 %776
        %778 = vrot.lane.b32.xlu0 %v756, 64
        %v779 = vpop.permute.xlu0 %778
        %780 = vrot.lane.b32.xlu0 %v757, 64
        %v781 = vpop.permute.xlu0 %780
        %v790 = vadd.f32 %v630, %v767
        %v791 = vadd.f32 %v631, %v769
        %v792 = vadd.f32 %v632, %v771
        %v793 = vadd.f32 %v633, %v773
        %v794 = vadd.f32 %v634, %v775
        %v795 = vadd.f32 %v635, %v777
        %v796 = vadd.f32 %v636, %v779
        %v797 = vadd.f32 %v637, %v781
        %798 = vset.pattern.permute.xlu0 4
        %799 = vperm.xlu0 %798, %v270
        %v800 = vpop.permute.xlu0 %799
        %802 = vset.pattern.permute.xlu0 4
        %803 = vperm.xlu0 %802, %v271
        %v804 = vpop.permute.xlu0 %803
        %806 = vset.pattern.permute.xlu0 4
        %807 = vperm.xlu0 %806, %v272
        %v808 = vpop.permute.xlu0 %807
        %810 = vset.pattern.permute.xlu0 4
        %811 = vperm.xlu0 %810, %v273
        %v812 = vpop.permute.xlu0 %811
        %814 = vset.pattern.permute.xlu0 4
        %815 = vperm.xlu0 %814, %v274
        %v816 = vpop.permute.xlu0 %815
        %818 = vset.pattern.permute.xlu0 4
        %819 = vperm.xlu0 %818, %v275
        %v820 = vpop.permute.xlu0 %819
        %822 = vset.pattern.permute.xlu0 4
        %823 = vperm.xlu0 %822, %v276
        %v824 = vpop.permute.xlu0 %823
        %826 = vset.pattern.permute.xlu0 4
        %827 = vperm.xlu0 %826, %v277
        %v828 = vpop.permute.xlu0 %827
        %v830 = vmul.f32 %v232, %v800
        %v831 = vmul.f32 %v237, %v804
        %v832 = vmul.f32 %v242, %v808
        %v833 = vmul.f32 %v247, %v812
        %v834 = vmul.f32 %v252, %v816
        %v835 = vmul.f32 %v257, %v820
        %v836 = vmul.f32 %v262, %v824
        %v837 = vmul.f32 %v267, %v828
        %v838 = vadd.f32 %v710, %v830
        %v839 = vadd.f32 %v711, %v831
        %v840 = vadd.f32 %v712, %v832
        %v841 = vadd.f32 %v713, %v833
        %v842 = vadd.f32 %v714, %v834
        %v843 = vadd.f32 %v715, %v835
        %v844 = vadd.f32 %v716, %v836
        %v845 = vadd.f32 %v717, %v837
        %846 = vset.pattern.permute.xlu0 13
        %847 = vperm.xlu0 %846, %v270
        %v848 = vpop.permute.xlu0 %847
        %850 = vset.pattern.permute.xlu0 13
        %851 = vperm.xlu0 %850, %v271
        %v852 = vpop.permute.xlu0 %851
        %854 = vset.pattern.permute.xlu0 13
        %855 = vperm.xlu0 %854, %v272
        %v856 = vpop.permute.xlu0 %855
        %858 = vset.pattern.permute.xlu0 13
        %859 = vperm.xlu0 %858, %v273
        %v860 = vpop.permute.xlu0 %859
        %862 = vset.pattern.permute.xlu0 13
        %863 = vperm.xlu0 %862, %v274
        %v864 = vpop.permute.xlu0 %863
        %866 = vset.pattern.permute.xlu0 13
        %867 = vperm.xlu0 %866, %v275
        %v868 = vpop.permute.xlu0 %867
        %870 = vset.pattern.permute.xlu0 13
        %871 = vperm.xlu0 %870, %v276
        %v872 = vpop.permute.xlu0 %871
        %874 = vset.pattern.permute.xlu0 13
        %875 = vperm.xlu0 %874, %v277
        %v876 = vpop.permute.xlu0 %875
        %v878 = vmul.f32 %v232, %v848
        %v879 = vmul.f32 %v237, %v852
        %v880 = vmul.f32 %v242, %v856
        %v881 = vmul.f32 %v247, %v860
        %v882 = vmul.f32 %v252, %v864
        %v883 = vmul.f32 %v257, %v868
        %v884 = vmul.f32 %v262, %v872
        %v885 = vmul.f32 %v267, %v876
        %v886 = vadd.f32 %v790, %v878
        %v887 = vadd.f32 %v791, %v879
        %v888 = vadd.f32 %v792, %v880
        %v889 = vadd.f32 %v793, %v881
        %v890 = vadd.f32 %v794, %v882
        %v891 = vadd.f32 %v795, %v883
        %v892 = vadd.f32 %v796, %v884
        %v893 = vadd.f32 %v797, %v885
        %894 = vset.pattern.permute.xlu0 5
        %895 = vperm.xlu0 %894, %v270
        %v896 = vpop.permute.xlu0 %895
        %898 = vset.pattern.permute.xlu0 5
        %899 = vperm.xlu0 %898, %v271
        %v900 = vpop.permute.xlu0 %899
        %902 = vset.pattern.permute.xlu0 5
        %903 = vperm.xlu0 %902, %v272
        %v904 = vpop.permute.xlu0 %903
        %906 = vset.pattern.permute.xlu0 5
        %907 = vperm.xlu0 %906, %v273
        %v908 = vpop.permute.xlu0 %907
        %910 = vset.pattern.permute.xlu0 5
        %911 = vperm.xlu0 %910, %v274
        %v912 = vpop.permute.xlu0 %911
        %914 = vset.pattern.permute.xlu0 5
        %915 = vperm.xlu0 %914, %v275
        %v916 = vpop.permute.xlu0 %915
        %918 = vset.pattern.permute.xlu0 5
        %919 = vperm.xlu0 %918, %v276
        %v920 = vpop.permute.xlu0 %919
        %922 = vset.pattern.permute.xlu0 5
        %923 = vperm.xlu0 %922, %v277
        %v924 = vpop.permute.xlu0 %923
        %v926 = vmul.f32 %v232, %v896
        %v927 = vmul.f32 %v237, %v900
        %v928 = vmul.f32 %v242, %v904
        %v929 = vmul.f32 %v247, %v908
        %v930 = vmul.f32 %v252, %v912
        %v931 = vmul.f32 %v257, %v916
        %v932 = vmul.f32 %v262, %v920
        %v933 = vmul.f32 %v267, %v924
        %942 = vrot.lane.b32.xlu0 %v926, 64
        %v943 = vpop.permute.xlu0 %942
        %944 = vrot.lane.b32.xlu0 %v927, 64
        %v945 = vpop.permute.xlu0 %944
        %946 = vrot.lane.b32.xlu0 %v928, 64
        %v947 = vpop.permute.xlu0 %946
        %948 = vrot.lane.b32.xlu0 %v929, 64
        %v949 = vpop.permute.xlu0 %948
        %950 = vrot.lane.b32.xlu0 %v930, 64
        %v951 = vpop.permute.xlu0 %950
        %952 = vrot.lane.b32.xlu0 %v931, 64
        %v953 = vpop.permute.xlu0 %952
        %954 = vrot.lane.b32.xlu0 %v932, 64
        %v955 = vpop.permute.xlu0 %954
        %956 = vrot.lane.b32.xlu0 %v933, 64
        %v957 = vpop.permute.xlu0 %956
        %v966 = vadd.f32 %v838, %v943
        %v967 = vadd.f32 %v839, %v945
        %v968 = vadd.f32 %v840, %v947
        %v969 = vadd.f32 %v841, %v949
        %v970 = vadd.f32 %v842, %v951
        %v971 = vadd.f32 %v843, %v953
        %v972 = vadd.f32 %v844, %v955
        %v973 = vadd.f32 %v845, %v957
        %974 = vset.pattern.permute.xlu0 14
        %975 = vperm.xlu0 %974, %v270
        %v976 = vpop.permute.xlu0 %975
        %978 = vset.pattern.permute.xlu0 14
        %979 = vperm.xlu0 %978, %v271
        %v980 = vpop.permute.xlu0 %979
        %982 = vset.pattern.permute.xlu0 14
        %983 = vperm.xlu0 %982, %v272
        %v984 = vpop.permute.xlu0 %983
        %986 = vset.pattern.permute.xlu0 14
        %987 = vperm.xlu0 %986, %v273
        %v988 = vpop.permute.xlu0 %987
        %990 = vset.pattern.permute.xlu0 14
        %991 = vperm.xlu0 %990, %v274
        %v992 = vpop.permute.xlu0 %991
        %994 = vset.pattern.permute.xlu0 14
        %995 = vperm.xlu0 %994, %v275
        %v996 = vpop.permute.xlu0 %995
        %998 = vset.pattern.permute.xlu0 14
        %999 = vperm.xlu0 %998, %v276
        %v1000 = vpop.permute.xlu0 %999
        %1002 = vset.pattern.permute.xlu0 14
        %1003 = vperm.xlu0 %1002, %v277
        %v1004 = vpop.permute.xlu0 %1003
        %v1006 = vmul.f32 %v232, %v976
        %v1007 = vmul.f32 %v237, %v980
        %v1008 = vmul.f32 %v242, %v984
        %v1009 = vmul.f32 %v247, %v988
        %v1010 = vmul.f32 %v252, %v992
        %v1011 = vmul.f32 %v257, %v996
        %v1012 = vmul.f32 %v262, %v1000
        %v1013 = vmul.f32 %v267, %v1004
        %1022 = vrot.lane.b32.xlu0 %v1006, 64
        %v1023 = vpop.permute.xlu0 %1022
        %1024 = vrot.lane.b32.xlu0 %v1007, 64
        %v1025 = vpop.permute.xlu0 %1024
        %1026 = vrot.lane.b32.xlu0 %v1008, 64
        %v1027 = vpop.permute.xlu0 %1026
        %1028 = vrot.lane.b32.xlu0 %v1009, 64
        %v1029 = vpop.permute.xlu0 %1028
        %1030 = vrot.lane.b32.xlu0 %v1010, 64
        %v1031 = vpop.permute.xlu0 %1030
        %1032 = vrot.lane.b32.xlu0 %v1011, 64
        %v1033 = vpop.permute.xlu0 %1032
        %1034 = vrot.lane.b32.xlu0 %v1012, 64
        %v1035 = vpop.permute.xlu0 %1034
        %1036 = vrot.lane.b32.xlu0 %v1013, 64
        %v1037 = vpop.permute.xlu0 %1036
        %v1046 = vadd.f32 %v886, %v1023
        %v1047 = vadd.f32 %v887, %v1025
        %v1048 = vadd.f32 %v888, %v1027
        %v1049 = vadd.f32 %v889, %v1029
        %v1050 = vadd.f32 %v890, %v1031
        %v1051 = vadd.f32 %v891, %v1033
        %v1052 = vadd.f32 %v892, %v1035
        %v1053 = vadd.f32 %v893, %v1037
        %1054 = vset.pattern.permute.xlu0 6
        %1055 = vperm.xlu0 %1054, %v270
        %v1056 = vpop.permute.xlu0 %1055
        %1058 = vset.pattern.permute.xlu0 6
        %1059 = vperm.xlu0 %1058, %v271
        %v1060 = vpop.permute.xlu0 %1059
        %1062 = vset.pattern.permute.xlu0 6
        %1063 = vperm.xlu0 %1062, %v272
        %v1064 = vpop.permute.xlu0 %1063
        %1066 = vset.pattern.permute.xlu0 6
        %1067 = vperm.xlu0 %1066, %v273
        %v1068 = vpop.permute.xlu0 %1067
        %1070 = vset.pattern.permute.xlu0 6
        %1071 = vperm.xlu0 %1070, %v274
        %v1072 = vpop.permute.xlu0 %1071
        %1074 = vset.pattern.permute.xlu0 6
        %1075 = vperm.xlu0 %1074, %v275
        %v1076 = vpop.permute.xlu0 %1075
        %1078 = vset.pattern.permute.xlu0 6
        %1079 = vperm.xlu0 %1078, %v276
        %v1080 = vpop.permute.xlu0 %1079
        %1082 = vset.pattern.permute.xlu0 6
        %1083 = vperm.xlu0 %1082, %v277
        %v1084 = vpop.permute.xlu0 %1083
        %v1086 = vmul.f32 %v233, %v1056
        %v1087 = vmul.f32 %v238, %v1060
        %v1088 = vmul.f32 %v243, %v1064
        %v1089 = vmul.f32 %v248, %v1068
        %v1090 = vmul.f32 %v253, %v1072
        %v1091 = vmul.f32 %v258, %v1076
        %v1092 = vmul.f32 %v263, %v1080
        %v1093 = vmul.f32 %v268, %v1084
        %v1094 = vadd.f32 %v966, %v1086
        %v1095 = vadd.f32 %v967, %v1087
        %v1096 = vadd.f32 %v968, %v1088
        %v1097 = vadd.f32 %v969, %v1089
        %v1098 = vadd.f32 %v970, %v1090
        %v1099 = vadd.f32 %v971, %v1091
        %v1100 = vadd.f32 %v972, %v1092
        %v1101 = vadd.f32 %v973, %v1093
        %1102 = vset.pattern.permute.xlu0 15
        %1103 = vperm.xlu0 %1102, %v270
        %v1104 = vpop.permute.xlu0 %1103
        %1106 = vset.pattern.permute.xlu0 15
        %1107 = vperm.xlu0 %1106, %v271
        %v1108 = vpop.permute.xlu0 %1107
        %1110 = vset.pattern.permute.xlu0 15
        %1111 = vperm.xlu0 %1110, %v272
        %v1112 = vpop.permute.xlu0 %1111
        %1114 = vset.pattern.permute.xlu0 15
        %1115 = vperm.xlu0 %1114, %v273
        %v1116 = vpop.permute.xlu0 %1115
        %1118 = vset.pattern.permute.xlu0 15
        %1119 = vperm.xlu0 %1118, %v274
        %v1120 = vpop.permute.xlu0 %1119
        %1122 = vset.pattern.permute.xlu0 15
        %1123 = vperm.xlu0 %1122, %v275
        %v1124 = vpop.permute.xlu0 %1123
        %1126 = vset.pattern.permute.xlu0 15
        %1127 = vperm.xlu0 %1126, %v276
        %v1128 = vpop.permute.xlu0 %1127
        %1130 = vset.pattern.permute.xlu0 15
        %1131 = vperm.xlu0 %1130, %v277
        %v1132 = vpop.permute.xlu0 %1131
        %v1134 = vmul.f32 %v233, %v1104
        %v1135 = vmul.f32 %v238, %v1108
        %v1136 = vmul.f32 %v243, %v1112
        %v1137 = vmul.f32 %v248, %v1116
        %v1138 = vmul.f32 %v253, %v1120
        %v1139 = vmul.f32 %v258, %v1124
        %v1140 = vmul.f32 %v263, %v1128
        %v1141 = vmul.f32 %v268, %v1132
        %v1142 = vadd.f32 %v1046, %v1134
        %v1143 = vadd.f32 %v1047, %v1135
        %v1144 = vadd.f32 %v1048, %v1136
        %v1145 = vadd.f32 %v1049, %v1137
        %v1146 = vadd.f32 %v1050, %v1138
        %v1147 = vadd.f32 %v1051, %v1139
        %v1148 = vadd.f32 %v1052, %v1140
        %v1149 = vadd.f32 %v1053, %v1141
        %1150 = vset.pattern.permute.xlu0 7
        %1151 = vperm.xlu0 %1150, %v270
        %v1152 = vpop.permute.xlu0 %1151
        %1154 = vset.pattern.permute.xlu0 7
        %1155 = vperm.xlu0 %1154, %v271
        %v1156 = vpop.permute.xlu0 %1155
        %1158 = vset.pattern.permute.xlu0 7
        %1159 = vperm.xlu0 %1158, %v272
        %v1160 = vpop.permute.xlu0 %1159
        %1162 = vset.pattern.permute.xlu0 7
        %1163 = vperm.xlu0 %1162, %v273
        %v1164 = vpop.permute.xlu0 %1163
        %1166 = vset.pattern.permute.xlu0 7
        %1167 = vperm.xlu0 %1166, %v274
        %v1168 = vpop.permute.xlu0 %1167
        %1170 = vset.pattern.permute.xlu0 7
        %1171 = vperm.xlu0 %1170, %v275
        %v1172 = vpop.permute.xlu0 %1171
        %1174 = vset.pattern.permute.xlu0 7
        %1175 = vperm.xlu0 %1174, %v276
        %v1176 = vpop.permute.xlu0 %1175
        %1178 = vset.pattern.permute.xlu0 7
        %1179 = vperm.xlu0 %1178, %v277
        %v1180 = vpop.permute.xlu0 %1179
        %v1182 = vmul.f32 %v233, %v1152
        %v1183 = vmul.f32 %v238, %v1156
        %v1184 = vmul.f32 %v243, %v1160
        %v1185 = vmul.f32 %v248, %v1164
        %v1186 = vmul.f32 %v253, %v1168
        %v1187 = vmul.f32 %v258, %v1172
        %v1188 = vmul.f32 %v263, %v1176
        %v1189 = vmul.f32 %v268, %v1180
        %1198 = vrot.lane.b32.xlu0 %v1182, 64
        %v1199 = vpop.permute.xlu0 %1198
        %1200 = vrot.lane.b32.xlu0 %v1183, 64
        %v1201 = vpop.permute.xlu0 %1200
        %1202 = vrot.lane.b32.xlu0 %v1184, 64
        %v1203 = vpop.permute.xlu0 %1202
        %1204 = vrot.lane.b32.xlu0 %v1185, 64
        %v1205 = vpop.permute.xlu0 %1204
        %1206 = vrot.lane.b32.xlu0 %v1186, 64
        %v1207 = vpop.permute.xlu0 %1206
        %1208 = vrot.lane.b32.xlu0 %v1187, 64
        %v1209 = vpop.permute.xlu0 %1208
        %1210 = vrot.lane.b32.xlu0 %v1188, 64
        %v1211 = vpop.permute.xlu0 %1210
        %1212 = vrot.lane.b32.xlu0 %v1189, 64
        %v1213 = vpop.permute.xlu0 %1212
        %v1222 = vadd.f32 %v1094, %v1199
        %v1223 = vadd.f32 %v1095, %v1201
        %v1224 = vadd.f32 %v1096, %v1203
        %v1225 = vadd.f32 %v1097, %v1205
        %v1226 = vadd.f32 %v1098, %v1207
        %v1227 = vadd.f32 %v1099, %v1209
        %v1228 = vadd.f32 %v1100, %v1211
        %v1229 = vadd.f32 %v1101, %v1213
        %1230 = vset.pattern.permute.xlu0 16
        %1231 = vperm.xlu0 %1230, %v270
        %v1232 = vpop.permute.xlu0 %1231
        %1234 = vset.pattern.permute.xlu0 16
        %1235 = vperm.xlu0 %1234, %v271
        %v1236 = vpop.permute.xlu0 %1235
        %1238 = vset.pattern.permute.xlu0 16
        %1239 = vperm.xlu0 %1238, %v272
        %v1240 = vpop.permute.xlu0 %1239
        %1242 = vset.pattern.permute.xlu0 16
        %1243 = vperm.xlu0 %1242, %v273
        %v1244 = vpop.permute.xlu0 %1243
        %1246 = vset.pattern.permute.xlu0 16
        %1247 = vperm.xlu0 %1246, %v274
        %v1248 = vpop.permute.xlu0 %1247
        %1250 = vset.pattern.permute.xlu0 16
        %1251 = vperm.xlu0 %1250, %v275
        %v1252 = vpop.permute.xlu0 %1251
        %1254 = vset.pattern.permute.xlu0 16
        %1255 = vperm.xlu0 %1254, %v276
        %v1256 = vpop.permute.xlu0 %1255
        %1258 = vset.pattern.permute.xlu0 16
        %1259 = vperm.xlu0 %1258, %v277
        %v1260 = vpop.permute.xlu0 %1259
        %v1262 = vmul.f32 %v233, %v1232
        %v1263 = vmul.f32 %v238, %v1236
        %v1264 = vmul.f32 %v243, %v1240
        %v1265 = vmul.f32 %v248, %v1244
        %v1266 = vmul.f32 %v253, %v1248
        %v1267 = vmul.f32 %v258, %v1252
        %v1268 = vmul.f32 %v263, %v1256
        %v1269 = vmul.f32 %v268, %v1260
        %1278 = vrot.lane.b32.xlu0 %v1262, 64
        %v1279 = vpop.permute.xlu0 %1278
        %1280 = vrot.lane.b32.xlu0 %v1263, 64
        %v1281 = vpop.permute.xlu0 %1280
        %1282 = vrot.lane.b32.xlu0 %v1264, 64
        %v1283 = vpop.permute.xlu0 %1282
        %1284 = vrot.lane.b32.xlu0 %v1265, 64
        %v1285 = vpop.permute.xlu0 %1284
        %1286 = vrot.lane.b32.xlu0 %v1266, 64
        %v1287 = vpop.permute.xlu0 %1286
        %1288 = vrot.lane.b32.xlu0 %v1267, 64
        %v1289 = vpop.permute.xlu0 %1288
        %1290 = vrot.lane.b32.xlu0 %v1268, 64
        %v1291 = vpop.permute.xlu0 %1290
        %1292 = vrot.lane.b32.xlu0 %v1269, 64
        %v1293 = vpop.permute.xlu0 %1292
        %v1302 = vadd.f32 %v1142, %v1279
        %v1303 = vadd.f32 %v1143, %v1281
        %v1304 = vadd.f32 %v1144, %v1283
        %v1305 = vadd.f32 %v1145, %v1285
        %v1306 = vadd.f32 %v1146, %v1287
        %v1307 = vadd.f32 %v1147, %v1289
        %v1308 = vadd.f32 %v1148, %v1291
        %v1309 = vadd.f32 %v1149, %v1293
        %1310 = vset.pattern.permute.xlu0 8
        %1311 = vperm.xlu0 %1310, %v270
        %v1312 = vpop.permute.xlu0 %1311
        %1314 = vset.pattern.permute.xlu0 8
        %1315 = vperm.xlu0 %1314, %v271
        %v1316 = vpop.permute.xlu0 %1315
        %1318 = vset.pattern.permute.xlu0 8
        %1319 = vperm.xlu0 %1318, %v272
        %v1320 = vpop.permute.xlu0 %1319
        %1322 = vset.pattern.permute.xlu0 8
        %1323 = vperm.xlu0 %1322, %v273
        %v1324 = vpop.permute.xlu0 %1323
        %1326 = vset.pattern.permute.xlu0 8
        %1327 = vperm.xlu0 %1326, %v274
        %v1328 = vpop.permute.xlu0 %1327
        %1330 = vset.pattern.permute.xlu0 8
        %1331 = vperm.xlu0 %1330, %v275
        %v1332 = vpop.permute.xlu0 %1331
        %1334 = vset.pattern.permute.xlu0 8
        %1335 = vperm.xlu0 %1334, %v276
        %v1336 = vpop.permute.xlu0 %1335
        %1338 = vset.pattern.permute.xlu0 8
        %1339 = vperm.xlu0 %1338, %v277
        %v1340 = vpop.permute.xlu0 %1339
        %v1342 = vmul.f32 %v234, %v1312
        %v1343 = vmul.f32 %v239, %v1316
        %v1344 = vmul.f32 %v244, %v1320
        %v1345 = vmul.f32 %v249, %v1324
        %v1346 = vmul.f32 %v254, %v1328
        %v1347 = vmul.f32 %v259, %v1332
        %v1348 = vmul.f32 %v264, %v1336
        %v1349 = vmul.f32 %v269, %v1340
        %v1350 = vadd.f32 %v1222, %v1342
        %v1351 = vadd.f32 %v1223, %v1343
        %v1352 = vadd.f32 %v1224, %v1344
        %v1353 = vadd.f32 %v1225, %v1345
        %v1354 = vadd.f32 %v1226, %v1346
        %v1355 = vadd.f32 %v1227, %v1347
        %v1356 = vadd.f32 %v1228, %v1348
        %v1357 = vadd.f32 %v1229, %v1349
        %1358 = vset.pattern.permute.xlu0 17
        %1359 = vperm.xlu0 %1358, %v270
        %v1360 = vpop.permute.xlu0 %1359
        %1362 = vset.pattern.permute.xlu0 17
        %1363 = vperm.xlu0 %1362, %v271
        %v1364 = vpop.permute.xlu0 %1363
        %1366 = vset.pattern.permute.xlu0 17
        %1367 = vperm.xlu0 %1366, %v272
        %v1368 = vpop.permute.xlu0 %1367
        %1370 = vset.pattern.permute.xlu0 17
        %1371 = vperm.xlu0 %1370, %v273
        %v1372 = vpop.permute.xlu0 %1371
        %1374 = vset.pattern.permute.xlu0 17
        %1375 = vperm.xlu0 %1374, %v274
        %v1376 = vpop.permute.xlu0 %1375
        %1378 = vset.pattern.permute.xlu0 17
        %1379 = vperm.xlu0 %1378, %v275
        %v1380 = vpop.permute.xlu0 %1379
        %1382 = vset.pattern.permute.xlu0 17
        %1383 = vperm.xlu0 %1382, %v276
        %v1384 = vpop.permute.xlu0 %1383
        %1386 = vset.pattern.permute.xlu0 17
        %1387 = vperm.xlu0 %1386, %v277
        %v1388 = vpop.permute.xlu0 %1387
        %v1390 = vmul.f32 %v234, %v1360
        %v1391 = vmul.f32 %v239, %v1364
        %v1392 = vmul.f32 %v244, %v1368
        %v1393 = vmul.f32 %v249, %v1372
        %v1394 = vmul.f32 %v254, %v1376
        %v1395 = vmul.f32 %v259, %v1380
        %v1396 = vmul.f32 %v264, %v1384
        %v1397 = vmul.f32 %v269, %v1388
        %v1398 = vadd.f32 %v1302, %v1390
        %v1399 = vadd.f32 %v1303, %v1391
        %v1400 = vadd.f32 %v1304, %v1392
        %v1401 = vadd.f32 %v1305, %v1393
        %v1402 = vadd.f32 %v1306, %v1394
        %v1403 = vadd.f32 %v1307, %v1395
        %v1404 = vadd.f32 %v1308, %v1396
        %v1405 = vadd.f32 %v1309, %v1397
        %1414 = vrot.lane.b32.xlu0 %v1398, 64
        %v1415 = vpop.permute.xlu0 %1414
        %1416 = vrot.lane.b32.xlu0 %v1399, 64
        %v1417 = vpop.permute.xlu0 %1416
        %1418 = vrot.lane.b32.xlu0 %v1400, 64
        %v1419 = vpop.permute.xlu0 %1418
        %1420 = vrot.lane.b32.xlu0 %v1401, 64
        %v1421 = vpop.permute.xlu0 %1420
        %1422 = vrot.lane.b32.xlu0 %v1402, 64
        %v1423 = vpop.permute.xlu0 %1422
        %1424 = vrot.lane.b32.xlu0 %v1403, 64
        %v1425 = vpop.permute.xlu0 %1424
        %1426 = vrot.lane.b32.xlu0 %v1404, 64
        %v1427 = vpop.permute.xlu0 %1426
        %1428 = vrot.lane.b32.xlu0 %v1405, 64
        %v1429 = vpop.permute.xlu0 %1428
        %vm1438 = vcmask 523264
        %v1439 = vsel %vm1438, %v1350, %v1415
        %v1440 = vsel %vm1438, %v1351, %v1417
        %v1441 = vsel %vm1438, %v1352, %v1419
        %v1442 = vsel %vm1438, %v1353, %v1421
        %v1443 = vsel %vm1438, %v1354, %v1423
        %v1444 = vsel %vm1438, %v1355, %v1425
        %v1445 = vsel %vm1438, %v1356, %v1427
        %v1446 = vsel %vm1438, %v1357, %v1429
        %1447 = vst [vmem:[%s202] sm:$0xff] %v1439
        %1448 = vst [vmem:[%s202 + $0x8] sm:$0xff] %v1440
        %1449 = vst [vmem:[%s202 + $0x10] sm:$0xff] %v1441
        %1450 = vst [vmem:[%s202 + $0x18] sm:$0xff] %v1442
        %1451 = vst [vmem:[%s202 + $0x20] sm:$0xff] %v1443
        %1452 = vst [vmem:[%s202 + $0x28] sm:$0xff] %v1444
        %1453 = vst [vmem:[%s202 + $0x30] sm:$0xff] %v1445
        %1454 = vst [vmem:[%s202 + $0x38] sm:$0xff] %v1446
        %s1455 = sand.u32 %s82, 1
        %s1456 = scalar_lea.sflag [#allocation4], %s1455
        %s1457 = sand.u32 %s82, 1
        %s1458 = smul.addr %s1457, 64
        %s1459 = scalar_lea.vmem [#allocation7], %s1458
        // Predicated region
        $region37: #{raft_forward.21} parent=27 // pred_check
          %p1460 = pneg %p92
        $region38: #{raft_forward.21} parent=27 // pred_check_branch
          %1462 = sbr.rel (%p1460) target = $region40
        $region39: #{raft_forward.21} parent=27 // pred_region
          %s1463 = smul.u32 8, %s22
          %s1465 = ssub.s32 1024, 1024
          %1466 = vsyncadd %s1456, %s1465
          %s1467 = smul.addr %s1463, 128
          %s1468 = scalar_lea.hbm %s2, %s1467
          %s1469 = sshll.u32 %s1459, 4
          %s1470 = int_to_ptr.vmem [resolvable:$true] %s1469
          %1475 = dma.vmem_to_hbm [thread:$0]  %s1470, 1024, %s1468, %s1456, 128, 128, 8
        $region40: #{raft_forward.21} parent=27 // pred_fallthru
          _
      $region28: #{raft_forward.21} parent=5 // pred_fallthru
        _
      %p1476 = scmp.le.s32.totalorder 2, %s17
      // Predicated region
      $region41: #{raft_forward.21} parent=5 // pred_check
        %p1477 = pneg %p1476
      $region42: #{raft_forward.21} parent=5 // pred_check_branch
        %1479 = sbr.rel (%p1477) target = $region44
      $region43: #{raft_forward.21} parent=5 // pred_region
        %s1480 = ssub.s32 %s17, 2
        // Predicated region
        $region45: #{raft_forward.21} parent=43 // pred_check
          %p1481 = pneg %p98
        $region46: #{raft_forward.21} parent=43 // pred_check_branch
          %1483 = sbr.rel (%p1481) target = $region48
        $region47: #{raft_forward.21} parent=43 // pred_region
          %s1484 = sand.u32 %s83, 1
          %s1485 = scalar_lea.sflag [#allocation4], %s1484
          %s1486 = sand.u32 %s83, 1
          %s1487 = smul.addr %s1486, 64
          %s1488 = scalar_lea.vmem [#allocation7], %s1487
          %1489 = dma.done %s1485, 1024
        $region48: #{raft_forward.21} parent=43 // pred_fallthru
          _
      $region44: #{raft_forward.21} parent=5 // pred_fallthru
        _
    $region6: #{raft_forward.21} parent=1 // loop_footer
      %s21 = sadd.s32 1, %s17
    $region7: #{raft_forward.21} parent=1 // loop_footer_branch
      %16 = sbr.rel target = $region3
    $region8: #{raft_forward.21} parent=1 // loop_exit
      _
    %1490 = vsyncpa [#allocation3], 1
    %s1491 = scalar_lea.sflag [#allocation3], 1
    %1492 = vsyncpa %s1491, 1
    %1493 = vsyncpa [#allocation6], 1
    %s1494 = scalar_lea.sflag [#allocation6], 1
    %1495 = vsyncpa %s1494, 1
    %1496 = vsyncpa [#allocation4], 1
    %s1497 = scalar_lea.sflag [#allocation4], 1
    %1498 = vsyncpa %s1497, 1

</llo_original>
